<compile_context>
chip_gen: v6e
topology: v6e:2x2x1
jax: 0.10.0
libtpu: 0.0.40
codegen_flags: <defaults>
</compile_context>

<pallas_src>
import jax
import jax.numpy as jnp
from jax.experimental import pallas as pl
from jax.experimental.pallas import tpu as pltpu

EPS = 1e-5  # torch.nn.InstanceNorm2d default


def _instance_norm_relu(y, hw):
    """InstanceNorm2d(affine=False) + ReLU on an (H*W, C) f32 slab.

    Both moments are reduced in one pass: [y, y*y] packed along lanes
    (C + C = 128 lanes at C = 64) -> one sublane reduction.
    """
    c = y.shape[1]
    inv_n = 1.0 / float(hw)
    moments = jnp.sum(jnp.concatenate([y, y * y], axis=-1),
                      axis=0, keepdims=True) * inv_n          # (1, 2C)
    mean = moments[:, :c]
    msq = moments[:, c:]
    var = jnp.maximum(msq - mean * mean, 0.0)   # guard tiny negative rounding
    return jnp.maximum((y - mean) * jax.lax.rsqrt(var + EPS), 0.0)


def _reflect_pad_into(pad_ref, x_hwc):
    """ReflectionPad2d(1): write an (H, W, C) value into (H+2, W+2, C) scratch.

    Store ordering matters: left/right column copies read the already-written
    top/bottom rows so the corners come out reflected in both dims (matches
    torch.nn.ReflectionPad2d).
    """
    H, W, _ = x_hwc.shape
    pad_ref[1:H + 1, 1:W + 1, :] = x_hwc
    pad_ref[0:1, 1:W + 1, :] = x_hwc[1:2]                    # top    <- row 1
    pad_ref[H + 1:H + 2, 1:W + 1, :] = x_hwc[H - 2:H - 1]    # bottom <- row H-2
    pad_ref[:, 0:1, :] = pad_ref[:, 2:3, :]                  # left   <- orig col 1
    pad_ref[:, W + 1:W + 2, :] = pad_ref[:, W - 1:W, :]      # right  <- orig col W-2


def _conv3x3_in_relu(a, w_ref, pad_ref):
    """ReflectionPad(1) + Conv3x3 (bias-free) + InstanceNorm + ReLU.

    a       : (H*W, Cin) f32 activation value
    w_ref   : (9, Cin, Cout) bf16 weight ref, tap index t = dy*3 + dx
    pad_ref : (H+2, W+2, Cin) f32 VMEM scratch

    The conv is nine shifted matmuls accumulated in f32: each tap slab is read
    from pad_ref directly into vregs (bf16 cast in-register) and pushed to the
    MXU -- no intermediate im2col buffer in VMEM.
    """
    H = pad_ref.shape[0] - 2
    W = pad_ref.shape[1] - 2
    Cin = pad_ref.shape[2]
    HW = H * W

    _reflect_pad_into(pad_ref, a.reshape(H, W, Cin))

    acc = None
    for t in range(9):
        dy, dx = t // 3, t % 3
        tap = (pad_ref[dy:dy + H, dx:dx + W, :]
               .reshape(HW, Cin).astype(jnp.bfloat16))
        contrib = jnp.dot(tap, w_ref[t], preferred_element_type=jnp.float32)
        acc = contrib if acc is None else acc + contrib

    return _instance_norm_relu(acc, HW)


def tnet_kernel(xcol_ref, w1_ref, w2_ref, w3_ref, w4_ref, wft_ref, bf_ref,
                out_ref, pad_ref):
    # xcol_ref: (1, H*W, 27) bf16  layer-1 im2col of the reflection-padded input
    # w1_ref  : (27, C) bf16       w2..w4: (9, C, C) bf16
    # wft_ref : (Cf, C) bf16       bf_ref: (Cf, 1) f32
    # out_ref : (1, Cf, H*W) f32   (lane-dense: HW along lanes)
    # pad_ref : (H+2, W+2, C) f32 VMEM scratch
    HW = out_ref.shape[2]

    # ---- layer 1 (Cin = 3): single im2col matmul, K = 27 ----
    y1 = jnp.dot(xcol_ref[0], w1_ref[...], preferred_element_type=jnp.float32)
    a = _instance_norm_relu(y1, HW)

    # ---- layers 2..4 (Cin = Cout = C): fully in VMEM, 9 tap matmuls each ----
    for w_ref in (w2_ref, w3_ref, w4_ref):
        a = _conv3x3_in_relu(a, w_ref, pad_ref)

    # ---- final 1x1 conv + bias + sigmoid, emitted as (Cf, HW) ----
    # (Cf, C) contracted with (HW, C) on the channel dim -> lane-dense output.
    yf = jax.lax.dot_general(wft_ref[...], a.astype(jnp.bfloat16),
                             (((1,), (1,)), ((), ())),
                             preferred_element_type=jnp.float32)
    yf = yf + bf_ref[...]
    out_ref[0] = jax.nn.sigmoid(yf)


def tnet_forward(x_nchw, params, final_w, final_b):
    """TNet forward.

    params  : 4 x (w[3, 3, Cin, Cout], b[Cout]) -- HWIO layout.  (PyTorch
              checkpoints are OIHW (Cout, Cin, kh, kw); permute (2, 3, 1, 0)
              before calling.)  Conv-block biases are ignored: InstanceNorm
              (affine=False) cancels them exactly.
    final_w : (C, 3), final_b: (3,)
    """
    N, cin0, H, W = x_nchw.shape
    C = params[0][0].shape[-1]
    Cf = final_w.shape[-1]
    HW = H * W

    x = jnp.transpose(x_nchw, (0, 2, 3, 1)).astype(jnp.float32)  # -> NHWC

    # Layer-1 im2col in the wrapper: the raw input is tiny (9*Cin0 = 27 cols),
    # so this costs ~nothing and keeps 3-lane-wide data out of the kernel.
    xpad = jnp.pad(x, ((0, 0), (1, 1), (1, 1), (0, 0)), mode="reflect")
    taps = [xpad[:, dy:dy + H, dx:dx + W, :]
            for dy in range(3) for dx in range(3)]
    xcol = (jnp.concatenate(taps, axis=-1)
            .reshape(N, HW, 9 * cin0).astype(jnp.bfloat16))

    # Weights as bf16; K ordered (dy, dx, cin) to match the im2col / tap loop.
    w1 = params[0][0].reshape(9 * cin0, C).astype(jnp.bfloat16)
    w2 = params[1][0].reshape(9, C, C).astype(jnp.bfloat16)
    w3 = params[2][0].reshape(9, C, C).astype(jnp.bfloat16)
    w4 = params[3][0].reshape(9, C, C).astype(jnp.bfloat16)
    wft = jnp.transpose(final_w, (1, 0)).astype(jnp.bfloat16)   # (Cf, C)
    bf = final_b.reshape(Cf, 1).astype(jnp.float32)

    out = pl.pallas_call(
        tnet_kernel,
        out_shape=jax.ShapeDtypeStruct((N, Cf, HW), jnp.float32),
        grid_spec=pltpu.PrefetchScalarGridSpec(
            num_scalar_prefetch=0,
            grid=(N,),
            in_specs=[
                pl.BlockSpec((1, HW, 9 * cin0), lambda n: (n, 0, 0)),
                pl.BlockSpec((9 * cin0, C), lambda n: (0, 0)),
                pl.BlockSpec((9, C, C), lambda n: (0, 0, 0)),
                pl.BlockSpec((9, C, C), lambda n: (0, 0, 0)),
                pl.BlockSpec((9, C, C), lambda n: (0, 0, 0)),
                pl.BlockSpec((Cf, C), lambda n: (0, 0)),
                pl.BlockSpec((Cf, 1), lambda n: (0, 0)),
            ],
            out_specs=pl.BlockSpec((1, Cf, HW), lambda n: (n, 0, 0)),
            scratch_shapes=[
                pltpu.VMEM((H + 2, W + 2, C), jnp.float32),  # reflect-pad buf
            ],
        ),
        compiler_params=pltpu.CompilerParams(
            dimension_semantics=("parallel",),
        ),
    )(xcol, w1, w2, w3, w4, wft, bf)

    # (N, Cf, H*W) is already NCHW-flat: just reshape, no transpose.
    return out.reshape(N, Cf, H, W)


if __name__ == "__main__":
    num = 64          # TNet default channel count
    N, H, W = 2, 16, 16

    key = jax.random.PRNGKey(0)
    keys = jax.random.split(key, 11)

    def init(k, shape, fan_in):
        return jax.random.normal(k, shape, jnp.float32) / jnp.sqrt(
            jnp.float32(fan_in))

    # 4 conv blocks: (3->num), (num->num) x3. Weights stored as (kh, kw, Cin, Cout).
    cins = [3, num, num, num]
    params = []
    for i, cin in enumerate(cins):
        w = init(keys[2 * i], (3, 3, cin, num), 9 * cin)
        b = init(keys[2 * i + 1], (num,), 9 * cin)  # no-op under InstanceNorm
        params.append((w, b))

    # final: 1x1 conv num -> 3, stored as (Cin, Cout).
    wf = init(keys[8], (num, 3), num)
    bf = init(keys[9], (3,), num)

    x_nchw = jax.random.uniform(keys[10], (N, 3, H, W), jnp.float32)

    fwd = jax.jit(tnet_forward)
    out = fwd(x_nchw, params, wf, bf)
    out = jax.block_until_ready(out)

    assert out.shape == (N, 3, H, W)
    assert bool(jnp.all(jnp.isfinite(out)))
    assert bool(jnp.all((out >= 0.0) & (out <= 1.0)))  # sigmoid range
    print("KERNEL_OK")
</pallas_src>

<mosaic_0001>
module attributes {stable_mosaic.version = 11 : i64} {
  func.func @tnet_kernel(%arg0: i32, %arg1: memref<1x256x27xbf16, #tpu.memory_space<vmem>>, %arg2: memref<27x64xbf16, #tpu.memory_space<vmem>>, %arg3: memref<9x64x64xbf16, #tpu.memory_space<vmem>>, %arg4: memref<9x64x64xbf16, #tpu.memory_space<vmem>>, %arg5: memref<9x64x64xbf16, #tpu.memory_space<vmem>>, %arg6: memref<3x64xbf16, #tpu.memory_space<vmem>>, %arg7: memref<3x1xf32, #tpu.memory_space<vmem>>, %arg8: memref<1x3x256xf32, #tpu.memory_space<vmem>>, %arg9: memref<18x18x64xf32, #tpu.memory_space<vmem>>) attributes {dimension_semantics = [#tpu.dimension_semantics<parallel>], iteration_bounds = array<i64: 2>, scalar_prefetch = 0 : i64, scratch_operands = 1 : i64, tpu.core_type = #tpu.core_type<tc>, window_params = [{transform_indices = @transform_0, window_bounds = array<i64: 1, 256, 27>}, {pipeline_mode = #tpu.pipeline_mode<synchronous>, transform_indices = @transform_1, window_bounds = array<i64: 27, 64>}, {pipeline_mode = #tpu.pipeline_mode<synchronous>, transform_indices = @transform_2, window_bounds = array<i64: 9, 64, 64>}, {pipeline_mode = #tpu.pipeline_mode<synchronous>, transform_indices = @transform_3, window_bounds = array<i64: 9, 64, 64>}, {pipeline_mode = #tpu.pipeline_mode<synchronous>, transform_indices = @transform_4, window_bounds = array<i64: 9, 64, 64>}, {pipeline_mode = #tpu.pipeline_mode<synchronous>, transform_indices = @transform_5, window_bounds = array<i64: 3, 64>}, {pipeline_mode = #tpu.pipeline_mode<synchronous>, transform_indices = @transform_6, window_bounds = array<i64: 3, 1>}, {transform_indices = @transform_7, window_bounds = array<i64: 1, 3, 256>}]} {
    %c0 = arith.constant 0 : index
    %c0_0 = arith.constant 0 : index
    %c0_1 = arith.constant 0 : index
    %0 = vector.load %arg1[%c0, %c0_0, %c0_1] : memref<1x256x27xbf16, #tpu.memory_space<vmem>>, vector<1x256x27xbf16>
    %1 = vector.shape_cast %0 : vector<1x256x27xbf16> to vector<256x27xbf16>
    %c0_2 = arith.constant 0 : index
    %c0_3 = arith.constant 0 : index
    %2 = vector.load %arg2[%c0_2, %c0_3] : memref<27x64xbf16, #tpu.memory_space<vmem>>, vector<27x64xbf16>
    %cst = arith.constant dense<0.000000e+00> : vector<256x64xf32>
    %3 = tpu.matmul %1, %2, %cst {dimension_numbers = #tpu.dot_dimension_numbers<[1], [0], [0], [1], [0, 0, 1, 1], [], []>} : vector<256x27xbf16>, vector<27x64xbf16>, vector<256x64xf32> -> vector<256x64xf32>
    %4 = arith.mulf %3, %3 : vector<256x64xf32>
    %5 = tpu.concatenate %3, %4 in 1 : vector<256x64xf32>, vector<256x64xf32> -> vector<256x128xf32>
    %cst_4 = arith.constant dense<0.000000e+00> : vector<128xf32>
    %6 = vector.multi_reduction <add>, %5, %cst_4 [0] : vector<256x128xf32> to vector<128xf32>
    %7 = vector.shape_cast %6 : vector<128xf32> to vector<1x128xf32>
    %cst_5 = arith.constant 3.906250e-03 : f32
    %8 = vector.broadcast %cst_5 : f32 to vector<1x128xf32>
    %9 = arith.mulf %7, %8 : vector<1x128xf32>
    %10 = vector.extract_strided_slice %9 {offsets = [0, 0], sizes = [1, 64], strides = [1, 1]} : vector<1x128xf32> to vector<1x64xf32>
    %11 = vector.extract_strided_slice %9 {offsets = [0, 64], sizes = [1, 64], strides = [1, 1]} : vector<1x128xf32> to vector<1x64xf32>
    %12 = arith.mulf %10, %10 : vector<1x64xf32>
    %13 = arith.subf %11, %12 : vector<1x64xf32>
    %cst_6 = arith.constant 0.000000e+00 : f32
    %14 = vector.broadcast %cst_6 : f32 to vector<1x64xf32>
    %15 = arith.maximumf %13, %14 : vector<1x64xf32>
    %16 = vector.broadcast %10 : vector<1x64xf32> to vector<256x64xf32>
    %17 = arith.subf %3, %16 : vector<256x64xf32>
    %cst_7 = arith.constant 9.99999974E-6 : f32
    %18 = vector.broadcast %cst_7 : f32 to vector<1x64xf32>
    %19 = arith.addf %15, %18 : vector<1x64xf32>
    %20 = math.rsqrt %19 : vector<1x64xf32>
    %21 = vector.broadcast %20 : vector<1x64xf32> to vector<256x64xf32>
    %22 = arith.mulf %17, %21 : vector<256x64xf32>
    %cst_8 = arith.constant 0.000000e+00 : f32
    %23 = vector.broadcast %cst_8 : f32 to vector<256x64xf32>
    %24 = arith.maximumf %22, %23 : vector<256x64xf32>
    %25 = vector.shape_cast %24 : vector<256x64xf32> to vector<16x16x64xf32>
    %c1 = arith.constant 1 : index
    %c1_9 = arith.constant 1 : index
    %c0_10 = arith.constant 0 : index
    %26 = vector.load %arg9[%c1, %c1_9, %c0_10] : memref<18x18x64xf32, #tpu.memory_space<vmem>>, vector<16x16x64xf32>
    tpu.vector_store %arg9[%c1, %c1_9, %c0_10], %25 {strides = array<i32>} : memref<18x18x64xf32, #tpu.memory_space<vmem>>, vector<16x16x64xf32>,
    %27 = vector.extract_strided_slice %25 {offsets = [1, 0, 0], sizes = [1, 16, 64], strides = [1, 1, 1]} : vector<16x16x64xf32> to vector<1x16x64xf32>
    %c0_11 = arith.constant 0 : index
    %c1_12 = arith.constant 1 : index
    %c0_13 = arith.constant 0 : index
    %28 = vector.load %arg9[%c0_11, %c1_12, %c0_13] : memref<18x18x64xf32, #tpu.memory_space<vmem>>, vector<1x16x64xf32>
    tpu.vector_store %arg9[%c0_11, %c1_12, %c0_13], %27 {strides = array<i32>} : memref<18x18x64xf32, #tpu.memory_space<vmem>>, vector<1x16x64xf32>,
    %29 = vector.extract_strided_slice %25 {offsets = [14, 0, 0], sizes = [1, 16, 64], strides = [1, 1, 1]} : vector<16x16x64xf32> to vector<1x16x64xf32>
    %c17 = arith.constant 17 : index
    %c1_14 = arith.constant 1 : index
    %c0_15 = arith.constant 0 : index
    %30 = vector.load %arg9[%c17, %c1_14, %c0_15] : memref<18x18x64xf32, #tpu.memory_space<vmem>>, vector<1x16x64xf32>
    tpu.vector_store %arg9[%c17, %c1_14, %c0_15], %29 {strides = array<i32>} : memref<18x18x64xf32, #tpu.memory_space<vmem>>, vector<1x16x64xf32>,
    %c0_16 = arith.constant 0 : index
    %c2 = arith.constant 2 : index
    %c0_17 = arith.constant 0 : index
    %31 = vector.load %arg9[%c0_16, %c2, %c0_17] : memref<18x18x64xf32, #tpu.memory_space<vmem>>, vector<18x1x64xf32>
    %c0_18 = arith.constant 0 : index
    %c0_19 = arith.constant 0 : index
    %c0_20 = arith.constant 0 : index
    %32 = vector.load %arg9[%c0_18, %c0_19, %c0_20] : memref<18x18x64xf32, #tpu.memory_space<vmem>>, vector<18x1x64xf32>
    tpu.vector_store %arg9[%c0_18, %c0_19, %c0_20], %31 {strides = array<i32>} : memref<18x18x64xf32, #tpu.memory_space<vmem>>, vector<18x1x64xf32>,
    %c0_21 = arith.constant 0 : index
    %c15 = arith.constant 15 : index
    %c0_22 = arith.constant 0 : index
    %33 = vector.load %arg9[%c0_21, %c15, %c0_22] : memref<18x18x64xf32, #tpu.memory_space<vmem>>, vector<18x1x64xf32>
    %c0_23 = arith.constant 0 : index
    %c17_24 = arith.constant 17 : index
    %c0_25 = arith.constant 0 : index
    %34 = vector.load %arg9[%c0_23, %c17_24, %c0_25] : memref<18x18x64xf32, #tpu.memory_space<vmem>>, vector<18x1x64xf32>
    tpu.vector_store %arg9[%c0_23, %c17_24, %c0_25], %33 {strides = array<i32>} : memref<18x18x64xf32, #tpu.memory_space<vmem>>, vector<18x1x64xf32>,
    %c0_26 = arith.constant 0 : index
    %c0_27 = arith.constant 0 : index
    %c0_28 = arith.constant 0 : index
    %35 = vector.load %arg9[%c0_26, %c0_27, %c0_28] : memref<18x18x64xf32, #tpu.memory_space<vmem>>, vector<16x16x64xf32>
    %36 = vector.shape_cast %35 : vector<16x16x64xf32> to vector<256x64xf32>
    %37 = arith.truncf %36 : vector<256x64xf32> to vector<256x64xbf16>
    %c0_29 = arith.constant 0 : index
    %c0_30 = arith.constant 0 : index
    %c0_31 = arith.constant 0 : index
    %38 = vector.load %arg3[%c0_29, %c0_30, %c0_31] : memref<9x64x64xbf16, #tpu.memory_space<vmem>>, vector<1x64x64xbf16>
    %39 = vector.shape_cast %38 : vector<1x64x64xbf16> to vector<64x64xbf16>
    %cst_32 = arith.constant dense<0.000000e+00> : vector<256x64xf32>
    %40 = tpu.matmul %37, %39, %cst_32 {dimension_numbers = #tpu.dot_dimension_numbers<[1], [0], [0], [1], [0, 0, 1, 1], [], []>} : vector<256x64xbf16>, vector<64x64xbf16>, vector<256x64xf32> -> vector<256x64xf32>
    %c0_33 = arith.constant 0 : index
    %c1_34 = arith.constant 1 : index
    %c0_35 = arith.constant 0 : index
    %41 = vector.load %arg9[%c0_33, %c1_34, %c0_35] : memref<18x18x64xf32, #tpu.memory_space<vmem>>, vector<16x16x64xf32>
    %42 = vector.shape_cast %41 : vector<16x16x64xf32> to vector<256x64xf32>
    %43 = arith.truncf %42 : vector<256x64xf32> to vector<256x64xbf16>
    %c1_36 = arith.constant 1 : index
    %c0_37 = arith.constant 0 : index
    %c0_38 = arith.constant 0 : index
    %44 = vector.load %arg3[%c1_36, %c0_37, %c0_38] : memref<9x64x64xbf16, #tpu.memory_space<vmem>>, vector<1x64x64xbf16>
    %45 = vector.shape_cast %44 : vector<1x64x64xbf16> to vector<64x64xbf16>
    %cst_39 = arith.constant dense<0.000000e+00> : vector<256x64xf32>
    %46 = tpu.matmul %43, %45, %cst_39 {dimension_numbers = #tpu.dot_dimension_numbers<[1], [0], [0], [1], [0, 0, 1, 1], [], []>} : vector<256x64xbf16>, vector<64x64xbf16>, vector<256x64xf32> -> vector<256x64xf32>
    %47 = arith.addf %40, %46 : vector<256x64xf32>
    %c0_40 = arith.constant 0 : index
    %c2_41 = arith.constant 2 : index
    %c0_42 = arith.constant 0 : index
    %48 = vector.load %arg9[%c0_40, %c2_41, %c0_42] : memref<18x18x64xf32, #tpu.memory_space<vmem>>, vector<16x16x64xf32>
    %49 = vector.shape_cast %48 : vector<16x16x64xf32> to vector<256x64xf32>
    %50 = arith.truncf %49 : vector<256x64xf32> to vector<256x64xbf16>
    %c2_43 = arith.constant 2 : index
    %c0_44 = arith.constant 0 : index
    %c0_45 = arith.constant 0 : index
    %51 = vector.load %arg3[%c2_43, %c0_44, %c0_45] : memref<9x64x64xbf16, #tpu.memory_space<vmem>>, vector<1x64x64xbf16>
    %52 = vector.shape_cast %51 : vector<1x64x64xbf16> to vector<64x64xbf16>
    %cst_46 = arith.constant dense<0.000000e+00> : vector<256x64xf32>
    %53 = tpu.matmul %50, %52, %cst_46 {dimension_numbers = #tpu.dot_dimension_numbers<[1], [0], [0], [1], [0, 0, 1, 1], [], []>} : vector<256x64xbf16>, vector<64x64xbf16>, vector<256x64xf32> -> vector<256x64xf32>
    %54 = arith.addf %47, %53 : vector<256x64xf32>
    %c1_47 = arith.constant 1 : index
    %c0_48 = arith.constant 0 : index
    %c0_49 = arith.constant 0 : index
    %55 = vector.load %arg9[%c1_47, %c0_48, %c0_49] : memref<18x18x64xf32, #tpu.memory_space<vmem>>, vector<16x16x64xf32>
    %56 = vector.shape_cast %55 : vector<16x16x64xf32> to vector<256x64xf32>
    %57 = arith.truncf %56 : vector<256x64xf32> to vector<256x64xbf16>
    %c3 = arith.constant 3 : index
    %c0_50 = arith.constant 0 : index
    %c0_51 = arith.constant 0 : index
    %58 = vector.load %arg3[%c3, %c0_50, %c0_51] : memref<9x64x64xbf16, #tpu.memory_space<vmem>>, vector<1x64x64xbf16>
    %59 = vector.shape_cast %58 : vector<1x64x64xbf16> to vector<64x64xbf16>
    %cst_52 = arith.constant dense<0.000000e+00> : vector<256x64xf32>
    %60 = tpu.matmul %57, %59, %cst_52 {dimension_numbers = #tpu.dot_dimension_numbers<[1], [0], [0], [1], [0, 0, 1, 1], [], []>} : vector<256x64xbf16>, vector<64x64xbf16>, vector<256x64xf32> -> vector<256x64xf32>
    %61 = arith.addf %54, %60 : vector<256x64xf32>
    %c1_53 = arith.constant 1 : index
    %c1_54 = arith.constant 1 : index
    %c0_55 = arith.constant 0 : index
    %62 = vector.load %arg9[%c1_53, %c1_54, %c0_55] : memref<18x18x64xf32, #tpu.memory_space<vmem>>, vector<16x16x64xf32>
    %63 = vector.shape_cast %62 : vector<16x16x64xf32> to vector<256x64xf32>
    %64 = arith.truncf %63 : vector<256x64xf32> to vector<256x64xbf16>
    %c4 = arith.constant 4 : index
    %c0_56 = arith.constant 0 : index
    %c0_57 = arith.constant 0 : index
    %65 = vector.load %arg3[%c4, %c0_56, %c0_57] : memref<9x64x64xbf16, #tpu.memory_space<vmem>>, vector<1x64x64xbf16>
    %66 = vector.shape_cast %65 : vector<1x64x64xbf16> to vector<64x64xbf16>
    %cst_58 = arith.constant dense<0.000000e+00> : vector<256x64xf32>
    %67 = tpu.matmul %64, %66, %cst_58 {dimension_numbers = #tpu.dot_dimension_numbers<[1], [0], [0], [1], [0, 0, 1, 1], [], []>} : vector<256x64xbf16>, vector<64x64xbf16>, vector<256x64xf32> -> vector<256x64xf32>
    %68 = arith.addf %61, %67 : vector<256x64xf32>
    %c1_59 = arith.constant 1 : index
    %c2_60 = arith.constant 2 : index
    %c0_61 = arith.constant 0 : index
    %69 = vector.load %arg9[%c1_59, %c2_60, %c0_61] : memref<18x18x64xf32, #tpu.memory_space<vmem>>, vector<16x16x64xf32>
    %70 = vector.shape_cast %69 : vector<16x16x64xf32> to vector<256x64xf32>
    %71 = arith.truncf %70 : vector<256x64xf32> to vector<256x64xbf16>
    %c5 = arith.constant 5 : index
    %c0_62 = arith.constant 0 : index
    %c0_63 = arith.constant 0 : index
    %72 = vector.load %arg3[%c5, %c0_62, %c0_63] : memref<9x64x64xbf16, #tpu.memory_space<vmem>>, vector<1x64x64xbf16>
    %73 = vector.shape_cast %72 : vector<1x64x64xbf16> to vector<64x64xbf16>
    %cst_64 = arith.constant dense<0.000000e+00> : vector<256x64xf32>
    %74 = tpu.matmul %71, %73, %cst_64 {dimension_numbers = #tpu.dot_dimension_numbers<[1], [0], [0], [1], [0, 0, 1, 1], [], []>} : vector<256x64xbf16>, vector<64x64xbf16>, vector<256x64xf32> -> vector<256x64xf32>
    %75 = arith.addf %68, %74 : vector<256x64xf32>
    %c2_65 = arith.constant 2 : index
    %c0_66 = arith.constant 0 : index
    %c0_67 = arith.constant 0 : index
    %76 = vector.load %arg9[%c2_65, %c0_66, %c0_67] : memref<18x18x64xf32, #tpu.memory_space<vmem>>, vector<16x16x64xf32>
    %77 = vector.shape_cast %76 : vector<16x16x64xf32> to vector<256x64xf32>
    %78 = arith.truncf %77 : vector<256x64xf32> to vector<256x64xbf16>
    %c6 = arith.constant 6 : index
    %c0_68 = arith.constant 0 : index
    %c0_69 = arith.constant 0 : index
    %79 = vector.load %arg3[%c6, %c0_68, %c0_69] : memref<9x64x64xbf16, #tpu.memory_space<vmem>>, vector<1x64x64xbf16>
    %80 = vector.shape_cast %79 : vector<1x64x64xbf16> to vector<64x64xbf16>
    %cst_70 = arith.constant dense<0.000000e+00> : vector<256x64xf32>
    %81 = tpu.matmul %78, %80, %cst_70 {dimension_numbers = #tpu.dot_dimension_numbers<[1], [0], [0], [1], [0, 0, 1, 1], [], []>} : vector<256x64xbf16>, vector<64x64xbf16>, vector<256x64xf32> -> vector<256x64xf32>
    %82 = arith.addf %75, %81 : vector<256x64xf32>
    %c2_71 = arith.constant 2 : index
    %c1_72 = arith.constant 1 : index
    %c0_73 = arith.constant 0 : index
    %83 = vector.load %arg9[%c2_71, %c1_72, %c0_73] : memref<18x18x64xf32, #tpu.memory_space<vmem>>, vector<16x16x64xf32>
    %84 = vector.shape_cast %83 : vector<16x16x64xf32> to vector<256x64xf32>
    %85 = arith.truncf %84 : vector<256x64xf32> to vector<256x64xbf16>
    %c7 = arith.constant 7 : index
    %c0_74 = arith.constant 0 : index
    %c0_75 = arith.constant 0 : index
    %86 = vector.load %arg3[%c7, %c0_74, %c0_75] : memref<9x64x64xbf16, #tpu.memory_space<vmem>>, vector<1x64x64xbf16>
    %87 = vector.shape_cast %86 : vector<1x64x64xbf16> to vector<64x64xbf16>
    %cst_76 = arith.constant dense<0.000000e+00> : vector<256x64xf32>
    %88 = tpu.matmul %85, %87, %cst_76 {dimension_numbers = #tpu.dot_dimension_numbers<[1], [0], [0], [1], [0, 0, 1, 1], [], []>} : vector<256x64xbf16>, vector<64x64xbf16>, vector<256x64xf32> -> vector<256x64xf32>
    %89 = arith.addf %82, %88 : vector<256x64xf32>
    %c2_77 = arith.constant 2 : index
    %c2_78 = arith.constant 2 : index
    %c0_79 = arith.constant 0 : index
    %90 = vector.load %arg9[%c2_77, %c2_78, %c0_79] : memref<18x18x64xf32, #tpu.memory_space<vmem>>, vector<16x16x64xf32>
    %91 = vector.shape_cast %90 : vector<16x16x64xf32> to vector<256x64xf32>
    %92 = arith.truncf %91 : vector<256x64xf32> to vector<256x64xbf16>
    %c8 = arith.constant 8 : index
    %c0_80 = arith.constant 0 : index
    %c0_81 = arith.constant 0 : index
    %93 = vector.load %arg3[%c8, %c0_80, %c0_81] : memref<9x64x64xbf16, #tpu.memory_space<vmem>>, vector<1x64x64xbf16>
    %94 = vector.shape_cast %93 : vector<1x64x64xbf16> to vector<64x64xbf16>
    %cst_82 = arith.constant dense<0.000000e+00> : vector<256x64xf32>
    %95 = tpu.matmul %92, %94, %cst_82 {dimension_numbers = #tpu.dot_dimension_numbers<[1], [0], [0], [1], [0, 0, 1, 1], [], []>} : vector<256x64xbf16>, vector<64x64xbf16>, vector<256x64xf32> -> vector<256x64xf32>
    %96 = arith.addf %89, %95 : vector<256x64xf32>
    %97 = arith.mulf %96, %96 : vector<256x64xf32>
    %98 = tpu.concatenate %96, %97 in 1 : vector<256x64xf32>, vector<256x64xf32> -> vector<256x128xf32>
    %cst_83 = arith.constant dense<0.000000e+00> : vector<128xf32>
    %99 = vector.multi_reduction <add>, %98, %cst_83 [0] : vector<256x128xf32> to vector<128xf32>
    %100 = vector.shape_cast %99 : vector<128xf32> to vector<1x128xf32>
    %cst_84 = arith.constant 3.906250e-03 : f32
    %101 = vector.broadcast %cst_84 : f32 to vector<1x128xf32>
    %102 = arith.mulf %100, %101 : vector<1x128xf32>
    %103 = vector.extract_strided_slice %102 {offsets = [0, 0], sizes = [1, 64], strides = [1, 1]} : vector<1x128xf32> to vector<1x64xf32>
    %104 = vector.extract_strided_slice %102 {offsets = [0, 64], sizes = [1, 64], strides = [1, 1]} : vector<1x128xf32> to vector<1x64xf32>
    %105 = arith.mulf %103, %103 : vector<1x64xf32>
    %106 = arith.subf %104, %105 : vector<1x64xf32>
    %cst_85 = arith.constant 0.000000e+00 : f32
    %107 = vector.broadcast %cst_85 : f32 to vector<1x64xf32>
    %108 = arith.maximumf %106, %107 : vector<1x64xf32>
    %109 = vector.broadcast %103 : vector<1x64xf32> to vector<256x64xf32>
    %110 = arith.subf %96, %109 : vector<256x64xf32>
    %cst_86 = arith.constant 9.99999974E-6 : f32
    %111 = vector.broadcast %cst_86 : f32 to vector<1x64xf32>
    %112 = arith.addf %108, %111 : vector<1x64xf32>
    %113 = math.rsqrt %112 : vector<1x64xf32>
    %114 = vector.broadcast %113 : vector<1x64xf32> to vector<256x64xf32>
    %115 = arith.mulf %110, %114 : vector<256x64xf32>
    %cst_87 = arith.constant 0.000000e+00 : f32
    %116 = vector.broadcast %cst_87 : f32 to vector<256x64xf32>
    %117 = arith.maximumf %115, %116 : vector<256x64xf32>
    %118 = vector.shape_cast %117 : vector<256x64xf32> to vector<16x16x64xf32>
    %c1_88 = arith.constant 1 : index
    %c1_89 = arith.constant 1 : index
    %c0_90 = arith.constant 0 : index
    %119 = vector.load %arg9[%c1_88, %c1_89, %c0_90] : memref<18x18x64xf32, #tpu.memory_space<vmem>>, vector<16x16x64xf32>
    tpu.vector_store %arg9[%c1_88, %c1_89, %c0_90], %118 {strides = array<i32>} : memref<18x18x64xf32, #tpu.memory_space<vmem>>, vector<16x16x64xf32>,
    %120 = vector.extract_strided_slice %118 {offsets = [1, 0, 0], sizes = [1, 16, 64], strides = [1, 1, 1]} : vector<16x16x64xf32> to vector<1x16x64xf32>
    %c0_91 = arith.constant 0 : index
    %c1_92 = arith.constant 1 : index
    %c0_93 = arith.constant 0 : index
    %121 = vector.load %arg9[%c0_91, %c1_92, %c0_93] : memref<18x18x64xf32, #tpu.memory_space<vmem>>, vector<1x16x64xf32>
    tpu.vector_store %arg9[%c0_91, %c1_92, %c0_93], %120 {strides = array<i32>} : memref<18x18x64xf32, #tpu.memory_space<vmem>>, vector<1x16x64xf32>,
    %122 = vector.extract_strided_slice %118 {offsets = [14, 0, 0], sizes = [1, 16, 64], strides = [1, 1, 1]} : vector<16x16x64xf32> to vector<1x16x64xf32>
    %c17_94 = arith.constant 17 : index
    %c1_95 = arith.constant 1 : index
    %c0_96 = arith.constant 0 : index
    %123 = vector.load %arg9[%c17_94, %c1_95, %c0_96] : memref<18x18x64xf32, #tpu.memory_space<vmem>>, vector<1x16x64xf32>
    tpu.vector_store %arg9[%c17_94, %c1_95, %c0_96], %122 {strides = array<i32>} : memref<18x18x64xf32, #tpu.memory_space<vmem>>, vector<1x16x64xf32>,
    %c0_97 = arith.constant 0 : index
    %c2_98 = arith.constant 2 : index
    %c0_99 = arith.constant 0 : index
    %124 = vector.load %arg9[%c0_97, %c2_98, %c0_99] : memref<18x18x64xf32, #tpu.memory_space<vmem>>, vector<18x1x64xf32>
    %c0_100 = arith.constant 0 : index
    %c0_101 = arith.constant 0 : index
    %c0_102 = arith.constant 0 : index
    %125 = vector.load %arg9[%c0_100, %c0_101, %c0_102] : memref<18x18x64xf32, #tpu.memory_space<vmem>>, vector<18x1x64xf32>
    tpu.vector_store %arg9[%c0_100, %c0_101, %c0_102], %124 {strides = array<i32>} : memref<18x18x64xf32, #tpu.memory_space<vmem>>, vector<18x1x64xf32>,
    %c0_103 = arith.constant 0 : index
    %c15_104 = arith.constant 15 : index
    %c0_105 = arith.constant 0 : index
    %126 = vector.load %arg9[%c0_103, %c15_104, %c0_105] : memref<18x18x64xf32, #tpu.memory_space<vmem>>, vector<18x1x64xf32>
    %c0_106 = arith.constant 0 : index
    %c17_107 = arith.constant 17 : index
    %c0_108 = arith.constant 0 : index
    %127 = vector.load %arg9[%c0_106, %c17_107, %c0_108] : memref<18x18x64xf32, #tpu.memory_space<vmem>>, vector<18x1x64xf32>
    tpu.vector_store %arg9[%c0_106, %c17_107, %c0_108], %126 {strides = array<i32>} : memref<18x18x64xf32, #tpu.memory_space<vmem>>, vector<18x1x64xf32>,
    %c0_109 = arith.constant 0 : index
    %c0_110 = arith.constant 0 : index
    %c0_111 = arith.constant 0 : index
    %128 = vector.load %arg9[%c0_109, %c0_110, %c0_111] : memref<18x18x64xf32, #tpu.memory_space<vmem>>, vector<16x16x64xf32>
    %129 = vector.shape_cast %128 : vector<16x16x64xf32> to vector<256x64xf32>
    %130 = arith.truncf %129 : vector<256x64xf32> to vector<256x64xbf16>
    %c0_112 = arith.constant 0 : index
    %c0_113 = arith.constant 0 : index
    %c0_114 = arith.constant 0 : index
    %131 = vector.load %arg4[%c0_112, %c0_113, %c0_114] : memref<9x64x64xbf16, #tpu.memory_space<vmem>>, vector<1x64x64xbf16>
    %132 = vector.shape_cast %131 : vector<1x64x64xbf16> to vector<64x64xbf16>
    %cst_115 = arith.constant dense<0.000000e+00> : vector<256x64xf32>
    %133 = tpu.matmul %130, %132, %cst_115 {dimension_numbers = #tpu.dot_dimension_numbers<[1], [0], [0], [1], [0, 0, 1, 1], [], []>} : vector<256x64xbf16>, vector<64x64xbf16>, vector<256x64xf32> -> vector<256x64xf32>
    %c0_116 = arith.constant 0 : index
    %c1_117 = arith.constant 1 : index
    %c0_118 = arith.constant 0 : index
    %134 = vector.load %arg9[%c0_116, %c1_117, %c0_118] : memref<18x18x64xf32, #tpu.memory_space<vmem>>, vector<16x16x64xf32>
    %135 = vector.shape_cast %134 : vector<16x16x64xf32> to vector<256x64xf32>
    %136 = arith.truncf %135 : vector<256x64xf32> to vector<256x64xbf16>
    %c1_119 = arith.constant 1 : index
    %c0_120 = arith.constant 0 : index
    %c0_121 = arith.constant 0 : index
    %137 = vector.load %arg4[%c1_119, %c0_120, %c0_121] : memref<9x64x64xbf16, #tpu.memory_space<vmem>>, vector<1x64x64xbf16>
    %138 = vector.shape_cast %137 : vector<1x64x64xbf16> to vector<64x64xbf16>
    %cst_122 = arith.constant dense<0.000000e+00> : vector<256x64xf32>
    %139 = tpu.matmul %136, %138, %cst_122 {dimension_numbers = #tpu.dot_dimension_numbers<[1], [0], [0], [1], [0, 0, 1, 1], [], []>} : vector<256x64xbf16>, vector<64x64xbf16>, vector<256x64xf32> -> vector<256x64xf32>
    %140 = arith.addf %133, %139 : vector<256x64xf32>
    %c0_123 = arith.constant 0 : index
    %c2_124 = arith.constant 2 : index
    %c0_125 = arith.constant 0 : index
    %141 = vector.load %arg9[%c0_123, %c2_124, %c0_125] : memref<18x18x64xf32, #tpu.memory_space<vmem>>, vector<16x16x64xf32>
    %142 = vector.shape_cast %141 : vector<16x16x64xf32> to vector<256x64xf32>
    %143 = arith.truncf %142 : vector<256x64xf32> to vector<256x64xbf16>
    %c2_126 = arith.constant 2 : index
    %c0_127 = arith.constant 0 : index
    %c0_128 = arith.constant 0 : index
    %144 = vector.load %arg4[%c2_126, %c0_127, %c0_128] : memref<9x64x64xbf16, #tpu.memory_space<vmem>>, vector<1x64x64xbf16>
    %145 = vector.shape_cast %144 : vector<1x64x64xbf16> to vector<64x64xbf16>
    %cst_129 = arith.constant dense<0.000000e+00> : vector<256x64xf32>
    %146 = tpu.matmul %143, %145, %cst_129 {dimension_numbers = #tpu.dot_dimension_numbers<[1], [0], [0], [1], [0, 0, 1, 1], [], []>} : vector<256x64xbf16>, vector<64x64xbf16>, vector<256x64xf32> -> vector<256x64xf32>
    %147 = arith.addf %140, %146 : vector<256x64xf32>
    %c1_130 = arith.constant 1 : index
    %c0_131 = arith.constant 0 : index
    %c0_132 = arith.constant 0 : index
    %148 = vector.load %arg9[%c1_130, %c0_131, %c0_132] : memref<18x18x64xf32, #tpu.memory_space<vmem>>, vector<16x16x64xf32>
    %149 = vector.shape_cast %148 : vector<16x16x64xf32> to vector<256x64xf32>
    %150 = arith.truncf %149 : vector<256x64xf32> to vector<256x64xbf16>
    %c3_133 = arith.constant 3 : index
    %c0_134 = arith.constant 0 : index
    %c0_135 = arith.constant 0 : index
    %151 = vector.load %arg4[%c3_133, %c0_134, %c0_135] : memref<9x64x64xbf16, #tpu.memory_space<vmem>>, vector<1x64x64xbf16>
    %152 = vector.shape_cast %151 : vector<1x64x64xbf16> to vector<64x64xbf16>
    %cst_136 = arith.constant dense<0.000000e+00> : vector<256x64xf32>
    %153 = tpu.matmul %150, %152, %cst_136 {dimension_numbers = #tpu.dot_dimension_numbers<[1], [0], [0], [1], [0, 0, 1, 1], [], []>} : vector<256x64xbf16>, vector<64x64xbf16>, vector<256x64xf32> -> vector<256x64xf32>
    %154 = arith.addf %147, %153 : vector<256x64xf32>
    %c1_137 = arith.constant 1 : index
    %c1_138 = arith.constant 1 : index
    %c0_139 = arith.constant 0 : index
    %155 = vector.load %arg9[%c1_137, %c1_138, %c0_139] : memref<18x18x64xf32, #tpu.memory_space<vmem>>, vector<16x16x64xf32>
    %156 = vector.shape_cast %155 : vector<16x16x64xf32> to vector<256x64xf32>
    %157 = arith.truncf %156 : vector<256x64xf32> to vector<256x64xbf16>
    %c4_140 = arith.constant 4 : index
    %c0_141 = arith.constant 0 : index
    %c0_142 = arith.constant 0 : index
    %158 = vector.load %arg4[%c4_140, %c0_141, %c0_142] : memref<9x64x64xbf16, #tpu.memory_space<vmem>>, vector<1x64x64xbf16>
    %159 = vector.shape_cast %158 : vector<1x64x64xbf16> to vector<64x64xbf16>
    %cst_143 = arith.constant dense<0.000000e+00> : vector<256x64xf32>
    %160 = tpu.matmul %157, %159, %cst_143 {dimension_numbers = #tpu.dot_dimension_numbers<[1], [0], [0], [1], [0, 0, 1, 1], [], []>} : vector<256x64xbf16>, vector<64x64xbf16>, vector<256x64xf32> -> vector<256x64xf32>
    %161 = arith.addf %154, %160 : vector<256x64xf32>
    %c1_144 = arith.constant 1 : index
    %c2_145 = arith.constant 2 : index
    %c0_146 = arith.constant 0 : index
    %162 = vector.load %arg9[%c1_144, %c2_145, %c0_146] : memref<18x18x64xf32, #tpu.memory_space<vmem>>, vector<16x16x64xf32>
    %163 = vector.shape_cast %162 : vector<16x16x64xf32> to vector<256x64xf32>
    %164 = arith.truncf %163 : vector<256x64xf32> to vector<256x64xbf16>
    %c5_147 = arith.constant 5 : index
    %c0_148 = arith.constant 0 : index
    %c0_149 = arith.constant 0 : index
    %165 = vector.load %arg4[%c5_147, %c0_148, %c0_149] : memref<9x64x64xbf16, #tpu.memory_space<vmem>>, vector<1x64x64xbf16>
    %166 = vector.shape_cast %165 : vector<1x64x64xbf16> to vector<64x64xbf16>
    %cst_150 = arith.constant dense<0.000000e+00> : vector<256x64xf32>
    %167 = tpu.matmul %164, %166, %cst_150 {dimension_numbers = #tpu.dot_dimension_numbers<[1], [0], [0], [1], [0, 0, 1, 1], [], []>} : vector<256x64xbf16>, vector<64x64xbf16>, vector<256x64xf32> -> vector<256x64xf32>
    %168 = arith.addf %161, %167 : vector<256x64xf32>
    %c2_151 = arith.constant 2 : index
    %c0_152 = arith.constant 0 : index
    %c0_153 = arith.constant 0 : index
    %169 = vector.load %arg9[%c2_151, %c0_152, %c0_153] : memref<18x18x64xf32, #tpu.memory_space<vmem>>, vector<16x16x64xf32>
    %170 = vector.shape_cast %169 : vector<16x16x64xf32> to vector<256x64xf32>
    %171 = arith.truncf %170 : vector<256x64xf32> to vector<256x64xbf16>
    %c6_154 = arith.constant 6 : index
    %c0_155 = arith.constant 0 : index
    %c0_156 = arith.constant 0 : index
    %172 = vector.load %arg4[%c6_154, %c0_155, %c0_156] : memref<9x64x64xbf16, #tpu.memory_space<vmem>>, vector<1x64x64xbf16>
    %173 = vector.shape_cast %172 : vector<1x64x64xbf16> to vector<64x64xbf16>
    %cst_157 = arith.constant dense<0.000000e+00> : vector<256x64xf32>
    %174 = tpu.matmul %171, %173, %cst_157 {dimension_numbers = #tpu.dot_dimension_numbers<[1], [0], [0], [1], [0, 0, 1, 1], [], []>} : vector<256x64xbf16>, vector<64x64xbf16>, vector<256x64xf32> -> vector<256x64xf32>
    %175 = arith.addf %168, %174 : vector<256x64xf32>
    %c2_158 = arith.constant 2 : index
    %c1_159 = arith.constant 1 : index
    %c0_160 = arith.constant 0 : index
    %176 = vector.load %arg9[%c2_158, %c1_159, %c0_160] : memref<18x18x64xf32, #tpu.memory_space<vmem>>, vector<16x16x64xf32>
    %177 = vector.shape_cast %176 : vector<16x16x64xf32> to vector<256x64xf32>
    %178 = arith.truncf %177 : vector<256x64xf32> to vector<256x64xbf16>
    %c7_161 = arith.constant 7 : index
    %c0_162 = arith.constant 0 : index
    %c0_163 = arith.constant 0 : index
    %179 = vector.load %arg4[%c7_161, %c0_162, %c0_163] : memref<9x64x64xbf16, #tpu.memory_space<vmem>>, vector<1x64x64xbf16>
    %180 = vector.shape_cast %179 : vector<1x64x64xbf16> to vector<64x64xbf16>
    %cst_164 = arith.constant dense<0.000000e+00> : vector<256x64xf32>
    %181 = tpu.matmul %178, %180, %cst_164 {dimension_numbers = #tpu.dot_dimension_numbers<[1], [0], [0], [1], [0, 0, 1, 1], [], []>} : vector<256x64xbf16>, vector<64x64xbf16>, vector<256x64xf32> -> vector<256x64xf32>
    %182 = arith.addf %175, %181 : vector<256x64xf32>
    %c2_165 = arith.constant 2 : index
    %c2_166 = arith.constant 2 : index
    %c0_167 = arith.constant 0 : index
    %183 = vector.load %arg9[%c2_165, %c2_166, %c0_167] : memref<18x18x64xf32, #tpu.memory_space<vmem>>, vector<16x16x64xf32>
    %184 = vector.shape_cast %183 : vector<16x16x64xf32> to vector<256x64xf32>
    %185 = arith.truncf %184 : vector<256x64xf32> to vector<256x64xbf16>
    %c8_168 = arith.constant 8 : index
    %c0_169 = arith.constant 0 : index
    %c0_170 = arith.constant 0 : index
    %186 = vector.load %arg4[%c8_168, %c0_169, %c0_170] : memref<9x64x64xbf16, #tpu.memory_space<vmem>>, vector<1x64x64xbf16>
    %187 = vector.shape_cast %186 : vector<1x64x64xbf16> to vector<64x64xbf16>
    %cst_171 = arith.constant dense<0.000000e+00> : vector<256x64xf32>
    %188 = tpu.matmul %185, %187, %cst_171 {dimension_numbers = #tpu.dot_dimension_numbers<[1], [0], [0], [1], [0, 0, 1, 1], [], []>} : vector<256x64xbf16>, vector<64x64xbf16>, vector<256x64xf32> -> vector<256x64xf32>
    %189 = arith.addf %182, %188 : vector<256x64xf32>
    %190 = arith.mulf %189, %189 : vector<256x64xf32>
    %191 = tpu.concatenate %189, %190 in 1 : vector<256x64xf32>, vector<256x64xf32> -> vector<256x128xf32>
    %cst_172 = arith.constant dense<0.000000e+00> : vector<128xf32>
    %192 = vector.multi_reduction <add>, %191, %cst_172 [0] : vector<256x128xf32> to vector<128xf32>
    %193 = vector.shape_cast %192 : vector<128xf32> to vector<1x128xf32>
    %cst_173 = arith.constant 3.906250e-03 : f32
    %194 = vector.broadcast %cst_173 : f32 to vector<1x128xf32>
    %195 = arith.mulf %193, %194 : vector<1x128xf32>
    %196 = vector.extract_strided_slice %195 {offsets = [0, 0], sizes = [1, 64], strides = [1, 1]} : vector<1x128xf32> to vector<1x64xf32>
    %197 = vector.extract_strided_slice %195 {offsets = [0, 64], sizes = [1, 64], strides = [1, 1]} : vector<1x128xf32> to vector<1x64xf32>
    %198 = arith.mulf %196, %196 : vector<1x64xf32>
    %199 = arith.subf %197, %198 : vector<1x64xf32>
    %cst_174 = arith.constant 0.000000e+00 : f32
    %200 = vector.broadcast %cst_174 : f32 to vector<1x64xf32>
    %201 = arith.maximumf %199, %200 : vector<1x64xf32>
    %202 = vector.broadcast %196 : vector<1x64xf32> to vector<256x64xf32>
    %203 = arith.subf %189, %202 : vector<256x64xf32>
    %cst_175 = arith.constant 9.99999974E-6 : f32
    %204 = vector.broadcast %cst_175 : f32 to vector<1x64xf32>
    %205 = arith.addf %201, %204 : vector<1x64xf32>
    %206 = math.rsqrt %205 : vector<1x64xf32>
    %207 = vector.broadcast %206 : vector<1x64xf32> to vector<256x64xf32>
    %208 = arith.mulf %203, %207 : vector<256x64xf32>
    %cst_176 = arith.constant 0.000000e+00 : f32
    %209 = vector.broadcast %cst_176 : f32 to vector<256x64xf32>
    %210 = arith.maximumf %208, %209 : vector<256x64xf32>
    %211 = vector.shape_cast %210 : vector<256x64xf32> to vector<16x16x64xf32>
    %c1_177 = arith.constant 1 : index
    %c1_178 = arith.constant 1 : index
    %c0_179 = arith.constant 0 : index
    %212 = vector.load %arg9[%c1_177, %c1_178, %c0_179] : memref<18x18x64xf32, #tpu.memory_space<vmem>>, vector<16x16x64xf32>
    tpu.vector_store %arg9[%c1_177, %c1_178, %c0_179], %211 {strides = array<i32>} : memref<18x18x64xf32, #tpu.memory_space<vmem>>, vector<16x16x64xf32>,
    %213 = vector.extract_strided_slice %211 {offsets = [1, 0, 0], sizes = [1, 16, 64], strides = [1, 1, 1]} : vector<16x16x64xf32> to vector<1x16x64xf32>
    %c0_180 = arith.constant 0 : index
    %c1_181 = arith.constant 1 : index
    %c0_182 = arith.constant 0 : index
    %214 = vector.load %arg9[%c0_180, %c1_181, %c0_182] : memref<18x18x64xf32, #tpu.memory_space<vmem>>, vector<1x16x64xf32>
    tpu.vector_store %arg9[%c0_180, %c1_181, %c0_182], %213 {strides = array<i32>} : memref<18x18x64xf32, #tpu.memory_space<vmem>>, vector<1x16x64xf32>,
    %215 = vector.extract_strided_slice %211 {offsets = [14, 0, 0], sizes = [1, 16, 64], strides = [1, 1, 1]} : vector<16x16x64xf32> to vector<1x16x64xf32>
    %c17_183 = arith.constant 17 : index
    %c1_184 = arith.constant 1 : index
    %c0_185 = arith.constant 0 : index
    %216 = vector.load %arg9[%c17_183, %c1_184, %c0_185] : memref<18x18x64xf32, #tpu.memory_space<vmem>>, vector<1x16x64xf32>
    tpu.vector_store %arg9[%c17_183, %c1_184, %c0_185], %215 {strides = array<i32>} : memref<18x18x64xf32, #tpu.memory_space<vmem>>, vector<1x16x64xf32>,
    %c0_186 = arith.constant 0 : index
    %c2_187 = arith.constant 2 : index
    %c0_188 = arith.constant 0 : index
    %217 = vector.load %arg9[%c0_186, %c2_187, %c0_188] : memref<18x18x64xf32, #tpu.memory_space<vmem>>, vector<18x1x64xf32>
    %c0_189 = arith.constant 0 : index
    %c0_190 = arith.constant 0 : index
    %c0_191 = arith.constant 0 : index
    %218 = vector.load %arg9[%c0_189, %c0_190, %c0_191] : memref<18x18x64xf32, #tpu.memory_space<vmem>>, vector<18x1x64xf32>
    tpu.vector_store %arg9[%c0_189, %c0_190, %c0_191], %217 {strides = array<i32>} : memref<18x18x64xf32, #tpu.memory_space<vmem>>, vector<18x1x64xf32>,
    %c0_192 = arith.constant 0 : index
    %c15_193 = arith.constant 15 : index
    %c0_194 = arith.constant 0 : index
    %219 = vector.load %arg9[%c0_192, %c15_193, %c0_194] : memref<18x18x64xf32, #tpu.memory_space<vmem>>, vector<18x1x64xf32>
    %c0_195 = arith.constant 0 : index
    %c17_196 = arith.constant 17 : index
    %c0_197 = arith.constant 0 : index
    %220 = vector.load %arg9[%c0_195, %c17_196, %c0_197] : memref<18x18x64xf32, #tpu.memory_space<vmem>>, vector<18x1x64xf32>
    tpu.vector_store %arg9[%c0_195, %c17_196, %c0_197], %219 {strides = array<i32>} : memref<18x18x64xf32, #tpu.memory_space<vmem>>, vector<18x1x64xf32>,
    %c0_198 = arith.constant 0 : index
    %c0_199 = arith.constant 0 : index
    %c0_200 = arith.constant 0 : index
    %221 = vector.load %arg9[%c0_198, %c0_199, %c0_200] : memref<18x18x64xf32, #tpu.memory_space<vmem>>, vector<16x16x64xf32>
    %222 = vector.shape_cast %221 : vector<16x16x64xf32> to vector<256x64xf32>
    %223 = arith.truncf %222 : vector<256x64xf32> to vector<256x64xbf16>
    %c0_201 = arith.constant 0 : index
    %c0_202 = arith.constant 0 : index
    %c0_203 = arith.constant 0 : index
    %224 = vector.load %arg5[%c0_201, %c0_202, %c0_203] : memref<9x64x64xbf16, #tpu.memory_space<vmem>>, vector<1x64x64xbf16>
    %225 = vector.shape_cast %224 : vector<1x64x64xbf16> to vector<64x64xbf16>
    %cst_204 = arith.constant dense<0.000000e+00> : vector<256x64xf32>
    %226 = tpu.matmul %223, %225, %cst_204 {dimension_numbers = #tpu.dot_dimension_numbers<[1], [0], [0], [1], [0, 0, 1, 1], [], []>} : vector<256x64xbf16>, vector<64x64xbf16>, vector<256x64xf32> -> vector<256x64xf32>
    %c0_205 = arith.constant 0 : index
    %c1_206 = arith.constant 1 : index
    %c0_207 = arith.constant 0 : index
    %227 = vector.load %arg9[%c0_205, %c1_206, %c0_207] : memref<18x18x64xf32, #tpu.memory_space<vmem>>, vector<16x16x64xf32>
    %228 = vector.shape_cast %227 : vector<16x16x64xf32> to vector<256x64xf32>
    %229 = arith.truncf %228 : vector<256x64xf32> to vector<256x64xbf16>
    %c1_208 = arith.constant 1 : index
    %c0_209 = arith.constant 0 : index
    %c0_210 = arith.constant 0 : index
    %230 = vector.load %arg5[%c1_208, %c0_209, %c0_210] : memref<9x64x64xbf16, #tpu.memory_space<vmem>>, vector<1x64x64xbf16>
    %231 = vector.shape_cast %230 : vector<1x64x64xbf16> to vector<64x64xbf16>
    %cst_211 = arith.constant dense<0.000000e+00> : vector<256x64xf32>
    %232 = tpu.matmul %229, %231, %cst_211 {dimension_numbers = #tpu.dot_dimension_numbers<[1], [0], [0], [1], [0, 0, 1, 1], [], []>} : vector<256x64xbf16>, vector<64x64xbf16>, vector<256x64xf32> -> vector<256x64xf32>
    %233 = arith.addf %226, %232 : vector<256x64xf32>
    %c0_212 = arith.constant 0 : index
    %c2_213 = arith.constant 2 : index
    %c0_214 = arith.constant 0 : index
    %234 = vector.load %arg9[%c0_212, %c2_213, %c0_214] : memref<18x18x64xf32, #tpu.memory_space<vmem>>, vector<16x16x64xf32>
    %235 = vector.shape_cast %234 : vector<16x16x64xf32> to vector<256x64xf32>
    %236 = arith.truncf %235 : vector<256x64xf32> to vector<256x64xbf16>
    %c2_215 = arith.constant 2 : index
    %c0_216 = arith.constant 0 : index
    %c0_217 = arith.constant 0 : index
    %237 = vector.load %arg5[%c2_215, %c0_216, %c0_217] : memref<9x64x64xbf16, #tpu.memory_space<vmem>>, vector<1x64x64xbf16>
    %238 = vector.shape_cast %237 : vector<1x64x64xbf16> to vector<64x64xbf16>
    %cst_218 = arith.constant dense<0.000000e+00> : vector<256x64xf32>
    %239 = tpu.matmul %236, %238, %cst_218 {dimension_numbers = #tpu.dot_dimension_numbers<[1], [0], [0], [1], [0, 0, 1, 1], [], []>} : vector<256x64xbf16>, vector<64x64xbf16>, vector<256x64xf32> -> vector<256x64xf32>
    %240 = arith.addf %233, %239 : vector<256x64xf32>
    %c1_219 = arith.constant 1 : index
    %c0_220 = arith.constant 0 : index
    %c0_221 = arith.constant 0 : index
    %241 = vector.load %arg9[%c1_219, %c0_220, %c0_221] : memref<18x18x64xf32, #tpu.memory_space<vmem>>, vector<16x16x64xf32>
    %242 = vector.shape_cast %241 : vector<16x16x64xf32> to vector<256x64xf32>
    %243 = arith.truncf %242 : vector<256x64xf32> to vector<256x64xbf16>
    %c3_222 = arith.constant 3 : index
    %c0_223 = arith.constant 0 : index
    %c0_224 = arith.constant 0 : index
    %244 = vector.load %arg5[%c3_222, %c0_223, %c0_224] : memref<9x64x64xbf16, #tpu.memory_space<vmem>>, vector<1x64x64xbf16>
    %245 = vector.shape_cast %244 : vector<1x64x64xbf16> to vector<64x64xbf16>
    %cst_225 = arith.constant dense<0.000000e+00> : vector<256x64xf32>
    %246 = tpu.matmul %243, %245, %cst_225 {dimension_numbers = #tpu.dot_dimension_numbers<[1], [0], [0], [1], [0, 0, 1, 1], [], []>} : vector<256x64xbf16>, vector<64x64xbf16>, vector<256x64xf32> -> vector<256x64xf32>
    %247 = arith.addf %240, %246 : vector<256x64xf32>
    %c1_226 = arith.constant 1 : index
    %c1_227 = arith.constant 1 : index
    %c0_228 = arith.constant 0 : index
    %248 = vector.load %arg9[%c1_226, %c1_227, %c0_228] : memref<18x18x64xf32, #tpu.memory_space<vmem>>, vector<16x16x64xf32>
    %249 = vector.shape_cast %248 : vector<16x16x64xf32> to vector<256x64xf32>
    %250 = arith.truncf %249 : vector<256x64xf32> to vector<256x64xbf16>
    %c4_229 = arith.constant 4 : index
    %c0_230 = arith.constant 0 : index
    %c0_231 = arith.constant 0 : index
    %251 = vector.load %arg5[%c4_229, %c0_230, %c0_231] : memref<9x64x64xbf16, #tpu.memory_space<vmem>>, vector<1x64x64xbf16>
    %252 = vector.shape_cast %251 : vector<1x64x64xbf16> to vector<64x64xbf16>
    %cst_232 = arith.constant dense<0.000000e+00> : vector<256x64xf32>
    %253 = tpu.matmul %250, %252, %cst_232 {dimension_numbers = #tpu.dot_dimension_numbers<[1], [0], [0], [1], [0, 0, 1, 1], [], []>} : vector<256x64xbf16>, vector<64x64xbf16>, vector<256x64xf32> -> vector<256x64xf32>
    %254 = arith.addf %247, %253 : vector<256x64xf32>
    %c1_233 = arith.constant 1 : index
    %c2_234 = arith.constant 2 : index
    %c0_235 = arith.constant 0 : index
    %255 = vector.load %arg9[%c1_233, %c2_234, %c0_235] : memref<18x18x64xf32, #tpu.memory_space<vmem>>, vector<16x16x64xf32>
    %256 = vector.shape_cast %255 : vector<16x16x64xf32> to vector<256x64xf32>
    %257 = arith.truncf %256 : vector<256x64xf32> to vector<256x64xbf16>
    %c5_236 = arith.constant 5 : index
    %c0_237 = arith.constant 0 : index
    %c0_238 = arith.constant 0 : index
    %258 = vector.load %arg5[%c5_236, %c0_237, %c0_238] : memref<9x64x64xbf16, #tpu.memory_space<vmem>>, vector<1x64x64xbf16>
    %259 = vector.shape_cast %258 : vector<1x64x64xbf16> to vector<64x64xbf16>
    %cst_239 = arith.constant dense<0.000000e+00> : vector<256x64xf32>
    %260 = tpu.matmul %257, %259, %cst_239 {dimension_numbers = #tpu.dot_dimension_numbers<[1], [0], [0], [1], [0, 0, 1, 1], [], []>} : vector<256x64xbf16>, vector<64x64xbf16>, vector<256x64xf32> -> vector<256x64xf32>
    %261 = arith.addf %254, %260 : vector<256x64xf32>
    %c2_240 = arith.constant 2 : index
    %c0_241 = arith.constant 0 : index
    %c0_242 = arith.constant 0 : index
    %262 = vector.load %arg9[%c2_240, %c0_241, %c0_242] : memref<18x18x64xf32, #tpu.memory_space<vmem>>, vector<16x16x64xf32>
    %263 = vector.shape_cast %262 : vector<16x16x64xf32> to vector<256x64xf32>
    %264 = arith.truncf %263 : vector<256x64xf32> to vector<256x64xbf16>
    %c6_243 = arith.constant 6 : index
    %c0_244 = arith.constant 0 : index
    %c0_245 = arith.constant 0 : index
    %265 = vector.load %arg5[%c6_243, %c0_244, %c0_245] : memref<9x64x64xbf16, #tpu.memory_space<vmem>>, vector<1x64x64xbf16>
    %266 = vector.shape_cast %265 : vector<1x64x64xbf16> to vector<64x64xbf16>
    %cst_246 = arith.constant dense<0.000000e+00> : vector<256x64xf32>
    %267 = tpu.matmul %264, %266, %cst_246 {dimension_numbers = #tpu.dot_dimension_numbers<[1], [0], [0], [1], [0, 0, 1, 1], [], []>} : vector<256x64xbf16>, vector<64x64xbf16>, vector<256x64xf32> -> vector<256x64xf32>
    %268 = arith.addf %261, %267 : vector<256x64xf32>
    %c2_247 = arith.constant 2 : index
    %c1_248 = arith.constant 1 : index
    %c0_249 = arith.constant 0 : index
    %269 = vector.load %arg9[%c2_247, %c1_248, %c0_249] : memref<18x18x64xf32, #tpu.memory_space<vmem>>, vector<16x16x64xf32>
    %270 = vector.shape_cast %269 : vector<16x16x64xf32> to vector<256x64xf32>
    %271 = arith.truncf %270 : vector<256x64xf32> to vector<256x64xbf16>
    %c7_250 = arith.constant 7 : index
    %c0_251 = arith.constant 0 : index
    %c0_252 = arith.constant 0 : index
    %272 = vector.load %arg5[%c7_250, %c0_251, %c0_252] : memref<9x64x64xbf16, #tpu.memory_space<vmem>>, vector<1x64x64xbf16>
    %273 = vector.shape_cast %272 : vector<1x64x64xbf16> to vector<64x64xbf16>
    %cst_253 = arith.constant dense<0.000000e+00> : vector<256x64xf32>
    %274 = tpu.matmul %271, %273, %cst_253 {dimension_numbers = #tpu.dot_dimension_numbers<[1], [0], [0], [1], [0, 0, 1, 1], [], []>} : vector<256x64xbf16>, vector<64x64xbf16>, vector<256x64xf32> -> vector<256x64xf32>
    %275 = arith.addf %268, %274 : vector<256x64xf32>
    %c2_254 = arith.constant 2 : index
    %c2_255 = arith.constant 2 : index
    %c0_256 = arith.constant 0 : index
    %276 = vector.load %arg9[%c2_254, %c2_255, %c0_256] : memref<18x18x64xf32, #tpu.memory_space<vmem>>, vector<16x16x64xf32>
    %277 = vector.shape_cast %276 : vector<16x16x64xf32> to vector<256x64xf32>
    %278 = arith.truncf %277 : vector<256x64xf32> to vector<256x64xbf16>
    %c8_257 = arith.constant 8 : index
    %c0_258 = arith.constant 0 : index
    %c0_259 = arith.constant 0 : index
    %279 = vector.load %arg5[%c8_257, %c0_258, %c0_259] : memref<9x64x64xbf16, #tpu.memory_space<vmem>>, vector<1x64x64xbf16>
    %280 = vector.shape_cast %279 : vector<1x64x64xbf16> to vector<64x64xbf16>
    %cst_260 = arith.constant dense<0.000000e+00> : vector<256x64xf32>
    %281 = tpu.matmul %278, %280, %cst_260 {dimension_numbers = #tpu.dot_dimension_numbers<[1], [0], [0], [1], [0, 0, 1, 1], [], []>} : vector<256x64xbf16>, vector<64x64xbf16>, vector<256x64xf32> -> vector<256x64xf32>
    %282 = arith.addf %275, %281 : vector<256x64xf32>
    %283 = arith.mulf %282, %282 : vector<256x64xf32>
    %284 = tpu.concatenate %282, %283 in 1 : vector<256x64xf32>, vector<256x64xf32> -> vector<256x128xf32>
    %cst_261 = arith.constant dense<0.000000e+00> : vector<128xf32>
    %285 = vector.multi_reduction <add>, %284, %cst_261 [0] : vector<256x128xf32> to vector<128xf32>
    %286 = vector.shape_cast %285 : vector<128xf32> to vector<1x128xf32>
    %cst_262 = arith.constant 3.906250e-03 : f32
    %287 = vector.broadcast %cst_262 : f32 to vector<1x128xf32>
    %288 = arith.mulf %286, %287 : vector<1x128xf32>
    %289 = vector.extract_strided_slice %288 {offsets = [0, 0], sizes = [1, 64], strides = [1, 1]} : vector<1x128xf32> to vector<1x64xf32>
    %290 = vector.extract_strided_slice %288 {offsets = [0, 64], sizes = [1, 64], strides = [1, 1]} : vector<1x128xf32> to vector<1x64xf32>
    %291 = arith.mulf %289, %289 : vector<1x64xf32>
    %292 = arith.subf %290, %291 : vector<1x64xf32>
    %cst_263 = arith.constant 0.000000e+00 : f32
    %293 = vector.broadcast %cst_263 : f32 to vector<1x64xf32>
    %294 = arith.maximumf %292, %293 : vector<1x64xf32>
    %295 = vector.broadcast %289 : vector<1x64xf32> to vector<256x64xf32>
    %296 = arith.subf %282, %295 : vector<256x64xf32>
    %cst_264 = arith.constant 9.99999974E-6 : f32
    %297 = vector.broadcast %cst_264 : f32 to vector<1x64xf32>
    %298 = arith.addf %294, %297 : vector<1x64xf32>
    %299 = math.rsqrt %298 : vector<1x64xf32>
    %300 = vector.broadcast %299 : vector<1x64xf32> to vector<256x64xf32>
    %301 = arith.mulf %296, %300 : vector<256x64xf32>
    %cst_265 = arith.constant 0.000000e+00 : f32
    %302 = vector.broadcast %cst_265 : f32 to vector<256x64xf32>
    %303 = arith.maximumf %301, %302 : vector<256x64xf32>
    %c0_266 = arith.constant 0 : index
    %c0_267 = arith.constant 0 : index
    %304 = vector.load %arg6[%c0_266, %c0_267] : memref<3x64xbf16, #tpu.memory_space<vmem>>, vector<3x64xbf16>
    %305 = arith.truncf %303 : vector<256x64xf32> to vector<256x64xbf16>
    %cst_268 = arith.constant dense<0.000000e+00> : vector<3x256xf32>
    %306 = tpu.matmul %304, %305, %cst_268 {dimension_numbers = #tpu.dot_dimension_numbers<[1], [1], [0], [0], [0, 0, 1, 0], [], []>} : vector<3x64xbf16>, vector<256x64xbf16>, vector<3x256xf32> -> vector<3x256xf32>
    %c0_269 = arith.constant 0 : index
    %c0_270 = arith.constant 0 : index
    %307 = vector.load %arg7[%c0_269, %c0_270] : memref<3x1xf32, #tpu.memory_space<vmem>>, vector<3x1xf32>
    %308 = vector.broadcast %307 : vector<3x1xf32> to vector<3x256xf32>
    %309 = arith.addf %306, %308 : vector<3x256xf32>
    %310 = arith.negf %309 : vector<3x256xf32>
    %311 = math.exp %310 : vector<3x256xf32>
    %cst_271 = arith.constant 1.000000e+00 : f32
    %312 = vector.broadcast %cst_271 : f32 to vector<3x256xf32>
    %313 = arith.addf %312, %311 : vector<3x256xf32>
    %314 = arith.divf %312, %313 : vector<3x256xf32>
    %c0_272 = arith.constant 0 : index
    %c0_273 = arith.constant 0 : index
    %c0_274 = arith.constant 0 : index
    %315 = vector.load %arg8[%c0_272, %c0_273, %c0_274] : memref<1x3x256xf32, #tpu.memory_space<vmem>>, vector<1x3x256xf32>
    %316 = vector.shape_cast %315 : vector<1x3x256xf32> to vector<3x256xf32>
    %317 = vector.shape_cast %314 : vector<3x256xf32> to vector<1x3x256xf32>
    tpu.vector_store %arg8[%c0_272, %c0_273, %c0_274], %317 {strides = array<i32>} : memref<1x3x256xf32, #tpu.memory_space<vmem>>, vector<1x3x256xf32>,
    return
  }
  func.func @transform_0(%arg0: i32) -> (i32, i32, i32) {
    %c0_i32 = arith.constant 0 : i32
    %c0_i32_0 = arith.constant 0 : i32
    %c0_i32_1 = arith.constant 0 : i32
    return %arg0, %c0_i32, %c0_i32_0 : i32, i32, i32
  }
  func.func @transform_1(%arg0: i32) -> (i32, i32) {
    %c0_i32 = arith.constant 0 : i32
    %c0_i32_0 = arith.constant 0 : i32
    %c0_i32_1 = arith.constant 0 : i32
    return %c0_i32, %c0_i32_0 : i32, i32
  }
  func.func @transform_2(%arg0: i32) -> (i32, i32, i32) {
    %c0_i32 = arith.constant 0 : i32
    %c0_i32_0 = arith.constant 0 : i32
    %c0_i32_1 = arith.constant 0 : i32
    %c0_i32_2 = arith.constant 0 : i32
    return %c0_i32, %c0_i32_0, %c0_i32_1 : i32, i32, i32
  }
  func.func @transform_3(%arg0: i32) -> (i32, i32, i32) {
    %c0_i32 = arith.constant 0 : i32
    %c0_i32_0 = arith.constant 0 : i32
    %c0_i32_1 = arith.constant 0 : i32
    %c0_i32_2 = arith.constant 0 : i32
    return %c0_i32, %c0_i32_0, %c0_i32_1 : i32, i32, i32
  }
  func.func @transform_4(%arg0: i32) -> (i32, i32, i32) {
    %c0_i32 = arith.constant 0 : i32
    %c0_i32_0 = arith.constant 0 : i32
    %c0_i32_1 = arith.constant 0 : i32
    %c0_i32_2 = arith.constant 0 : i32
    return %c0_i32, %c0_i32_0, %c0_i32_1 : i32, i32, i32
  }
  func.func @transform_5(%arg0: i32) -> (i32, i32) {
    %c0_i32 = arith.constant 0 : i32
    %c0_i32_0 = arith.constant 0 : i32
    %c0_i32_1 = arith.constant 0 : i32
    return %c0_i32, %c0_i32_0 : i32, i32
  }
  func.func @transform_6(%arg0: i32) -> (i32, i32) {
    %c0_i32 = arith.constant 0 : i32
    %c0_i32_0 = arith.constant 0 : i32
    %c0_i32_1 = arith.constant 0 : i32
    return %c0_i32, %c0_i32_0 : i32, i32
  }
  func.func @transform_7(%arg0: i32) -> (i32, i32, i32) {
    %c0_i32 = arith.constant 0 : i32
    %c0_i32_0 = arith.constant 0 : i32
    %c0_i32_1 = arith.constant 0 : i32
    return %arg0, %c0_i32, %c0_i32_0 : i32, i32, i32
  }
}

</mosaic_0001>

<llo_original>
// kernel: tnet_forward.1
$region0: #{tnet_forward.1}
  #allocation0 [shape = 'u32[]', space=smem, size = 0x4, offset = 0x4, fixed_abs, tag = 'smem constant byte address 0x4 - core index']
  #allocation1 [shape = 'u32[144,128]{1,0:T(1,128)}', space=vmem, size = 0x12000, scoped, tag = 'internal scratch']
  #allocation2 [shape = 'f32[18,18,64]{2,1,0:T(8,128)}', space=vmem, size = 0x36000, scoped, tag = 'scratch operand']
  %s0 = inlined_call_operand.vmem [shape: bf16[2,256,27], index: 0, kind: input, shape index: {}]
  %s1 = inlined_call_operand.vmem [shape: bf16[27,64], index: 1, kind: input, shape index: {}]
  %s2 = inlined_call_operand.vmem [shape: bf16[9,64,64], index: 2, kind: input, shape index: {}]
  %s3 = inlined_call_operand.vmem [shape: bf16[9,64,64], index: 3, kind: input, shape index: {}]
  %s4 = inlined_call_operand.vmem [shape: bf16[9,64,64], index: 4, kind: input, shape index: {}]
  %s5 = inlined_call_operand.vmem [shape: bf16[3,64], index: 5, kind: input, shape index: {}]
  %s6 = inlined_call_operand.vmem [shape: f32[3,1], index: 6, kind: input, shape index: {}]
  %s7 = inlined_call_operand.vmem [shape: f32[2,3,256], index: 7, kind: output, shape index: {}]
  %s8 = sld [smem:[#allocation0]]
  $region61: #{tnet_forward.1} parent=0
    _
  %s10 = ssub.s32 1, %s8
  %s11 = scalar_select 0, %s10, %s8
  loop: start=0, step=1, limit=4
  $region2: #{tnet_forward.1} parent=0 // loop_pre_header
    _
  $region3: #{tnet_forward.1} parent=0 // loop_header
    %s13 = sphi 0, %s17
    %p14 = scmp.ge.s32.totalorder %s13, 4
    %s23 = sphi 0, %s25
    %s26 = sphi 0, %s23
    %s27 = sphi 0, %s26
    %s43 = sphi 0, %s27
    %s47 = sphi 0, %s47
    %s49 = sphi 0, %s47
    %s50 = sphi 0, %s49
    %s64 = sphi 0, %s50
    %s68 = sphi 0, %s68
    %s70 = sphi 0, %s68
    %s71 = sphi 0, %s70
    %s85 = sphi 0, %s71
    %s89 = sphi 0, %s89
    %s91 = sphi 0, %s89
    %s92 = sphi 0, %s91
    %s106 = sphi 0, %s92
    %s110 = sphi 0, %s110
    %s112 = sphi 0, %s110
    %s113 = sphi 0, %s112
    %s127 = sphi 0, %s113
    %s131 = sphi 0, %s131
    %s133 = sphi 0, %s131
    %s134 = sphi 0, %s133
    %s148 = sphi 0, %s134
    %s152 = sphi 0, %s152
    %s154 = sphi 0, %s152
    %s155 = sphi 0, %s154
    %s169 = sphi 0, %s155
    %s175 = sphi 0, %s177
    %s178 = sphi 0, %s175
    %s179 = sphi 0, %s178
    %s195 = sphi 0, %s179
  $region4: #{tnet_forward.1} parent=0 // loop_header_branch
    %16 = sbr.rel (%p14) target = $region8
  $region5: #{tnet_forward.1} parent=0 // loop_body
    %s18 = ssub.s32 %s13, 1
    %s19 = ssub.s32 %s13, 2
    %s20 = sadd.s32 %s13, 1
    %s21 = ssub.s32 %s13, %s20
    %p22 = scmp.eq.s32.totalorder %s21, 0
    %s24 = sadd.s32 %s23, 1
    %s25 = scalar_select %p22, %s23, %s24
    %p28 = pneg %p22
    %p29 = scmp.eq.s32.totalorder %s13, 1
    %p30 = por %p28, %p29
    %p31 = scmp.ne.s32.totalorder %s23, %s26
    %p32 = scmp.eq.s32.totalorder %s13, 0
    %p33 = por %p31, %p32
    %p34 = scmp.ne.s32.totalorder %s23, %s26
    %p35 = scmp.eq.s32.totalorder %s18, 1
    %p36 = por %p34, %p35
    %p37 = scmp.ne.s32.totalorder %s26, %s27
    %p38 = scmp.eq.s32.totalorder %s18, 0
    %p39 = por %p37, %p38
    %p40 = scmp.ne.s32.totalorder %s26, %s27
    %p41 = scmp.eq.s32.totalorder %s19, 1
    %p42 = por %p40, %p41
    %p44 = scmp.ne.s32.totalorder %s27, %s43
    %p45 = scmp.eq.s32.totalorder %s19, 0
    %p46 = por %p44, %p45
    %s48 = sadd.s32 %s47, 1
    %p51 = scmp.eq.s32.totalorder %s13, 1
    %p52 = scmp.ne.s32.totalorder %s47, %s49
    %p53 = scmp.eq.s32.totalorder %s13, 0
    %p54 = por %p52, %p53
    %p55 = scmp.ne.s32.totalorder %s47, %s49
    %p56 = scmp.eq.s32.totalorder %s18, 1
    %p57 = por %p55, %p56
    %p58 = scmp.ne.s32.totalorder %s49, %s50
    %p59 = scmp.eq.s32.totalorder %s18, 0
    %p60 = por %p58, %p59
    %p61 = scmp.ne.s32.totalorder %s49, %s50
    %p62 = scmp.eq.s32.totalorder %s19, 1
    %p63 = por %p61, %p62
    %p65 = scmp.ne.s32.totalorder %s50, %s64
    %p66 = scmp.eq.s32.totalorder %s19, 0
    %p67 = por %p65, %p66
    %s69 = sadd.s32 %s68, 1
    %p72 = scmp.eq.s32.totalorder %s13, 1
    %p73 = scmp.ne.s32.totalorder %s68, %s70
    %p74 = scmp.eq.s32.totalorder %s13, 0
    %p75 = por %p73, %p74
    %p76 = scmp.ne.s32.totalorder %s68, %s70
    %p77 = scmp.eq.s32.totalorder %s18, 1
    %p78 = por %p76, %p77
    %p79 = scmp.ne.s32.totalorder %s70, %s71
    %p80 = scmp.eq.s32.totalorder %s18, 0
    %p81 = por %p79, %p80
    %p82 = scmp.ne.s32.totalorder %s70, %s71
    %p83 = scmp.eq.s32.totalorder %s19, 1
    %p84 = por %p82, %p83
    %p86 = scmp.ne.s32.totalorder %s71, %s85
    %p87 = scmp.eq.s32.totalorder %s19, 0
    %p88 = por %p86, %p87
    %s90 = sadd.s32 %s89, 1
    %p93 = scmp.eq.s32.totalorder %s13, 1
    %p94 = scmp.ne.s32.totalorder %s89, %s91
    %p95 = scmp.eq.s32.totalorder %s13, 0
    %p96 = por %p94, %p95
    %p97 = scmp.ne.s32.totalorder %s89, %s91
    %p98 = scmp.eq.s32.totalorder %s18, 1
    %p99 = por %p97, %p98
    %p100 = scmp.ne.s32.totalorder %s91, %s92
    %p101 = scmp.eq.s32.totalorder %s18, 0
    %p102 = por %p100, %p101
    %p103 = scmp.ne.s32.totalorder %s91, %s92
    %p104 = scmp.eq.s32.totalorder %s19, 1
    %p105 = por %p103, %p104
    %p107 = scmp.ne.s32.totalorder %s92, %s106
    %p108 = scmp.eq.s32.totalorder %s19, 0
    %p109 = por %p107, %p108
    %s111 = sadd.s32 %s110, 1
    %p114 = scmp.eq.s32.totalorder %s13, 1
    %p115 = scmp.ne.s32.totalorder %s110, %s112
    %p116 = scmp.eq.s32.totalorder %s13, 0
    %p117 = por %p115, %p116
    %p118 = scmp.ne.s32.totalorder %s110, %s112
    %p119 = scmp.eq.s32.totalorder %s18, 1
    %p120 = por %p118, %p119
    %p121 = scmp.ne.s32.totalorder %s112, %s113
    %p122 = scmp.eq.s32.totalorder %s18, 0
    %p123 = por %p121, %p122
    %p124 = scmp.ne.s32.totalorder %s112, %s113
    %p125 = scmp.eq.s32.totalorder %s19, 1
    %p126 = por %p124, %p125
    %p128 = scmp.ne.s32.totalorder %s113, %s127
    %p129 = scmp.eq.s32.totalorder %s19, 0
    %p130 = por %p128, %p129
    %s132 = sadd.s32 %s131, 1
    %p135 = scmp.eq.s32.totalorder %s13, 1
    %p136 = scmp.ne.s32.totalorder %s131, %s133
    %p137 = scmp.eq.s32.totalorder %s13, 0
    %p138 = por %p136, %p137
    %p139 = scmp.ne.s32.totalorder %s131, %s133
    %p140 = scmp.eq.s32.totalorder %s18, 1
    %p141 = por %p139, %p140
    %p142 = scmp.ne.s32.totalorder %s133, %s134
    %p143 = scmp.eq.s32.totalorder %s18, 0
    %p144 = por %p142, %p143
    %p145 = scmp.ne.s32.totalorder %s133, %s134
    %p146 = scmp.eq.s32.totalorder %s19, 1
    %p147 = por %p145, %p146
    %p149 = scmp.ne.s32.totalorder %s134, %s148
    %p150 = scmp.eq.s32.totalorder %s19, 0
    %p151 = por %p149, %p150
    %s153 = sadd.s32 %s152, 1
    %p156 = scmp.eq.s32.totalorder %s13, 1
    %p157 = scmp.ne.s32.totalorder %s152, %s154
    %p158 = scmp.eq.s32.totalorder %s13, 0
    %p159 = por %p157, %p158
    %p160 = scmp.ne.s32.totalorder %s152, %s154
    %p161 = scmp.eq.s32.totalorder %s18, 1
    %p162 = por %p160, %p161
    %p163 = scmp.ne.s32.totalorder %s154, %s155
    %p164 = scmp.eq.s32.totalorder %s18, 0
    %p165 = por %p163, %p164
    %p166 = scmp.ne.s32.totalorder %s154, %s155
    %p167 = scmp.eq.s32.totalorder %s19, 1
    %p168 = por %p166, %p167
    %p170 = scmp.ne.s32.totalorder %s155, %s169
    %p171 = scmp.eq.s32.totalorder %s19, 0
    %p172 = por %p170, %p171
    %s173 = ssub.s32 %s13, %s20
    %p174 = scmp.eq.s32.totalorder %s173, 0
    %s176 = sadd.s32 %s175, 1
    %s177 = scalar_select %p174, %s175, %s176
    %p180 = pneg %p174
    %p181 = scmp.eq.s32.totalorder %s13, 1
    %p182 = por %p180, %p181
    %p183 = scmp.ne.s32.totalorder %s175, %s178
    %p184 = scmp.eq.s32.totalorder %s13, 0
    %p185 = por %p183, %p184
    %p186 = scmp.ne.s32.totalorder %s175, %s178
    %p187 = scmp.eq.s32.totalorder %s18, 1
    %p188 = por %p186, %p187
    %p189 = scmp.ne.s32.totalorder %s178, %s179
    %p190 = scmp.eq.s32.totalorder %s18, 0
    %p191 = por %p189, %p190
    %p192 = scmp.ne.s32.totalorder %s178, %s179
    %p193 = scmp.eq.s32.totalorder %s19, 1
    %p194 = por %p192, %p193
    %p196 = scmp.ne.s32.totalorder %s179, %s195
    %p197 = scmp.eq.s32.totalorder %s19, 0
    %p198 = por %p196, %p197
    %p199 = scmp.le.s32.totalorder 1, %s13
    %p200 = scmp.lt.s32.totalorder %s13, 3
    %p201 = pnand %p199, %p200
    %p202 = pneg %p201
    // Predicated region
    $region9: #{tnet_forward.1} parent=5 // pred_check
      _
    $region10: #{tnet_forward.1} parent=5 // pred_check_branch
      %204 = sbr.rel (%p201) target = $region12
    $region11: #{tnet_forward.1} parent=5 // pred_region
      %s205 = ssub.s32 %s13, 1
      // Predicated region
      $region13: #{tnet_forward.1} parent=11 // pred_check
        %p206 = pneg %p60
      $region14: #{tnet_forward.1} parent=11 // pred_check_branch
        %208 = sbr.rel (%p206) target = $region16
      $region15: #{tnet_forward.1} parent=11 // pred_region
        _
      $region16: #{tnet_forward.1} parent=11 // pred_fallthru
        _
      // Predicated region
      $region17: #{tnet_forward.1} parent=11 // pred_check
        %p209 = pneg %p81
      $region18: #{tnet_forward.1} parent=11 // pred_check_branch
        %211 = sbr.rel (%p209) target = $region20
      $region19: #{tnet_forward.1} parent=11 // pred_region
        _
      $region20: #{tnet_forward.1} parent=11 // pred_fallthru
        _
      // Predicated region
      $region21: #{tnet_forward.1} parent=11 // pred_check
        %p212 = pneg %p102
      $region22: #{tnet_forward.1} parent=11 // pred_check_branch
        %214 = sbr.rel (%p212) target = $region24
      $region23: #{tnet_forward.1} parent=11 // pred_region
        _
      $region24: #{tnet_forward.1} parent=11 // pred_fallthru
        _
      // Predicated region
      $region25: #{tnet_forward.1} parent=11 // pred_check
        %p215 = pneg %p123
      $region26: #{tnet_forward.1} parent=11 // pred_check_branch
        %217 = sbr.rel (%p215) target = $region28
      $region27: #{tnet_forward.1} parent=11 // pred_region
        _
      $region28: #{tnet_forward.1} parent=11 // pred_fallthru
        _
      // Predicated region
      $region29: #{tnet_forward.1} parent=11 // pred_check
        %p218 = pneg %p144
      $region30: #{tnet_forward.1} parent=11 // pred_check_branch
        %220 = sbr.rel (%p218) target = $region32
      $region31: #{tnet_forward.1} parent=11 // pred_region
        _
      $region32: #{tnet_forward.1} parent=11 // pred_fallthru
        _
      // Predicated region
      $region33: #{tnet_forward.1} parent=11 // pred_check
        %p221 = pneg %p165
      $region34: #{tnet_forward.1} parent=11 // pred_check_branch
        %223 = sbr.rel (%p221) target = $region36
      $region35: #{tnet_forward.1} parent=11 // pred_region
        _
      $region36: #{tnet_forward.1} parent=11 // pred_fallthru
        _
    $region12: #{tnet_forward.1} parent=5 // pred_fallthru
      _
    %p224 = scmp.lt.s32.totalorder %s13, 2
    // Predicated region
    $region37: #{tnet_forward.1} parent=5 // pred_check
      %p225 = pneg %p224
    $region38: #{tnet_forward.1} parent=5 // pred_check_branch
      %227 = sbr.rel (%p225) target = $region40
    $region39: #{tnet_forward.1} parent=5 // pred_region
      // Predicated region
      $region41: #{tnet_forward.1} parent=39 // pred_check
        %p228 = pneg %p33
      $region42: #{tnet_forward.1} parent=39 // pred_check_branch
        %230 = sbr.rel (%p228) target = $region44
      $region43: #{tnet_forward.1} parent=39 // pred_region
        %p231 = scmp.lt.s32.totalorder %s13, 1
        %s232 = scalar_select %p231, %s13, 1
        %s233 = smul.addr %s232, 32
        %s234 = smul.addr %s233, 4
        %s235 = scalar_lea.vmem %s0, %s234
      $region44: #{tnet_forward.1} parent=39 // pred_fallthru
        _
    $region40: #{tnet_forward.1} parent=5 // pred_fallthru
      _
    %p236 = scmp.le.s32.totalorder 1, %s13
    %p237 = scmp.lt.s32.totalorder %s13, 3
    %p238 = pnand %p236, %p237
    %p239 = pneg %p238
    // Predicated region
    $region45: #{tnet_forward.1} parent=5 // pred_check
      _
    $region46: #{tnet_forward.1} parent=5 // pred_check_branch
      %241 = sbr.rel (%p238) target = $region48
    $region47: #{tnet_forward.1} parent=5 // pred_region
      %s242 = ssub.s32 %s13, 1
      %p243 = scmp.lt.s32.totalorder %s18, 1
      %s244 = scalar_select %p243, %s18, 1
      %s245 = smul.addr %s244, 32
      %s246 = smul.addr %s245, 4
      %s247 = scalar_lea.vmem %s0, %s246
      %p248 = pneg %p39
      %p249 = pneg %p36
      %p250 = pneg %p60
      %p251 = pneg %p57
      %p252 = pneg %p81
      %p253 = pneg %p78
      %p254 = pneg %p102
      %p255 = pneg %p99
      %p256 = pneg %p123
      %p257 = pneg %p120
      %p258 = pneg %p144
      %p259 = pneg %p141
      %p260 = pneg %p165
      %p261 = pneg %p162
      %p262 = pneg %p191
      %p263 = pneg %p188
      %p264 = scmp.lt.s32.totalorder %s18, 1
      %s265 = scalar_select %p264, %s18, 1
      %s266 = smul.addr %s265, 2
      %s267 = smul.addr %s266, 4
      %s268 = scalar_lea.vmem %s7, %s267
      %p269 = scmp.lt.s32.totalorder %s18, 1
      %s270 = scalar_select %p269, %s18, 1
      %s271 = smul.addr %s270, 32
      %s272 = smul.addr %s271, 4
      %s273 = scalar_lea.vmem %s0, %s272
      %p274 = scmp.lt.s32.totalorder %s18, 1
      %s275 = scalar_select %p274, %s18, 1
      %s276 = smul.addr %s275, 2
      %s277 = smul.addr %s276, 4
      %s278 = scalar_lea.vmem %s7, %s277
      %v280 = vld [vmem:[%s273] sm:$0xf]
      %v281 = vld [vmem:[%s273 + $0x4] sm:$0xf]
      %v282 = vld [vmem:[%s273 + $0x8] sm:$0xf]
      %v283 = vld [vmem:[%s273 + $0xc] sm:$0xf]
      %v284 = vld [vmem:[%s273 + $0x10] sm:$0xf]
      %v285 = vld [vmem:[%s273 + $0x14] sm:$0xf]
      %v286 = vld [vmem:[%s273 + $0x18] sm:$0xf]
      %v287 = vld [vmem:[%s273 + $0x1c] sm:$0xf]
      %v288 = vld [vmem:[%s273 + $0x20] sm:$0xf]
      %v289 = vld [vmem:[%s273 + $0x24] sm:$0xf]
      %v290 = vld [vmem:[%s273 + $0x28] sm:$0xf]
      %v291 = vld [vmem:[%s273 + $0x2c] sm:$0xf]
      %v292 = vld [vmem:[%s273 + $0x30] sm:$0xf]
      %v293 = vld [vmem:[%s273 + $0x34] sm:$0xf]
      %v294 = vld [vmem:[%s273 + $0x38] sm:$0xf]
      %v295 = vld [vmem:[%s273 + $0x3c] sm:$0xf]
      %v296 = vld [vmem:[%s273 + $0x40] sm:$0xf]
      %v297 = vld [vmem:[%s273 + $0x44] sm:$0xf]
      %v298 = vld [vmem:[%s273 + $0x48] sm:$0xf]
      %v299 = vld [vmem:[%s273 + $0x4c] sm:$0xf]
      %v300 = vld [vmem:[%s273 + $0x50] sm:$0xf]
      %v301 = vld [vmem:[%s273 + $0x54] sm:$0xf]
      %v302 = vld [vmem:[%s273 + $0x58] sm:$0xf]
      %v303 = vld [vmem:[%s273 + $0x5c] sm:$0xf]
      %v304 = vld [vmem:[%s273 + $0x60] sm:$0xf]
      %v305 = vld [vmem:[%s273 + $0x64] sm:$0xf]
      %v306 = vld [vmem:[%s273 + $0x68] sm:$0xf]
      %v307 = vld [vmem:[%s273 + $0x6c] sm:$0xf]
      %v308 = vld [vmem:[%s273 + $0x70] sm:$0xf]
      %v309 = vld [vmem:[%s273 + $0x74] sm:$0xf]
      %v310 = vld [vmem:[%s273 + $0x78] sm:$0xf]
      %v311 = vld [vmem:[%s273 + $0x7c] sm:$0xf]
      %v312 = vld [vmem:[%s1] sm:$0xf]
      %v313 = vld [vmem:[%s1 + $0x4] sm:$0xf]
      %v314 = vld [vmem:[%s1 + $0x8] sm:$0xf]
      %v315 = vld [vmem:[%s1 + $0xc] sm:$0x3]
      %v348 = vunpack.c.l.b16 %v280
      %v349 = vunpack.c.l.b16 %v281
      %v350 = vunpack.c.l.b16 %v282
      %v351 = vunpack.c.l.b16 %v283
      %v352 = vunpack.c.l.b16 %v284
      %v353 = vunpack.c.l.b16 %v285
      %v354 = vunpack.c.l.b16 %v286
      %v355 = vunpack.c.l.b16 %v287
      %v356 = vunpack.c.l.b16 %v288
      %v357 = vunpack.c.l.b16 %v289
      %v358 = vunpack.c.l.b16 %v290
      %v359 = vunpack.c.l.b16 %v291
      %v360 = vunpack.c.l.b16 %v292
      %v361 = vunpack.c.l.b16 %v293
      %v362 = vunpack.c.l.b16 %v294
      %v363 = vunpack.c.l.b16 %v295
      %v364 = vunpack.c.l.b16 %v296
      %v365 = vunpack.c.l.b16 %v297
      %v366 = vunpack.c.l.b16 %v298
      %v367 = vunpack.c.l.b16 %v299
      %v368 = vunpack.c.l.b16 %v300
      %v369 = vunpack.c.l.b16 %v301
      %v370 = vunpack.c.l.b16 %v302
      %v371 = vunpack.c.l.b16 %v303
      %v372 = vunpack.c.l.b16 %v304
      %v373 = vunpack.c.l.b16 %v305
      %v374 = vunpack.c.l.b16 %v306
      %v375 = vunpack.c.l.b16 %v307
      %v376 = vunpack.c.l.b16 %v308
      %v377 = vunpack.c.l.b16 %v309
      %v378 = vunpack.c.l.b16 %v310
      %v379 = vunpack.c.l.b16 %v311
      %v380 = vpack.c.b16 %v349, %v348
      %v381 = vpack.c.b16 %v351, %v350
      %v382 = vpack.c.b16 %v353, %v352
      %v383 = vpack.c.b16 %v355, %v354
      %v384 = vpack.c.b16 %v357, %v356
      %v385 = vpack.c.b16 %v359, %v358
      %v386 = vpack.c.b16 %v361, %v360
      %v387 = vpack.c.b16 %v363, %v362
      %v388 = vpack.c.b16 %v365, %v364
      %v389 = vpack.c.b16 %v367, %v366
      %v390 = vpack.c.b16 %v369, %v368
      %v391 = vpack.c.b16 %v371, %v370
      %v392 = vpack.c.b16 %v373, %v372
      %v393 = vpack.c.b16 %v375, %v374
      %v394 = vpack.c.b16 %v377, %v376
      %v395 = vpack.c.b16 %v379, %v378
      %v400 = vunpack.c.l.b16 %v312
      %v401 = vunpack.c.l.b16 %v313
      %v402 = vunpack.c.l.b16 %v314
      %v403 = vunpack.c.l.b16 %v315
      %v404 = vpack.c.b16 %v401, %v400
      %v405 = vpack.c.b16 %v403, %v402
      %vm407 = vcmask 220160
      %v409 = vsel %vm407, %v380, 0
      %v412 = vsel %vm407, %v381, 0
      %v415 = vsel %vm407, %v382, 0
      %v418 = vsel %vm407, %v383, 0
      %v421 = vsel %vm407, %v384, 0
      %v424 = vsel %vm407, %v385, 0
      %v427 = vsel %vm407, %v386, 0
      %v430 = vsel %vm407, %v387, 0
      %v433 = vsel %vm407, %v388, 0
      %v436 = vsel %vm407, %v389, 0
      %v439 = vsel %vm407, %v390, 0
      %v442 = vsel %vm407, %v391, 0
      %v445 = vsel %vm407, %v392, 0
      %v448 = vsel %vm407, %v393, 0
      %v451 = vsel %vm407, %v394, 0
      %v454 = vsel %vm407, %v395, 0
      %vm456 = vcmask 1044480
      %vm457 = vcmask 1045504
      %v458 = vsel %vm456, 4294967295, 65535
      %v459 = vsel %vm457, %v458, 0
      %v461 = vand.u32 %v405, %v459
      %463 = vmatprep.subr.bf16.mxu0 0
      %464 = vmatpush1.bf16.msra.mxu0 0
      %465 = vmatprep.subr.bf16.mxu0 0
      %466 = vmatpush1.bf16.msra.mxu0 0
      %467 = vmatprep.subr.bf16.mxu0 0
      %468 = vmatpush1.bf16.msra.mxu0 0
      %469 = vmatprep.subr.bf16.mxu0 0
      %470 = vmatpush1.bf16.msra.mxu0 0
      %471 = vmatprep.subr.bf16.mxu0 0
      %472 = vmatpush1.bf16.msra.mxu0 0
      %473 = vmatprep.subr.bf16.mxu0 0
      %474 = vmatpush1.bf16.msra.mxu0 0
      %475 = vmatprep.subr.bf16.mxu0 0
      %476 = vmatpush1.bf16.msra.mxu0 %v461
      %477 = vmatprep.subr.bf16.mxu0 0
      %478 = vmatpush1.bf16.msra.mxu0 %v404
      %479 = vmatprep.subr.bf16.mxu0 0
      %480 = vmatpush2.bf16.msra.mxu0 0
      %481 = vmatprep.subr.bf16.mxu0 0
      %482 = vmatpush2.bf16.msra.mxu0 0
      %483 = vmatprep.subr.bf16.mxu0 0
      %484 = vmatpush2.bf16.msra.mxu0 0
      %485 = vmatprep.subr.bf16.mxu0 0
      %486 = vmatpush2.bf16.msra.mxu0 0
      %487 = vmatprep.subr.bf16.mxu0 0
      %488 = vmatpush2.bf16.msra.mxu0 0
      %489 = vmatprep.subr.bf16.mxu0 0
      %490 = vmatpush2.bf16.msra.mxu0 0
      %491 = vmatprep.subr.bf16.mxu0 0
      %492 = vmatpush2.bf16.msra.mxu0 0
      %493 = vmatprep.subr.bf16.mxu0 0
      %494 = vmatpush2.bf16.msra.mxu0 0
      %495 = vmatprep.mubr.bf16.mxu0 0
      %496 = vmatmul.mubr.bf16.gmra.mxu0 %v409
      %v497 = vpop.f32.mrf.mxu0
      %v498 = vadd.f32 0.0, %v497
      %v499 = vpop.f32.mrf.mxu0
      %v500 = vpop.f32.mrf.mxu0
      %v501 = vadd.f32 0.0, %v500
      %v502 = vpop.f32.mrf.mxu0
      %503 = vmatprep.mubr.bf16.mxu0 0
      %504 = vmatmul.mubr.bf16.gmra.mxu0 %v412
      %v505 = vpop.f32.mrf.mxu0
      %v506 = vadd.f32 0.0, %v505
      %v507 = vpop.f32.mrf.mxu0
      %v508 = vpop.f32.mrf.mxu0
      %v509 = vadd.f32 0.0, %v508
      %v510 = vpop.f32.mrf.mxu0
      %511 = vmatprep.mubr.bf16.mxu0 0
      %512 = vmatmul.mubr.bf16.gmra.mxu0 %v415
      %v513 = vpop.f32.mrf.mxu0
      %v514 = vadd.f32 0.0, %v513
      %v515 = vpop.f32.mrf.mxu0
      %v516 = vpop.f32.mrf.mxu0
      %v517 = vadd.f32 0.0, %v516
      %v518 = vpop.f32.mrf.mxu0
      %519 = vmatprep.mubr.bf16.mxu0 0
      %520 = vmatmul.mubr.bf16.gmra.mxu0 %v418
      %v521 = vpop.f32.mrf.mxu0
      %v522 = vadd.f32 0.0, %v521
      %v523 = vpop.f32.mrf.mxu0
      %v524 = vpop.f32.mrf.mxu0
      %v525 = vadd.f32 0.0, %v524
      %v526 = vpop.f32.mrf.mxu0
      %527 = vmatprep.mubr.bf16.mxu0 0
      %528 = vmatmul.mubr.bf16.gmra.mxu0 %v421
      %v529 = vpop.f32.mrf.mxu0
      %v530 = vadd.f32 0.0, %v529
      %v531 = vpop.f32.mrf.mxu0
      %v532 = vpop.f32.mrf.mxu0
      %v533 = vadd.f32 0.0, %v532
      %v534 = vpop.f32.mrf.mxu0
      %535 = vmatprep.mubr.bf16.mxu0 0
      %536 = vmatmul.mubr.bf16.gmra.mxu0 %v424
      %v537 = vpop.f32.mrf.mxu0
      %v538 = vadd.f32 0.0, %v537
      %v539 = vpop.f32.mrf.mxu0
      %v540 = vpop.f32.mrf.mxu0
      %v541 = vadd.f32 0.0, %v540
      %v542 = vpop.f32.mrf.mxu0
      %543 = vmatprep.mubr.bf16.mxu0 0
      %544 = vmatmul.mubr.bf16.gmra.mxu0 %v427
      %v545 = vpop.f32.mrf.mxu0
      %v546 = vadd.f32 0.0, %v545
      %v547 = vpop.f32.mrf.mxu0
      %v548 = vpop.f32.mrf.mxu0
      %v549 = vadd.f32 0.0, %v548
      %v550 = vpop.f32.mrf.mxu0
      %551 = vmatprep.mubr.bf16.mxu0 0
      %552 = vmatmul.mubr.bf16.gmra.mxu0 %v430
      %v553 = vpop.f32.mrf.mxu0
      %v554 = vadd.f32 0.0, %v553
      %v555 = vpop.f32.mrf.mxu0
      %v556 = vpop.f32.mrf.mxu0
      %v557 = vadd.f32 0.0, %v556
      %v558 = vpop.f32.mrf.mxu0
      %559 = vmatprep.mubr.bf16.mxu0 0
      %560 = vmatmul.mubr.bf16.gmra.mxu0 %v433
      %v561 = vpop.f32.mrf.mxu0
      %v562 = vadd.f32 0.0, %v561
      %v563 = vpop.f32.mrf.mxu0
      %v564 = vpop.f32.mrf.mxu0
      %v565 = vadd.f32 0.0, %v564
      %v566 = vpop.f32.mrf.mxu0
      %567 = vmatprep.mubr.bf16.mxu0 0
      %568 = vmatmul.mubr.bf16.gmra.mxu0 %v436
      %v569 = vpop.f32.mrf.mxu0
      %v570 = vadd.f32 0.0, %v569
      %v571 = vpop.f32.mrf.mxu0
      %v572 = vpop.f32.mrf.mxu0
      %v573 = vadd.f32 0.0, %v572
      %v574 = vpop.f32.mrf.mxu0
      %575 = vmatprep.mubr.bf16.mxu0 0
      %576 = vmatmul.mubr.bf16.gmra.mxu0 %v439
      %v577 = vpop.f32.mrf.mxu0
      %v578 = vadd.f32 0.0, %v577
      %v579 = vpop.f32.mrf.mxu0
      %v580 = vpop.f32.mrf.mxu0
      %v581 = vadd.f32 0.0, %v580
      %v582 = vpop.f32.mrf.mxu0
      %583 = vmatprep.mubr.bf16.mxu0 0
      %584 = vmatmul.mubr.bf16.gmra.mxu0 %v442
      %v585 = vpop.f32.mrf.mxu0
      %v586 = vadd.f32 0.0, %v585
      %v587 = vpop.f32.mrf.mxu0
      %v588 = vpop.f32.mrf.mxu0
      %v589 = vadd.f32 0.0, %v588
      %v590 = vpop.f32.mrf.mxu0
      %591 = vmatprep.mubr.bf16.mxu0 0
      %592 = vmatmul.mubr.bf16.gmra.mxu0 %v445
      %v593 = vpop.f32.mrf.mxu0
      %v594 = vadd.f32 0.0, %v593
      %v595 = vpop.f32.mrf.mxu0
      %v596 = vpop.f32.mrf.mxu0
      %v597 = vadd.f32 0.0, %v596
      %v598 = vpop.f32.mrf.mxu0
      %599 = vmatprep.mubr.bf16.mxu0 0
      %600 = vmatmul.mubr.bf16.gmra.mxu0 %v448
      %v601 = vpop.f32.mrf.mxu0
      %v602 = vadd.f32 0.0, %v601
      %v603 = vpop.f32.mrf.mxu0
      %v604 = vpop.f32.mrf.mxu0
      %v605 = vadd.f32 0.0, %v604
      %v606 = vpop.f32.mrf.mxu0
      %607 = vmatprep.mubr.bf16.mxu0 0
      %608 = vmatmul.mubr.bf16.gmra.mxu0 %v451
      %v609 = vpop.f32.mrf.mxu0
      %v610 = vadd.f32 0.0, %v609
      %v611 = vpop.f32.mrf.mxu0
      %v612 = vpop.f32.mrf.mxu0
      %v613 = vadd.f32 0.0, %v612
      %v614 = vpop.f32.mrf.mxu0
      %615 = vmatprep.mubr.bf16.mxu0 0
      %616 = vmatmul.mubr.bf16.gmra.mxu0 %v454
      %v617 = vpop.f32.mrf.mxu0
      %v618 = vadd.f32 0.0, %v617
      %v619 = vpop.f32.mrf.mxu0
      %v620 = vpop.f32.mrf.mxu0
      %v621 = vadd.f32 0.0, %v620
      %v622 = vpop.f32.mrf.mxu0
      %623 = vdwg.mxu0
      %v624 = vmul.f32 %v498, %v498
      %v625 = vmul.f32 %v501, %v501
      %v626 = vmul.f32 %v506, %v506
      %v627 = vmul.f32 %v509, %v509
      %v628 = vmul.f32 %v514, %v514
      %v629 = vmul.f32 %v517, %v517
      %v630 = vmul.f32 %v522, %v522
      %v631 = vmul.f32 %v525, %v525
      %v632 = vmul.f32 %v530, %v530
      %v633 = vmul.f32 %v533, %v533
      %v634 = vmul.f32 %v538, %v538
      %v635 = vmul.f32 %v541, %v541
      %v636 = vmul.f32 %v546, %v546
      %v637 = vmul.f32 %v549, %v549
      %v638 = vmul.f32 %v554, %v554
      %v639 = vmul.f32 %v557, %v557
      %v640 = vmul.f32 %v562, %v562
      %v641 = vmul.f32 %v565, %v565
      %v642 = vmul.f32 %v570, %v570
      %v643 = vmul.f32 %v573, %v573
      %v644 = vmul.f32 %v578, %v578
      %v645 = vmul.f32 %v581, %v581
      %v646 = vmul.f32 %v586, %v586
      %v647 = vmul.f32 %v589, %v589
      %v648 = vmul.f32 %v594, %v594
      %v649 = vmul.f32 %v597, %v597
      %v650 = vmul.f32 %v602, %v602
      %v651 = vmul.f32 %v605, %v605
      %v652 = vmul.f32 %v610, %v610
      %v653 = vmul.f32 %v613, %v613
      %v654 = vmul.f32 %v618, %v618
      %v655 = vmul.f32 %v621, %v621
      %688 = vrot.lane.b32.xlu0 %v624, 64
      %v689 = vpop.permute.xlu0 %688
      %690 = vrot.lane.b32.xlu0 %v625, 64
      %v691 = vpop.permute.xlu0 %690
      %692 = vrot.lane.b32.xlu0 %v626, 64
      %v693 = vpop.permute.xlu0 %692
      %694 = vrot.lane.b32.xlu0 %v627, 64
      %v695 = vpop.permute.xlu0 %694
      %696 = vrot.lane.b32.xlu0 %v628, 64
      %v697 = vpop.permute.xlu0 %696
      %698 = vrot.lane.b32.xlu0 %v629, 64
      %v699 = vpop.permute.xlu0 %698
      %700 = vrot.lane.b32.xlu0 %v630, 64
      %v701 = vpop.permute.xlu0 %700
      %702 = vrot.lane.b32.xlu0 %v631, 64
      %v703 = vpop.permute.xlu0 %702
      %704 = vrot.lane.b32.xlu0 %v632, 64
      %v705 = vpop.permute.xlu0 %704
      %706 = vrot.lane.b32.xlu0 %v633, 64
      %v707 = vpop.permute.xlu0 %706
      %708 = vrot.lane.b32.xlu0 %v634, 64
      %v709 = vpop.permute.xlu0 %708
      %710 = vrot.lane.b32.xlu0 %v635, 64
      %v711 = vpop.permute.xlu0 %710
      %712 = vrot.lane.b32.xlu0 %v636, 64
      %v713 = vpop.permute.xlu0 %712
      %714 = vrot.lane.b32.xlu0 %v637, 64
      %v715 = vpop.permute.xlu0 %714
      %716 = vrot.lane.b32.xlu0 %v638, 64
      %v717 = vpop.permute.xlu0 %716
      %718 = vrot.lane.b32.xlu0 %v639, 64
      %v719 = vpop.permute.xlu0 %718
      %720 = vrot.lane.b32.xlu0 %v640, 64
      %v721 = vpop.permute.xlu0 %720
      %722 = vrot.lane.b32.xlu0 %v641, 64
      %v723 = vpop.permute.xlu0 %722
      %724 = vrot.lane.b32.xlu0 %v642, 64
      %v725 = vpop.permute.xlu0 %724
      %726 = vrot.lane.b32.xlu0 %v643, 64
      %v727 = vpop.permute.xlu0 %726
      %728 = vrot.lane.b32.xlu0 %v644, 64
      %v729 = vpop.permute.xlu0 %728
      %730 = vrot.lane.b32.xlu0 %v645, 64
      %v731 = vpop.permute.xlu0 %730
      %732 = vrot.lane.b32.xlu0 %v646, 64
      %v733 = vpop.permute.xlu0 %732
      %734 = vrot.lane.b32.xlu0 %v647, 64
      %v735 = vpop.permute.xlu0 %734
      %736 = vrot.lane.b32.xlu0 %v648, 64
      %v737 = vpop.permute.xlu0 %736
      %738 = vrot.lane.b32.xlu0 %v649, 64
      %v739 = vpop.permute.xlu0 %738
      %740 = vrot.lane.b32.xlu0 %v650, 64
      %v741 = vpop.permute.xlu0 %740
      %742 = vrot.lane.b32.xlu0 %v651, 64
      %v743 = vpop.permute.xlu0 %742
      %744 = vrot.lane.b32.xlu0 %v652, 64
      %v745 = vpop.permute.xlu0 %744
      %746 = vrot.lane.b32.xlu0 %v653, 64
      %v747 = vpop.permute.xlu0 %746
      %748 = vrot.lane.b32.xlu0 %v654, 64
      %v749 = vpop.permute.xlu0 %748
      %750 = vrot.lane.b32.xlu0 %v655, 64
      %v751 = vpop.permute.xlu0 %750
      %vm784 = vcmask 523264
      %v785 = vsel %vm784, %v498, %v689
      %v786 = vsel %vm784, %v501, %v691
      %v787 = vsel %vm784, %v506, %v693
      %v788 = vsel %vm784, %v509, %v695
      %v789 = vsel %vm784, %v514, %v697
      %v790 = vsel %vm784, %v517, %v699
      %v791 = vsel %vm784, %v522, %v701
      %v792 = vsel %vm784, %v525, %v703
      %v793 = vsel %vm784, %v530, %v705
      %v794 = vsel %vm784, %v533, %v707
      %v795 = vsel %vm784, %v538, %v709
      %v796 = vsel %vm784, %v541, %v711
      %v797 = vsel %vm784, %v546, %v713
      %v798 = vsel %vm784, %v549, %v715
      %v799 = vsel %vm784, %v554, %v717
      %v800 = vsel %vm784, %v557, %v719
      %v801 = vsel %vm784, %v562, %v721
      %v802 = vsel %vm784, %v565, %v723
      %v803 = vsel %vm784, %v570, %v725
      %v804 = vsel %vm784, %v573, %v727
      %v805 = vsel %vm784, %v578, %v729
      %v806 = vsel %vm784, %v581, %v731
      %v807 = vsel %vm784, %v586, %v733
      %v808 = vsel %vm784, %v589, %v735
      %v809 = vsel %vm784, %v594, %v737
      %v810 = vsel %vm784, %v597, %v739
      %v811 = vsel %vm784, %v602, %v741
      %v812 = vsel %vm784, %v605, %v743
      %v813 = vsel %vm784, %v610, %v745
      %v814 = vsel %vm784, %v613, %v747
      %v815 = vsel %vm784, %v618, %v749
      %v816 = vsel %vm784, %v621, %v751
      %v817 = vadd.f32 %v785, %v786
      %v818 = vadd.f32 %v817, %v787
      %v819 = vadd.f32 %v818, %v788
      %v820 = vadd.f32 %v819, %v789
      %v821 = vadd.f32 %v820, %v790
      %v822 = vadd.f32 %v821, %v791
      %v823 = vadd.f32 %v822, %v792
      %v824 = vadd.f32 %v823, %v793
      %v825 = vadd.f32 %v824, %v794
      %v826 = vadd.f32 %v825, %v795
      %v827 = vadd.f32 %v826, %v796
      %v828 = vadd.f32 %v827, %v797
      %v829 = vadd.f32 %v828, %v798
      %v830 = vadd.f32 %v829, %v799
      %v831 = vadd.f32 %v830, %v800
      %v832 = vadd.f32 %v831, %v801
      %v833 = vadd.f32 %v832, %v802
      %v834 = vadd.f32 %v833, %v803
      %v835 = vadd.f32 %v834, %v804
      %v836 = vadd.f32 %v835, %v805
      %v837 = vadd.f32 %v836, %v806
      %v838 = vadd.f32 %v837, %v807
      %v839 = vadd.f32 %v838, %v808
      %v840 = vadd.f32 %v839, %v809
      %v841 = vadd.f32 %v840, %v810
      %v842 = vadd.f32 %v841, %v811
      %v843 = vadd.f32 %v842, %v812
      %v844 = vadd.f32 %v843, %v813
      %v845 = vadd.f32 %v844, %v814
      %v846 = vadd.f32 %v845, %v815
      %v847 = vadd.f32 %v846, %v816
      %v848 = vrot.slane %v847, 4
      %v849 = vadd.f32 %v847, %v848
      %v850 = vrot.slane %v849, 2
      %v851 = vadd.f32 %v849, %v850
      %v852 = vrot.slane %v851, 1
      %v853 = vadd.f32 %v851, %v852
      %v854 = vmul.f32 %v853, 0.00390625
      %v855 = vmul.f32 %v854, %v854
      %857 = vrot.lane.b32.xlu0 %v855, 64
      %v858 = vpop.permute.xlu0 %857
      %v860 = vsub.f32 %v854, %v858
      %v861 = vmax.f32 %v860, 0.0
      %v862 = vsub.f32 %v498, %v854
      %v863 = vsub.f32 %v501, %v854
      %v864 = vsub.f32 %v506, %v854
      %v865 = vsub.f32 %v509, %v854
      %v866 = vsub.f32 %v514, %v854
      %v867 = vsub.f32 %v517, %v854
      %v868 = vsub.f32 %v522, %v854
      %v869 = vsub.f32 %v525, %v854
      %v870 = vsub.f32 %v530, %v854
      %v871 = vsub.f32 %v533, %v854
      %v872 = vsub.f32 %v538, %v854
      %v873 = vsub.f32 %v541, %v854
      %v874 = vsub.f32 %v546, %v854
      %v875 = vsub.f32 %v549, %v854
      %v876 = vsub.f32 %v554, %v854
      %v877 = vsub.f32 %v557, %v854
      %v878 = vsub.f32 %v562, %v854
      %v879 = vsub.f32 %v565, %v854
      %v880 = vsub.f32 %v570, %v854
      %v881 = vsub.f32 %v573, %v854
      %v882 = vsub.f32 %v578, %v854
      %v883 = vsub.f32 %v581, %v854
      %v884 = vsub.f32 %v586, %v854
      %v885 = vsub.f32 %v589, %v854
      %v886 = vsub.f32 %v594, %v854
      %v887 = vsub.f32 %v597, %v854
      %v888 = vsub.f32 %v602, %v854
      %v889 = vsub.f32 %v605, %v854
      %v890 = vsub.f32 %v610, %v854
      %v891 = vsub.f32 %v613, %v854
      %v892 = vsub.f32 %v618, %v854
      %v893 = vsub.f32 %v621, %v854
      %v894 = vadd.f32 %v861, 1e-05
      %v895 = vrsqrt.pop %v894
      %v896 = vlaneseq
      %v897 = vshrl.u32 %v896, 7
      %v898 = vsub.s32 0, %v897
      %v899 = vrot.slane %v895, %v898
      %901 = vrot.lane.b32.xlu0 %v899, 64
      %v902 = vpop.permute.xlu0 %901
      %v904 = vmul.f32 %v862, %v902
      %v905 = vmul.f32 %v863, %v902
      %v906 = vmul.f32 %v864, %v902
      %v907 = vmul.f32 %v865, %v902
      %v908 = vmul.f32 %v866, %v902
      %v909 = vmul.f32 %v867, %v902
      %v910 = vmul.f32 %v868, %v902
      %v911 = vmul.f32 %v869, %v902
      %v912 = vmul.f32 %v870, %v902
      %v913 = vmul.f32 %v871, %v902
      %v914 = vmul.f32 %v872, %v902
      %v915 = vmul.f32 %v873, %v902
      %v916 = vmul.f32 %v874, %v902
      %v917 = vmul.f32 %v875, %v902
      %v918 = vmul.f32 %v876, %v902
      %v919 = vmul.f32 %v877, %v902
      %v920 = vmul.f32 %v878, %v902
      %v921 = vmul.f32 %v879, %v902
      %v922 = vmul.f32 %v880, %v902
      %v923 = vmul.f32 %v881, %v902
      %v924 = vmul.f32 %v882, %v902
      %v925 = vmul.f32 %v883, %v902
      %v926 = vmul.f32 %v884, %v902
      %v927 = vmul.f32 %v885, %v902
      %v928 = vmul.f32 %v886, %v902
      %v929 = vmul.f32 %v887, %v902
      %v930 = vmul.f32 %v888, %v902
      %v931 = vmul.f32 %v889, %v902
      %v932 = vmul.f32 %v890, %v902
      %v933 = vmul.f32 %v891, %v902
      %v934 = vmul.f32 %v892, %v902
      %v935 = vmul.f32 %v893, %v902
      %v936 = vmax.f32 %v904, 0.0
      %v937 = vmax.f32 %v905, 0.0
      %v938 = vmax.f32 %v906, 0.0
      %v939 = vmax.f32 %v907, 0.0
      %v940 = vmax.f32 %v908, 0.0
      %v941 = vmax.f32 %v909, 0.0
      %v942 = vmax.f32 %v910, 0.0
      %v943 = vmax.f32 %v911, 0.0
      %v944 = vmax.f32 %v912, 0.0
      %v945 = vmax.f32 %v913, 0.0
      %v946 = vmax.f32 %v914, 0.0
      %v947 = vmax.f32 %v915, 0.0
      %v948 = vmax.f32 %v916, 0.0
      %v949 = vmax.f32 %v917, 0.0
      %v950 = vmax.f32 %v918, 0.0
      %v951 = vmax.f32 %v919, 0.0
      %v952 = vmax.f32 %v920, 0.0
      %v953 = vmax.f32 %v921, 0.0
      %v954 = vmax.f32 %v922, 0.0
      %v955 = vmax.f32 %v923, 0.0
      %v956 = vmax.f32 %v924, 0.0
      %v957 = vmax.f32 %v925, 0.0
      %v958 = vmax.f32 %v926, 0.0
      %v959 = vmax.f32 %v927, 0.0
      %v960 = vmax.f32 %v928, 0.0
      %v961 = vmax.f32 %v929, 0.0
      %v962 = vmax.f32 %v930, 0.0
      %v963 = vmax.f32 %v931, 0.0
      %v964 = vmax.f32 %v932, 0.0
      %v965 = vmax.f32 %v933, 0.0
      %v966 = vmax.f32 %v934, 0.0
      %v967 = vmax.f32 %v935, 0.0
      %s968 = scalar_lea.vmem [#allocation2], 24
      %969 = vst.msk [vmem:[%s968 + $0x1] sm:$0xff] %vm784, %v936
      %970 = vst.msk [vmem:[%s968 + $0x9] sm:$0xff] %vm784, %v937
      %971 = vst.msk [vmem:[%s968 + $0x19] sm:$0xff] %vm784, %v938
      %972 = vst.msk [vmem:[%s968 + $0x21] sm:$0xff] %vm784, %v939
      %973 = vst.msk [vmem:[%s968 + $0x31] sm:$0xff] %vm784, %v940
      %974 = vst.msk [vmem:[%s968 + $0x39] sm:$0xff] %vm784, %v941
      %975 = vst.msk [vmem:[%s968 + $0x49] sm:$0xff] %vm784, %v942
      %976 = vst.msk [vmem:[%s968 + $0x51] sm:$0xff] %vm784, %v943
      %977 = vst.msk [vmem:[%s968 + $0x61] sm:$0xff] %vm784, %v944
      %978 = vst.msk [vmem:[%s968 + $0x69] sm:$0xff] %vm784, %v945
      %979 = vst.msk [vmem:[%s968 + $0x79] sm:$0xff] %vm784, %v946
      %980 = vst.msk [vmem:[%s968 + $0x81] sm:$0xff] %vm784, %v947
      %981 = vst.msk [vmem:[%s968 + $0x91] sm:$0xff] %vm784, %v948
      %982 = vst.msk [vmem:[%s968 + $0x99] sm:$0xff] %vm784, %v949
      %983 = vst.msk [vmem:[%s968 + $0xa9] sm:$0xff] %vm784, %v950
      %984 = vst.msk [vmem:[%s968 + $0xb1] sm:$0xff] %vm784, %v951
      %985 = vst.msk [vmem:[%s968 + $0xc1] sm:$0xff] %vm784, %v952
      %986 = vst.msk [vmem:[%s968 + $0xc9] sm:$0xff] %vm784, %v953
      %987 = vst.msk [vmem:[%s968 + $0xd9] sm:$0xff] %vm784, %v954
      %988 = vst.msk [vmem:[%s968 + $0xe1] sm:$0xff] %vm784, %v955
      %989 = vst.msk [vmem:[%s968 + $0xf1] sm:$0xff] %vm784, %v956
      %990 = vst.msk [vmem:[%s968 + $0xf9] sm:$0xff] %vm784, %v957
      %991 = vst.msk [vmem:[%s968 + $0x109] sm:$0xff] %vm784, %v958
      %992 = vst.msk [vmem:[%s968 + $0x111] sm:$0xff] %vm784, %v959
      %993 = vst.msk [vmem:[%s968 + $0x121] sm:$0xff] %vm784, %v960
      %994 = vst.msk [vmem:[%s968 + $0x129] sm:$0xff] %vm784, %v961
      %995 = vst.msk [vmem:[%s968 + $0x139] sm:$0xff] %vm784, %v962
      %996 = vst.msk [vmem:[%s968 + $0x141] sm:$0xff] %vm784, %v963
      %997 = vst.msk [vmem:[%s968 + $0x151] sm:$0xff] %vm784, %v964
      %998 = vst.msk [vmem:[%s968 + $0x159] sm:$0xff] %vm784, %v965
      %999 = vst.msk [vmem:[%s968 + $0x169] sm:$0xff] %vm784, %v966
      %1000 = vst.msk [vmem:[%s968 + $0x171] sm:$0xff] %vm784, %v967
      %1001 = vst.msk [vmem:[#allocation2 + $0x1] sm:$0xff] %vm784, %v938
      %1002 = vst.msk [vmem:[#allocation2 + $0x9] sm:$0xff] %vm784, %v939
      %s1003 = scalar_lea.vmem [#allocation2], 408
      %1004 = vst.msk [vmem:[%s1003 + $0x1] sm:$0xff] %vm784, %v964
      %1005 = vst.msk [vmem:[%s1003 + $0x9] sm:$0xff] %vm784, %v965
      %v1006 = vld [vmem:[#allocation2 + $0x2] sm:$0x1]
      %v1007 = vld [vmem:[#allocation2 + $0x1a] sm:$0x1]
      %v1008 = vld [vmem:[#allocation2 + $0x32] sm:$0x1]
      %v1009 = vld [vmem:[#allocation2 + $0x4a] sm:$0x1]
      %v1010 = vld [vmem:[#allocation2 + $0x62] sm:$0x1]
      %v1011 = vld [vmem:[#allocation2 + $0x7a] sm:$0x1]
      %v1012 = vld [vmem:[#allocation2 + $0x92] sm:$0x1]
      %v1013 = vld [vmem:[#allocation2 + $0xaa] sm:$0x1]
      %v1014 = vld [vmem:[#allocation2 + $0xc2] sm:$0x1]
      %v1015 = vld [vmem:[#allocation2 + $0xda] sm:$0x1]
      %v1016 = vld [vmem:[#allocation2 + $0xf2] sm:$0x1]
      %v1017 = vld [vmem:[#allocation2 + $0x10a] sm:$0x1]
      %v1018 = vld [vmem:[#allocation2 + $0x122] sm:$0x1]
      %v1019 = vld [vmem:[#allocation2 + $0x13a] sm:$0x1]
      %v1020 = vld [vmem:[#allocation2 + $0x152] sm:$0x1]
      %v1021 = vld [vmem:[#allocation2 + $0x16a] sm:$0x1]
      %v1022 = vld [vmem:[#allocation2 + $0x182] sm:$0x1]
      %v1023 = vld [vmem:[#allocation2 + $0x19a] sm:$0x1]
      %vm1024 = vcmask 516096
      %1025 = vst.msk [vmem:[#allocation2] sm:$0x1] %vm1024, %v1006
      %1026 = vst.msk [vmem:[#allocation2 + $0x18] sm:$0x1] %vm1024, %v1007
      %1027 = vst.msk [vmem:[#allocation2 + $0x30] sm:$0x1] %vm1024, %v1008
      %1028 = vst.msk [vmem:[#allocation2 + $0x48] sm:$0x1] %vm1024, %v1009
      %1029 = vst.msk [vmem:[#allocation2 + $0x60] sm:$0x1] %vm1024, %v1010
      %1030 = vst.msk [vmem:[#allocation2 + $0x78] sm:$0x1] %vm1024, %v1011
      %1031 = vst.msk [vmem:[#allocation2 + $0x90] sm:$0x1] %vm1024, %v1012
      %1032 = vst.msk [vmem:[#allocation2 + $0xa8] sm:$0x1] %vm1024, %v1013
      %1033 = vst.msk [vmem:[#allocation2 + $0xc0] sm:$0x1] %vm1024, %v1014
      %1034 = vst.msk [vmem:[#allocation2 + $0xd8] sm:$0x1] %vm1024, %v1015
      %1035 = vst.msk [vmem:[#allocation2 + $0xf0] sm:$0x1] %vm1024, %v1016
      %1036 = vst.msk [vmem:[#allocation2 + $0x108] sm:$0x1] %vm1024, %v1017
      %1037 = vst.msk [vmem:[#allocation2 + $0x120] sm:$0x1] %vm1024, %v1018
      %1038 = vst.msk [vmem:[#allocation2 + $0x138] sm:$0x1] %vm1024, %v1019
      %1039 = vst.msk [vmem:[#allocation2 + $0x150] sm:$0x1] %vm1024, %v1020
      %1040 = vst.msk [vmem:[#allocation2 + $0x168] sm:$0x1] %vm1024, %v1021
      %1041 = vst.msk [vmem:[#allocation2 + $0x180] sm:$0x1] %vm1024, %v1022
      %1042 = vst.msk [vmem:[#allocation2 + $0x198] sm:$0x1] %vm1024, %v1023
      %v1043 = vld [vmem:[#allocation2 + $0xf] sm:$0x1]
      %v1044 = vld [vmem:[#allocation2 + $0x27] sm:$0x1]
      %v1045 = vld [vmem:[#allocation2 + $0x3f] sm:$0x1]
      %v1046 = vld [vmem:[#allocation2 + $0x57] sm:$0x1]
      %v1047 = vld [vmem:[#allocation2 + $0x6f] sm:$0x1]
      %v1048 = vld [vmem:[#allocation2 + $0x87] sm:$0x1]
      %v1049 = vld [vmem:[#allocation2 + $0x9f] sm:$0x1]
      %v1050 = vld [vmem:[#allocation2 + $0xb7] sm:$0x1]
      %v1051 = vld [vmem:[#allocation2 + $0xcf] sm:$0x1]
      %v1052 = vld [vmem:[#allocation2 + $0xe7] sm:$0x1]
      %v1053 = vld [vmem:[#allocation2 + $0xff] sm:$0x1]
      %v1054 = vld [vmem:[#allocation2 + $0x117] sm:$0x1]
      %v1055 = vld [vmem:[#allocation2 + $0x12f] sm:$0x1]
      %v1056 = vld [vmem:[#allocation2 + $0x147] sm:$0x1]
      %v1057 = vld [vmem:[#allocation2 + $0x15f] sm:$0x1]
      %v1058 = vld [vmem:[#allocation2 + $0x177] sm:$0x1]
      %v1059 = vld [vmem:[#allocation2 + $0x18f] sm:$0x1]
      %v1060 = vld [vmem:[#allocation2 + $0x1a7] sm:$0x1]
      %1061 = vst.msk [vmem:[#allocation2 + $0x11] sm:$0x1] %vm1024, %v1043
      %1062 = vst.msk [vmem:[#allocation2 + $0x29] sm:$0x1] %vm1024, %v1044
      %1063 = vst.msk [vmem:[#allocation2 + $0x41] sm:$0x1] %vm1024, %v1045
      %1064 = vst.msk [vmem:[#allocation2 + $0x59] sm:$0x1] %vm1024, %v1046
      %1065 = vst.msk [vmem:[#allocation2 + $0x71] sm:$0x1] %vm1024, %v1047
      %1066 = vst.msk [vmem:[#allocation2 + $0x89] sm:$0x1] %vm1024, %v1048
      %1067 = vst.msk [vmem:[#allocation2 + $0xa1] sm:$0x1] %vm1024, %v1049
      %1068 = vst.msk [vmem:[#allocation2 + $0xb9] sm:$0x1] %vm1024, %v1050
      %1069 = vst.msk [vmem:[#allocation2 + $0xd1] sm:$0x1] %vm1024, %v1051
      %1070 = vst.msk [vmem:[#allocation2 + $0xe9] sm:$0x1] %vm1024, %v1052
      %1071 = vst.msk [vmem:[#allocation2 + $0x101] sm:$0x1] %vm1024, %v1053
      %1072 = vst.msk [vmem:[#allocation2 + $0x119] sm:$0x1] %vm1024, %v1054
      %1073 = vst.msk [vmem:[#allocation2 + $0x131] sm:$0x1] %vm1024, %v1055
      %1074 = vst.msk [vmem:[#allocation2 + $0x149] sm:$0x1] %vm1024, %v1056
      %1075 = vst.msk [vmem:[#allocation2 + $0x161] sm:$0x1] %vm1024, %v1057
      %1076 = vst.msk [vmem:[#allocation2 + $0x179] sm:$0x1] %vm1024, %v1058
      %1077 = vst.msk [vmem:[#allocation2 + $0x191] sm:$0x1] %vm1024, %v1059
      %1078 = vst.msk [vmem:[#allocation2 + $0x1a9] sm:$0x1] %vm1024, %v1060
      %v1079 = vld [vmem:[#allocation2] sm:$0xff]
      %v1080 = vld [vmem:[#allocation2 + $0x8] sm:$0xff]
      %v1081 = vld [vmem:[#allocation2 + $0x18] sm:$0xff]
      %v1082 = vld [vmem:[#allocation2 + $0x20] sm:$0xff]
      %v1083 = vld [vmem:[#allocation2 + $0x30] sm:$0xff]
      %v1084 = vld [vmem:[#allocation2 + $0x38] sm:$0xff]
      %v1085 = vld [vmem:[#allocation2 + $0x48] sm:$0xff]
      %v1086 = vld [vmem:[#allocation2 + $0x50] sm:$0xff]
      %v1087 = vld [vmem:[#allocation2 + $0x60] sm:$0xff]
      %v1088 = vld [vmem:[#allocation2 + $0x68] sm:$0xff]
      %v1089 = vld [vmem:[#allocation2 + $0x78] sm:$0xff]
      %v1090 = vld [vmem:[#allocation2 + $0x80] sm:$0xff]
      %v1091 = vld [vmem:[#allocation2 + $0x90] sm:$0xff]
      %v1092 = vld [vmem:[#allocation2 + $0x98] sm:$0xff]
      %v1093 = vld [vmem:[#allocation2 + $0xa8] sm:$0xff]
      %v1094 = vld [vmem:[#allocation2 + $0xb0] sm:$0xff]
      %v1095 = vld [vmem:[#allocation2 + $0xc0] sm:$0xff]
      %v1096 = vld [vmem:[#allocation2 + $0xc8] sm:$0xff]
      %v1097 = vld [vmem:[#allocation2 + $0xd8] sm:$0xff]
      %v1098 = vld [vmem:[#allocation2 + $0xe0] sm:$0xff]
      %v1099 = vld [vmem:[#allocation2 + $0xf0] sm:$0xff]
      %v1100 = vld [vmem:[#allocation2 + $0xf8] sm:$0xff]
      %v1101 = vld [vmem:[#allocation2 + $0x108] sm:$0xff]
      %v1102 = vld [vmem:[#allocation2 + $0x110] sm:$0xff]
      %v1103 = vld [vmem:[#allocation2 + $0x120] sm:$0xff]
      %v1104 = vld [vmem:[#allocation2 + $0x128] sm:$0xff]
      %v1105 = vld [vmem:[#allocation2 + $0x138] sm:$0xff]
      %v1106 = vld [vmem:[#allocation2 + $0x140] sm:$0xff]
      %v1107 = vld [vmem:[#allocation2 + $0x150] sm:$0xff]
      %v1108 = vld [vmem:[#allocation2 + $0x158] sm:$0xff]
      %v1109 = vld [vmem:[#allocation2 + $0x168] sm:$0xff]
      %v1110 = vld [vmem:[#allocation2 + $0x170] sm:$0xff]
      %v1111 = vpack.c.bf16 %v1080, %v1079
      %v1112 = vpack.c.bf16 %v1082, %v1081
      %v1113 = vpack.c.bf16 %v1084, %v1083
      %v1114 = vpack.c.bf16 %v1086, %v1085
      %v1115 = vpack.c.bf16 %v1088, %v1087
      %v1116 = vpack.c.bf16 %v1090, %v1089
      %v1117 = vpack.c.bf16 %v1092, %v1091
      %v1118 = vpack.c.bf16 %v1094, %v1093
      %v1119 = vpack.c.bf16 %v1096, %v1095
      %v1120 = vpack.c.bf16 %v1098, %v1097
      %v1121 = vpack.c.bf16 %v1100, %v1099
      %v1122 = vpack.c.bf16 %v1102, %v1101
      %v1123 = vpack.c.bf16 %v1104, %v1103
      %v1124 = vpack.c.bf16 %v1106, %v1105
      %v1125 = vpack.c.bf16 %v1108, %v1107
      %v1126 = vpack.c.bf16 %v1110, %v1109
      %v1127 = vld [vmem:[%s2] sm:$0xf]
      %v1128 = vld [vmem:[%s2 + $0x4] sm:$0xf]
      %v1129 = vld [vmem:[%s2 + $0x8] sm:$0xf]
      %v1130 = vld [vmem:[%s2 + $0xc] sm:$0xf]
      %v1131 = vld [vmem:[%s2 + $0x10] sm:$0xf]
      %v1132 = vld [vmem:[%s2 + $0x14] sm:$0xf]
      %v1133 = vld [vmem:[%s2 + $0x18] sm:$0xf]
      %v1134 = vld [vmem:[%s2 + $0x1c] sm:$0xf]
      %v1135 = vld [vmem:[#allocation2 + $0x1] sm:$0xff]
      %v1136 = vld [vmem:[#allocation2 + $0x9] sm:$0xff]
      %v1137 = vld [vmem:[#allocation2 + $0x19] sm:$0xff]
      %v1138 = vld [vmem:[#allocation2 + $0x21] sm:$0xff]
      %v1139 = vld [vmem:[#allocation2 + $0x31] sm:$0xff]
      %v1140 = vld [vmem:[#allocation2 + $0x39] sm:$0xff]
      %v1141 = vld [vmem:[#allocation2 + $0x49] sm:$0xff]
      %v1142 = vld [vmem:[#allocation2 + $0x51] sm:$0xff]
      %v1143 = vld [vmem:[#allocation2 + $0x61] sm:$0xff]
      %v1144 = vld [vmem:[#allocation2 + $0x69] sm:$0xff]
      %v1145 = vld [vmem:[#allocation2 + $0x79] sm:$0xff]
      %v1146 = vld [vmem:[#allocation2 + $0x81] sm:$0xff]
      %v1147 = vld [vmem:[#allocation2 + $0x91] sm:$0xff]
      %v1148 = vld [vmem:[#allocation2 + $0x99] sm:$0xff]
      %v1149 = vld [vmem:[#allocation2 + $0xa9] sm:$0xff]
      %v1150 = vld [vmem:[#allocation2 + $0xb1] sm:$0xff]
      %v1151 = vld [vmem:[#allocation2 + $0xc1] sm:$0xff]
      %v1152 = vld [vmem:[#allocation2 + $0xc9] sm:$0xff]
      %v1153 = vld [vmem:[#allocation2 + $0xd9] sm:$0xff]
      %v1154 = vld [vmem:[#allocation2 + $0xe1] sm:$0xff]
      %v1155 = vld [vmem:[#allocation2 + $0xf1] sm:$0xff]
      %v1156 = vld [vmem:[#allocation2 + $0xf9] sm:$0xff]
      %v1157 = vld [vmem:[#allocation2 + $0x109] sm:$0xff]
      %v1158 = vld [vmem:[#allocation2 + $0x111] sm:$0xff]
      %v1159 = vld [vmem:[#allocation2 + $0x121] sm:$0xff]
      %v1160 = vld [vmem:[#allocation2 + $0x129] sm:$0xff]
      %v1161 = vld [vmem:[#allocation2 + $0x139] sm:$0xff]
      %v1162 = vld [vmem:[#allocation2 + $0x141] sm:$0xff]
      %v1163 = vld [vmem:[#allocation2 + $0x151] sm:$0xff]
      %v1164 = vld [vmem:[#allocation2 + $0x159] sm:$0xff]
      %v1165 = vld [vmem:[#allocation2 + $0x169] sm:$0xff]
      %v1166 = vld [vmem:[#allocation2 + $0x171] sm:$0xff]
      %v1167 = vpack.c.bf16 %v1136, %v1135
      %v1168 = vpack.c.bf16 %v1138, %v1137
      %v1169 = vpack.c.bf16 %v1140, %v1139
      %v1170 = vpack.c.bf16 %v1142, %v1141
      %v1171 = vpack.c.bf16 %v1144, %v1143
      %v1172 = vpack.c.bf16 %v1146, %v1145
      %v1173 = vpack.c.bf16 %v1148, %v1147
      %v1174 = vpack.c.bf16 %v1150, %v1149
      %v1175 = vpack.c.bf16 %v1152, %v1151
      %v1176 = vpack.c.bf16 %v1154, %v1153
      %v1177 = vpack.c.bf16 %v1156, %v1155
      %v1178 = vpack.c.bf16 %v1158, %v1157
      %v1179 = vpack.c.bf16 %v1160, %v1159
      %v1180 = vpack.c.bf16 %v1162, %v1161
      %v1181 = vpack.c.bf16 %v1164, %v1163
      %v1182 = vpack.c.bf16 %v1166, %v1165
      %s1183 = scalar_lea.vmem %s2, 32
      %v1184 = vld [vmem:[%s1183] sm:$0xf]
      %v1185 = vld [vmem:[%s1183 + $0x4] sm:$0xf]
      %v1186 = vld [vmem:[%s1183 + $0x8] sm:$0xf]
      %v1187 = vld [vmem:[%s1183 + $0xc] sm:$0xf]
      %v1188 = vld [vmem:[%s1183 + $0x10] sm:$0xf]
      %v1189 = vld [vmem:[%s1183 + $0x14] sm:$0xf]
      %v1190 = vld [vmem:[%s1183 + $0x18] sm:$0xf]
      %v1191 = vld [vmem:[%s1183 + $0x1c] sm:$0xf]
      %v1200 = vunpack.c.l.b16 %v1184
      %v1201 = vunpack.c.l.b16 %v1185
      %v1202 = vunpack.c.l.b16 %v1186
      %v1203 = vunpack.c.l.b16 %v1187
      %v1204 = vunpack.c.l.b16 %v1188
      %v1205 = vunpack.c.l.b16 %v1189
      %v1206 = vunpack.c.l.b16 %v1190
      %v1207 = vunpack.c.l.b16 %v1191
      %v1208 = vpack.c.b16 %v1201, %v1200
      %v1209 = vpack.c.b16 %v1203, %v1202
      %v1210 = vpack.c.b16 %v1205, %v1204
      %v1211 = vpack.c.b16 %v1207, %v1206
      %v1217 = vsel %vm784, %v1167, 0
      %v1220 = vsel %vm784, %v1168, 0
      %v1223 = vsel %vm784, %v1169, 0
      %v1226 = vsel %vm784, %v1170, 0
      %v1229 = vsel %vm784, %v1171, 0
      %v1232 = vsel %vm784, %v1172, 0
      %v1235 = vsel %vm784, %v1173, 0
      %v1238 = vsel %vm784, %v1174, 0
      %v1241 = vsel %vm784, %v1175, 0
      %v1244 = vsel %vm784, %v1176, 0
      %v1247 = vsel %vm784, %v1177, 0
      %v1250 = vsel %vm784, %v1178, 0
      %v1253 = vsel %vm784, %v1179, 0
      %v1256 = vsel %vm784, %v1180, 0
      %v1259 = vsel %vm784, %v1181, 0
      %v1262 = vsel %vm784, %v1182, 0
      %1264 = vmatprep.subr.bf16.mxu0 0
      %1265 = vmatpush1.bf16.msra.mxu0 0
      %1266 = vmatprep.subr.bf16.mxu0 0
      %1267 = vmatpush1.bf16.msra.mxu0 0
      %1268 = vmatprep.subr.bf16.mxu0 0
      %1269 = vmatpush1.bf16.msra.mxu0 0
      %1270 = vmatprep.subr.bf16.mxu0 0
      %1271 = vmatpush1.bf16.msra.mxu0 0
      %1272 = vmatprep.subr.bf16.mxu0 0
      %1273 = vmatpush1.bf16.msra.mxu0 %v1211
      %1274 = vmatprep.subr.bf16.mxu0 0
      %1275 = vmatpush1.bf16.msra.mxu0 %v1210
      %1276 = vmatprep.subr.bf16.mxu0 0
      %1277 = vmatpush1.bf16.msra.mxu0 %v1209
      %1278 = vmatprep.subr.bf16.mxu0 0
      %1279 = vmatpush1.bf16.msra.mxu0 %v1208
      %1280 = vmatprep.subr.bf16.mxu0 0
      %1281 = vmatpush2.bf16.msra.mxu0 0
      %1282 = vmatprep.subr.bf16.mxu0 0
      %1283 = vmatpush2.bf16.msra.mxu0 0
      %1284 = vmatprep.subr.bf16.mxu0 0
      %1285 = vmatpush2.bf16.msra.mxu0 0
      %1286 = vmatprep.subr.bf16.mxu0 0
      %1287 = vmatpush2.bf16.msra.mxu0 0
      %1288 = vmatprep.subr.bf16.mxu0 0
      %1289 = vmatpush2.bf16.msra.mxu0 0
      %1290 = vmatprep.subr.bf16.mxu0 0
      %1291 = vmatpush2.bf16.msra.mxu0 0
      %1292 = vmatprep.subr.bf16.mxu0 0
      %1293 = vmatpush2.bf16.msra.mxu0 0
      %1294 = vmatprep.subr.bf16.mxu0 0
      %1295 = vmatpush2.bf16.msra.mxu0 0
      %1296 = vmatprep.mubr.bf16.mxu0 0
      %1297 = vmatmul.mubr.bf16.gmra.mxu0 %v1217
      %v1298 = vpop.f32.mrf.mxu0
      %v1299 = vadd.f32 0.0, %v1298
      %v1300 = vpop.f32.mrf.mxu0
      %v1301 = vpop.f32.mrf.mxu0
      %v1302 = vadd.f32 0.0, %v1301
      %v1303 = vpop.f32.mrf.mxu0
      %1304 = vmatprep.mubr.bf16.mxu0 0
      %1305 = vmatmul.mubr.bf16.gmra.mxu0 %v1220
      %v1306 = vpop.f32.mrf.mxu0
      %v1307 = vadd.f32 0.0, %v1306
      %v1308 = vpop.f32.mrf.mxu0
      %v1309 = vpop.f32.mrf.mxu0
      %v1310 = vadd.f32 0.0, %v1309
      %v1311 = vpop.f32.mrf.mxu0
      %1312 = vmatprep.mubr.bf16.mxu0 0
      %1313 = vmatmul.mubr.bf16.gmra.mxu0 %v1223
      %v1314 = vpop.f32.mrf.mxu0
      %v1315 = vadd.f32 0.0, %v1314
      %v1316 = vpop.f32.mrf.mxu0
      %v1317 = vpop.f32.mrf.mxu0
      %v1318 = vadd.f32 0.0, %v1317
      %v1319 = vpop.f32.mrf.mxu0
      %1320 = vmatprep.mubr.bf16.mxu0 0
      %1321 = vmatmul.mubr.bf16.gmra.mxu0 %v1226
      %v1322 = vpop.f32.mrf.mxu0
      %v1323 = vadd.f32 0.0, %v1322
      %v1324 = vpop.f32.mrf.mxu0
      %v1325 = vpop.f32.mrf.mxu0
      %v1326 = vadd.f32 0.0, %v1325
      %v1327 = vpop.f32.mrf.mxu0
      %1328 = vmatprep.mubr.bf16.mxu0 0
      %1329 = vmatmul.mubr.bf16.gmra.mxu0 %v1229
      %v1330 = vpop.f32.mrf.mxu0
      %v1331 = vadd.f32 0.0, %v1330
      %v1332 = vpop.f32.mrf.mxu0
      %v1333 = vpop.f32.mrf.mxu0
      %v1334 = vadd.f32 0.0, %v1333
      %v1335 = vpop.f32.mrf.mxu0
      %1336 = vmatprep.mubr.bf16.mxu0 0
      %1337 = vmatmul.mubr.bf16.gmra.mxu0 %v1232
      %v1338 = vpop.f32.mrf.mxu0
      %v1339 = vadd.f32 0.0, %v1338
      %v1340 = vpop.f32.mrf.mxu0
      %v1341 = vpop.f32.mrf.mxu0
      %v1342 = vadd.f32 0.0, %v1341
      %v1343 = vpop.f32.mrf.mxu0
      %1344 = vmatprep.mubr.bf16.mxu0 0
      %1345 = vmatmul.mubr.bf16.gmra.mxu0 %v1235
      %v1346 = vpop.f32.mrf.mxu0
      %v1347 = vadd.f32 0.0, %v1346
      %v1348 = vpop.f32.mrf.mxu0
      %v1349 = vpop.f32.mrf.mxu0
      %v1350 = vadd.f32 0.0, %v1349
      %v1351 = vpop.f32.mrf.mxu0
      %1352 = vmatprep.mubr.bf16.mxu0 0
      %1353 = vmatmul.mubr.bf16.gmra.mxu0 %v1238
      %v1354 = vpop.f32.mrf.mxu0
      %v1355 = vadd.f32 0.0, %v1354
      %v1356 = vpop.f32.mrf.mxu0
      %v1357 = vpop.f32.mrf.mxu0
      %v1358 = vadd.f32 0.0, %v1357
      %v1359 = vpop.f32.mrf.mxu0
      %1360 = vmatprep.mubr.bf16.mxu0 0
      %1361 = vmatmul.mubr.bf16.gmra.mxu0 %v1241
      %v1362 = vpop.f32.mrf.mxu0
      %v1363 = vadd.f32 0.0, %v1362
      %v1364 = vpop.f32.mrf.mxu0
      %v1365 = vpop.f32.mrf.mxu0
      %v1366 = vadd.f32 0.0, %v1365
      %v1367 = vpop.f32.mrf.mxu0
      %1368 = vmatprep.mubr.bf16.mxu0 0
      %1369 = vmatmul.mubr.bf16.gmra.mxu0 %v1244
      %v1370 = vpop.f32.mrf.mxu0
      %v1371 = vadd.f32 0.0, %v1370
      %v1372 = vpop.f32.mrf.mxu0
      %v1373 = vpop.f32.mrf.mxu0
      %v1374 = vadd.f32 0.0, %v1373
      %v1375 = vpop.f32.mrf.mxu0
      %1376 = vmatprep.mubr.bf16.mxu0 0
      %1377 = vmatmul.mubr.bf16.gmra.mxu0 %v1247
      %v1378 = vpop.f32.mrf.mxu0
      %v1379 = vadd.f32 0.0, %v1378
      %v1380 = vpop.f32.mrf.mxu0
      %v1381 = vpop.f32.mrf.mxu0
      %v1382 = vadd.f32 0.0, %v1381
      %v1383 = vpop.f32.mrf.mxu0
      %1384 = vmatprep.mubr.bf16.mxu0 0
      %1385 = vmatmul.mubr.bf16.gmra.mxu0 %v1250
      %v1386 = vpop.f32.mrf.mxu0
      %v1387 = vadd.f32 0.0, %v1386
      %v1388 = vpop.f32.mrf.mxu0
      %v1389 = vpop.f32.mrf.mxu0
      %v1390 = vadd.f32 0.0, %v1389
      %v1391 = vpop.f32.mrf.mxu0
      %1392 = vmatprep.mubr.bf16.mxu0 0
      %1393 = vmatmul.mubr.bf16.gmra.mxu0 %v1253
      %v1394 = vpop.f32.mrf.mxu0
      %v1395 = vadd.f32 0.0, %v1394
      %v1396 = vpop.f32.mrf.mxu0
      %v1397 = vpop.f32.mrf.mxu0
      %v1398 = vadd.f32 0.0, %v1397
      %v1399 = vpop.f32.mrf.mxu0
      %1400 = vmatprep.mubr.bf16.mxu0 0
      %1401 = vmatmul.mubr.bf16.gmra.mxu0 %v1256
      %v1402 = vpop.f32.mrf.mxu0
      %v1403 = vadd.f32 0.0, %v1402
      %v1404 = vpop.f32.mrf.mxu0
      %v1405 = vpop.f32.mrf.mxu0
      %v1406 = vadd.f32 0.0, %v1405
      %v1407 = vpop.f32.mrf.mxu0
      %1408 = vmatprep.mubr.bf16.mxu0 0
      %1409 = vmatmul.mubr.bf16.gmra.mxu0 %v1259
      %v1410 = vpop.f32.mrf.mxu0
      %v1411 = vadd.f32 0.0, %v1410
      %v1412 = vpop.f32.mrf.mxu0
      %v1413 = vpop.f32.mrf.mxu0
      %v1414 = vadd.f32 0.0, %v1413
      %v1415 = vpop.f32.mrf.mxu0
      %1416 = vmatprep.mubr.bf16.mxu0 0
      %1417 = vmatmul.mubr.bf16.gmra.mxu0 %v1262
      %v1418 = vpop.f32.mrf.mxu0
      %v1419 = vadd.f32 0.0, %v1418
      %v1420 = vpop.f32.mrf.mxu0
      %v1421 = vpop.f32.mrf.mxu0
      %v1422 = vadd.f32 0.0, %v1421
      %v1423 = vpop.f32.mrf.mxu0
      %1424 = vdwg.mxu0
      %v1433 = vunpack.c.l.b16 %v1127
      %v1434 = vunpack.c.l.b16 %v1128
      %v1435 = vunpack.c.l.b16 %v1129
      %v1436 = vunpack.c.l.b16 %v1130
      %v1437 = vunpack.c.l.b16 %v1131
      %v1438 = vunpack.c.l.b16 %v1132
      %v1439 = vunpack.c.l.b16 %v1133
      %v1440 = vunpack.c.l.b16 %v1134
      %v1441 = vpack.c.b16 %v1434, %v1433
      %v1442 = vpack.c.b16 %v1436, %v1435
      %v1443 = vpack.c.b16 %v1438, %v1437
      %v1444 = vpack.c.b16 %v1440, %v1439
      %v1450 = vsel %vm784, %v1111, 0
      %v1453 = vsel %vm784, %v1112, 0
      %v1456 = vsel %vm784, %v1113, 0
      %v1459 = vsel %vm784, %v1114, 0
      %v1462 = vsel %vm784, %v1115, 0
      %v1465 = vsel %vm784, %v1116, 0
      %v1468 = vsel %vm784, %v1117, 0
      %v1471 = vsel %vm784, %v1118, 0
      %v1474 = vsel %vm784, %v1119, 0
      %v1477 = vsel %vm784, %v1120, 0
      %v1480 = vsel %vm784, %v1121, 0
      %v1483 = vsel %vm784, %v1122, 0
      %v1486 = vsel %vm784, %v1123, 0
      %v1489 = vsel %vm784, %v1124, 0
      %v1492 = vsel %vm784, %v1125, 0
      %v1495 = vsel %vm784, %v1126, 0
      %1497 = vmatprep.subr.bf16.mxu0 0
      %1498 = vmatpush1.bf16.msra.mxu0 0
      %1499 = vmatprep.subr.bf16.mxu0 0
      %1500 = vmatpush1.bf16.msra.mxu0 0
      %1501 = vmatprep.subr.bf16.mxu0 0
      %1502 = vmatpush1.bf16.msra.mxu0 0
      %1503 = vmatprep.subr.bf16.mxu0 0
      %1504 = vmatpush1.bf16.msra.mxu0 0
      %1505 = vmatprep.subr.bf16.mxu0 0
      %1506 = vmatpush1.bf16.msra.mxu0 %v1444
      %1507 = vmatprep.subr.bf16.mxu0 0
      %1508 = vmatpush1.bf16.msra.mxu0 %v1443
      %1509 = vmatprep.subr.bf16.mxu0 0
      %1510 = vmatpush1.bf16.msra.mxu0 %v1442
      %1511 = vmatprep.subr.bf16.mxu0 0
      %1512 = vmatpush1.bf16.msra.mxu0 %v1441
      %1513 = vmatprep.subr.bf16.mxu0 0
      %1514 = vmatpush2.bf16.msra.mxu0 0
      %1515 = vmatprep.subr.bf16.mxu0 0
      %1516 = vmatpush2.bf16.msra.mxu0 0
      %1517 = vmatprep.subr.bf16.mxu0 0
      %1518 = vmatpush2.bf16.msra.mxu0 0
      %1519 = vmatprep.subr.bf16.mxu0 0
      %1520 = vmatpush2.bf16.msra.mxu0 0
      %1521 = vmatprep.subr.bf16.mxu0 0
      %1522 = vmatpush2.bf16.msra.mxu0 0
      %1523 = vmatprep.subr.bf16.mxu0 0
      %1524 = vmatpush2.bf16.msra.mxu0 0
      %1525 = vmatprep.subr.bf16.mxu0 0
      %1526 = vmatpush2.bf16.msra.mxu0 0
      %1527 = vmatprep.subr.bf16.mxu0 0
      %1528 = vmatpush2.bf16.msra.mxu0 0
      %1529 = vmatprep.mubr.bf16.mxu0 0
      %1530 = vmatmul.mubr.bf16.gmra.mxu0 %v1450
      %v1531 = vpop.f32.mrf.mxu0
      %v1532 = vadd.f32 %v1299, %v1531
      %v1533 = vpop.f32.mrf.mxu0
      %v1534 = vpop.f32.mrf.mxu0
      %v1535 = vadd.f32 %v1302, %v1534
      %v1536 = vpop.f32.mrf.mxu0
      %1537 = vmatprep.mubr.bf16.mxu0 0
      %1538 = vmatmul.mubr.bf16.gmra.mxu0 %v1453
      %v1539 = vpop.f32.mrf.mxu0
      %v1540 = vadd.f32 %v1307, %v1539
      %v1541 = vpop.f32.mrf.mxu0
      %v1542 = vpop.f32.mrf.mxu0
      %v1543 = vadd.f32 %v1310, %v1542
      %v1544 = vpop.f32.mrf.mxu0
      %1545 = vmatprep.mubr.bf16.mxu0 0
      %1546 = vmatmul.mubr.bf16.gmra.mxu0 %v1456
      %v1547 = vpop.f32.mrf.mxu0
      %v1548 = vadd.f32 %v1315, %v1547
      %v1549 = vpop.f32.mrf.mxu0
      %v1550 = vpop.f32.mrf.mxu0
      %v1551 = vadd.f32 %v1318, %v1550
      %v1552 = vpop.f32.mrf.mxu0
      %1553 = vmatprep.mubr.bf16.mxu0 0
      %1554 = vmatmul.mubr.bf16.gmra.mxu0 %v1459
      %v1555 = vpop.f32.mrf.mxu0
      %v1556 = vadd.f32 %v1323, %v1555
      %v1557 = vpop.f32.mrf.mxu0
      %v1558 = vpop.f32.mrf.mxu0
      %v1559 = vadd.f32 %v1326, %v1558
      %v1560 = vpop.f32.mrf.mxu0
      %1561 = vmatprep.mubr.bf16.mxu0 0
      %1562 = vmatmul.mubr.bf16.gmra.mxu0 %v1462
      %v1563 = vpop.f32.mrf.mxu0
      %v1564 = vadd.f32 %v1331, %v1563
      %v1565 = vpop.f32.mrf.mxu0
      %v1566 = vpop.f32.mrf.mxu0
      %v1567 = vadd.f32 %v1334, %v1566
      %v1568 = vpop.f32.mrf.mxu0
      %1569 = vmatprep.mubr.bf16.mxu0 0
      %1570 = vmatmul.mubr.bf16.gmra.mxu0 %v1465
      %v1571 = vpop.f32.mrf.mxu0
      %v1572 = vadd.f32 %v1339, %v1571
      %v1573 = vpop.f32.mrf.mxu0
      %v1574 = vpop.f32.mrf.mxu0
      %v1575 = vadd.f32 %v1342, %v1574
      %v1576 = vpop.f32.mrf.mxu0
      %1577 = vmatprep.mubr.bf16.mxu0 0
      %1578 = vmatmul.mubr.bf16.gmra.mxu0 %v1468
      %v1579 = vpop.f32.mrf.mxu0
      %v1580 = vadd.f32 %v1347, %v1579
      %v1581 = vpop.f32.mrf.mxu0
      %v1582 = vpop.f32.mrf.mxu0
      %v1583 = vadd.f32 %v1350, %v1582
      %v1584 = vpop.f32.mrf.mxu0
      %1585 = vmatprep.mubr.bf16.mxu0 0
      %1586 = vmatmul.mubr.bf16.gmra.mxu0 %v1471
      %v1587 = vpop.f32.mrf.mxu0
      %v1588 = vadd.f32 %v1355, %v1587
      %v1589 = vpop.f32.mrf.mxu0
      %v1590 = vpop.f32.mrf.mxu0
      %v1591 = vadd.f32 %v1358, %v1590
      %v1592 = vpop.f32.mrf.mxu0
      %1593 = vmatprep.mubr.bf16.mxu0 0
      %1594 = vmatmul.mubr.bf16.gmra.mxu0 %v1474
      %v1595 = vpop.f32.mrf.mxu0
      %v1596 = vadd.f32 %v1363, %v1595
      %v1597 = vpop.f32.mrf.mxu0
      %v1598 = vpop.f32.mrf.mxu0
      %v1599 = vadd.f32 %v1366, %v1598
      %v1600 = vpop.f32.mrf.mxu0
      %1601 = vmatprep.mubr.bf16.mxu0 0
      %1602 = vmatmul.mubr.bf16.gmra.mxu0 %v1477
      %v1603 = vpop.f32.mrf.mxu0
      %v1604 = vadd.f32 %v1371, %v1603
      %v1605 = vpop.f32.mrf.mxu0
      %v1606 = vpop.f32.mrf.mxu0
      %v1607 = vadd.f32 %v1374, %v1606
      %v1608 = vpop.f32.mrf.mxu0
      %1609 = vmatprep.mubr.bf16.mxu0 0
      %1610 = vmatmul.mubr.bf16.gmra.mxu0 %v1480
      %v1611 = vpop.f32.mrf.mxu0
      %v1612 = vadd.f32 %v1379, %v1611
      %v1613 = vpop.f32.mrf.mxu0
      %v1614 = vpop.f32.mrf.mxu0
      %v1615 = vadd.f32 %v1382, %v1614
      %v1616 = vpop.f32.mrf.mxu0
      %1617 = vmatprep.mubr.bf16.mxu0 0
      %1618 = vmatmul.mubr.bf16.gmra.mxu0 %v1483
      %v1619 = vpop.f32.mrf.mxu0
      %v1620 = vadd.f32 %v1387, %v1619
      %v1621 = vpop.f32.mrf.mxu0
      %v1622 = vpop.f32.mrf.mxu0
      %v1623 = vadd.f32 %v1390, %v1622
      %v1624 = vpop.f32.mrf.mxu0
      %1625 = vmatprep.mubr.bf16.mxu0 0
      %1626 = vmatmul.mubr.bf16.gmra.mxu0 %v1486
      %v1627 = vpop.f32.mrf.mxu0
      %v1628 = vadd.f32 %v1395, %v1627
      %v1629 = vpop.f32.mrf.mxu0
      %v1630 = vpop.f32.mrf.mxu0
      %v1631 = vadd.f32 %v1398, %v1630
      %v1632 = vpop.f32.mrf.mxu0
      %1633 = vmatprep.mubr.bf16.mxu0 0
      %1634 = vmatmul.mubr.bf16.gmra.mxu0 %v1489
      %v1635 = vpop.f32.mrf.mxu0
      %v1636 = vadd.f32 %v1403, %v1635
      %v1637 = vpop.f32.mrf.mxu0
      %v1638 = vpop.f32.mrf.mxu0
      %v1639 = vadd.f32 %v1406, %v1638
      %v1640 = vpop.f32.mrf.mxu0
      %1641 = vmatprep.mubr.bf16.mxu0 0
      %1642 = vmatmul.mubr.bf16.gmra.mxu0 %v1492
      %v1643 = vpop.f32.mrf.mxu0
      %v1644 = vadd.f32 %v1411, %v1643
      %v1645 = vpop.f32.mrf.mxu0
      %v1646 = vpop.f32.mrf.mxu0
      %v1647 = vadd.f32 %v1414, %v1646
      %v1648 = vpop.f32.mrf.mxu0
      %1649 = vmatprep.mubr.bf16.mxu0 0
      %1650 = vmatmul.mubr.bf16.gmra.mxu0 %v1495
      %v1651 = vpop.f32.mrf.mxu0
      %v1652 = vadd.f32 %v1419, %v1651
      %v1653 = vpop.f32.mrf.mxu0
      %v1654 = vpop.f32.mrf.mxu0
      %v1655 = vadd.f32 %v1422, %v1654
      %v1656 = vpop.f32.mrf.mxu0
      %1657 = vdwg.mxu0
      %v1658 = vld [vmem:[#allocation2 + $0x2] sm:$0xff]
      %v1659 = vld [vmem:[#allocation2 + $0xa] sm:$0xff]
      %v1660 = vld [vmem:[#allocation2 + $0x1a] sm:$0xff]
      %v1661 = vld [vmem:[#allocation2 + $0x22] sm:$0xff]
      %v1662 = vld [vmem:[#allocation2 + $0x32] sm:$0xff]
      %v1663 = vld [vmem:[#allocation2 + $0x3a] sm:$0xff]
      %v1664 = vld [vmem:[#allocation2 + $0x4a] sm:$0xff]
      %v1665 = vld [vmem:[#allocation2 + $0x52] sm:$0xff]
      %v1666 = vld [vmem:[#allocation2 + $0x62] sm:$0xff]
      %v1667 = vld [vmem:[#allocation2 + $0x6a] sm:$0xff]
      %v1668 = vld [vmem:[#allocation2 + $0x7a] sm:$0xff]
      %v1669 = vld [vmem:[#allocation2 + $0x82] sm:$0xff]
      %v1670 = vld [vmem:[#allocation2 + $0x92] sm:$0xff]
      %v1671 = vld [vmem:[#allocation2 + $0x9a] sm:$0xff]
      %v1672 = vld [vmem:[#allocation2 + $0xaa] sm:$0xff]
      %v1673 = vld [vmem:[#allocation2 + $0xb2] sm:$0xff]
      %v1674 = vld [vmem:[#allocation2 + $0xc2] sm:$0xff]
      %v1675 = vld [vmem:[#allocation2 + $0xca] sm:$0xff]
      %v1676 = vld [vmem:[#allocation2 + $0xda] sm:$0xff]
      %v1677 = vld [vmem:[#allocation2 + $0xe2] sm:$0xff]
      %v1678 = vld [vmem:[#allocation2 + $0xf2] sm:$0xff]
      %v1679 = vld [vmem:[#allocation2 + $0xfa] sm:$0xff]
      %v1680 = vld [vmem:[#allocation2 + $0x10a] sm:$0xff]
      %v1681 = vld [vmem:[#allocation2 + $0x112] sm:$0xff]
      %v1682 = vld [vmem:[#allocation2 + $0x122] sm:$0xff]
      %v1683 = vld [vmem:[#allocation2 + $0x12a] sm:$0xff]
      %v1684 = vld [vmem:[#allocation2 + $0x13a] sm:$0xff]
      %v1685 = vld [vmem:[#allocation2 + $0x142] sm:$0xff]
      %v1686 = vld [vmem:[#allocation2 + $0x152] sm:$0xff]
      %v1687 = vld [vmem:[#allocation2 + $0x15a] sm:$0xff]
      %v1688 = vld [vmem:[#allocation2 + $0x16a] sm:$0xff]
      %v1689 = vld [vmem:[#allocation2 + $0x172] sm:$0xff]
      %v1690 = vpack.c.bf16 %v1659, %v1658
      %v1691 = vpack.c.bf16 %v1661, %v1660
      %v1692 = vpack.c.bf16 %v1663, %v1662
      %v1693 = vpack.c.bf16 %v1665, %v1664
      %v1694 = vpack.c.bf16 %v1667, %v1666
      %v1695 = vpack.c.bf16 %v1669, %v1668
      %v1696 = vpack.c.bf16 %v1671, %v1670
      %v1697 = vpack.c.bf16 %v1673, %v1672
      %v1698 = vpack.c.bf16 %v1675, %v1674
      %v1699 = vpack.c.bf16 %v1677, %v1676
      %v1700 = vpack.c.bf16 %v1679, %v1678
      %v1701 = vpack.c.bf16 %v1681, %v1680
      %v1702 = vpack.c.bf16 %v1683, %v1682
      %v1703 = vpack.c.bf16 %v1685, %v1684
      %v1704 = vpack.c.bf16 %v1687, %v1686
      %v1705 = vpack.c.bf16 %v1689, %v1688
      %s1706 = scalar_lea.vmem %s2, 64
      %v1707 = vld [vmem:[%s1706] sm:$0xf]
      %v1708 = vld [vmem:[%s1706 + $0x4] sm:$0xf]
      %v1709 = vld [vmem:[%s1706 + $0x8] sm:$0xf]
      %v1710 = vld [vmem:[%s1706 + $0xc] sm:$0xf]
      %v1711 = vld [vmem:[%s1706 + $0x10] sm:$0xf]
      %v1712 = vld [vmem:[%s1706 + $0x14] sm:$0xf]
      %v1713 = vld [vmem:[%s1706 + $0x18] sm:$0xf]
      %v1714 = vld [vmem:[%s1706 + $0x1c] sm:$0xf]
      %v1723 = vunpack.c.l.b16 %v1707
      %v1724 = vunpack.c.l.b16 %v1708
      %v1725 = vunpack.c.l.b16 %v1709
      %v1726 = vunpack.c.l.b16 %v1710
      %v1727 = vunpack.c.l.b16 %v1711
      %v1728 = vunpack.c.l.b16 %v1712
      %v1729 = vunpack.c.l.b16 %v1713
      %v1730 = vunpack.c.l.b16 %v1714
      %v1731 = vpack.c.b16 %v1724, %v1723
      %v1732 = vpack.c.b16 %v1726, %v1725
      %v1733 = vpack.c.b16 %v1728, %v1727
      %v1734 = vpack.c.b16 %v1730, %v1729
      %v1740 = vsel %vm784, %v1690, 0
      %v1743 = vsel %vm784, %v1691, 0
      %v1746 = vsel %vm784, %v1692, 0
      %v1749 = vsel %vm784, %v1693, 0
      %v1752 = vsel %vm784, %v1694, 0
      %v1755 = vsel %vm784, %v1695, 0
      %v1758 = vsel %vm784, %v1696, 0
      %v1761 = vsel %vm784, %v1697, 0
      %v1764 = vsel %vm784, %v1698, 0
      %v1767 = vsel %vm784, %v1699, 0
      %v1770 = vsel %vm784, %v1700, 0
      %v1773 = vsel %vm784, %v1701, 0
      %v1776 = vsel %vm784, %v1702, 0
      %v1779 = vsel %vm784, %v1703, 0
      %v1782 = vsel %vm784, %v1704, 0
      %v1785 = vsel %vm784, %v1705, 0
      %1787 = vmatprep.subr.bf16.mxu0 0
      %1788 = vmatpush1.bf16.msra.mxu0 0
      %1789 = vmatprep.subr.bf16.mxu0 0
      %1790 = vmatpush1.bf16.msra.mxu0 0
      %1791 = vmatprep.subr.bf16.mxu0 0
      %1792 = vmatpush1.bf16.msra.mxu0 0
      %1793 = vmatprep.subr.bf16.mxu0 0
      %1794 = vmatpush1.bf16.msra.mxu0 0
      %1795 = vmatprep.subr.bf16.mxu0 0
      %1796 = vmatpush1.bf16.msra.mxu0 %v1734
      %1797 = vmatprep.subr.bf16.mxu0 0
      %1798 = vmatpush1.bf16.msra.mxu0 %v1733
      %1799 = vmatprep.subr.bf16.mxu0 0
      %1800 = vmatpush1.bf16.msra.mxu0 %v1732
      %1801 = vmatprep.subr.bf16.mxu0 0
      %1802 = vmatpush1.bf16.msra.mxu0 %v1731
      %1803 = vmatprep.subr.bf16.mxu0 0
      %1804 = vmatpush2.bf16.msra.mxu0 0
      %1805 = vmatprep.subr.bf16.mxu0 0
      %1806 = vmatpush2.bf16.msra.mxu0 0
      %1807 = vmatprep.subr.bf16.mxu0 0
      %1808 = vmatpush2.bf16.msra.mxu0 0
      %1809 = vmatprep.subr.bf16.mxu0 0
      %1810 = vmatpush2.bf16.msra.mxu0 0
      %1811 = vmatprep.subr.bf16.mxu0 0
      %1812 = vmatpush2.bf16.msra.mxu0 0
      %1813 = vmatprep.subr.bf16.mxu0 0
      %1814 = vmatpush2.bf16.msra.mxu0 0
      %1815 = vmatprep.subr.bf16.mxu0 0
      %1816 = vmatpush2.bf16.msra.mxu0 0
      %1817 = vmatprep.subr.bf16.mxu0 0
      %1818 = vmatpush2.bf16.msra.mxu0 0
      %1819 = vmatprep.mubr.bf16.mxu0 0
      %1820 = vmatmul.mubr.bf16.gmra.mxu0 %v1740
      %v1821 = vpop.f32.mrf.mxu0
      %v1822 = vadd.f32 0.0, %v1821
      %v1823 = vpop.f32.mrf.mxu0
      %v1824 = vpop.f32.mrf.mxu0
      %v1825 = vadd.f32 0.0, %v1824
      %v1826 = vpop.f32.mrf.mxu0
      %1827 = vmatprep.mubr.bf16.mxu0 0
      %1828 = vmatmul.mubr.bf16.gmra.mxu0 %v1743
      %v1829 = vpop.f32.mrf.mxu0
      %v1830 = vadd.f32 0.0, %v1829
      %v1831 = vpop.f32.mrf.mxu0
      %v1832 = vpop.f32.mrf.mxu0
      %v1833 = vadd.f32 0.0, %v1832
      %v1834 = vpop.f32.mrf.mxu0
      %1835 = vmatprep.mubr.bf16.mxu0 0
      %1836 = vmatmul.mubr.bf16.gmra.mxu0 %v1746
      %v1837 = vpop.f32.mrf.mxu0
      %v1838 = vadd.f32 0.0, %v1837
      %v1839 = vpop.f32.mrf.mxu0
      %v1840 = vpop.f32.mrf.mxu0
      %v1841 = vadd.f32 0.0, %v1840
      %v1842 = vpop.f32.mrf.mxu0
      %1843 = vmatprep.mubr.bf16.mxu0 0
      %1844 = vmatmul.mubr.bf16.gmra.mxu0 %v1749
      %v1845 = vpop.f32.mrf.mxu0
      %v1846 = vadd.f32 0.0, %v1845
      %v1847 = vpop.f32.mrf.mxu0
      %v1848 = vpop.f32.mrf.mxu0
      %v1849 = vadd.f32 0.0, %v1848
      %v1850 = vpop.f32.mrf.mxu0
      %1851 = vmatprep.mubr.bf16.mxu0 0
      %1852 = vmatmul.mubr.bf16.gmra.mxu0 %v1752
      %v1853 = vpop.f32.mrf.mxu0
      %v1854 = vadd.f32 0.0, %v1853
      %v1855 = vpop.f32.mrf.mxu0
      %v1856 = vpop.f32.mrf.mxu0
      %v1857 = vadd.f32 0.0, %v1856
      %v1858 = vpop.f32.mrf.mxu0
      %1859 = vmatprep.mubr.bf16.mxu0 0
      %1860 = vmatmul.mubr.bf16.gmra.mxu0 %v1755
      %v1861 = vpop.f32.mrf.mxu0
      %v1862 = vadd.f32 0.0, %v1861
      %v1863 = vpop.f32.mrf.mxu0
      %v1864 = vpop.f32.mrf.mxu0
      %v1865 = vadd.f32 0.0, %v1864
      %v1866 = vpop.f32.mrf.mxu0
      %1867 = vmatprep.mubr.bf16.mxu0 0
      %1868 = vmatmul.mubr.bf16.gmra.mxu0 %v1758
      %v1869 = vpop.f32.mrf.mxu0
      %v1870 = vadd.f32 0.0, %v1869
      %v1871 = vpop.f32.mrf.mxu0
      %v1872 = vpop.f32.mrf.mxu0
      %v1873 = vadd.f32 0.0, %v1872
      %v1874 = vpop.f32.mrf.mxu0
      %1875 = vmatprep.mubr.bf16.mxu0 0
      %1876 = vmatmul.mubr.bf16.gmra.mxu0 %v1761
      %v1877 = vpop.f32.mrf.mxu0
      %v1878 = vadd.f32 0.0, %v1877
      %v1879 = vpop.f32.mrf.mxu0
      %v1880 = vpop.f32.mrf.mxu0
      %v1881 = vadd.f32 0.0, %v1880
      %v1882 = vpop.f32.mrf.mxu0
      %1883 = vmatprep.mubr.bf16.mxu0 0
      %1884 = vmatmul.mubr.bf16.gmra.mxu0 %v1764
      %v1885 = vpop.f32.mrf.mxu0
      %v1886 = vadd.f32 0.0, %v1885
      %v1887 = vpop.f32.mrf.mxu0
      %v1888 = vpop.f32.mrf.mxu0
      %v1889 = vadd.f32 0.0, %v1888
      %v1890 = vpop.f32.mrf.mxu0
      %1891 = vmatprep.mubr.bf16.mxu0 0
      %1892 = vmatmul.mubr.bf16.gmra.mxu0 %v1767
      %v1893 = vpop.f32.mrf.mxu0
      %v1894 = vadd.f32 0.0, %v1893
      %v1895 = vpop.f32.mrf.mxu0
      %v1896 = vpop.f32.mrf.mxu0
      %v1897 = vadd.f32 0.0, %v1896
      %v1898 = vpop.f32.mrf.mxu0
      %1899 = vmatprep.mubr.bf16.mxu0 0
      %1900 = vmatmul.mubr.bf16.gmra.mxu0 %v1770
      %v1901 = vpop.f32.mrf.mxu0
      %v1902 = vadd.f32 0.0, %v1901
      %v1903 = vpop.f32.mrf.mxu0
      %v1904 = vpop.f32.mrf.mxu0
      %v1905 = vadd.f32 0.0, %v1904
      %v1906 = vpop.f32.mrf.mxu0
      %1907 = vmatprep.mubr.bf16.mxu0 0
      %1908 = vmatmul.mubr.bf16.gmra.mxu0 %v1773
      %v1909 = vpop.f32.mrf.mxu0
      %v1910 = vadd.f32 0.0, %v1909
      %v1911 = vpop.f32.mrf.mxu0
      %v1912 = vpop.f32.mrf.mxu0
      %v1913 = vadd.f32 0.0, %v1912
      %v1914 = vpop.f32.mrf.mxu0
      %1915 = vmatprep.mubr.bf16.mxu0 0
      %1916 = vmatmul.mubr.bf16.gmra.mxu0 %v1776
      %v1917 = vpop.f32.mrf.mxu0
      %v1918 = vadd.f32 0.0, %v1917
      %v1919 = vpop.f32.mrf.mxu0
      %v1920 = vpop.f32.mrf.mxu0
      %v1921 = vadd.f32 0.0, %v1920
      %v1922 = vpop.f32.mrf.mxu0
      %1923 = vmatprep.mubr.bf16.mxu0 0
      %1924 = vmatmul.mubr.bf16.gmra.mxu0 %v1779
      %v1925 = vpop.f32.mrf.mxu0
      %v1926 = vadd.f32 0.0, %v1925
      %v1927 = vpop.f32.mrf.mxu0
      %v1928 = vpop.f32.mrf.mxu0
      %v1929 = vadd.f32 0.0, %v1928
      %v1930 = vpop.f32.mrf.mxu0
      %1931 = vmatprep.mubr.bf16.mxu0 0
      %1932 = vmatmul.mubr.bf16.gmra.mxu0 %v1782
      %v1933 = vpop.f32.mrf.mxu0
      %v1934 = vadd.f32 0.0, %v1933
      %v1935 = vpop.f32.mrf.mxu0
      %v1936 = vpop.f32.mrf.mxu0
      %v1937 = vadd.f32 0.0, %v1936
      %v1938 = vpop.f32.mrf.mxu0
      %1939 = vmatprep.mubr.bf16.mxu0 0
      %1940 = vmatmul.mubr.bf16.gmra.mxu0 %v1785
      %v1941 = vpop.f32.mrf.mxu0
      %v1942 = vadd.f32 0.0, %v1941
      %v1943 = vpop.f32.mrf.mxu0
      %v1944 = vpop.f32.mrf.mxu0
      %v1945 = vadd.f32 0.0, %v1944
      %v1946 = vpop.f32.mrf.mxu0
      %1947 = vdwg.mxu0
      %v1948 = vadd.f32 %v1532, %v1822
      %v1949 = vadd.f32 %v1535, %v1825
      %v1950 = vadd.f32 %v1540, %v1830
      %v1951 = vadd.f32 %v1543, %v1833
      %v1952 = vadd.f32 %v1548, %v1838
      %v1953 = vadd.f32 %v1551, %v1841
      %v1954 = vadd.f32 %v1556, %v1846
      %v1955 = vadd.f32 %v1559, %v1849
      %v1956 = vadd.f32 %v1564, %v1854
      %v1957 = vadd.f32 %v1567, %v1857
      %v1958 = vadd.f32 %v1572, %v1862
      %v1959 = vadd.f32 %v1575, %v1865
      %v1960 = vadd.f32 %v1580, %v1870
      %v1961 = vadd.f32 %v1583, %v1873
      %v1962 = vadd.f32 %v1588, %v1878
      %v1963 = vadd.f32 %v1591, %v1881
      %v1964 = vadd.f32 %v1596, %v1886
      %v1965 = vadd.f32 %v1599, %v1889
      %v1966 = vadd.f32 %v1604, %v1894
      %v1967 = vadd.f32 %v1607, %v1897
      %v1968 = vadd.f32 %v1612, %v1902
      %v1969 = vadd.f32 %v1615, %v1905
      %v1970 = vadd.f32 %v1620, %v1910
      %v1971 = vadd.f32 %v1623, %v1913
      %v1972 = vadd.f32 %v1628, %v1918
      %v1973 = vadd.f32 %v1631, %v1921
      %v1974 = vadd.f32 %v1636, %v1926
      %v1975 = vadd.f32 %v1639, %v1929
      %v1976 = vadd.f32 %v1644, %v1934
      %v1977 = vadd.f32 %v1647, %v1937
      %v1978 = vadd.f32 %v1652, %v1942
      %v1979 = vadd.f32 %v1655, %v1945
      %v1980 = vld [vmem:[%s968] sm:$0xff]
      %v1981 = vld [vmem:[%s968 + $0x8] sm:$0xff]
      %v1982 = vld [vmem:[%s968 + $0x18] sm:$0xff]
      %v1983 = vld [vmem:[%s968 + $0x20] sm:$0xff]
      %v1984 = vld [vmem:[%s968 + $0x30] sm:$0xff]
      %v1985 = vld [vmem:[%s968 + $0x38] sm:$0xff]
      %v1986 = vld [vmem:[%s968 + $0x48] sm:$0xff]
      %v1987 = vld [vmem:[%s968 + $0x50] sm:$0xff]
      %v1988 = vld [vmem:[%s968 + $0x60] sm:$0xff]
      %v1989 = vld [vmem:[%s968 + $0x68] sm:$0xff]
      %v1990 = vld [vmem:[%s968 + $0x78] sm:$0xff]
      %v1991 = vld [vmem:[%s968 + $0x80] sm:$0xff]
      %v1992 = vld [vmem:[%s968 + $0x90] sm:$0xff]
      %v1993 = vld [vmem:[%s968 + $0x98] sm:$0xff]
      %v1994 = vld [vmem:[%s968 + $0xa8] sm:$0xff]
      %v1995 = vld [vmem:[%s968 + $0xb0] sm:$0xff]
      %v1996 = vld [vmem:[%s968 + $0xc0] sm:$0xff]
      %v1997 = vld [vmem:[%s968 + $0xc8] sm:$0xff]
      %v1998 = vld [vmem:[%s968 + $0xd8] sm:$0xff]
      %v1999 = vld [vmem:[%s968 + $0xe0] sm:$0xff]
      %v2000 = vld [vmem:[%s968 + $0xf0] sm:$0xff]
      %v2001 = vld [vmem:[%s968 + $0xf8] sm:$0xff]
      %v2002 = vld [vmem:[%s968 + $0x108] sm:$0xff]
      %v2003 = vld [vmem:[%s968 + $0x110] sm:$0xff]
      %v2004 = vld [vmem:[%s968 + $0x120] sm:$0xff]
      %v2005 = vld [vmem:[%s968 + $0x128] sm:$0xff]
      %v2006 = vld [vmem:[%s968 + $0x138] sm:$0xff]
      %v2007 = vld [vmem:[%s968 + $0x140] sm:$0xff]
      %v2008 = vld [vmem:[%s968 + $0x150] sm:$0xff]
      %v2009 = vld [vmem:[%s968 + $0x158] sm:$0xff]
      %v2010 = vld [vmem:[%s968 + $0x168] sm:$0xff]
      %v2011 = vld [vmem:[%s968 + $0x170] sm:$0xff]
      %v2012 = vpack.c.bf16 %v1981, %v1980
      %v2013 = vpack.c.bf16 %v1983, %v1982
      %v2014 = vpack.c.bf16 %v1985, %v1984
      %v2015 = vpack.c.bf16 %v1987, %v1986
      %v2016 = vpack.c.bf16 %v1989, %v1988
      %v2017 = vpack.c.bf16 %v1991, %v1990
      %v2018 = vpack.c.bf16 %v1993, %v1992
      %v2019 = vpack.c.bf16 %v1995, %v1994
      %v2020 = vpack.c.bf16 %v1997, %v1996
      %v2021 = vpack.c.bf16 %v1999, %v1998
      %v2022 = vpack.c.bf16 %v2001, %v2000
      %v2023 = vpack.c.bf16 %v2003, %v2002
      %v2024 = vpack.c.bf16 %v2005, %v2004
      %v2025 = vpack.c.bf16 %v2007, %v2006
      %v2026 = vpack.c.bf16 %v2009, %v2008
      %v2027 = vpack.c.bf16 %v2011, %v2010
      %s2028 = scalar_lea.vmem %s2, 96
      %v2029 = vld [vmem:[%s2028] sm:$0xf]
      %v2030 = vld [vmem:[%s2028 + $0x4] sm:$0xf]
      %v2031 = vld [vmem:[%s2028 + $0x8] sm:$0xf]
      %v2032 = vld [vmem:[%s2028 + $0xc] sm:$0xf]
      %v2033 = vld [vmem:[%s2028 + $0x10] sm:$0xf]
      %v2034 = vld [vmem:[%s2028 + $0x14] sm:$0xf]
      %v2035 = vld [vmem:[%s2028 + $0x18] sm:$0xf]
      %v2036 = vld [vmem:[%s2028 + $0x1c] sm:$0xf]
      %v2045 = vunpack.c.l.b16 %v2029
      %v2046 = vunpack.c.l.b16 %v2030
      %v2047 = vunpack.c.l.b16 %v2031
      %v2048 = vunpack.c.l.b16 %v2032
      %v2049 = vunpack.c.l.b16 %v2033
      %v2050 = vunpack.c.l.b16 %v2034
      %v2051 = vunpack.c.l.b16 %v2035
      %v2052 = vunpack.c.l.b16 %v2036
      %v2053 = vpack.c.b16 %v2046, %v2045
      %v2054 = vpack.c.b16 %v2048, %v2047
      %v2055 = vpack.c.b16 %v2050, %v2049
      %v2056 = vpack.c.b16 %v2052, %v2051
      %v2062 = vsel %vm784, %v2012, 0
      %v2065 = vsel %vm784, %v2013, 0
      %v2068 = vsel %vm784, %v2014, 0
      %v2071 = vsel %vm784, %v2015, 0
      %v2074 = vsel %vm784, %v2016, 0
      %v2077 = vsel %vm784, %v2017, 0
      %v2080 = vsel %vm784, %v2018, 0
      %v2083 = vsel %vm784, %v2019, 0
      %v2086 = vsel %vm784, %v2020, 0
      %v2089 = vsel %vm784, %v2021, 0
      %v2092 = vsel %vm784, %v2022, 0
      %v2095 = vsel %vm784, %v2023, 0
      %v2098 = vsel %vm784, %v2024, 0
      %v2101 = vsel %vm784, %v2025, 0
      %v2104 = vsel %vm784, %v2026, 0
      %v2107 = vsel %vm784, %v2027, 0
      %2109 = vmatprep.subr.bf16.mxu0 0
      %2110 = vmatpush1.bf16.msra.mxu0 0
      %2111 = vmatprep.subr.bf16.mxu0 0
      %2112 = vmatpush1.bf16.msra.mxu0 0
      %2113 = vmatprep.subr.bf16.mxu0 0
      %2114 = vmatpush1.bf16.msra.mxu0 0
      %2115 = vmatprep.subr.bf16.mxu0 0
      %2116 = vmatpush1.bf16.msra.mxu0 0
      %2117 = vmatprep.subr.bf16.mxu0 0
      %2118 = vmatpush1.bf16.msra.mxu0 %v2056
      %2119 = vmatprep.subr.bf16.mxu0 0
      %2120 = vmatpush1.bf16.msra.mxu0 %v2055
      %2121 = vmatprep.subr.bf16.mxu0 0
      %2122 = vmatpush1.bf16.msra.mxu0 %v2054
      %2123 = vmatprep.subr.bf16.mxu0 0
      %2124 = vmatpush1.bf16.msra.mxu0 %v2053
      %2125 = vmatprep.subr.bf16.mxu0 0
      %2126 = vmatpush2.bf16.msra.mxu0 0
      %2127 = vmatprep.subr.bf16.mxu0 0
      %2128 = vmatpush2.bf16.msra.mxu0 0
      %2129 = vmatprep.subr.bf16.mxu0 0
      %2130 = vmatpush2.bf16.msra.mxu0 0
      %2131 = vmatprep.subr.bf16.mxu0 0
      %2132 = vmatpush2.bf16.msra.mxu0 0
      %2133 = vmatprep.subr.bf16.mxu0 0
      %2134 = vmatpush2.bf16.msra.mxu0 0
      %2135 = vmatprep.subr.bf16.mxu0 0
      %2136 = vmatpush2.bf16.msra.mxu0 0
      %2137 = vmatprep.subr.bf16.mxu0 0
      %2138 = vmatpush2.bf16.msra.mxu0 0
      %2139 = vmatprep.subr.bf16.mxu0 0
      %2140 = vmatpush2.bf16.msra.mxu0 0
      %2141 = vmatprep.mubr.bf16.mxu0 0
      %2142 = vmatmul.mubr.bf16.gmra.mxu0 %v2062
      %v2143 = vpop.f32.mrf.mxu0
      %v2144 = vadd.f32 0.0, %v2143
      %v2145 = vpop.f32.mrf.mxu0
      %v2146 = vpop.f32.mrf.mxu0
      %v2147 = vadd.f32 0.0, %v2146
      %v2148 = vpop.f32.mrf.mxu0
      %2149 = vmatprep.mubr.bf16.mxu0 0
      %2150 = vmatmul.mubr.bf16.gmra.mxu0 %v2065
      %v2151 = vpop.f32.mrf.mxu0
      %v2152 = vadd.f32 0.0, %v2151
      %v2153 = vpop.f32.mrf.mxu0
      %v2154 = vpop.f32.mrf.mxu0
      %v2155 = vadd.f32 0.0, %v2154
      %v2156 = vpop.f32.mrf.mxu0
      %2157 = vmatprep.mubr.bf16.mxu0 0
      %2158 = vmatmul.mubr.bf16.gmra.mxu0 %v2068
      %v2159 = vpop.f32.mrf.mxu0
      %v2160 = vadd.f32 0.0, %v2159
      %v2161 = vpop.f32.mrf.mxu0
      %v2162 = vpop.f32.mrf.mxu0
      %v2163 = vadd.f32 0.0, %v2162
      %v2164 = vpop.f32.mrf.mxu0
      %2165 = vmatprep.mubr.bf16.mxu0 0
      %2166 = vmatmul.mubr.bf16.gmra.mxu0 %v2071
      %v2167 = vpop.f32.mrf.mxu0
      %v2168 = vadd.f32 0.0, %v2167
      %v2169 = vpop.f32.mrf.mxu0
      %v2170 = vpop.f32.mrf.mxu0
      %v2171 = vadd.f32 0.0, %v2170
      %v2172 = vpop.f32.mrf.mxu0
      %2173 = vmatprep.mubr.bf16.mxu0 0
      %2174 = vmatmul.mubr.bf16.gmra.mxu0 %v2074
      %v2175 = vpop.f32.mrf.mxu0
      %v2176 = vadd.f32 0.0, %v2175
      %v2177 = vpop.f32.mrf.mxu0
      %v2178 = vpop.f32.mrf.mxu0
      %v2179 = vadd.f32 0.0, %v2178
      %v2180 = vpop.f32.mrf.mxu0
      %2181 = vmatprep.mubr.bf16.mxu0 0
      %2182 = vmatmul.mubr.bf16.gmra.mxu0 %v2077
      %v2183 = vpop.f32.mrf.mxu0
      %v2184 = vadd.f32 0.0, %v2183
      %v2185 = vpop.f32.mrf.mxu0
      %v2186 = vpop.f32.mrf.mxu0
      %v2187 = vadd.f32 0.0, %v2186
      %v2188 = vpop.f32.mrf.mxu0
      %2189 = vmatprep.mubr.bf16.mxu0 0
      %2190 = vmatmul.mubr.bf16.gmra.mxu0 %v2080
      %v2191 = vpop.f32.mrf.mxu0
      %v2192 = vadd.f32 0.0, %v2191
      %v2193 = vpop.f32.mrf.mxu0
      %v2194 = vpop.f32.mrf.mxu0
      %v2195 = vadd.f32 0.0, %v2194
      %v2196 = vpop.f32.mrf.mxu0
      %2197 = vmatprep.mubr.bf16.mxu0 0
      %2198 = vmatmul.mubr.bf16.gmra.mxu0 %v2083
      %v2199 = vpop.f32.mrf.mxu0
      %v2200 = vadd.f32 0.0, %v2199
      %v2201 = vpop.f32.mrf.mxu0
      %v2202 = vpop.f32.mrf.mxu0
      %v2203 = vadd.f32 0.0, %v2202
      %v2204 = vpop.f32.mrf.mxu0
      %2205 = vmatprep.mubr.bf16.mxu0 0
      %2206 = vmatmul.mubr.bf16.gmra.mxu0 %v2086
      %v2207 = vpop.f32.mrf.mxu0
      %v2208 = vadd.f32 0.0, %v2207
      %v2209 = vpop.f32.mrf.mxu0
      %v2210 = vpop.f32.mrf.mxu0
      %v2211 = vadd.f32 0.0, %v2210
      %v2212 = vpop.f32.mrf.mxu0
      %2213 = vmatprep.mubr.bf16.mxu0 0
      %2214 = vmatmul.mubr.bf16.gmra.mxu0 %v2089
      %v2215 = vpop.f32.mrf.mxu0
      %v2216 = vadd.f32 0.0, %v2215
      %v2217 = vpop.f32.mrf.mxu0
      %v2218 = vpop.f32.mrf.mxu0
      %v2219 = vadd.f32 0.0, %v2218
      %v2220 = vpop.f32.mrf.mxu0
      %2221 = vmatprep.mubr.bf16.mxu0 0
      %2222 = vmatmul.mubr.bf16.gmra.mxu0 %v2092
      %v2223 = vpop.f32.mrf.mxu0
      %v2224 = vadd.f32 0.0, %v2223
      %v2225 = vpop.f32.mrf.mxu0
      %v2226 = vpop.f32.mrf.mxu0
      %v2227 = vadd.f32 0.0, %v2226
      %v2228 = vpop.f32.mrf.mxu0
      %2229 = vmatprep.mubr.bf16.mxu0 0
      %2230 = vmatmul.mubr.bf16.gmra.mxu0 %v2095
      %v2231 = vpop.f32.mrf.mxu0
      %v2232 = vadd.f32 0.0, %v2231
      %v2233 = vpop.f32.mrf.mxu0
      %v2234 = vpop.f32.mrf.mxu0
      %v2235 = vadd.f32 0.0, %v2234
      %v2236 = vpop.f32.mrf.mxu0
      %2237 = vmatprep.mubr.bf16.mxu0 0
      %2238 = vmatmul.mubr.bf16.gmra.mxu0 %v2098
      %v2239 = vpop.f32.mrf.mxu0
      %v2240 = vadd.f32 0.0, %v2239
      %v2241 = vpop.f32.mrf.mxu0
      %v2242 = vpop.f32.mrf.mxu0
      %v2243 = vadd.f32 0.0, %v2242
      %v2244 = vpop.f32.mrf.mxu0
      %2245 = vmatprep.mubr.bf16.mxu0 0
      %2246 = vmatmul.mubr.bf16.gmra.mxu0 %v2101
      %v2247 = vpop.f32.mrf.mxu0
      %v2248 = vadd.f32 0.0, %v2247
      %v2249 = vpop.f32.mrf.mxu0
      %v2250 = vpop.f32.mrf.mxu0
      %v2251 = vadd.f32 0.0, %v2250
      %v2252 = vpop.f32.mrf.mxu0
      %2253 = vmatprep.mubr.bf16.mxu0 0
      %2254 = vmatmul.mubr.bf16.gmra.mxu0 %v2104
      %v2255 = vpop.f32.mrf.mxu0
      %v2256 = vadd.f32 0.0, %v2255
      %v2257 = vpop.f32.mrf.mxu0
      %v2258 = vpop.f32.mrf.mxu0
      %v2259 = vadd.f32 0.0, %v2258
      %v2260 = vpop.f32.mrf.mxu0
      %2261 = vmatprep.mubr.bf16.mxu0 0
      %2262 = vmatmul.mubr.bf16.gmra.mxu0 %v2107
      %v2263 = vpop.f32.mrf.mxu0
      %v2264 = vadd.f32 0.0, %v2263
      %v2265 = vpop.f32.mrf.mxu0
      %v2266 = vpop.f32.mrf.mxu0
      %v2267 = vadd.f32 0.0, %v2266
      %v2268 = vpop.f32.mrf.mxu0
      %2269 = vdwg.mxu0
      %v2270 = vadd.f32 %v1948, %v2144
      %v2271 = vadd.f32 %v1949, %v2147
      %v2272 = vadd.f32 %v1950, %v2152
      %v2273 = vadd.f32 %v1951, %v2155
      %v2274 = vadd.f32 %v1952, %v2160
      %v2275 = vadd.f32 %v1953, %v2163
      %v2276 = vadd.f32 %v1954, %v2168
      %v2277 = vadd.f32 %v1955, %v2171
      %v2278 = vadd.f32 %v1956, %v2176
      %v2279 = vadd.f32 %v1957, %v2179
      %v2280 = vadd.f32 %v1958, %v2184
      %v2281 = vadd.f32 %v1959, %v2187
      %v2282 = vadd.f32 %v1960, %v2192
      %v2283 = vadd.f32 %v1961, %v2195
      %v2284 = vadd.f32 %v1962, %v2200
      %v2285 = vadd.f32 %v1963, %v2203
      %v2286 = vadd.f32 %v1964, %v2208
      %v2287 = vadd.f32 %v1965, %v2211
      %v2288 = vadd.f32 %v1966, %v2216
      %v2289 = vadd.f32 %v1967, %v2219
      %v2290 = vadd.f32 %v1968, %v2224
      %v2291 = vadd.f32 %v1969, %v2227
      %v2292 = vadd.f32 %v1970, %v2232
      %v2293 = vadd.f32 %v1971, %v2235
      %v2294 = vadd.f32 %v1972, %v2240
      %v2295 = vadd.f32 %v1973, %v2243
      %v2296 = vadd.f32 %v1974, %v2248
      %v2297 = vadd.f32 %v1975, %v2251
      %v2298 = vadd.f32 %v1976, %v2256
      %v2299 = vadd.f32 %v1977, %v2259
      %v2300 = vadd.f32 %v1978, %v2264
      %v2301 = vadd.f32 %v1979, %v2267
      %v2302 = vld [vmem:[%s968 + $0x1] sm:$0xff]
      %v2303 = vld [vmem:[%s968 + $0x9] sm:$0xff]
      %v2304 = vld [vmem:[%s968 + $0x19] sm:$0xff]
      %v2305 = vld [vmem:[%s968 + $0x21] sm:$0xff]
      %v2306 = vld [vmem:[%s968 + $0x31] sm:$0xff]
      %v2307 = vld [vmem:[%s968 + $0x39] sm:$0xff]
      %v2308 = vld [vmem:[%s968 + $0x49] sm:$0xff]
      %v2309 = vld [vmem:[%s968 + $0x51] sm:$0xff]
      %v2310 = vld [vmem:[%s968 + $0x61] sm:$0xff]
      %v2311 = vld [vmem:[%s968 + $0x69] sm:$0xff]
      %v2312 = vld [vmem:[%s968 + $0x79] sm:$0xff]
      %v2313 = vld [vmem:[%s968 + $0x81] sm:$0xff]
      %v2314 = vld [vmem:[%s968 + $0x91] sm:$0xff]
      %v2315 = vld [vmem:[%s968 + $0x99] sm:$0xff]
      %v2316 = vld [vmem:[%s968 + $0xa9] sm:$0xff]
      %v2317 = vld [vmem:[%s968 + $0xb1] sm:$0xff]
      %v2318 = vld [vmem:[%s968 + $0xc1] sm:$0xff]
      %v2319 = vld [vmem:[%s968 + $0xc9] sm:$0xff]
      %v2320 = vld [vmem:[%s968 + $0xd9] sm:$0xff]
      %v2321 = vld [vmem:[%s968 + $0xe1] sm:$0xff]
      %v2322 = vld [vmem:[%s968 + $0xf1] sm:$0xff]
      %v2323 = vld [vmem:[%s968 + $0xf9] sm:$0xff]
      %v2324 = vld [vmem:[%s968 + $0x109] sm:$0xff]
      %v2325 = vld [vmem:[%s968 + $0x111] sm:$0xff]
      %v2326 = vld [vmem:[%s968 + $0x121] sm:$0xff]
      %v2327 = vld [vmem:[%s968 + $0x129] sm:$0xff]
      %v2328 = vld [vmem:[%s968 + $0x139] sm:$0xff]
      %v2329 = vld [vmem:[%s968 + $0x141] sm:$0xff]
      %v2330 = vld [vmem:[%s968 + $0x151] sm:$0xff]
      %v2331 = vld [vmem:[%s968 + $0x159] sm:$0xff]
      %v2332 = vld [vmem:[%s968 + $0x169] sm:$0xff]
      %v2333 = vld [vmem:[%s968 + $0x171] sm:$0xff]
      %v2334 = vpack.c.bf16 %v2303, %v2302
      %v2335 = vpack.c.bf16 %v2305, %v2304
      %v2336 = vpack.c.bf16 %v2307, %v2306
      %v2337 = vpack.c.bf16 %v2309, %v2308
      %v2338 = vpack.c.bf16 %v2311, %v2310
      %v2339 = vpack.c.bf16 %v2313, %v2312
      %v2340 = vpack.c.bf16 %v2315, %v2314
      %v2341 = vpack.c.bf16 %v2317, %v2316
      %v2342 = vpack.c.bf16 %v2319, %v2318
      %v2343 = vpack.c.bf16 %v2321, %v2320
      %v2344 = vpack.c.bf16 %v2323, %v2322
      %v2345 = vpack.c.bf16 %v2325, %v2324
      %v2346 = vpack.c.bf16 %v2327, %v2326
      %v2347 = vpack.c.bf16 %v2329, %v2328
      %v2348 = vpack.c.bf16 %v2331, %v2330
      %v2349 = vpack.c.bf16 %v2333, %v2332
      %s2350 = scalar_lea.vmem %s2, 128
      %v2351 = vld [vmem:[%s2350] sm:$0xf]
      %v2352 = vld [vmem:[%s2350 + $0x4] sm:$0xf]
      %v2353 = vld [vmem:[%s2350 + $0x8] sm:$0xf]
      %v2354 = vld [vmem:[%s2350 + $0xc] sm:$0xf]
      %v2355 = vld [vmem:[%s2350 + $0x10] sm:$0xf]
      %v2356 = vld [vmem:[%s2350 + $0x14] sm:$0xf]
      %v2357 = vld [vmem:[%s2350 + $0x18] sm:$0xf]
      %v2358 = vld [vmem:[%s2350 + $0x1c] sm:$0xf]
      %v2367 = vunpack.c.l.b16 %v2351
      %v2368 = vunpack.c.l.b16 %v2352
      %v2369 = vunpack.c.l.b16 %v2353
      %v2370 = vunpack.c.l.b16 %v2354
      %v2371 = vunpack.c.l.b16 %v2355
      %v2372 = vunpack.c.l.b16 %v2356
      %v2373 = vunpack.c.l.b16 %v2357
      %v2374 = vunpack.c.l.b16 %v2358
      %v2375 = vpack.c.b16 %v2368, %v2367
      %v2376 = vpack.c.b16 %v2370, %v2369
      %v2377 = vpack.c.b16 %v2372, %v2371
      %v2378 = vpack.c.b16 %v2374, %v2373
      %v2384 = vsel %vm784, %v2334, 0
      %v2387 = vsel %vm784, %v2335, 0
      %v2390 = vsel %vm784, %v2336, 0
      %v2393 = vsel %vm784, %v2337, 0
      %v2396 = vsel %vm784, %v2338, 0
      %v2399 = vsel %vm784, %v2339, 0
      %v2402 = vsel %vm784, %v2340, 0
      %v2405 = vsel %vm784, %v2341, 0
      %v2408 = vsel %vm784, %v2342, 0
      %v2411 = vsel %vm784, %v2343, 0
      %v2414 = vsel %vm784, %v2344, 0
      %v2417 = vsel %vm784, %v2345, 0
      %v2420 = vsel %vm784, %v2346, 0
      %v2423 = vsel %vm784, %v2347, 0
      %v2426 = vsel %vm784, %v2348, 0
      %v2429 = vsel %vm784, %v2349, 0
      %2431 = vmatprep.subr.bf16.mxu0 0
      %2432 = vmatpush1.bf16.msra.mxu0 0
      %2433 = vmatprep.subr.bf16.mxu0 0
      %2434 = vmatpush1.bf16.msra.mxu0 0
      %2435 = vmatprep.subr.bf16.mxu0 0
      %2436 = vmatpush1.bf16.msra.mxu0 0
      %2437 = vmatprep.subr.bf16.mxu0 0
      %2438 = vmatpush1.bf16.msra.mxu0 0
      %2439 = vmatprep.subr.bf16.mxu0 0
      %2440 = vmatpush1.bf16.msra.mxu0 %v2378
      %2441 = vmatprep.subr.bf16.mxu0 0
      %2442 = vmatpush1.bf16.msra.mxu0 %v2377
      %2443 = vmatprep.subr.bf16.mxu0 0
      %2444 = vmatpush1.bf16.msra.mxu0 %v2376
      %2445 = vmatprep.subr.bf16.mxu0 0
      %2446 = vmatpush1.bf16.msra.mxu0 %v2375
      %2447 = vmatprep.subr.bf16.mxu0 0
      %2448 = vmatpush2.bf16.msra.mxu0 0
      %2449 = vmatprep.subr.bf16.mxu0 0
      %2450 = vmatpush2.bf16.msra.mxu0 0
      %2451 = vmatprep.subr.bf16.mxu0 0
      %2452 = vmatpush2.bf16.msra.mxu0 0
      %2453 = vmatprep.subr.bf16.mxu0 0
      %2454 = vmatpush2.bf16.msra.mxu0 0
      %2455 = vmatprep.subr.bf16.mxu0 0
      %2456 = vmatpush2.bf16.msra.mxu0 0
      %2457 = vmatprep.subr.bf16.mxu0 0
      %2458 = vmatpush2.bf16.msra.mxu0 0
      %2459 = vmatprep.subr.bf16.mxu0 0
      %2460 = vmatpush2.bf16.msra.mxu0 0
      %2461 = vmatprep.subr.bf16.mxu0 0
      %2462 = vmatpush2.bf16.msra.mxu0 0
      %2463 = vmatprep.mubr.bf16.mxu0 0
      %2464 = vmatmul.mubr.bf16.gmra.mxu0 %v2384
      %v2465 = vpop.f32.mrf.mxu0
      %v2466 = vadd.f32 0.0, %v2465
      %v2467 = vpop.f32.mrf.mxu0
      %v2468 = vpop.f32.mrf.mxu0
      %v2469 = vadd.f32 0.0, %v2468
      %v2470 = vpop.f32.mrf.mxu0
      %2471 = vmatprep.mubr.bf16.mxu0 0
      %2472 = vmatmul.mubr.bf16.gmra.mxu0 %v2387
      %v2473 = vpop.f32.mrf.mxu0
      %v2474 = vadd.f32 0.0, %v2473
      %v2475 = vpop.f32.mrf.mxu0
      %v2476 = vpop.f32.mrf.mxu0
      %v2477 = vadd.f32 0.0, %v2476
      %v2478 = vpop.f32.mrf.mxu0
      %2479 = vmatprep.mubr.bf16.mxu0 0
      %2480 = vmatmul.mubr.bf16.gmra.mxu0 %v2390
      %v2481 = vpop.f32.mrf.mxu0
      %v2482 = vadd.f32 0.0, %v2481
      %v2483 = vpop.f32.mrf.mxu0
      %v2484 = vpop.f32.mrf.mxu0
      %v2485 = vadd.f32 0.0, %v2484
      %v2486 = vpop.f32.mrf.mxu0
      %2487 = vmatprep.mubr.bf16.mxu0 0
      %2488 = vmatmul.mubr.bf16.gmra.mxu0 %v2393
      %v2489 = vpop.f32.mrf.mxu0
      %v2490 = vadd.f32 0.0, %v2489
      %v2491 = vpop.f32.mrf.mxu0
      %v2492 = vpop.f32.mrf.mxu0
      %v2493 = vadd.f32 0.0, %v2492
      %v2494 = vpop.f32.mrf.mxu0
      %2495 = vmatprep.mubr.bf16.mxu0 0
      %2496 = vmatmul.mubr.bf16.gmra.mxu0 %v2396
      %v2497 = vpop.f32.mrf.mxu0
      %v2498 = vadd.f32 0.0, %v2497
      %v2499 = vpop.f32.mrf.mxu0
      %v2500 = vpop.f32.mrf.mxu0
      %v2501 = vadd.f32 0.0, %v2500
      %v2502 = vpop.f32.mrf.mxu0
      %2503 = vmatprep.mubr.bf16.mxu0 0
      %2504 = vmatmul.mubr.bf16.gmra.mxu0 %v2399
      %v2505 = vpop.f32.mrf.mxu0
      %v2506 = vadd.f32 0.0, %v2505
      %v2507 = vpop.f32.mrf.mxu0
      %v2508 = vpop.f32.mrf.mxu0
      %v2509 = vadd.f32 0.0, %v2508
      %v2510 = vpop.f32.mrf.mxu0
      %2511 = vmatprep.mubr.bf16.mxu0 0
      %2512 = vmatmul.mubr.bf16.gmra.mxu0 %v2402
      %v2513 = vpop.f32.mrf.mxu0
      %v2514 = vadd.f32 0.0, %v2513
      %v2515 = vpop.f32.mrf.mxu0
      %v2516 = vpop.f32.mrf.mxu0
      %v2517 = vadd.f32 0.0, %v2516
      %v2518 = vpop.f32.mrf.mxu0
      %2519 = vmatprep.mubr.bf16.mxu0 0
      %2520 = vmatmul.mubr.bf16.gmra.mxu0 %v2405
      %v2521 = vpop.f32.mrf.mxu0
      %v2522 = vadd.f32 0.0, %v2521
      %v2523 = vpop.f32.mrf.mxu0
      %v2524 = vpop.f32.mrf.mxu0
      %v2525 = vadd.f32 0.0, %v2524
      %v2526 = vpop.f32.mrf.mxu0
      %2527 = vmatprep.mubr.bf16.mxu0 0
      %2528 = vmatmul.mubr.bf16.gmra.mxu0 %v2408
      %v2529 = vpop.f32.mrf.mxu0
      %v2530 = vadd.f32 0.0, %v2529
      %v2531 = vpop.f32.mrf.mxu0
      %v2532 = vpop.f32.mrf.mxu0
      %v2533 = vadd.f32 0.0, %v2532
      %v2534 = vpop.f32.mrf.mxu0
      %2535 = vmatprep.mubr.bf16.mxu0 0
      %2536 = vmatmul.mubr.bf16.gmra.mxu0 %v2411
      %v2537 = vpop.f32.mrf.mxu0
      %v2538 = vadd.f32 0.0, %v2537
      %v2539 = vpop.f32.mrf.mxu0
      %v2540 = vpop.f32.mrf.mxu0
      %v2541 = vadd.f32 0.0, %v2540
      %v2542 = vpop.f32.mrf.mxu0
      %2543 = vmatprep.mubr.bf16.mxu0 0
      %2544 = vmatmul.mubr.bf16.gmra.mxu0 %v2414
      %v2545 = vpop.f32.mrf.mxu0
      %v2546 = vadd.f32 0.0, %v2545
      %v2547 = vpop.f32.mrf.mxu0
      %v2548 = vpop.f32.mrf.mxu0
      %v2549 = vadd.f32 0.0, %v2548
      %v2550 = vpop.f32.mrf.mxu0
      %2551 = vmatprep.mubr.bf16.mxu0 0
      %2552 = vmatmul.mubr.bf16.gmra.mxu0 %v2417
      %v2553 = vpop.f32.mrf.mxu0
      %v2554 = vadd.f32 0.0, %v2553
      %v2555 = vpop.f32.mrf.mxu0
      %v2556 = vpop.f32.mrf.mxu0
      %v2557 = vadd.f32 0.0, %v2556
      %v2558 = vpop.f32.mrf.mxu0
      %2559 = vmatprep.mubr.bf16.mxu0 0
      %2560 = vmatmul.mubr.bf16.gmra.mxu0 %v2420
      %v2561 = vpop.f32.mrf.mxu0
      %v2562 = vadd.f32 0.0, %v2561
      %v2563 = vpop.f32.mrf.mxu0
      %v2564 = vpop.f32.mrf.mxu0
      %v2565 = vadd.f32 0.0, %v2564
      %v2566 = vpop.f32.mrf.mxu0
      %2567 = vmatprep.mubr.bf16.mxu0 0
      %2568 = vmatmul.mubr.bf16.gmra.mxu0 %v2423
      %v2569 = vpop.f32.mrf.mxu0
      %v2570 = vadd.f32 0.0, %v2569
      %v2571 = vpop.f32.mrf.mxu0
      %v2572 = vpop.f32.mrf.mxu0
      %v2573 = vadd.f32 0.0, %v2572
      %v2574 = vpop.f32.mrf.mxu0
      %2575 = vmatprep.mubr.bf16.mxu0 0
      %2576 = vmatmul.mubr.bf16.gmra.mxu0 %v2426
      %v2577 = vpop.f32.mrf.mxu0
      %v2578 = vadd.f32 0.0, %v2577
      %v2579 = vpop.f32.mrf.mxu0
      %v2580 = vpop.f32.mrf.mxu0
      %v2581 = vadd.f32 0.0, %v2580
      %v2582 = vpop.f32.mrf.mxu0
      %2583 = vmatprep.mubr.bf16.mxu0 0
      %2584 = vmatmul.mubr.bf16.gmra.mxu0 %v2429
      %v2585 = vpop.f32.mrf.mxu0
      %v2586 = vadd.f32 0.0, %v2585
      %v2587 = vpop.f32.mrf.mxu0
      %v2588 = vpop.f32.mrf.mxu0
      %v2589 = vadd.f32 0.0, %v2588
      %v2590 = vpop.f32.mrf.mxu0
      %2591 = vdwg.mxu0
      %v2592 = vadd.f32 %v2270, %v2466
      %v2593 = vadd.f32 %v2271, %v2469
      %v2594 = vadd.f32 %v2272, %v2474
      %v2595 = vadd.f32 %v2273, %v2477
      %v2596 = vadd.f32 %v2274, %v2482
      %v2597 = vadd.f32 %v2275, %v2485
      %v2598 = vadd.f32 %v2276, %v2490
      %v2599 = vadd.f32 %v2277, %v2493
      %v2600 = vadd.f32 %v2278, %v2498
      %v2601 = vadd.f32 %v2279, %v2501
      %v2602 = vadd.f32 %v2280, %v2506
      %v2603 = vadd.f32 %v2281, %v2509
      %v2604 = vadd.f32 %v2282, %v2514
      %v2605 = vadd.f32 %v2283, %v2517
      %v2606 = vadd.f32 %v2284, %v2522
      %v2607 = vadd.f32 %v2285, %v2525
      %v2608 = vadd.f32 %v2286, %v2530
      %v2609 = vadd.f32 %v2287, %v2533
      %v2610 = vadd.f32 %v2288, %v2538
      %v2611 = vadd.f32 %v2289, %v2541
      %v2612 = vadd.f32 %v2290, %v2546
      %v2613 = vadd.f32 %v2291, %v2549
      %v2614 = vadd.f32 %v2292, %v2554
      %v2615 = vadd.f32 %v2293, %v2557
      %v2616 = vadd.f32 %v2294, %v2562
      %v2617 = vadd.f32 %v2295, %v2565
      %v2618 = vadd.f32 %v2296, %v2570
      %v2619 = vadd.f32 %v2297, %v2573
      %v2620 = vadd.f32 %v2298, %v2578
      %v2621 = vadd.f32 %v2299, %v2581
      %v2622 = vadd.f32 %v2300, %v2586
      %v2623 = vadd.f32 %v2301, %v2589
      %v2624 = vld [vmem:[%s968 + $0x2] sm:$0xff]
      %v2625 = vld [vmem:[%s968 + $0xa] sm:$0xff]
      %v2626 = vld [vmem:[%s968 + $0x1a] sm:$0xff]
      %v2627 = vld [vmem:[%s968 + $0x22] sm:$0xff]
      %v2628 = vld [vmem:[%s968 + $0x32] sm:$0xff]
      %v2629 = vld [vmem:[%s968 + $0x3a] sm:$0xff]
      %v2630 = vld [vmem:[%s968 + $0x4a] sm:$0xff]
      %v2631 = vld [vmem:[%s968 + $0x52] sm:$0xff]
      %v2632 = vld [vmem:[%s968 + $0x62] sm:$0xff]
      %v2633 = vld [vmem:[%s968 + $0x6a] sm:$0xff]
      %v2634 = vld [vmem:[%s968 + $0x7a] sm:$0xff]
      %v2635 = vld [vmem:[%s968 + $0x82] sm:$0xff]
      %v2636 = vld [vmem:[%s968 + $0x92] sm:$0xff]
      %v2637 = vld [vmem:[%s968 + $0x9a] sm:$0xff]
      %v2638 = vld [vmem:[%s968 + $0xaa] sm:$0xff]
      %v2639 = vld [vmem:[%s968 + $0xb2] sm:$0xff]
      %v2640 = vld [vmem:[%s968 + $0xc2] sm:$0xff]
      %v2641 = vld [vmem:[%s968 + $0xca] sm:$0xff]
      %v2642 = vld [vmem:[%s968 + $0xda] sm:$0xff]
      %v2643 = vld [vmem:[%s968 + $0xe2] sm:$0xff]
      %v2644 = vld [vmem:[%s968 + $0xf2] sm:$0xff]
      %v2645 = vld [vmem:[%s968 + $0xfa] sm:$0xff]
      %v2646 = vld [vmem:[%s968 + $0x10a] sm:$0xff]
      %v2647 = vld [vmem:[%s968 + $0x112] sm:$0xff]
      %v2648 = vld [vmem:[%s968 + $0x122] sm:$0xff]
      %v2649 = vld [vmem:[%s968 + $0x12a] sm:$0xff]
      %v2650 = vld [vmem:[%s968 + $0x13a] sm:$0xff]
      %v2651 = vld [vmem:[%s968 + $0x142] sm:$0xff]
      %v2652 = vld [vmem:[%s968 + $0x152] sm:$0xff]
      %v2653 = vld [vmem:[%s968 + $0x15a] sm:$0xff]
      %v2654 = vld [vmem:[%s968 + $0x16a] sm:$0xff]
      %v2655 = vld [vmem:[%s968 + $0x172] sm:$0xff]
      %v2656 = vpack.c.bf16 %v2625, %v2624
      %v2657 = vpack.c.bf16 %v2627, %v2626
      %v2658 = vpack.c.bf16 %v2629, %v2628
      %v2659 = vpack.c.bf16 %v2631, %v2630
      %v2660 = vpack.c.bf16 %v2633, %v2632
      %v2661 = vpack.c.bf16 %v2635, %v2634
      %v2662 = vpack.c.bf16 %v2637, %v2636
      %v2663 = vpack.c.bf16 %v2639, %v2638
      %v2664 = vpack.c.bf16 %v2641, %v2640
      %v2665 = vpack.c.bf16 %v2643, %v2642
      %v2666 = vpack.c.bf16 %v2645, %v2644
      %v2667 = vpack.c.bf16 %v2647, %v2646
      %v2668 = vpack.c.bf16 %v2649, %v2648
      %v2669 = vpack.c.bf16 %v2651, %v2650
      %v2670 = vpack.c.bf16 %v2653, %v2652
      %v2671 = vpack.c.bf16 %v2655, %v2654
      %s2672 = scalar_lea.vmem %s2, 160
      %v2673 = vld [vmem:[%s2672] sm:$0xf]
      %v2674 = vld [vmem:[%s2672 + $0x4] sm:$0xf]
      %v2675 = vld [vmem:[%s2672 + $0x8] sm:$0xf]
      %v2676 = vld [vmem:[%s2672 + $0xc] sm:$0xf]
      %v2677 = vld [vmem:[%s2672 + $0x10] sm:$0xf]
      %v2678 = vld [vmem:[%s2672 + $0x14] sm:$0xf]
      %v2679 = vld [vmem:[%s2672 + $0x18] sm:$0xf]
      %v2680 = vld [vmem:[%s2672 + $0x1c] sm:$0xf]
      %v2689 = vunpack.c.l.b16 %v2673
      %v2690 = vunpack.c.l.b16 %v2674
      %v2691 = vunpack.c.l.b16 %v2675
      %v2692 = vunpack.c.l.b16 %v2676
      %v2693 = vunpack.c.l.b16 %v2677
      %v2694 = vunpack.c.l.b16 %v2678
      %v2695 = vunpack.c.l.b16 %v2679
      %v2696 = vunpack.c.l.b16 %v2680
      %v2697 = vpack.c.b16 %v2690, %v2689
      %v2698 = vpack.c.b16 %v2692, %v2691
      %v2699 = vpack.c.b16 %v2694, %v2693
      %v2700 = vpack.c.b16 %v2696, %v2695
      %v2706 = vsel %vm784, %v2656, 0
      %v2709 = vsel %vm784, %v2657, 0
      %v2712 = vsel %vm784, %v2658, 0
      %v2715 = vsel %vm784, %v2659, 0
      %v2718 = vsel %vm784, %v2660, 0
      %v2721 = vsel %vm784, %v2661, 0
      %v2724 = vsel %vm784, %v2662, 0
      %v2727 = vsel %vm784, %v2663, 0
      %v2730 = vsel %vm784, %v2664, 0
      %v2733 = vsel %vm784, %v2665, 0
      %v2736 = vsel %vm784, %v2666, 0
      %v2739 = vsel %vm784, %v2667, 0
      %v2742 = vsel %vm784, %v2668, 0
      %v2745 = vsel %vm784, %v2669, 0
      %v2748 = vsel %vm784, %v2670, 0
      %v2751 = vsel %vm784, %v2671, 0
      %2753 = vmatprep.subr.bf16.mxu0 0
      %2754 = vmatpush1.bf16.msra.mxu0 0
      %2755 = vmatprep.subr.bf16.mxu0 0
      %2756 = vmatpush1.bf16.msra.mxu0 0
      %2757 = vmatprep.subr.bf16.mxu0 0
      %2758 = vmatpush1.bf16.msra.mxu0 0
      %2759 = vmatprep.subr.bf16.mxu0 0
      %2760 = vmatpush1.bf16.msra.mxu0 0
      %2761 = vmatprep.subr.bf16.mxu0 0
      %2762 = vmatpush1.bf16.msra.mxu0 %v2700
      %2763 = vmatprep.subr.bf16.mxu0 0
      %2764 = vmatpush1.bf16.msra.mxu0 %v2699
      %2765 = vmatprep.subr.bf16.mxu0 0
      %2766 = vmatpush1.bf16.msra.mxu0 %v2698
      %2767 = vmatprep.subr.bf16.mxu0 0
      %2768 = vmatpush1.bf16.msra.mxu0 %v2697
      %2769 = vmatprep.subr.bf16.mxu0 0
      %2770 = vmatpush2.bf16.msra.mxu0 0
      %2771 = vmatprep.subr.bf16.mxu0 0
      %2772 = vmatpush2.bf16.msra.mxu0 0
      %2773 = vmatprep.subr.bf16.mxu0 0
      %2774 = vmatpush2.bf16.msra.mxu0 0
      %2775 = vmatprep.subr.bf16.mxu0 0
      %2776 = vmatpush2.bf16.msra.mxu0 0
      %2777 = vmatprep.subr.bf16.mxu0 0
      %2778 = vmatpush2.bf16.msra.mxu0 0
      %2779 = vmatprep.subr.bf16.mxu0 0
      %2780 = vmatpush2.bf16.msra.mxu0 0
      %2781 = vmatprep.subr.bf16.mxu0 0
      %2782 = vmatpush2.bf16.msra.mxu0 0
      %2783 = vmatprep.subr.bf16.mxu0 0
      %2784 = vmatpush2.bf16.msra.mxu0 0
      %2785 = vmatprep.mubr.bf16.mxu0 0
      %2786 = vmatmul.mubr.bf16.gmra.mxu0 %v2706
      %v2787 = vpop.f32.mrf.mxu0
      %v2788 = vadd.f32 0.0, %v2787
      %v2789 = vpop.f32.mrf.mxu0
      %v2790 = vpop.f32.mrf.mxu0
      %v2791 = vadd.f32 0.0, %v2790
      %v2792 = vpop.f32.mrf.mxu0
      %2793 = vmatprep.mubr.bf16.mxu0 0
      %2794 = vmatmul.mubr.bf16.gmra.mxu0 %v2709
      %v2795 = vpop.f32.mrf.mxu0
      %v2796 = vadd.f32 0.0, %v2795
      %v2797 = vpop.f32.mrf.mxu0
      %v2798 = vpop.f32.mrf.mxu0
      %v2799 = vadd.f32 0.0, %v2798
      %v2800 = vpop.f32.mrf.mxu0
      %2801 = vmatprep.mubr.bf16.mxu0 0
      %2802 = vmatmul.mubr.bf16.gmra.mxu0 %v2712
      %v2803 = vpop.f32.mrf.mxu0
      %v2804 = vadd.f32 0.0, %v2803
      %v2805 = vpop.f32.mrf.mxu0
      %v2806 = vpop.f32.mrf.mxu0
      %v2807 = vadd.f32 0.0, %v2806
      %v2808 = vpop.f32.mrf.mxu0
      %2809 = vmatprep.mubr.bf16.mxu0 0
      %2810 = vmatmul.mubr.bf16.gmra.mxu0 %v2715
      %v2811 = vpop.f32.mrf.mxu0
      %v2812 = vadd.f32 0.0, %v2811
      %v2813 = vpop.f32.mrf.mxu0
      %v2814 = vpop.f32.mrf.mxu0
      %v2815 = vadd.f32 0.0, %v2814
      %v2816 = vpop.f32.mrf.mxu0
      %2817 = vmatprep.mubr.bf16.mxu0 0
      %2818 = vmatmul.mubr.bf16.gmra.mxu0 %v2718
      %v2819 = vpop.f32.mrf.mxu0
      %v2820 = vadd.f32 0.0, %v2819
      %v2821 = vpop.f32.mrf.mxu0
      %v2822 = vpop.f32.mrf.mxu0
      %v2823 = vadd.f32 0.0, %v2822
      %v2824 = vpop.f32.mrf.mxu0
      %2825 = vmatprep.mubr.bf16.mxu0 0
      %2826 = vmatmul.mubr.bf16.gmra.mxu0 %v2721
      %v2827 = vpop.f32.mrf.mxu0
      %v2828 = vadd.f32 0.0, %v2827
      %v2829 = vpop.f32.mrf.mxu0
      %v2830 = vpop.f32.mrf.mxu0
      %v2831 = vadd.f32 0.0, %v2830
      %v2832 = vpop.f32.mrf.mxu0
      %2833 = vmatprep.mubr.bf16.mxu0 0
      %2834 = vmatmul.mubr.bf16.gmra.mxu0 %v2724
      %v2835 = vpop.f32.mrf.mxu0
      %v2836 = vadd.f32 0.0, %v2835
      %v2837 = vpop.f32.mrf.mxu0
      %v2838 = vpop.f32.mrf.mxu0
      %v2839 = vadd.f32 0.0, %v2838
      %v2840 = vpop.f32.mrf.mxu0
      %2841 = vmatprep.mubr.bf16.mxu0 0
      %2842 = vmatmul.mubr.bf16.gmra.mxu0 %v2727
      %v2843 = vpop.f32.mrf.mxu0
      %v2844 = vadd.f32 0.0, %v2843
      %v2845 = vpop.f32.mrf.mxu0
      %v2846 = vpop.f32.mrf.mxu0
      %v2847 = vadd.f32 0.0, %v2846
      %v2848 = vpop.f32.mrf.mxu0
      %2849 = vmatprep.mubr.bf16.mxu0 0
      %2850 = vmatmul.mubr.bf16.gmra.mxu0 %v2730
      %v2851 = vpop.f32.mrf.mxu0
      %v2852 = vadd.f32 0.0, %v2851
      %v2853 = vpop.f32.mrf.mxu0
      %v2854 = vpop.f32.mrf.mxu0
      %v2855 = vadd.f32 0.0, %v2854
      %v2856 = vpop.f32.mrf.mxu0
      %2857 = vmatprep.mubr.bf16.mxu0 0
      %2858 = vmatmul.mubr.bf16.gmra.mxu0 %v2733
      %v2859 = vpop.f32.mrf.mxu0
      %v2860 = vadd.f32 0.0, %v2859
      %v2861 = vpop.f32.mrf.mxu0
      %v2862 = vpop.f32.mrf.mxu0
      %v2863 = vadd.f32 0.0, %v2862
      %v2864 = vpop.f32.mrf.mxu0
      %2865 = vmatprep.mubr.bf16.mxu0 0
      %2866 = vmatmul.mubr.bf16.gmra.mxu0 %v2736
      %v2867 = vpop.f32.mrf.mxu0
      %v2868 = vadd.f32 0.0, %v2867
      %v2869 = vpop.f32.mrf.mxu0
      %v2870 = vpop.f32.mrf.mxu0
      %v2871 = vadd.f32 0.0, %v2870
      %v2872 = vpop.f32.mrf.mxu0
      %2873 = vmatprep.mubr.bf16.mxu0 0
      %2874 = vmatmul.mubr.bf16.gmra.mxu0 %v2739
      %v2875 = vpop.f32.mrf.mxu0
      %v2876 = vadd.f32 0.0, %v2875
      %v2877 = vpop.f32.mrf.mxu0
      %v2878 = vpop.f32.mrf.mxu0
      %v2879 = vadd.f32 0.0, %v2878
      %v2880 = vpop.f32.mrf.mxu0
      %2881 = vmatprep.mubr.bf16.mxu0 0
      %2882 = vmatmul.mubr.bf16.gmra.mxu0 %v2742
      %v2883 = vpop.f32.mrf.mxu0
      %v2884 = vadd.f32 0.0, %v2883
      %v2885 = vpop.f32.mrf.mxu0
      %v2886 = vpop.f32.mrf.mxu0
      %v2887 = vadd.f32 0.0, %v2886
      %v2888 = vpop.f32.mrf.mxu0
      %2889 = vmatprep.mubr.bf16.mxu0 0
      %2890 = vmatmul.mubr.bf16.gmra.mxu0 %v2745
      %v2891 = vpop.f32.mrf.mxu0
      %v2892 = vadd.f32 0.0, %v2891
      %v2893 = vpop.f32.mrf.mxu0
      %v2894 = vpop.f32.mrf.mxu0
      %v2895 = vadd.f32 0.0, %v2894
      %v2896 = vpop.f32.mrf.mxu0
      %2897 = vmatprep.mubr.bf16.mxu0 0
      %2898 = vmatmul.mubr.bf16.gmra.mxu0 %v2748
      %v2899 = vpop.f32.mrf.mxu0
      %v2900 = vadd.f32 0.0, %v2899
      %v2901 = vpop.f32.mrf.mxu0
      %v2902 = vpop.f32.mrf.mxu0
      %v2903 = vadd.f32 0.0, %v2902
      %v2904 = vpop.f32.mrf.mxu0
      %2905 = vmatprep.mubr.bf16.mxu0 0
      %2906 = vmatmul.mubr.bf16.gmra.mxu0 %v2751
      %v2907 = vpop.f32.mrf.mxu0
      %v2908 = vadd.f32 0.0, %v2907
      %v2909 = vpop.f32.mrf.mxu0
      %v2910 = vpop.f32.mrf.mxu0
      %v2911 = vadd.f32 0.0, %v2910
      %v2912 = vpop.f32.mrf.mxu0
      %2913 = vdwg.mxu0
      %v2914 = vadd.f32 %v2592, %v2788
      %v2915 = vadd.f32 %v2593, %v2791
      %v2916 = vadd.f32 %v2594, %v2796
      %v2917 = vadd.f32 %v2595, %v2799
      %v2918 = vadd.f32 %v2596, %v2804
      %v2919 = vadd.f32 %v2597, %v2807
      %v2920 = vadd.f32 %v2598, %v2812
      %v2921 = vadd.f32 %v2599, %v2815
      %v2922 = vadd.f32 %v2600, %v2820
      %v2923 = vadd.f32 %v2601, %v2823
      %v2924 = vadd.f32 %v2602, %v2828
      %v2925 = vadd.f32 %v2603, %v2831
      %v2926 = vadd.f32 %v2604, %v2836
      %v2927 = vadd.f32 %v2605, %v2839
      %v2928 = vadd.f32 %v2606, %v2844
      %v2929 = vadd.f32 %v2607, %v2847
      %v2930 = vadd.f32 %v2608, %v2852
      %v2931 = vadd.f32 %v2609, %v2855
      %v2932 = vadd.f32 %v2610, %v2860
      %v2933 = vadd.f32 %v2611, %v2863
      %v2934 = vadd.f32 %v2612, %v2868
      %v2935 = vadd.f32 %v2613, %v2871
      %v2936 = vadd.f32 %v2614, %v2876
      %v2937 = vadd.f32 %v2615, %v2879
      %v2938 = vadd.f32 %v2616, %v2884
      %v2939 = vadd.f32 %v2617, %v2887
      %v2940 = vadd.f32 %v2618, %v2892
      %v2941 = vadd.f32 %v2619, %v2895
      %v2942 = vadd.f32 %v2620, %v2900
      %v2943 = vadd.f32 %v2621, %v2903
      %v2944 = vadd.f32 %v2622, %v2908
      %v2945 = vadd.f32 %v2623, %v2911
      %s2946 = scalar_lea.vmem [#allocation2], 48
      %v2947 = vld [vmem:[%s2946] sm:$0xff]
      %v2948 = vld [vmem:[%s2946 + $0x8] sm:$0xff]
      %v2949 = vld [vmem:[%s2946 + $0x18] sm:$0xff]
      %v2950 = vld [vmem:[%s2946 + $0x20] sm:$0xff]
      %v2951 = vld [vmem:[%s2946 + $0x30] sm:$0xff]
      %v2952 = vld [vmem:[%s2946 + $0x38] sm:$0xff]
      %v2953 = vld [vmem:[%s2946 + $0x48] sm:$0xff]
      %v2954 = vld [vmem:[%s2946 + $0x50] sm:$0xff]
      %v2955 = vld [vmem:[%s2946 + $0x60] sm:$0xff]
      %v2956 = vld [vmem:[%s2946 + $0x68] sm:$0xff]
      %v2957 = vld [vmem:[%s2946 + $0x78] sm:$0xff]
      %v2958 = vld [vmem:[%s2946 + $0x80] sm:$0xff]
      %v2959 = vld [vmem:[%s2946 + $0x90] sm:$0xff]
      %v2960 = vld [vmem:[%s2946 + $0x98] sm:$0xff]
      %v2961 = vld [vmem:[%s2946 + $0xa8] sm:$0xff]
      %v2962 = vld [vmem:[%s2946 + $0xb0] sm:$0xff]
      %v2963 = vld [vmem:[%s2946 + $0xc0] sm:$0xff]
      %v2964 = vld [vmem:[%s2946 + $0xc8] sm:$0xff]
      %v2965 = vld [vmem:[%s2946 + $0xd8] sm:$0xff]
      %v2966 = vld [vmem:[%s2946 + $0xe0] sm:$0xff]
      %v2967 = vld [vmem:[%s2946 + $0xf0] sm:$0xff]
      %v2968 = vld [vmem:[%s2946 + $0xf8] sm:$0xff]
      %v2969 = vld [vmem:[%s2946 + $0x108] sm:$0xff]
      %v2970 = vld [vmem:[%s2946 + $0x110] sm:$0xff]
      %v2971 = vld [vmem:[%s2946 + $0x120] sm:$0xff]
      %v2972 = vld [vmem:[%s2946 + $0x128] sm:$0xff]
      %v2973 = vld [vmem:[%s2946 + $0x138] sm:$0xff]
      %v2974 = vld [vmem:[%s2946 + $0x140] sm:$0xff]
      %v2975 = vld [vmem:[%s2946 + $0x150] sm:$0xff]
      %v2976 = vld [vmem:[%s2946 + $0x158] sm:$0xff]
      %v2977 = vld [vmem:[%s2946 + $0x168] sm:$0xff]
      %v2978 = vld [vmem:[%s2946 + $0x170] sm:$0xff]
      %v2979 = vpack.c.bf16 %v2948, %v2947
      %v2980 = vpack.c.bf16 %v2950, %v2949
      %v2981 = vpack.c.bf16 %v2952, %v2951
      %v2982 = vpack.c.bf16 %v2954, %v2953
      %v2983 = vpack.c.bf16 %v2956, %v2955
      %v2984 = vpack.c.bf16 %v2958, %v2957
      %v2985 = vpack.c.bf16 %v2960, %v2959
      %v2986 = vpack.c.bf16 %v2962, %v2961
      %v2987 = vpack.c.bf16 %v2964, %v2963
      %v2988 = vpack.c.bf16 %v2966, %v2965
      %v2989 = vpack.c.bf16 %v2968, %v2967
      %v2990 = vpack.c.bf16 %v2970, %v2969
      %v2991 = vpack.c.bf16 %v2972, %v2971
      %v2992 = vpack.c.bf16 %v2974, %v2973
      %v2993 = vpack.c.bf16 %v2976, %v2975
      %v2994 = vpack.c.bf16 %v2978, %v2977
      %s2995 = scalar_lea.vmem %s2, 192
      %v2996 = vld [vmem:[%s2995] sm:$0xf]
      %v2997 = vld [vmem:[%s2995 + $0x4] sm:$0xf]
      %v2998 = vld [vmem:[%s2995 + $0x8] sm:$0xf]
      %v2999 = vld [vmem:[%s2995 + $0xc] sm:$0xf]
      %v3000 = vld [vmem:[%s2995 + $0x10] sm:$0xf]
      %v3001 = vld [vmem:[%s2995 + $0x14] sm:$0xf]
      %v3002 = vld [vmem:[%s2995 + $0x18] sm:$0xf]
      %v3003 = vld [vmem:[%s2995 + $0x1c] sm:$0xf]
      %v3012 = vunpack.c.l.b16 %v2996
      %v3013 = vunpack.c.l.b16 %v2997
      %v3014 = vunpack.c.l.b16 %v2998
      %v3015 = vunpack.c.l.b16 %v2999
      %v3016 = vunpack.c.l.b16 %v3000
      %v3017 = vunpack.c.l.b16 %v3001
      %v3018 = vunpack.c.l.b16 %v3002
      %v3019 = vunpack.c.l.b16 %v3003
      %v3020 = vpack.c.b16 %v3013, %v3012
      %v3021 = vpack.c.b16 %v3015, %v3014
      %v3022 = vpack.c.b16 %v3017, %v3016
      %v3023 = vpack.c.b16 %v3019, %v3018
      %v3029 = vsel %vm784, %v2979, 0
      %v3032 = vsel %vm784, %v2980, 0
      %v3035 = vsel %vm784, %v2981, 0
      %v3038 = vsel %vm784, %v2982, 0
      %v3041 = vsel %vm784, %v2983, 0
      %v3044 = vsel %vm784, %v2984, 0
      %v3047 = vsel %vm784, %v2985, 0
      %v3050 = vsel %vm784, %v2986, 0
      %v3053 = vsel %vm784, %v2987, 0
      %v3056 = vsel %vm784, %v2988, 0
      %v3059 = vsel %vm784, %v2989, 0
      %v3062 = vsel %vm784, %v2990, 0
      %v3065 = vsel %vm784, %v2991, 0
      %v3068 = vsel %vm784, %v2992, 0
      %v3071 = vsel %vm784, %v2993, 0
      %v3074 = vsel %vm784, %v2994, 0
      %3076 = vmatprep.subr.bf16.mxu0 0
      %3077 = vmatpush1.bf16.msra.mxu0 0
      %3078 = vmatprep.subr.bf16.mxu0 0
      %3079 = vmatpush1.bf16.msra.mxu0 0
      %3080 = vmatprep.subr.bf16.mxu0 0
      %3081 = vmatpush1.bf16.msra.mxu0 0
      %3082 = vmatprep.subr.bf16.mxu0 0
      %3083 = vmatpush1.bf16.msra.mxu0 0
      %3084 = vmatprep.subr.bf16.mxu0 0
      %3085 = vmatpush1.bf16.msra.mxu0 %v3023
      %3086 = vmatprep.subr.bf16.mxu0 0
      %3087 = vmatpush1.bf16.msra.mxu0 %v3022
      %3088 = vmatprep.subr.bf16.mxu0 0
      %3089 = vmatpush1.bf16.msra.mxu0 %v3021
      %3090 = vmatprep.subr.bf16.mxu0 0
      %3091 = vmatpush1.bf16.msra.mxu0 %v3020
      %3092 = vmatprep.subr.bf16.mxu0 0
      %3093 = vmatpush2.bf16.msra.mxu0 0
      %3094 = vmatprep.subr.bf16.mxu0 0
      %3095 = vmatpush2.bf16.msra.mxu0 0
      %3096 = vmatprep.subr.bf16.mxu0 0
      %3097 = vmatpush2.bf16.msra.mxu0 0
      %3098 = vmatprep.subr.bf16.mxu0 0
      %3099 = vmatpush2.bf16.msra.mxu0 0
      %3100 = vmatprep.subr.bf16.mxu0 0
      %3101 = vmatpush2.bf16.msra.mxu0 0
      %3102 = vmatprep.subr.bf16.mxu0 0
      %3103 = vmatpush2.bf16.msra.mxu0 0
      %3104 = vmatprep.subr.bf16.mxu0 0
      %3105 = vmatpush2.bf16.msra.mxu0 0
      %3106 = vmatprep.subr.bf16.mxu0 0
      %3107 = vmatpush2.bf16.msra.mxu0 0
      %3108 = vmatprep.mubr.bf16.mxu0 0
      %3109 = vmatmul.mubr.bf16.gmra.mxu0 %v3029
      %v3110 = vpop.f32.mrf.mxu0
      %v3111 = vadd.f32 0.0, %v3110
      %v3112 = vpop.f32.mrf.mxu0
      %v3113 = vpop.f32.mrf.mxu0
      %v3114 = vadd.f32 0.0, %v3113
      %v3115 = vpop.f32.mrf.mxu0
      %3116 = vmatprep.mubr.bf16.mxu0 0
      %3117 = vmatmul.mubr.bf16.gmra.mxu0 %v3032
      %v3118 = vpop.f32.mrf.mxu0
      %v3119 = vadd.f32 0.0, %v3118
      %v3120 = vpop.f32.mrf.mxu0
      %v3121 = vpop.f32.mrf.mxu0
      %v3122 = vadd.f32 0.0, %v3121
      %v3123 = vpop.f32.mrf.mxu0
      %3124 = vmatprep.mubr.bf16.mxu0 0
      %3125 = vmatmul.mubr.bf16.gmra.mxu0 %v3035
      %v3126 = vpop.f32.mrf.mxu0
      %v3127 = vadd.f32 0.0, %v3126
      %v3128 = vpop.f32.mrf.mxu0
      %v3129 = vpop.f32.mrf.mxu0
      %v3130 = vadd.f32 0.0, %v3129
      %v3131 = vpop.f32.mrf.mxu0
      %3132 = vmatprep.mubr.bf16.mxu0 0
      %3133 = vmatmul.mubr.bf16.gmra.mxu0 %v3038
      %v3134 = vpop.f32.mrf.mxu0
      %v3135 = vadd.f32 0.0, %v3134
      %v3136 = vpop.f32.mrf.mxu0
      %v3137 = vpop.f32.mrf.mxu0
      %v3138 = vadd.f32 0.0, %v3137
      %v3139 = vpop.f32.mrf.mxu0
      %3140 = vmatprep.mubr.bf16.mxu0 0
      %3141 = vmatmul.mubr.bf16.gmra.mxu0 %v3041
      %v3142 = vpop.f32.mrf.mxu0
      %v3143 = vadd.f32 0.0, %v3142
      %v3144 = vpop.f32.mrf.mxu0
      %v3145 = vpop.f32.mrf.mxu0
      %v3146 = vadd.f32 0.0, %v3145
      %v3147 = vpop.f32.mrf.mxu0
      %3148 = vmatprep.mubr.bf16.mxu0 0
      %3149 = vmatmul.mubr.bf16.gmra.mxu0 %v3044
      %v3150 = vpop.f32.mrf.mxu0
      %v3151 = vadd.f32 0.0, %v3150
      %v3152 = vpop.f32.mrf.mxu0
      %v3153 = vpop.f32.mrf.mxu0
      %v3154 = vadd.f32 0.0, %v3153
      %v3155 = vpop.f32.mrf.mxu0
      %3156 = vmatprep.mubr.bf16.mxu0 0
      %3157 = vmatmul.mubr.bf16.gmra.mxu0 %v3047
      %v3158 = vpop.f32.mrf.mxu0
      %v3159 = vadd.f32 0.0, %v3158
      %v3160 = vpop.f32.mrf.mxu0
      %v3161 = vpop.f32.mrf.mxu0
      %v3162 = vadd.f32 0.0, %v3161
      %v3163 = vpop.f32.mrf.mxu0
      %3164 = vmatprep.mubr.bf16.mxu0 0
      %3165 = vmatmul.mubr.bf16.gmra.mxu0 %v3050
      %v3166 = vpop.f32.mrf.mxu0
      %v3167 = vadd.f32 0.0, %v3166
      %v3168 = vpop.f32.mrf.mxu0
      %v3169 = vpop.f32.mrf.mxu0
      %v3170 = vadd.f32 0.0, %v3169
      %v3171 = vpop.f32.mrf.mxu0
      %3172 = vmatprep.mubr.bf16.mxu0 0
      %3173 = vmatmul.mubr.bf16.gmra.mxu0 %v3053
      %v3174 = vpop.f32.mrf.mxu0
      %v3175 = vadd.f32 0.0, %v3174
      %v3176 = vpop.f32.mrf.mxu0
      %v3177 = vpop.f32.mrf.mxu0
      %v3178 = vadd.f32 0.0, %v3177
      %v3179 = vpop.f32.mrf.mxu0
      %3180 = vmatprep.mubr.bf16.mxu0 0
      %3181 = vmatmul.mubr.bf16.gmra.mxu0 %v3056
      %v3182 = vpop.f32.mrf.mxu0
      %v3183 = vadd.f32 0.0, %v3182
      %v3184 = vpop.f32.mrf.mxu0
      %v3185 = vpop.f32.mrf.mxu0
      %v3186 = vadd.f32 0.0, %v3185
      %v3187 = vpop.f32.mrf.mxu0
      %3188 = vmatprep.mubr.bf16.mxu0 0
      %3189 = vmatmul.mubr.bf16.gmra.mxu0 %v3059
      %v3190 = vpop.f32.mrf.mxu0
      %v3191 = vadd.f32 0.0, %v3190
      %v3192 = vpop.f32.mrf.mxu0
      %v3193 = vpop.f32.mrf.mxu0
      %v3194 = vadd.f32 0.0, %v3193
      %v3195 = vpop.f32.mrf.mxu0
      %3196 = vmatprep.mubr.bf16.mxu0 0
      %3197 = vmatmul.mubr.bf16.gmra.mxu0 %v3062
      %v3198 = vpop.f32.mrf.mxu0
      %v3199 = vadd.f32 0.0, %v3198
      %v3200 = vpop.f32.mrf.mxu0
      %v3201 = vpop.f32.mrf.mxu0
      %v3202 = vadd.f32 0.0, %v3201
      %v3203 = vpop.f32.mrf.mxu0
      %3204 = vmatprep.mubr.bf16.mxu0 0
      %3205 = vmatmul.mubr.bf16.gmra.mxu0 %v3065
      %v3206 = vpop.f32.mrf.mxu0
      %v3207 = vadd.f32 0.0, %v3206
      %v3208 = vpop.f32.mrf.mxu0
      %v3209 = vpop.f32.mrf.mxu0
      %v3210 = vadd.f32 0.0, %v3209
      %v3211 = vpop.f32.mrf.mxu0
      %3212 = vmatprep.mubr.bf16.mxu0 0
      %3213 = vmatmul.mubr.bf16.gmra.mxu0 %v3068
      %v3214 = vpop.f32.mrf.mxu0
      %v3215 = vadd.f32 0.0, %v3214
      %v3216 = vpop.f32.mrf.mxu0
      %v3217 = vpop.f32.mrf.mxu0
      %v3218 = vadd.f32 0.0, %v3217
      %v3219 = vpop.f32.mrf.mxu0
      %3220 = vmatprep.mubr.bf16.mxu0 0
      %3221 = vmatmul.mubr.bf16.gmra.mxu0 %v3071
      %v3222 = vpop.f32.mrf.mxu0
      %v3223 = vadd.f32 0.0, %v3222
      %v3224 = vpop.f32.mrf.mxu0
      %v3225 = vpop.f32.mrf.mxu0
      %v3226 = vadd.f32 0.0, %v3225
      %v3227 = vpop.f32.mrf.mxu0
      %3228 = vmatprep.mubr.bf16.mxu0 0
      %3229 = vmatmul.mubr.bf16.gmra.mxu0 %v3074
      %v3230 = vpop.f32.mrf.mxu0
      %v3231 = vadd.f32 0.0, %v3230
      %v3232 = vpop.f32.mrf.mxu0
      %v3233 = vpop.f32.mrf.mxu0
      %v3234 = vadd.f32 0.0, %v3233
      %v3235 = vpop.f32.mrf.mxu0
      %3236 = vdwg.mxu0
      %v3237 = vadd.f32 %v2914, %v3111
      %v3238 = vadd.f32 %v2915, %v3114
      %v3239 = vadd.f32 %v2916, %v3119
      %v3240 = vadd.f32 %v2917, %v3122
      %v3241 = vadd.f32 %v2918, %v3127
      %v3242 = vadd.f32 %v2919, %v3130
      %v3243 = vadd.f32 %v2920, %v3135
      %v3244 = vadd.f32 %v2921, %v3138
      %v3245 = vadd.f32 %v2922, %v3143
      %v3246 = vadd.f32 %v2923, %v3146
      %v3247 = vadd.f32 %v2924, %v3151
      %v3248 = vadd.f32 %v2925, %v3154
      %v3249 = vadd.f32 %v2926, %v3159
      %v3250 = vadd.f32 %v2927, %v3162
      %v3251 = vadd.f32 %v2928, %v3167
      %v3252 = vadd.f32 %v2929, %v3170
      %v3253 = vadd.f32 %v2930, %v3175
      %v3254 = vadd.f32 %v2931, %v3178
      %v3255 = vadd.f32 %v2932, %v3183
      %v3256 = vadd.f32 %v2933, %v3186
      %v3257 = vadd.f32 %v2934, %v3191
      %v3258 = vadd.f32 %v2935, %v3194
      %v3259 = vadd.f32 %v2936, %v3199
      %v3260 = vadd.f32 %v2937, %v3202
      %v3261 = vadd.f32 %v2938, %v3207
      %v3262 = vadd.f32 %v2939, %v3210
      %v3263 = vadd.f32 %v2940, %v3215
      %v3264 = vadd.f32 %v2941, %v3218
      %v3265 = vadd.f32 %v2942, %v3223
      %v3266 = vadd.f32 %v2943, %v3226
      %v3267 = vadd.f32 %v2944, %v3231
      %v3268 = vadd.f32 %v2945, %v3234
      %v3269 = vld [vmem:[%s2946 + $0x1] sm:$0xff]
      %v3270 = vld [vmem:[%s2946 + $0x9] sm:$0xff]
      %v3271 = vld [vmem:[%s2946 + $0x19] sm:$0xff]
      %v3272 = vld [vmem:[%s2946 + $0x21] sm:$0xff]
      %v3273 = vld [vmem:[%s2946 + $0x31] sm:$0xff]
      %v3274 = vld [vmem:[%s2946 + $0x39] sm:$0xff]
      %v3275 = vld [vmem:[%s2946 + $0x49] sm:$0xff]
      %v3276 = vld [vmem:[%s2946 + $0x51] sm:$0xff]
      %v3277 = vld [vmem:[%s2946 + $0x61] sm:$0xff]
      %v3278 = vld [vmem:[%s2946 + $0x69] sm:$0xff]
      %v3279 = vld [vmem:[%s2946 + $0x79] sm:$0xff]
      %v3280 = vld [vmem:[%s2946 + $0x81] sm:$0xff]
      %v3281 = vld [vmem:[%s2946 + $0x91] sm:$0xff]
      %v3282 = vld [vmem:[%s2946 + $0x99] sm:$0xff]
      %v3283 = vld [vmem:[%s2946 + $0xa9] sm:$0xff]
      %v3284 = vld [vmem:[%s2946 + $0xb1] sm:$0xff]
      %v3285 = vld [vmem:[%s2946 + $0xc1] sm:$0xff]
      %v3286 = vld [vmem:[%s2946 + $0xc9] sm:$0xff]
      %v3287 = vld [vmem:[%s2946 + $0xd9] sm:$0xff]
      %v3288 = vld [vmem:[%s2946 + $0xe1] sm:$0xff]
      %v3289 = vld [vmem:[%s2946 + $0xf1] sm:$0xff]
      %v3290 = vld [vmem:[%s2946 + $0xf9] sm:$0xff]
      %v3291 = vld [vmem:[%s2946 + $0x109] sm:$0xff]
      %v3292 = vld [vmem:[%s2946 + $0x111] sm:$0xff]
      %v3293 = vld [vmem:[%s2946 + $0x121] sm:$0xff]
      %v3294 = vld [vmem:[%s2946 + $0x129] sm:$0xff]
      %v3295 = vld [vmem:[%s2946 + $0x139] sm:$0xff]
      %v3296 = vld [vmem:[%s2946 + $0x141] sm:$0xff]
      %v3297 = vld [vmem:[%s2946 + $0x151] sm:$0xff]
      %v3298 = vld [vmem:[%s2946 + $0x159] sm:$0xff]
      %v3299 = vld [vmem:[%s2946 + $0x169] sm:$0xff]
      %v3300 = vld [vmem:[%s2946 + $0x171] sm:$0xff]
      %v3301 = vpack.c.bf16 %v3270, %v3269
      %v3302 = vpack.c.bf16 %v3272, %v3271
      %v3303 = vpack.c.bf16 %v3274, %v3273
      %v3304 = vpack.c.bf16 %v3276, %v3275
      %v3305 = vpack.c.bf16 %v3278, %v3277
      %v3306 = vpack.c.bf16 %v3280, %v3279
      %v3307 = vpack.c.bf16 %v3282, %v3281
      %v3308 = vpack.c.bf16 %v3284, %v3283
      %v3309 = vpack.c.bf16 %v3286, %v3285
      %v3310 = vpack.c.bf16 %v3288, %v3287
      %v3311 = vpack.c.bf16 %v3290, %v3289
      %v3312 = vpack.c.bf16 %v3292, %v3291
      %v3313 = vpack.c.bf16 %v3294, %v3293
      %v3314 = vpack.c.bf16 %v3296, %v3295
      %v3315 = vpack.c.bf16 %v3298, %v3297
      %v3316 = vpack.c.bf16 %v3300, %v3299
      %s3317 = scalar_lea.vmem %s2, 224
      %v3318 = vld [vmem:[%s3317] sm:$0xf]
      %v3319 = vld [vmem:[%s3317 + $0x4] sm:$0xf]
      %v3320 = vld [vmem:[%s3317 + $0x8] sm:$0xf]
      %v3321 = vld [vmem:[%s3317 + $0xc] sm:$0xf]
      %v3322 = vld [vmem:[%s3317 + $0x10] sm:$0xf]
      %v3323 = vld [vmem:[%s3317 + $0x14] sm:$0xf]
      %v3324 = vld [vmem:[%s3317 + $0x18] sm:$0xf]
      %v3325 = vld [vmem:[%s3317 + $0x1c] sm:$0xf]
      %v3334 = vunpack.c.l.b16 %v3318
      %v3335 = vunpack.c.l.b16 %v3319
      %v3336 = vunpack.c.l.b16 %v3320
      %v3337 = vunpack.c.l.b16 %v3321
      %v3338 = vunpack.c.l.b16 %v3322
      %v3339 = vunpack.c.l.b16 %v3323
      %v3340 = vunpack.c.l.b16 %v3324
      %v3341 = vunpack.c.l.b16 %v3325
      %v3342 = vpack.c.b16 %v3335, %v3334
      %v3343 = vpack.c.b16 %v3337, %v3336
      %v3344 = vpack.c.b16 %v3339, %v3338
      %v3345 = vpack.c.b16 %v3341, %v3340
      %v3351 = vsel %vm784, %v3301, 0
      %v3354 = vsel %vm784, %v3302, 0
      %v3357 = vsel %vm784, %v3303, 0
      %v3360 = vsel %vm784, %v3304, 0
      %v3363 = vsel %vm784, %v3305, 0
      %v3366 = vsel %vm784, %v3306, 0
      %v3369 = vsel %vm784, %v3307, 0
      %v3372 = vsel %vm784, %v3308, 0
      %v3375 = vsel %vm784, %v3309, 0
      %v3378 = vsel %vm784, %v3310, 0
      %v3381 = vsel %vm784, %v3311, 0
      %v3384 = vsel %vm784, %v3312, 0
      %v3387 = vsel %vm784, %v3313, 0
      %v3390 = vsel %vm784, %v3314, 0
      %v3393 = vsel %vm784, %v3315, 0
      %v3396 = vsel %vm784, %v3316, 0
      %3398 = vmatprep.subr.bf16.mxu0 0
      %3399 = vmatpush1.bf16.msra.mxu0 0
      %3400 = vmatprep.subr.bf16.mxu0 0
      %3401 = vmatpush1.bf16.msra.mxu0 0
      %3402 = vmatprep.subr.bf16.mxu0 0
      %3403 = vmatpush1.bf16.msra.mxu0 0
      %3404 = vmatprep.subr.bf16.mxu0 0
      %3405 = vmatpush1.bf16.msra.mxu0 0
      %3406 = vmatprep.subr.bf16.mxu0 0
      %3407 = vmatpush1.bf16.msra.mxu0 %v3345
      %3408 = vmatprep.subr.bf16.mxu0 0
      %3409 = vmatpush1.bf16.msra.mxu0 %v3344
      %3410 = vmatprep.subr.bf16.mxu0 0
      %3411 = vmatpush1.bf16.msra.mxu0 %v3343
      %3412 = vmatprep.subr.bf16.mxu0 0
      %3413 = vmatpush1.bf16.msra.mxu0 %v3342
      %3414 = vmatprep.subr.bf16.mxu0 0
      %3415 = vmatpush2.bf16.msra.mxu0 0
      %3416 = vmatprep.subr.bf16.mxu0 0
      %3417 = vmatpush2.bf16.msra.mxu0 0
      %3418 = vmatprep.subr.bf16.mxu0 0
      %3419 = vmatpush2.bf16.msra.mxu0 0
      %3420 = vmatprep.subr.bf16.mxu0 0
      %3421 = vmatpush2.bf16.msra.mxu0 0
      %3422 = vmatprep.subr.bf16.mxu0 0
      %3423 = vmatpush2.bf16.msra.mxu0 0
      %3424 = vmatprep.subr.bf16.mxu0 0
      %3425 = vmatpush2.bf16.msra.mxu0 0
      %3426 = vmatprep.subr.bf16.mxu0 0
      %3427 = vmatpush2.bf16.msra.mxu0 0
      %3428 = vmatprep.subr.bf16.mxu0 0
      %3429 = vmatpush2.bf16.msra.mxu0 0
      %3430 = vmatprep.mubr.bf16.mxu0 0
      %3431 = vmatmul.mubr.bf16.gmra.mxu0 %v3351
      %v3432 = vpop.f32.mrf.mxu0
      %v3433 = vadd.f32 0.0, %v3432
      %v3434 = vpop.f32.mrf.mxu0
      %v3435 = vpop.f32.mrf.mxu0
      %v3436 = vadd.f32 0.0, %v3435
      %v3437 = vpop.f32.mrf.mxu0
      %3438 = vmatprep.mubr.bf16.mxu0 0
      %3439 = vmatmul.mubr.bf16.gmra.mxu0 %v3354
      %v3440 = vpop.f32.mrf.mxu0
      %v3441 = vadd.f32 0.0, %v3440
      %v3442 = vpop.f32.mrf.mxu0
      %v3443 = vpop.f32.mrf.mxu0
      %v3444 = vadd.f32 0.0, %v3443
      %v3445 = vpop.f32.mrf.mxu0
      %3446 = vmatprep.mubr.bf16.mxu0 0
      %3447 = vmatmul.mubr.bf16.gmra.mxu0 %v3357
      %v3448 = vpop.f32.mrf.mxu0
      %v3449 = vadd.f32 0.0, %v3448
      %v3450 = vpop.f32.mrf.mxu0
      %v3451 = vpop.f32.mrf.mxu0
      %v3452 = vadd.f32 0.0, %v3451
      %v3453 = vpop.f32.mrf.mxu0
      %3454 = vmatprep.mubr.bf16.mxu0 0
      %3455 = vmatmul.mubr.bf16.gmra.mxu0 %v3360
      %v3456 = vpop.f32.mrf.mxu0
      %v3457 = vadd.f32 0.0, %v3456
      %v3458 = vpop.f32.mrf.mxu0
      %v3459 = vpop.f32.mrf.mxu0
      %v3460 = vadd.f32 0.0, %v3459
      %v3461 = vpop.f32.mrf.mxu0
      %3462 = vmatprep.mubr.bf16.mxu0 0
      %3463 = vmatmul.mubr.bf16.gmra.mxu0 %v3363
      %v3464 = vpop.f32.mrf.mxu0
      %v3465 = vadd.f32 0.0, %v3464
      %v3466 = vpop.f32.mrf.mxu0
      %v3467 = vpop.f32.mrf.mxu0
      %v3468 = vadd.f32 0.0, %v3467
      %v3469 = vpop.f32.mrf.mxu0
      %3470 = vmatprep.mubr.bf16.mxu0 0
      %3471 = vmatmul.mubr.bf16.gmra.mxu0 %v3366
      %v3472 = vpop.f32.mrf.mxu0
      %v3473 = vadd.f32 0.0, %v3472
      %v3474 = vpop.f32.mrf.mxu0
      %v3475 = vpop.f32.mrf.mxu0
      %v3476 = vadd.f32 0.0, %v3475
      %v3477 = vpop.f32.mrf.mxu0
      %3478 = vmatprep.mubr.bf16.mxu0 0
      %3479 = vmatmul.mubr.bf16.gmra.mxu0 %v3369
      %v3480 = vpop.f32.mrf.mxu0
      %v3481 = vadd.f32 0.0, %v3480
      %v3482 = vpop.f32.mrf.mxu0
      %v3483 = vpop.f32.mrf.mxu0
      %v3484 = vadd.f32 0.0, %v3483
      %v3485 = vpop.f32.mrf.mxu0
      %3486 = vmatprep.mubr.bf16.mxu0 0
      %3487 = vmatmul.mubr.bf16.gmra.mxu0 %v3372
      %v3488 = vpop.f32.mrf.mxu0
      %v3489 = vadd.f32 0.0, %v3488
      %v3490 = vpop.f32.mrf.mxu0
      %v3491 = vpop.f32.mrf.mxu0
      %v3492 = vadd.f32 0.0, %v3491
      %v3493 = vpop.f32.mrf.mxu0
      %3494 = vmatprep.mubr.bf16.mxu0 0
      %3495 = vmatmul.mubr.bf16.gmra.mxu0 %v3375
      %v3496 = vpop.f32.mrf.mxu0
      %v3497 = vadd.f32 0.0, %v3496
      %v3498 = vpop.f32.mrf.mxu0
      %v3499 = vpop.f32.mrf.mxu0
      %v3500 = vadd.f32 0.0, %v3499
      %v3501 = vpop.f32.mrf.mxu0
      %3502 = vmatprep.mubr.bf16.mxu0 0
      %3503 = vmatmul.mubr.bf16.gmra.mxu0 %v3378
      %v3504 = vpop.f32.mrf.mxu0
      %v3505 = vadd.f32 0.0, %v3504
      %v3506 = vpop.f32.mrf.mxu0
      %v3507 = vpop.f32.mrf.mxu0
      %v3508 = vadd.f32 0.0, %v3507
      %v3509 = vpop.f32.mrf.mxu0
      %3510 = vmatprep.mubr.bf16.mxu0 0
      %3511 = vmatmul.mubr.bf16.gmra.mxu0 %v3381
      %v3512 = vpop.f32.mrf.mxu0
      %v3513 = vadd.f32 0.0, %v3512
      %v3514 = vpop.f32.mrf.mxu0
      %v3515 = vpop.f32.mrf.mxu0
      %v3516 = vadd.f32 0.0, %v3515
      %v3517 = vpop.f32.mrf.mxu0
      %3518 = vmatprep.mubr.bf16.mxu0 0
      %3519 = vmatmul.mubr.bf16.gmra.mxu0 %v3384
      %v3520 = vpop.f32.mrf.mxu0
      %v3521 = vadd.f32 0.0, %v3520
      %v3522 = vpop.f32.mrf.mxu0
      %v3523 = vpop.f32.mrf.mxu0
      %v3524 = vadd.f32 0.0, %v3523
      %v3525 = vpop.f32.mrf.mxu0
      %3526 = vmatprep.mubr.bf16.mxu0 0
      %3527 = vmatmul.mubr.bf16.gmra.mxu0 %v3387
      %v3528 = vpop.f32.mrf.mxu0
      %v3529 = vadd.f32 0.0, %v3528
      %v3530 = vpop.f32.mrf.mxu0
      %v3531 = vpop.f32.mrf.mxu0
      %v3532 = vadd.f32 0.0, %v3531
      %v3533 = vpop.f32.mrf.mxu0
      %3534 = vmatprep.mubr.bf16.mxu0 0
      %3535 = vmatmul.mubr.bf16.gmra.mxu0 %v3390
      %v3536 = vpop.f32.mrf.mxu0
      %v3537 = vadd.f32 0.0, %v3536
      %v3538 = vpop.f32.mrf.mxu0
      %v3539 = vpop.f32.mrf.mxu0
      %v3540 = vadd.f32 0.0, %v3539
      %v3541 = vpop.f32.mrf.mxu0
      %3542 = vmatprep.mubr.bf16.mxu0 0
      %3543 = vmatmul.mubr.bf16.gmra.mxu0 %v3393
      %v3544 = vpop.f32.mrf.mxu0
      %v3545 = vadd.f32 0.0, %v3544
      %v3546 = vpop.f32.mrf.mxu0
      %v3547 = vpop.f32.mrf.mxu0
      %v3548 = vadd.f32 0.0, %v3547
      %v3549 = vpop.f32.mrf.mxu0
      %3550 = vmatprep.mubr.bf16.mxu0 0
      %3551 = vmatmul.mubr.bf16.gmra.mxu0 %v3396
      %v3552 = vpop.f32.mrf.mxu0
      %v3553 = vadd.f32 0.0, %v3552
      %v3554 = vpop.f32.mrf.mxu0
      %v3555 = vpop.f32.mrf.mxu0
      %v3556 = vadd.f32 0.0, %v3555
      %v3557 = vpop.f32.mrf.mxu0
      %3558 = vdwg.mxu0
      %v3559 = vadd.f32 %v3237, %v3433
      %v3560 = vadd.f32 %v3238, %v3436
      %v3561 = vadd.f32 %v3239, %v3441
      %v3562 = vadd.f32 %v3240, %v3444
      %v3563 = vadd.f32 %v3241, %v3449
      %v3564 = vadd.f32 %v3242, %v3452
      %v3565 = vadd.f32 %v3243, %v3457
      %v3566 = vadd.f32 %v3244, %v3460
      %v3567 = vadd.f32 %v3245, %v3465
      %v3568 = vadd.f32 %v3246, %v3468
      %v3569 = vadd.f32 %v3247, %v3473
      %v3570 = vadd.f32 %v3248, %v3476
      %v3571 = vadd.f32 %v3249, %v3481
      %v3572 = vadd.f32 %v3250, %v3484
      %v3573 = vadd.f32 %v3251, %v3489
      %v3574 = vadd.f32 %v3252, %v3492
      %v3575 = vadd.f32 %v3253, %v3497
      %v3576 = vadd.f32 %v3254, %v3500
      %v3577 = vadd.f32 %v3255, %v3505
      %v3578 = vadd.f32 %v3256, %v3508
      %v3579 = vadd.f32 %v3257, %v3513
      %v3580 = vadd.f32 %v3258, %v3516
      %v3581 = vadd.f32 %v3259, %v3521
      %v3582 = vadd.f32 %v3260, %v3524
      %v3583 = vadd.f32 %v3261, %v3529
      %v3584 = vadd.f32 %v3262, %v3532
      %v3585 = vadd.f32 %v3263, %v3537
      %v3586 = vadd.f32 %v3264, %v3540
      %v3587 = vadd.f32 %v3265, %v3545
      %v3588 = vadd.f32 %v3266, %v3548
      %v3589 = vadd.f32 %v3267, %v3553
      %v3590 = vadd.f32 %v3268, %v3556
      %v3591 = vld [vmem:[%s2946 + $0x2] sm:$0xff]
      %v3592 = vld [vmem:[%s2946 + $0xa] sm:$0xff]
      %v3593 = vld [vmem:[%s2946 + $0x1a] sm:$0xff]
      %v3594 = vld [vmem:[%s2946 + $0x22] sm:$0xff]
      %v3595 = vld [vmem:[%s2946 + $0x32] sm:$0xff]
      %v3596 = vld [vmem:[%s2946 + $0x3a] sm:$0xff]
      %v3597 = vld [vmem:[%s2946 + $0x4a] sm:$0xff]
      %v3598 = vld [vmem:[%s2946 + $0x52] sm:$0xff]
      %v3599 = vld [vmem:[%s2946 + $0x62] sm:$0xff]
      %v3600 = vld [vmem:[%s2946 + $0x6a] sm:$0xff]
      %v3601 = vld [vmem:[%s2946 + $0x7a] sm:$0xff]
      %v3602 = vld [vmem:[%s2946 + $0x82] sm:$0xff]
      %v3603 = vld [vmem:[%s2946 + $0x92] sm:$0xff]
      %v3604 = vld [vmem:[%s2946 + $0x9a] sm:$0xff]
      %v3605 = vld [vmem:[%s2946 + $0xaa] sm:$0xff]
      %v3606 = vld [vmem:[%s2946 + $0xb2] sm:$0xff]
      %v3607 = vld [vmem:[%s2946 + $0xc2] sm:$0xff]
      %v3608 = vld [vmem:[%s2946 + $0xca] sm:$0xff]
      %v3609 = vld [vmem:[%s2946 + $0xda] sm:$0xff]
      %v3610 = vld [vmem:[%s2946 + $0xe2] sm:$0xff]
      %v3611 = vld [vmem:[%s2946 + $0xf2] sm:$0xff]
      %v3612 = vld [vmem:[%s2946 + $0xfa] sm:$0xff]
      %v3613 = vld [vmem:[%s2946 + $0x10a] sm:$0xff]
      %v3614 = vld [vmem:[%s2946 + $0x112] sm:$0xff]
      %v3615 = vld [vmem:[%s2946 + $0x122] sm:$0xff]
      %v3616 = vld [vmem:[%s2946 + $0x12a] sm:$0xff]
      %v3617 = vld [vmem:[%s2946 + $0x13a] sm:$0xff]
      %v3618 = vld [vmem:[%s2946 + $0x142] sm:$0xff]
      %v3619 = vld [vmem:[%s2946 + $0x152] sm:$0xff]
      %v3620 = vld [vmem:[%s2946 + $0x15a] sm:$0xff]
      %v3621 = vld [vmem:[%s2946 + $0x16a] sm:$0xff]
      %v3622 = vld [vmem:[%s2946 + $0x172] sm:$0xff]
      %v3623 = vpack.c.bf16 %v3592, %v3591
      %v3624 = vpack.c.bf16 %v3594, %v3593
      %v3625 = vpack.c.bf16 %v3596, %v3595
      %v3626 = vpack.c.bf16 %v3598, %v3597
      %v3627 = vpack.c.bf16 %v3600, %v3599
      %v3628 = vpack.c.bf16 %v3602, %v3601
      %v3629 = vpack.c.bf16 %v3604, %v3603
      %v3630 = vpack.c.bf16 %v3606, %v3605
      %v3631 = vpack.c.bf16 %v3608, %v3607
      %v3632 = vpack.c.bf16 %v3610, %v3609
      %v3633 = vpack.c.bf16 %v3612, %v3611
      %v3634 = vpack.c.bf16 %v3614, %v3613
      %v3635 = vpack.c.bf16 %v3616, %v3615
      %v3636 = vpack.c.bf16 %v3618, %v3617
      %v3637 = vpack.c.bf16 %v3620, %v3619
      %v3638 = vpack.c.bf16 %v3622, %v3621
      %s3639 = scalar_lea.vmem %s2, 256
      %v3640 = vld [vmem:[%s3639] sm:$0xf]
      %v3641 = vld [vmem:[%s3639 + $0x4] sm:$0xf]
      %v3642 = vld [vmem:[%s3639 + $0x8] sm:$0xf]
      %v3643 = vld [vmem:[%s3639 + $0xc] sm:$0xf]
      %v3644 = vld [vmem:[%s3639 + $0x10] sm:$0xf]
      %v3645 = vld [vmem:[%s3639 + $0x14] sm:$0xf]
      %v3646 = vld [vmem:[%s3639 + $0x18] sm:$0xf]
      %v3647 = vld [vmem:[%s3639 + $0x1c] sm:$0xf]
      %v3656 = vunpack.c.l.b16 %v3640
      %v3657 = vunpack.c.l.b16 %v3641
      %v3658 = vunpack.c.l.b16 %v3642
      %v3659 = vunpack.c.l.b16 %v3643
      %v3660 = vunpack.c.l.b16 %v3644
      %v3661 = vunpack.c.l.b16 %v3645
      %v3662 = vunpack.c.l.b16 %v3646
      %v3663 = vunpack.c.l.b16 %v3647
      %v3664 = vpack.c.b16 %v3657, %v3656
      %v3665 = vpack.c.b16 %v3659, %v3658
      %v3666 = vpack.c.b16 %v3661, %v3660
      %v3667 = vpack.c.b16 %v3663, %v3662
      %v3673 = vsel %vm784, %v3623, 0
      %v3676 = vsel %vm784, %v3624, 0
      %v3679 = vsel %vm784, %v3625, 0
      %v3682 = vsel %vm784, %v3626, 0
      %v3685 = vsel %vm784, %v3627, 0
      %v3688 = vsel %vm784, %v3628, 0
      %v3691 = vsel %vm784, %v3629, 0
      %v3694 = vsel %vm784, %v3630, 0
      %v3697 = vsel %vm784, %v3631, 0
      %v3700 = vsel %vm784, %v3632, 0
      %v3703 = vsel %vm784, %v3633, 0
      %v3706 = vsel %vm784, %v3634, 0
      %v3709 = vsel %vm784, %v3635, 0
      %v3712 = vsel %vm784, %v3636, 0
      %v3715 = vsel %vm784, %v3637, 0
      %v3718 = vsel %vm784, %v3638, 0
      %3720 = vmatprep.subr.bf16.mxu0 0
      %3721 = vmatpush1.bf16.msra.mxu0 0
      %3722 = vmatprep.subr.bf16.mxu0 0
      %3723 = vmatpush1.bf16.msra.mxu0 0
      %3724 = vmatprep.subr.bf16.mxu0 0
      %3725 = vmatpush1.bf16.msra.mxu0 0
      %3726 = vmatprep.subr.bf16.mxu0 0
      %3727 = vmatpush1.bf16.msra.mxu0 0
      %3728 = vmatprep.subr.bf16.mxu0 0
      %3729 = vmatpush1.bf16.msra.mxu0 %v3667
      %3730 = vmatprep.subr.bf16.mxu0 0
      %3731 = vmatpush1.bf16.msra.mxu0 %v3666
      %3732 = vmatprep.subr.bf16.mxu0 0
      %3733 = vmatpush1.bf16.msra.mxu0 %v3665
      %3734 = vmatprep.subr.bf16.mxu0 0
      %3735 = vmatpush1.bf16.msra.mxu0 %v3664
      %3736 = vmatprep.subr.bf16.mxu0 0
      %3737 = vmatpush2.bf16.msra.mxu0 0
      %3738 = vmatprep.subr.bf16.mxu0 0
      %3739 = vmatpush2.bf16.msra.mxu0 0
      %3740 = vmatprep.subr.bf16.mxu0 0
      %3741 = vmatpush2.bf16.msra.mxu0 0
      %3742 = vmatprep.subr.bf16.mxu0 0
      %3743 = vmatpush2.bf16.msra.mxu0 0
      %3744 = vmatprep.subr.bf16.mxu0 0
      %3745 = vmatpush2.bf16.msra.mxu0 0
      %3746 = vmatprep.subr.bf16.mxu0 0
      %3747 = vmatpush2.bf16.msra.mxu0 0
      %3748 = vmatprep.subr.bf16.mxu0 0
      %3749 = vmatpush2.bf16.msra.mxu0 0
      %3750 = vmatprep.subr.bf16.mxu0 0
      %3751 = vmatpush2.bf16.msra.mxu0 0
      %3752 = vmatprep.mubr.bf16.mxu0 0
      %3753 = vmatmul.mubr.bf16.gmra.mxu0 %v3673
      %v3754 = vpop.f32.mrf.mxu0
      %v3755 = vadd.f32 0.0, %v3754
      %v3756 = vpop.f32.mrf.mxu0
      %v3757 = vpop.f32.mrf.mxu0
      %v3758 = vadd.f32 0.0, %v3757
      %v3759 = vpop.f32.mrf.mxu0
      %3760 = vmatprep.mubr.bf16.mxu0 0
      %3761 = vmatmul.mubr.bf16.gmra.mxu0 %v3676
      %v3762 = vpop.f32.mrf.mxu0
      %v3763 = vadd.f32 0.0, %v3762
      %v3764 = vpop.f32.mrf.mxu0
      %v3765 = vpop.f32.mrf.mxu0
      %v3766 = vadd.f32 0.0, %v3765
      %v3767 = vpop.f32.mrf.mxu0
      %3768 = vmatprep.mubr.bf16.mxu0 0
      %3769 = vmatmul.mubr.bf16.gmra.mxu0 %v3679
      %v3770 = vpop.f32.mrf.mxu0
      %v3771 = vadd.f32 0.0, %v3770
      %v3772 = vpop.f32.mrf.mxu0
      %v3773 = vpop.f32.mrf.mxu0
      %v3774 = vadd.f32 0.0, %v3773
      %v3775 = vpop.f32.mrf.mxu0
      %3776 = vmatprep.mubr.bf16.mxu0 0
      %3777 = vmatmul.mubr.bf16.gmra.mxu0 %v3682
      %v3778 = vpop.f32.mrf.mxu0
      %v3779 = vadd.f32 0.0, %v3778
      %v3780 = vpop.f32.mrf.mxu0
      %v3781 = vpop.f32.mrf.mxu0
      %v3782 = vadd.f32 0.0, %v3781
      %v3783 = vpop.f32.mrf.mxu0
      %3784 = vmatprep.mubr.bf16.mxu0 0
      %3785 = vmatmul.mubr.bf16.gmra.mxu0 %v3685
      %v3786 = vpop.f32.mrf.mxu0
      %v3787 = vadd.f32 0.0, %v3786
      %v3788 = vpop.f32.mrf.mxu0
      %v3789 = vpop.f32.mrf.mxu0
      %v3790 = vadd.f32 0.0, %v3789
      %v3791 = vpop.f32.mrf.mxu0
      %3792 = vmatprep.mubr.bf16.mxu0 0
      %3793 = vmatmul.mubr.bf16.gmra.mxu0 %v3688
      %v3794 = vpop.f32.mrf.mxu0
      %v3795 = vadd.f32 0.0, %v3794
      %v3796 = vpop.f32.mrf.mxu0
      %v3797 = vpop.f32.mrf.mxu0
      %v3798 = vadd.f32 0.0, %v3797
      %v3799 = vpop.f32.mrf.mxu0
      %3800 = vmatprep.mubr.bf16.mxu0 0
      %3801 = vmatmul.mubr.bf16.gmra.mxu0 %v3691
      %v3802 = vpop.f32.mrf.mxu0
      %v3803 = vadd.f32 0.0, %v3802
      %v3804 = vpop.f32.mrf.mxu0
      %v3805 = vpop.f32.mrf.mxu0
      %v3806 = vadd.f32 0.0, %v3805
      %v3807 = vpop.f32.mrf.mxu0
      %3808 = vmatprep.mubr.bf16.mxu0 0
      %3809 = vmatmul.mubr.bf16.gmra.mxu0 %v3694
      %v3810 = vpop.f32.mrf.mxu0
      %v3811 = vadd.f32 0.0, %v3810
      %v3812 = vpop.f32.mrf.mxu0
      %v3813 = vpop.f32.mrf.mxu0
      %v3814 = vadd.f32 0.0, %v3813
      %v3815 = vpop.f32.mrf.mxu0
      %3816 = vmatprep.mubr.bf16.mxu0 0
      %3817 = vmatmul.mubr.bf16.gmra.mxu0 %v3697
      %v3818 = vpop.f32.mrf.mxu0
      %v3819 = vadd.f32 0.0, %v3818
      %v3820 = vpop.f32.mrf.mxu0
      %v3821 = vpop.f32.mrf.mxu0
      %v3822 = vadd.f32 0.0, %v3821
      %v3823 = vpop.f32.mrf.mxu0
      %3824 = vmatprep.mubr.bf16.mxu0 0
      %3825 = vmatmul.mubr.bf16.gmra.mxu0 %v3700
      %v3826 = vpop.f32.mrf.mxu0
      %v3827 = vadd.f32 0.0, %v3826
      %v3828 = vpop.f32.mrf.mxu0
      %v3829 = vpop.f32.mrf.mxu0
      %v3830 = vadd.f32 0.0, %v3829
      %v3831 = vpop.f32.mrf.mxu0
      %3832 = vmatprep.mubr.bf16.mxu0 0
      %3833 = vmatmul.mubr.bf16.gmra.mxu0 %v3703
      %v3834 = vpop.f32.mrf.mxu0
      %v3835 = vadd.f32 0.0, %v3834
      %v3836 = vpop.f32.mrf.mxu0
      %v3837 = vpop.f32.mrf.mxu0
      %v3838 = vadd.f32 0.0, %v3837
      %v3839 = vpop.f32.mrf.mxu0
      %3840 = vmatprep.mubr.bf16.mxu0 0
      %3841 = vmatmul.mubr.bf16.gmra.mxu0 %v3706
      %v3842 = vpop.f32.mrf.mxu0
      %v3843 = vadd.f32 0.0, %v3842
      %v3844 = vpop.f32.mrf.mxu0
      %v3845 = vpop.f32.mrf.mxu0
      %v3846 = vadd.f32 0.0, %v3845
      %v3847 = vpop.f32.mrf.mxu0
      %3848 = vmatprep.mubr.bf16.mxu0 0
      %3849 = vmatmul.mubr.bf16.gmra.mxu0 %v3709
      %v3850 = vpop.f32.mrf.mxu0
      %v3851 = vadd.f32 0.0, %v3850
      %v3852 = vpop.f32.mrf.mxu0
      %v3853 = vpop.f32.mrf.mxu0
      %v3854 = vadd.f32 0.0, %v3853
      %v3855 = vpop.f32.mrf.mxu0
      %3856 = vmatprep.mubr.bf16.mxu0 0
      %3857 = vmatmul.mubr.bf16.gmra.mxu0 %v3712
      %v3858 = vpop.f32.mrf.mxu0
      %v3859 = vadd.f32 0.0, %v3858
      %v3860 = vpop.f32.mrf.mxu0
      %v3861 = vpop.f32.mrf.mxu0
      %v3862 = vadd.f32 0.0, %v3861
      %v3863 = vpop.f32.mrf.mxu0
      %3864 = vmatprep.mubr.bf16.mxu0 0
      %3865 = vmatmul.mubr.bf16.gmra.mxu0 %v3715
      %v3866 = vpop.f32.mrf.mxu0
      %v3867 = vadd.f32 0.0, %v3866
      %v3868 = vpop.f32.mrf.mxu0
      %v3869 = vpop.f32.mrf.mxu0
      %v3870 = vadd.f32 0.0, %v3869
      %v3871 = vpop.f32.mrf.mxu0
      %3872 = vmatprep.mubr.bf16.mxu0 0
      %3873 = vmatmul.mubr.bf16.gmra.mxu0 %v3718
      %v3874 = vpop.f32.mrf.mxu0
      %v3875 = vadd.f32 0.0, %v3874
      %v3876 = vpop.f32.mrf.mxu0
      %v3877 = vpop.f32.mrf.mxu0
      %v3878 = vadd.f32 0.0, %v3877
      %v3879 = vpop.f32.mrf.mxu0
      %3880 = vdwg.mxu0
      %v3881 = vadd.f32 %v3559, %v3755
      %v3882 = vadd.f32 %v3560, %v3758
      %v3883 = vadd.f32 %v3561, %v3763
      %v3884 = vadd.f32 %v3562, %v3766
      %v3885 = vadd.f32 %v3563, %v3771
      %v3886 = vadd.f32 %v3564, %v3774
      %v3887 = vadd.f32 %v3565, %v3779
      %v3888 = vadd.f32 %v3566, %v3782
      %v3889 = vadd.f32 %v3567, %v3787
      %v3890 = vadd.f32 %v3568, %v3790
      %v3891 = vadd.f32 %v3569, %v3795
      %v3892 = vadd.f32 %v3570, %v3798
      %v3893 = vadd.f32 %v3571, %v3803
      %v3894 = vadd.f32 %v3572, %v3806
      %v3895 = vadd.f32 %v3573, %v3811
      %v3896 = vadd.f32 %v3574, %v3814
      %v3897 = vadd.f32 %v3575, %v3819
      %v3898 = vadd.f32 %v3576, %v3822
      %v3899 = vadd.f32 %v3577, %v3827
      %v3900 = vadd.f32 %v3578, %v3830
      %v3901 = vadd.f32 %v3579, %v3835
      %v3902 = vadd.f32 %v3580, %v3838
      %v3903 = vadd.f32 %v3581, %v3843
      %v3904 = vadd.f32 %v3582, %v3846
      %v3905 = vadd.f32 %v3583, %v3851
      %v3906 = vadd.f32 %v3584, %v3854
      %v3907 = vadd.f32 %v3585, %v3859
      %v3908 = vadd.f32 %v3586, %v3862
      %v3909 = vadd.f32 %v3587, %v3867
      %v3910 = vadd.f32 %v3588, %v3870
      %v3911 = vadd.f32 %v3589, %v3875
      %v3912 = vadd.f32 %v3590, %v3878
      %v3913 = vmul.f32 %v3881, %v3881
      %v3914 = vmul.f32 %v3882, %v3882
      %v3915 = vmul.f32 %v3883, %v3883
      %v3916 = vmul.f32 %v3884, %v3884
      %v3917 = vmul.f32 %v3885, %v3885
      %v3918 = vmul.f32 %v3886, %v3886
      %v3919 = vmul.f32 %v3887, %v3887
      %v3920 = vmul.f32 %v3888, %v3888
      %v3921 = vmul.f32 %v3889, %v3889
      %v3922 = vmul.f32 %v3890, %v3890
      %v3923 = vmul.f32 %v3891, %v3891
      %v3924 = vmul.f32 %v3892, %v3892
      %v3925 = vmul.f32 %v3893, %v3893
      %v3926 = vmul.f32 %v3894, %v3894
      %v3927 = vmul.f32 %v3895, %v3895
      %v3928 = vmul.f32 %v3896, %v3896
      %v3929 = vmul.f32 %v3897, %v3897
      %v3930 = vmul.f32 %v3898, %v3898
      %v3931 = vmul.f32 %v3899, %v3899
      %v3932 = vmul.f32 %v3900, %v3900
      %v3933 = vmul.f32 %v3901, %v3901
      %v3934 = vmul.f32 %v3902, %v3902
      %v3935 = vmul.f32 %v3903, %v3903
      %v3936 = vmul.f32 %v3904, %v3904
      %v3937 = vmul.f32 %v3905, %v3905
      %v3938 = vmul.f32 %v3906, %v3906
      %v3939 = vmul.f32 %v3907, %v3907
      %v3940 = vmul.f32 %v3908, %v3908
      %v3941 = vmul.f32 %v3909, %v3909
      %v3942 = vmul.f32 %v3910, %v3910
      %v3943 = vmul.f32 %v3911, %v3911
      %v3944 = vmul.f32 %v3912, %v3912
      %3977 = vrot.lane.b32.xlu0 %v3913, 64
      %v3978 = vpop.permute.xlu0 %3977
      %3979 = vrot.lane.b32.xlu0 %v3914, 64
      %v3980 = vpop.permute.xlu0 %3979
      %3981 = vrot.lane.b32.xlu0 %v3915, 64
      %v3982 = vpop.permute.xlu0 %3981
      %3983 = vrot.lane.b32.xlu0 %v3916, 64
      %v3984 = vpop.permute.xlu0 %3983
      %3985 = vrot.lane.b32.xlu0 %v3917, 64
      %v3986 = vpop.permute.xlu0 %3985
      %3987 = vrot.lane.b32.xlu0 %v3918, 64
      %v3988 = vpop.permute.xlu0 %3987
      %3989 = vrot.lane.b32.xlu0 %v3919, 64
      %v3990 = vpop.permute.xlu0 %3989
      %3991 = vrot.lane.b32.xlu0 %v3920, 64
      %v3992 = vpop.permute.xlu0 %3991
      %3993 = vrot.lane.b32.xlu0 %v3921, 64
      %v3994 = vpop.permute.xlu0 %3993
      %3995 = vrot.lane.b32.xlu0 %v3922, 64
      %v3996 = vpop.permute.xlu0 %3995
      %3997 = vrot.lane.b32.xlu0 %v3923, 64
      %v3998 = vpop.permute.xlu0 %3997
      %3999 = vrot.lane.b32.xlu0 %v3924, 64
      %v4000 = vpop.permute.xlu0 %3999
      %4001 = vrot.lane.b32.xlu0 %v3925, 64
      %v4002 = vpop.permute.xlu0 %4001
      %4003 = vrot.lane.b32.xlu0 %v3926, 64
      %v4004 = vpop.permute.xlu0 %4003
      %4005 = vrot.lane.b32.xlu0 %v3927, 64
      %v4006 = vpop.permute.xlu0 %4005
      %4007 = vrot.lane.b32.xlu0 %v3928, 64
      %v4008 = vpop.permute.xlu0 %4007
      %4009 = vrot.lane.b32.xlu0 %v3929, 64
      %v4010 = vpop.permute.xlu0 %4009
      %4011 = vrot.lane.b32.xlu0 %v3930, 64
      %v4012 = vpop.permute.xlu0 %4011
      %4013 = vrot.lane.b32.xlu0 %v3931, 64
      %v4014 = vpop.permute.xlu0 %4013
      %4015 = vrot.lane.b32.xlu0 %v3932, 64
      %v4016 = vpop.permute.xlu0 %4015
      %4017 = vrot.lane.b32.xlu0 %v3933, 64
      %v4018 = vpop.permute.xlu0 %4017
      %4019 = vrot.lane.b32.xlu0 %v3934, 64
      %v4020 = vpop.permute.xlu0 %4019
      %4021 = vrot.lane.b32.xlu0 %v3935, 64
      %v4022 = vpop.permute.xlu0 %4021
      %4023 = vrot.lane.b32.xlu0 %v3936, 64
      %v4024 = vpop.permute.xlu0 %4023
      %4025 = vrot.lane.b32.xlu0 %v3937, 64
      %v4026 = vpop.permute.xlu0 %4025
      %4027 = vrot.lane.b32.xlu0 %v3938, 64
      %v4028 = vpop.permute.xlu0 %4027
      %4029 = vrot.lane.b32.xlu0 %v3939, 64
      %v4030 = vpop.permute.xlu0 %4029
      %4031 = vrot.lane.b32.xlu0 %v3940, 64
      %v4032 = vpop.permute.xlu0 %4031
      %4033 = vrot.lane.b32.xlu0 %v3941, 64
      %v4034 = vpop.permute.xlu0 %4033
      %4035 = vrot.lane.b32.xlu0 %v3942, 64
      %v4036 = vpop.permute.xlu0 %4035
      %4037 = vrot.lane.b32.xlu0 %v3943, 64
      %v4038 = vpop.permute.xlu0 %4037
      %4039 = vrot.lane.b32.xlu0 %v3944, 64
      %v4040 = vpop.permute.xlu0 %4039
      %v4073 = vsel %vm784, %v3881, %v3978
      %v4074 = vsel %vm784, %v3882, %v3980
      %v4075 = vsel %vm784, %v3883, %v3982
      %v4076 = vsel %vm784, %v3884, %v3984
      %v4077 = vsel %vm784, %v3885, %v3986
      %v4078 = vsel %vm784, %v3886, %v3988
      %v4079 = vsel %vm784, %v3887, %v3990
      %v4080 = vsel %vm784, %v3888, %v3992
      %v4081 = vsel %vm784, %v3889, %v3994
      %v4082 = vsel %vm784, %v3890, %v3996
      %v4083 = vsel %vm784, %v3891, %v3998
      %v4084 = vsel %vm784, %v3892, %v4000
      %v4085 = vsel %vm784, %v3893, %v4002
      %v4086 = vsel %vm784, %v3894, %v4004
      %v4087 = vsel %vm784, %v3895, %v4006
      %v4088 = vsel %vm784, %v3896, %v4008
      %v4089 = vsel %vm784, %v3897, %v4010
      %v4090 = vsel %vm784, %v3898, %v4012
      %v4091 = vsel %vm784, %v3899, %v4014
      %v4092 = vsel %vm784, %v3900, %v4016
      %v4093 = vsel %vm784, %v3901, %v4018
      %v4094 = vsel %vm784, %v3902, %v4020
      %v4095 = vsel %vm784, %v3903, %v4022
      %v4096 = vsel %vm784, %v3904, %v4024
      %v4097 = vsel %vm784, %v3905, %v4026
      %v4098 = vsel %vm784, %v3906, %v4028
      %v4099 = vsel %vm784, %v3907, %v4030
      %v4100 = vsel %vm784, %v3908, %v4032
      %v4101 = vsel %vm784, %v3909, %v4034
      %v4102 = vsel %vm784, %v3910, %v4036
      %v4103 = vsel %vm784, %v3911, %v4038
      %v4104 = vsel %vm784, %v3912, %v4040
      %v4105 = vadd.f32 %v4073, %v4074
      %v4106 = vadd.f32 %v4105, %v4075
      %v4107 = vadd.f32 %v4106, %v4076
      %v4108 = vadd.f32 %v4107, %v4077
      %v4109 = vadd.f32 %v4108, %v4078
      %v4110 = vadd.f32 %v4109, %v4079
      %v4111 = vadd.f32 %v4110, %v4080
      %v4112 = vadd.f32 %v4111, %v4081
      %v4113 = vadd.f32 %v4112, %v4082
      %v4114 = vadd.f32 %v4113, %v4083
      %v4115 = vadd.f32 %v4114, %v4084
      %v4116 = vadd.f32 %v4115, %v4085
      %v4117 = vadd.f32 %v4116, %v4086
      %v4118 = vadd.f32 %v4117, %v4087
      %v4119 = vadd.f32 %v4118, %v4088
      %v4120 = vadd.f32 %v4119, %v4089
      %v4121 = vadd.f32 %v4120, %v4090
      %v4122 = vadd.f32 %v4121, %v4091
      %v4123 = vadd.f32 %v4122, %v4092
      %v4124 = vadd.f32 %v4123, %v4093
      %v4125 = vadd.f32 %v4124, %v4094
      %v4126 = vadd.f32 %v4125, %v4095
      %v4127 = vadd.f32 %v4126, %v4096
      %v4128 = vadd.f32 %v4127, %v4097
      %v4129 = vadd.f32 %v4128, %v4098
      %v4130 = vadd.f32 %v4129, %v4099
      %v4131 = vadd.f32 %v4130, %v4100
      %v4132 = vadd.f32 %v4131, %v4101
      %v4133 = vadd.f32 %v4132, %v4102
      %v4134 = vadd.f32 %v4133, %v4103
      %v4135 = vadd.f32 %v4134, %v4104
      %v4136 = vrot.slane %v4135, 4
      %v4137 = vadd.f32 %v4135, %v4136
      %v4138 = vrot.slane %v4137, 2
      %v4139 = vadd.f32 %v4137, %v4138
      %v4140 = vrot.slane %v4139, 1
      %v4141 = vadd.f32 %v4139, %v4140
      %v4142 = vmul.f32 %v4141, 0.00390625
      %v4143 = vmul.f32 %v4142, %v4142
      %4145 = vrot.lane.b32.xlu0 %v4143, 64
      %v4146 = vpop.permute.xlu0 %4145
      %v4148 = vsub.f32 %v4142, %v4146
      %v4149 = vmax.f32 %v4148, 0.0
      %v4150 = vsub.f32 %v3881, %v4142
      %v4151 = vsub.f32 %v3882, %v4142
      %v4152 = vsub.f32 %v3883, %v4142
      %v4153 = vsub.f32 %v3884, %v4142
      %v4154 = vsub.f32 %v3885, %v4142
      %v4155 = vsub.f32 %v3886, %v4142
      %v4156 = vsub.f32 %v3887, %v4142
      %v4157 = vsub.f32 %v3888, %v4142
      %v4158 = vsub.f32 %v3889, %v4142
      %v4159 = vsub.f32 %v3890, %v4142
      %v4160 = vsub.f32 %v3891, %v4142
      %v4161 = vsub.f32 %v3892, %v4142
      %v4162 = vsub.f32 %v3893, %v4142
      %v4163 = vsub.f32 %v3894, %v4142
      %v4164 = vsub.f32 %v3895, %v4142
      %v4165 = vsub.f32 %v3896, %v4142
      %v4166 = vsub.f32 %v3897, %v4142
      %v4167 = vsub.f32 %v3898, %v4142
      %v4168 = vsub.f32 %v3899, %v4142
      %v4169 = vsub.f32 %v3900, %v4142
      %v4170 = vsub.f32 %v3901, %v4142
      %v4171 = vsub.f32 %v3902, %v4142
      %v4172 = vsub.f32 %v3903, %v4142
      %v4173 = vsub.f32 %v3904, %v4142
      %v4174 = vsub.f32 %v3905, %v4142
      %v4175 = vsub.f32 %v3906, %v4142
      %v4176 = vsub.f32 %v3907, %v4142
      %v4177 = vsub.f32 %v3908, %v4142
      %v4178 = vsub.f32 %v3909, %v4142
      %v4179 = vsub.f32 %v3910, %v4142
      %v4180 = vsub.f32 %v3911, %v4142
      %v4181 = vsub.f32 %v3912, %v4142
      %v4182 = vadd.f32 %v4149, 1e-05
      %v4183 = vrsqrt.pop %v4182
      %v4184 = vlaneseq
      %v4185 = vshrl.u32 %v4184, 7
      %v4186 = vsub.s32 0, %v4185
      %v4187 = vrot.slane %v4183, %v4186
      %4189 = vrot.lane.b32.xlu0 %v4187, 64
      %v4190 = vpop.permute.xlu0 %4189
      %v4192 = vmul.f32 %v4150, %v4190
      %v4193 = vmul.f32 %v4151, %v4190
      %v4194 = vmul.f32 %v4152, %v4190
      %v4195 = vmul.f32 %v4153, %v4190
      %v4196 = vmul.f32 %v4154, %v4190
      %v4197 = vmul.f32 %v4155, %v4190
      %v4198 = vmul.f32 %v4156, %v4190
      %v4199 = vmul.f32 %v4157, %v4190
      %v4200 = vmul.f32 %v4158, %v4190
      %v4201 = vmul.f32 %v4159, %v4190
      %v4202 = vmul.f32 %v4160, %v4190
      %v4203 = vmul.f32 %v4161, %v4190
      %v4204 = vmul.f32 %v4162, %v4190
      %v4205 = vmul.f32 %v4163, %v4190
      %v4206 = vmul.f32 %v4164, %v4190
      %v4207 = vmul.f32 %v4165, %v4190
      %v4208 = vmul.f32 %v4166, %v4190
      %v4209 = vmul.f32 %v4167, %v4190
      %v4210 = vmul.f32 %v4168, %v4190
      %v4211 = vmul.f32 %v4169, %v4190
      %v4212 = vmul.f32 %v4170, %v4190
      %v4213 = vmul.f32 %v4171, %v4190
      %v4214 = vmul.f32 %v4172, %v4190
      %v4215 = vmul.f32 %v4173, %v4190
      %v4216 = vmul.f32 %v4174, %v4190
      %v4217 = vmul.f32 %v4175, %v4190
      %v4218 = vmul.f32 %v4176, %v4190
      %v4219 = vmul.f32 %v4177, %v4190
      %v4220 = vmul.f32 %v4178, %v4190
      %v4221 = vmul.f32 %v4179, %v4190
      %v4222 = vmul.f32 %v4180, %v4190
      %v4223 = vmul.f32 %v4181, %v4190
      %v4224 = vmax.f32 %v4192, 0.0
      %v4225 = vmax.f32 %v4193, 0.0
      %v4226 = vmax.f32 %v4194, 0.0
      %v4227 = vmax.f32 %v4195, 0.0
      %v4228 = vmax.f32 %v4196, 0.0
      %v4229 = vmax.f32 %v4197, 0.0
      %v4230 = vmax.f32 %v4198, 0.0
      %v4231 = vmax.f32 %v4199, 0.0
      %v4232 = vmax.f32 %v4200, 0.0
      %v4233 = vmax.f32 %v4201, 0.0
      %v4234 = vmax.f32 %v4202, 0.0
      %v4235 = vmax.f32 %v4203, 0.0
      %v4236 = vmax.f32 %v4204, 0.0
      %v4237 = vmax.f32 %v4205, 0.0
      %v4238 = vmax.f32 %v4206, 0.0
      %v4239 = vmax.f32 %v4207, 0.0
      %v4240 = vmax.f32 %v4208, 0.0
      %v4241 = vmax.f32 %v4209, 0.0
      %v4242 = vmax.f32 %v4210, 0.0
      %v4243 = vmax.f32 %v4211, 0.0
      %v4244 = vmax.f32 %v4212, 0.0
      %v4245 = vmax.f32 %v4213, 0.0
      %v4246 = vmax.f32 %v4214, 0.0
      %v4247 = vmax.f32 %v4215, 0.0
      %v4248 = vmax.f32 %v4216, 0.0
      %v4249 = vmax.f32 %v4217, 0.0
      %v4250 = vmax.f32 %v4218, 0.0
      %v4251 = vmax.f32 %v4219, 0.0
      %v4252 = vmax.f32 %v4220, 0.0
      %v4253 = vmax.f32 %v4221, 0.0
      %v4254 = vmax.f32 %v4222, 0.0
      %v4255 = vmax.f32 %v4223, 0.0
      %4256 = vst.msk [vmem:[%s968 + $0x1] sm:$0xff] %vm784, %v4224
      %4257 = vst.msk [vmem:[%s968 + $0x9] sm:$0xff] %vm784, %v4225
      %4258 = vst.msk [vmem:[%s968 + $0x19] sm:$0xff] %vm784, %v4226
      %4259 = vst.msk [vmem:[%s968 + $0x21] sm:$0xff] %vm784, %v4227
      %4260 = vst.msk [vmem:[%s968 + $0x31] sm:$0xff] %vm784, %v4228
      %4261 = vst.msk [vmem:[%s968 + $0x39] sm:$0xff] %vm784, %v4229
      %4262 = vst.msk [vmem:[%s968 + $0x49] sm:$0xff] %vm784, %v4230
      %4263 = vst.msk [vmem:[%s968 + $0x51] sm:$0xff] %vm784, %v4231
      %4264 = vst.msk [vmem:[%s968 + $0x61] sm:$0xff] %vm784, %v4232
      %4265 = vst.msk [vmem:[%s968 + $0x69] sm:$0xff] %vm784, %v4233
      %4266 = vst.msk [vmem:[%s968 + $0x79] sm:$0xff] %vm784, %v4234
      %4267 = vst.msk [vmem:[%s968 + $0x81] sm:$0xff] %vm784, %v4235
      %4268 = vst.msk [vmem:[%s968 + $0x91] sm:$0xff] %vm784, %v4236
      %4269 = vst.msk [vmem:[%s968 + $0x99] sm:$0xff] %vm784, %v4237
      %4270 = vst.msk [vmem:[%s968 + $0xa9] sm:$0xff] %vm784, %v4238
      %4271 = vst.msk [vmem:[%s968 + $0xb1] sm:$0xff] %vm784, %v4239
      %4272 = vst.msk [vmem:[%s968 + $0xc1] sm:$0xff] %vm784, %v4240
      %4273 = vst.msk [vmem:[%s968 + $0xc9] sm:$0xff] %vm784, %v4241
      %4274 = vst.msk [vmem:[%s968 + $0xd9] sm:$0xff] %vm784, %v4242
      %4275 = vst.msk [vmem:[%s968 + $0xe1] sm:$0xff] %vm784, %v4243
      %4276 = vst.msk [vmem:[%s968 + $0xf1] sm:$0xff] %vm784, %v4244
      %4277 = vst.msk [vmem:[%s968 + $0xf9] sm:$0xff] %vm784, %v4245
      %4278 = vst.msk [vmem:[%s968 + $0x109] sm:$0xff] %vm784, %v4246
      %4279 = vst.msk [vmem:[%s968 + $0x111] sm:$0xff] %vm784, %v4247
      %4280 = vst.msk [vmem:[%s968 + $0x121] sm:$0xff] %vm784, %v4248
      %4281 = vst.msk [vmem:[%s968 + $0x129] sm:$0xff] %vm784, %v4249
      %4282 = vst.msk [vmem:[%s968 + $0x139] sm:$0xff] %vm784, %v4250
      %4283 = vst.msk [vmem:[%s968 + $0x141] sm:$0xff] %vm784, %v4251
      %4284 = vst.msk [vmem:[%s968 + $0x151] sm:$0xff] %vm784, %v4252
      %4285 = vst.msk [vmem:[%s968 + $0x159] sm:$0xff] %vm784, %v4253
      %4286 = vst.msk [vmem:[%s968 + $0x169] sm:$0xff] %vm784, %v4254
      %4287 = vst.msk [vmem:[%s968 + $0x171] sm:$0xff] %vm784, %v4255
      %4288 = vst.msk [vmem:[#allocation2 + $0x1] sm:$0xff] %vm784, %v4226
      %4289 = vst.msk [vmem:[#allocation2 + $0x9] sm:$0xff] %vm784, %v4227
      %4290 = vst.msk [vmem:[%s1003 + $0x1] sm:$0xff] %vm784, %v4252
      %4291 = vst.msk [vmem:[%s1003 + $0x9] sm:$0xff] %vm784, %v4253
      %v4292 = vld [vmem:[#allocation2 + $0x2] sm:$0x1]
      %v4293 = vld [vmem:[#allocation2 + $0x1a] sm:$0x1]
      %v4294 = vld [vmem:[#allocation2 + $0x32] sm:$0x1]
      %v4295 = vld [vmem:[#allocation2 + $0x4a] sm:$0x1]
      %v4296 = vld [vmem:[#allocation2 + $0x62] sm:$0x1]
      %v4297 = vld [vmem:[#allocation2 + $0x7a] sm:$0x1]
      %v4298 = vld [vmem:[#allocation2 + $0x92] sm:$0x1]
      %v4299 = vld [vmem:[#allocation2 + $0xaa] sm:$0x1]
      %v4300 = vld [vmem:[#allocation2 + $0xc2] sm:$0x1]
      %v4301 = vld [vmem:[#allocation2 + $0xda] sm:$0x1]
      %v4302 = vld [vmem:[#allocation2 + $0xf2] sm:$0x1]
      %v4303 = vld [vmem:[#allocation2 + $0x10a] sm:$0x1]
      %v4304 = vld [vmem:[#allocation2 + $0x122] sm:$0x1]
      %v4305 = vld [vmem:[#allocation2 + $0x13a] sm:$0x1]
      %v4306 = vld [vmem:[#allocation2 + $0x152] sm:$0x1]
      %v4307 = vld [vmem:[#allocation2 + $0x16a] sm:$0x1]
      %v4308 = vld [vmem:[#allocation2 + $0x182] sm:$0x1]
      %v4309 = vld [vmem:[#allocation2 + $0x19a] sm:$0x1]
      %4310 = vst.msk [vmem:[#allocation2] sm:$0x1] %vm1024, %v4292
      %4311 = vst.msk [vmem:[#allocation2 + $0x18] sm:$0x1] %vm1024, %v4293
      %4312 = vst.msk [vmem:[#allocation2 + $0x30] sm:$0x1] %vm1024, %v4294
      %4313 = vst.msk [vmem:[#allocation2 + $0x48] sm:$0x1] %vm1024, %v4295
      %4314 = vst.msk [vmem:[#allocation2 + $0x60] sm:$0x1] %vm1024, %v4296
      %4315 = vst.msk [vmem:[#allocation2 + $0x78] sm:$0x1] %vm1024, %v4297
      %4316 = vst.msk [vmem:[#allocation2 + $0x90] sm:$0x1] %vm1024, %v4298
      %4317 = vst.msk [vmem:[#allocation2 + $0xa8] sm:$0x1] %vm1024, %v4299
      %4318 = vst.msk [vmem:[#allocation2 + $0xc0] sm:$0x1] %vm1024, %v4300
      %4319 = vst.msk [vmem:[#allocation2 + $0xd8] sm:$0x1] %vm1024, %v4301
      %4320 = vst.msk [vmem:[#allocation2 + $0xf0] sm:$0x1] %vm1024, %v4302
      %4321 = vst.msk [vmem:[#allocation2 + $0x108] sm:$0x1] %vm1024, %v4303
      %4322 = vst.msk [vmem:[#allocation2 + $0x120] sm:$0x1] %vm1024, %v4304
      %4323 = vst.msk [vmem:[#allocation2 + $0x138] sm:$0x1] %vm1024, %v4305
      %4324 = vst.msk [vmem:[#allocation2 + $0x150] sm:$0x1] %vm1024, %v4306
      %4325 = vst.msk [vmem:[#allocation2 + $0x168] sm:$0x1] %vm1024, %v4307
      %4326 = vst.msk [vmem:[#allocation2 + $0x180] sm:$0x1] %vm1024, %v4308
      %4327 = vst.msk [vmem:[#allocation2 + $0x198] sm:$0x1] %vm1024, %v4309
      %v4328 = vld [vmem:[#allocation2 + $0xf] sm:$0x1]
      %v4329 = vld [vmem:[#allocation2 + $0x27] sm:$0x1]
      %v4330 = vld [vmem:[#allocation2 + $0x3f] sm:$0x1]
      %v4331 = vld [vmem:[#allocation2 + $0x57] sm:$0x1]
      %v4332 = vld [vmem:[#allocation2 + $0x6f] sm:$0x1]
      %v4333 = vld [vmem:[#allocation2 + $0x87] sm:$0x1]
      %v4334 = vld [vmem:[#allocation2 + $0x9f] sm:$0x1]
      %v4335 = vld [vmem:[#allocation2 + $0xb7] sm:$0x1]
      %v4336 = vld [vmem:[#allocation2 + $0xcf] sm:$0x1]
      %v4337 = vld [vmem:[#allocation2 + $0xe7] sm:$0x1]
      %v4338 = vld [vmem:[#allocation2 + $0xff] sm:$0x1]
      %v4339 = vld [vmem:[#allocation2 + $0x117] sm:$0x1]
      %v4340 = vld [vmem:[#allocation2 + $0x12f] sm:$0x1]
      %v4341 = vld [vmem:[#allocation2 + $0x147] sm:$0x1]
      %v4342 = vld [vmem:[#allocation2 + $0x15f] sm:$0x1]
      %v4343 = vld [vmem:[#allocation2 + $0x177] sm:$0x1]
      %v4344 = vld [vmem:[#allocation2 + $0x18f] sm:$0x1]
      %v4345 = vld [vmem:[#allocation2 + $0x1a7] sm:$0x1]
      %4346 = vst.msk [vmem:[#allocation2 + $0x11] sm:$0x1] %vm1024, %v4328
      %4347 = vst.msk [vmem:[#allocation2 + $0x29] sm:$0x1] %vm1024, %v4329
      %4348 = vst.msk [vmem:[#allocation2 + $0x41] sm:$0x1] %vm1024, %v4330
      %4349 = vst.msk [vmem:[#allocation2 + $0x59] sm:$0x1] %vm1024, %v4331
      %4350 = vst.msk [vmem:[#allocation2 + $0x71] sm:$0x1] %vm1024, %v4332
      %4351 = vst.msk [vmem:[#allocation2 + $0x89] sm:$0x1] %vm1024, %v4333
      %4352 = vst.msk [vmem:[#allocation2 + $0xa1] sm:$0x1] %vm1024, %v4334
      %4353 = vst.msk [vmem:[#allocation2 + $0xb9] sm:$0x1] %vm1024, %v4335
      %4354 = vst.msk [vmem:[#allocation2 + $0xd1] sm:$0x1] %vm1024, %v4336
      %4355 = vst.msk [vmem:[#allocation2 + $0xe9] sm:$0x1] %vm1024, %v4337
      %4356 = vst.msk [vmem:[#allocation2 + $0x101] sm:$0x1] %vm1024, %v4338
      %4357 = vst.msk [vmem:[#allocation2 + $0x119] sm:$0x1] %vm1024, %v4339
      %4358 = vst.msk [vmem:[#allocation2 + $0x131] sm:$0x1] %vm1024, %v4340
      %4359 = vst.msk [vmem:[#allocation2 + $0x149] sm:$0x1] %vm1024, %v4341
      %4360 = vst.msk [vmem:[#allocation2 + $0x161] sm:$0x1] %vm1024, %v4342
      %4361 = vst.msk [vmem:[#allocation2 + $0x179] sm:$0x1] %vm1024, %v4343
      %4362 = vst.msk [vmem:[#allocation2 + $0x191] sm:$0x1] %vm1024, %v4344
      %4363 = vst.msk [vmem:[#allocation2 + $0x1a9] sm:$0x1] %vm1024, %v4345
      %v4364 = vld [vmem:[#allocation2] sm:$0xff]
      %v4365 = vld [vmem:[#allocation2 + $0x8] sm:$0xff]
      %v4366 = vld [vmem:[#allocation2 + $0x18] sm:$0xff]
      %v4367 = vld [vmem:[#allocation2 + $0x20] sm:$0xff]
      %v4368 = vld [vmem:[#allocation2 + $0x30] sm:$0xff]
      %v4369 = vld [vmem:[#allocation2 + $0x38] sm:$0xff]
      %v4370 = vld [vmem:[#allocation2 + $0x48] sm:$0xff]
      %v4371 = vld [vmem:[#allocation2 + $0x50] sm:$0xff]
      %v4372 = vld [vmem:[#allocation2 + $0x60] sm:$0xff]
      %v4373 = vld [vmem:[#allocation2 + $0x68] sm:$0xff]
      %v4374 = vld [vmem:[#allocation2 + $0x78] sm:$0xff]
      %v4375 = vld [vmem:[#allocation2 + $0x80] sm:$0xff]
      %v4376 = vld [vmem:[#allocation2 + $0x90] sm:$0xff]
      %v4377 = vld [vmem:[#allocation2 + $0x98] sm:$0xff]
      %v4378 = vld [vmem:[#allocation2 + $0xa8] sm:$0xff]
      %v4379 = vld [vmem:[#allocation2 + $0xb0] sm:$0xff]
      %v4380 = vld [vmem:[#allocation2 + $0xc0] sm:$0xff]
      %v4381 = vld [vmem:[#allocation2 + $0xc8] sm:$0xff]
      %v4382 = vld [vmem:[#allocation2 + $0xd8] sm:$0xff]
      %v4383 = vld [vmem:[#allocation2 + $0xe0] sm:$0xff]
      %v4384 = vld [vmem:[#allocation2 + $0xf0] sm:$0xff]
      %v4385 = vld [vmem:[#allocation2 + $0xf8] sm:$0xff]
      %v4386 = vld [vmem:[#allocation2 + $0x108] sm:$0xff]
      %v4387 = vld [vmem:[#allocation2 + $0x110] sm:$0xff]
      %v4388 = vld [vmem:[#allocation2 + $0x120] sm:$0xff]
      %v4389 = vld [vmem:[#allocation2 + $0x128] sm:$0xff]
      %v4390 = vld [vmem:[#allocation2 + $0x138] sm:$0xff]
      %v4391 = vld [vmem:[#allocation2 + $0x140] sm:$0xff]
      %v4392 = vld [vmem:[#allocation2 + $0x150] sm:$0xff]
      %v4393 = vld [vmem:[#allocation2 + $0x158] sm:$0xff]
      %v4394 = vld [vmem:[#allocation2 + $0x168] sm:$0xff]
      %v4395 = vld [vmem:[#allocation2 + $0x170] sm:$0xff]
      %v4396 = vpack.c.bf16 %v4365, %v4364
      %v4397 = vpack.c.bf16 %v4367, %v4366
      %v4398 = vpack.c.bf16 %v4369, %v4368
      %v4399 = vpack.c.bf16 %v4371, %v4370
      %v4400 = vpack.c.bf16 %v4373, %v4372
      %v4401 = vpack.c.bf16 %v4375, %v4374
      %v4402 = vpack.c.bf16 %v4377, %v4376
      %v4403 = vpack.c.bf16 %v4379, %v4378
      %v4404 = vpack.c.bf16 %v4381, %v4380
      %v4405 = vpack.c.bf16 %v4383, %v4382
      %v4406 = vpack.c.bf16 %v4385, %v4384
      %v4407 = vpack.c.bf16 %v4387, %v4386
      %v4408 = vpack.c.bf16 %v4389, %v4388
      %v4409 = vpack.c.bf16 %v4391, %v4390
      %v4410 = vpack.c.bf16 %v4393, %v4392
      %v4411 = vpack.c.bf16 %v4395, %v4394
      %v4412 = vld [vmem:[%s3] sm:$0xf]
      %v4413 = vld [vmem:[%s3 + $0x4] sm:$0xf]
      %v4414 = vld [vmem:[%s3 + $0x8] sm:$0xf]
      %v4415 = vld [vmem:[%s3 + $0xc] sm:$0xf]
      %v4416 = vld [vmem:[%s3 + $0x10] sm:$0xf]
      %v4417 = vld [vmem:[%s3 + $0x14] sm:$0xf]
      %v4418 = vld [vmem:[%s3 + $0x18] sm:$0xf]
      %v4419 = vld [vmem:[%s3 + $0x1c] sm:$0xf]
      %v4420 = vld [vmem:[#allocation2 + $0x1] sm:$0xff]
      %v4421 = vld [vmem:[#allocation2 + $0x9] sm:$0xff]
      %v4422 = vld [vmem:[#allocation2 + $0x19] sm:$0xff]
      %v4423 = vld [vmem:[#allocation2 + $0x21] sm:$0xff]
      %v4424 = vld [vmem:[#allocation2 + $0x31] sm:$0xff]
      %v4425 = vld [vmem:[#allocation2 + $0x39] sm:$0xff]
      %v4426 = vld [vmem:[#allocation2 + $0x49] sm:$0xff]
      %v4427 = vld [vmem:[#allocation2 + $0x51] sm:$0xff]
      %v4428 = vld [vmem:[#allocation2 + $0x61] sm:$0xff]
      %v4429 = vld [vmem:[#allocation2 + $0x69] sm:$0xff]
      %v4430 = vld [vmem:[#allocation2 + $0x79] sm:$0xff]
      %v4431 = vld [vmem:[#allocation2 + $0x81] sm:$0xff]
      %v4432 = vld [vmem:[#allocation2 + $0x91] sm:$0xff]
      %v4433 = vld [vmem:[#allocation2 + $0x99] sm:$0xff]
      %v4434 = vld [vmem:[#allocation2 + $0xa9] sm:$0xff]
      %v4435 = vld [vmem:[#allocation2 + $0xb1] sm:$0xff]
      %v4436 = vld [vmem:[#allocation2 + $0xc1] sm:$0xff]
      %v4437 = vld [vmem:[#allocation2 + $0xc9] sm:$0xff]
      %v4438 = vld [vmem:[#allocation2 + $0xd9] sm:$0xff]
      %v4439 = vld [vmem:[#allocation2 + $0xe1] sm:$0xff]
      %v4440 = vld [vmem:[#allocation2 + $0xf1] sm:$0xff]
      %v4441 = vld [vmem:[#allocation2 + $0xf9] sm:$0xff]
      %v4442 = vld [vmem:[#allocation2 + $0x109] sm:$0xff]
      %v4443 = vld [vmem:[#allocation2 + $0x111] sm:$0xff]
      %v4444 = vld [vmem:[#allocation2 + $0x121] sm:$0xff]
      %v4445 = vld [vmem:[#allocation2 + $0x129] sm:$0xff]
      %v4446 = vld [vmem:[#allocation2 + $0x139] sm:$0xff]
      %v4447 = vld [vmem:[#allocation2 + $0x141] sm:$0xff]
      %v4448 = vld [vmem:[#allocation2 + $0x151] sm:$0xff]
      %v4449 = vld [vmem:[#allocation2 + $0x159] sm:$0xff]
      %v4450 = vld [vmem:[#allocation2 + $0x169] sm:$0xff]
      %v4451 = vld [vmem:[#allocation2 + $0x171] sm:$0xff]
      %v4452 = vpack.c.bf16 %v4421, %v4420
      %v4453 = vpack.c.bf16 %v4423, %v4422
      %v4454 = vpack.c.bf16 %v4425, %v4424
      %v4455 = vpack.c.bf16 %v4427, %v4426
      %v4456 = vpack.c.bf16 %v4429, %v4428
      %v4457 = vpack.c.bf16 %v4431, %v4430
      %v4458 = vpack.c.bf16 %v4433, %v4432
      %v4459 = vpack.c.bf16 %v4435, %v4434
      %v4460 = vpack.c.bf16 %v4437, %v4436
      %v4461 = vpack.c.bf16 %v4439, %v4438
      %v4462 = vpack.c.bf16 %v4441, %v4440
      %v4463 = vpack.c.bf16 %v4443, %v4442
      %v4464 = vpack.c.bf16 %v4445, %v4444
      %v4465 = vpack.c.bf16 %v4447, %v4446
      %v4466 = vpack.c.bf16 %v4449, %v4448
      %v4467 = vpack.c.bf16 %v4451, %v4450
      %s4468 = scalar_lea.vmem %s3, 32
      %v4469 = vld [vmem:[%s4468] sm:$0xf]
      %v4470 = vld [vmem:[%s4468 + $0x4] sm:$0xf]
      %v4471 = vld [vmem:[%s4468 + $0x8] sm:$0xf]
      %v4472 = vld [vmem:[%s4468 + $0xc] sm:$0xf]
      %v4473 = vld [vmem:[%s4468 + $0x10] sm:$0xf]
      %v4474 = vld [vmem:[%s4468 + $0x14] sm:$0xf]
      %v4475 = vld [vmem:[%s4468 + $0x18] sm:$0xf]
      %v4476 = vld [vmem:[%s4468 + $0x1c] sm:$0xf]
      %v4485 = vunpack.c.l.b16 %v4469
      %v4486 = vunpack.c.l.b16 %v4470
      %v4487 = vunpack.c.l.b16 %v4471
      %v4488 = vunpack.c.l.b16 %v4472
      %v4489 = vunpack.c.l.b16 %v4473
      %v4490 = vunpack.c.l.b16 %v4474
      %v4491 = vunpack.c.l.b16 %v4475
      %v4492 = vunpack.c.l.b16 %v4476
      %v4493 = vpack.c.b16 %v4486, %v4485
      %v4494 = vpack.c.b16 %v4488, %v4487
      %v4495 = vpack.c.b16 %v4490, %v4489
      %v4496 = vpack.c.b16 %v4492, %v4491
      %v4502 = vsel %vm784, %v4452, 0
      %v4505 = vsel %vm784, %v4453, 0
      %v4508 = vsel %vm784, %v4454, 0
      %v4511 = vsel %vm784, %v4455, 0
      %v4514 = vsel %vm784, %v4456, 0
      %v4517 = vsel %vm784, %v4457, 0
      %v4520 = vsel %vm784, %v4458, 0
      %v4523 = vsel %vm784, %v4459, 0
      %v4526 = vsel %vm784, %v4460, 0
      %v4529 = vsel %vm784, %v4461, 0
      %v4532 = vsel %vm784, %v4462, 0
      %v4535 = vsel %vm784, %v4463, 0
      %v4538 = vsel %vm784, %v4464, 0
      %v4541 = vsel %vm784, %v4465, 0
      %v4544 = vsel %vm784, %v4466, 0
      %v4547 = vsel %vm784, %v4467, 0
      %4549 = vmatprep.subr.bf16.mxu0 0
      %4550 = vmatpush1.bf16.msra.mxu0 0
      %4551 = vmatprep.subr.bf16.mxu0 0
      %4552 = vmatpush1.bf16.msra.mxu0 0
      %4553 = vmatprep.subr.bf16.mxu0 0
      %4554 = vmatpush1.bf16.msra.mxu0 0
      %4555 = vmatprep.subr.bf16.mxu0 0
      %4556 = vmatpush1.bf16.msra.mxu0 0
      %4557 = vmatprep.subr.bf16.mxu0 0
      %4558 = vmatpush1.bf16.msra.mxu0 %v4496
      %4559 = vmatprep.subr.bf16.mxu0 0
      %4560 = vmatpush1.bf16.msra.mxu0 %v4495
      %4561 = vmatprep.subr.bf16.mxu0 0
      %4562 = vmatpush1.bf16.msra.mxu0 %v4494
      %4563 = vmatprep.subr.bf16.mxu0 0
      %4564 = vmatpush1.bf16.msra.mxu0 %v4493
      %4565 = vmatprep.subr.bf16.mxu0 0
      %4566 = vmatpush2.bf16.msra.mxu0 0
      %4567 = vmatprep.subr.bf16.mxu0 0
      %4568 = vmatpush2.bf16.msra.mxu0 0
      %4569 = vmatprep.subr.bf16.mxu0 0
      %4570 = vmatpush2.bf16.msra.mxu0 0
      %4571 = vmatprep.subr.bf16.mxu0 0
      %4572 = vmatpush2.bf16.msra.mxu0 0
      %4573 = vmatprep.subr.bf16.mxu0 0
      %4574 = vmatpush2.bf16.msra.mxu0 0
      %4575 = vmatprep.subr.bf16.mxu0 0
      %4576 = vmatpush2.bf16.msra.mxu0 0
      %4577 = vmatprep.subr.bf16.mxu0 0
      %4578 = vmatpush2.bf16.msra.mxu0 0
      %4579 = vmatprep.subr.bf16.mxu0 0
      %4580 = vmatpush2.bf16.msra.mxu0 0
      %4581 = vmatprep.mubr.bf16.mxu0 0
      %4582 = vmatmul.mubr.bf16.gmra.mxu0 %v4502
      %v4583 = vpop.f32.mrf.mxu0
      %v4584 = vadd.f32 0.0, %v4583
      %v4585 = vpop.f32.mrf.mxu0
      %v4586 = vpop.f32.mrf.mxu0
      %v4587 = vadd.f32 0.0, %v4586
      %v4588 = vpop.f32.mrf.mxu0
      %4589 = vmatprep.mubr.bf16.mxu0 0
      %4590 = vmatmul.mubr.bf16.gmra.mxu0 %v4505
      %v4591 = vpop.f32.mrf.mxu0
      %v4592 = vadd.f32 0.0, %v4591
      %v4593 = vpop.f32.mrf.mxu0
      %v4594 = vpop.f32.mrf.mxu0
      %v4595 = vadd.f32 0.0, %v4594
      %v4596 = vpop.f32.mrf.mxu0
      %4597 = vmatprep.mubr.bf16.mxu0 0
      %4598 = vmatmul.mubr.bf16.gmra.mxu0 %v4508
      %v4599 = vpop.f32.mrf.mxu0
      %v4600 = vadd.f32 0.0, %v4599
      %v4601 = vpop.f32.mrf.mxu0
      %v4602 = vpop.f32.mrf.mxu0
      %v4603 = vadd.f32 0.0, %v4602
      %v4604 = vpop.f32.mrf.mxu0
      %4605 = vmatprep.mubr.bf16.mxu0 0
      %4606 = vmatmul.mubr.bf16.gmra.mxu0 %v4511
      %v4607 = vpop.f32.mrf.mxu0
      %v4608 = vadd.f32 0.0, %v4607
      %v4609 = vpop.f32.mrf.mxu0
      %v4610 = vpop.f32.mrf.mxu0
      %v4611 = vadd.f32 0.0, %v4610
      %v4612 = vpop.f32.mrf.mxu0
      %4613 = vmatprep.mubr.bf16.mxu0 0
      %4614 = vmatmul.mubr.bf16.gmra.mxu0 %v4514
      %v4615 = vpop.f32.mrf.mxu0
      %v4616 = vadd.f32 0.0, %v4615
      %v4617 = vpop.f32.mrf.mxu0
      %v4618 = vpop.f32.mrf.mxu0
      %v4619 = vadd.f32 0.0, %v4618
      %v4620 = vpop.f32.mrf.mxu0
      %4621 = vmatprep.mubr.bf16.mxu0 0
      %4622 = vmatmul.mubr.bf16.gmra.mxu0 %v4517
      %v4623 = vpop.f32.mrf.mxu0
      %v4624 = vadd.f32 0.0, %v4623
      %v4625 = vpop.f32.mrf.mxu0
      %v4626 = vpop.f32.mrf.mxu0
      %v4627 = vadd.f32 0.0, %v4626
      %v4628 = vpop.f32.mrf.mxu0
      %4629 = vmatprep.mubr.bf16.mxu0 0
      %4630 = vmatmul.mubr.bf16.gmra.mxu0 %v4520
      %v4631 = vpop.f32.mrf.mxu0
      %v4632 = vadd.f32 0.0, %v4631
      %v4633 = vpop.f32.mrf.mxu0
      %v4634 = vpop.f32.mrf.mxu0
      %v4635 = vadd.f32 0.0, %v4634
      %v4636 = vpop.f32.mrf.mxu0
      %4637 = vmatprep.mubr.bf16.mxu0 0
      %4638 = vmatmul.mubr.bf16.gmra.mxu0 %v4523
      %v4639 = vpop.f32.mrf.mxu0
      %v4640 = vadd.f32 0.0, %v4639
      %v4641 = vpop.f32.mrf.mxu0
      %v4642 = vpop.f32.mrf.mxu0
      %v4643 = vadd.f32 0.0, %v4642
      %v4644 = vpop.f32.mrf.mxu0
      %4645 = vmatprep.mubr.bf16.mxu0 0
      %4646 = vmatmul.mubr.bf16.gmra.mxu0 %v4526
      %v4647 = vpop.f32.mrf.mxu0
      %v4648 = vadd.f32 0.0, %v4647
      %v4649 = vpop.f32.mrf.mxu0
      %v4650 = vpop.f32.mrf.mxu0
      %v4651 = vadd.f32 0.0, %v4650
      %v4652 = vpop.f32.mrf.mxu0
      %4653 = vmatprep.mubr.bf16.mxu0 0
      %4654 = vmatmul.mubr.bf16.gmra.mxu0 %v4529
      %v4655 = vpop.f32.mrf.mxu0
      %v4656 = vadd.f32 0.0, %v4655
      %v4657 = vpop.f32.mrf.mxu0
      %v4658 = vpop.f32.mrf.mxu0
      %v4659 = vadd.f32 0.0, %v4658
      %v4660 = vpop.f32.mrf.mxu0
      %4661 = vmatprep.mubr.bf16.mxu0 0
      %4662 = vmatmul.mubr.bf16.gmra.mxu0 %v4532
      %v4663 = vpop.f32.mrf.mxu0
      %v4664 = vadd.f32 0.0, %v4663
      %v4665 = vpop.f32.mrf.mxu0
      %v4666 = vpop.f32.mrf.mxu0
      %v4667 = vadd.f32 0.0, %v4666
      %v4668 = vpop.f32.mrf.mxu0
      %4669 = vmatprep.mubr.bf16.mxu0 0
      %4670 = vmatmul.mubr.bf16.gmra.mxu0 %v4535
      %v4671 = vpop.f32.mrf.mxu0
      %v4672 = vadd.f32 0.0, %v4671
      %v4673 = vpop.f32.mrf.mxu0
      %v4674 = vpop.f32.mrf.mxu0
      %v4675 = vadd.f32 0.0, %v4674
      %v4676 = vpop.f32.mrf.mxu0
      %4677 = vmatprep.mubr.bf16.mxu0 0
      %4678 = vmatmul.mubr.bf16.gmra.mxu0 %v4538
      %v4679 = vpop.f32.mrf.mxu0
      %v4680 = vadd.f32 0.0, %v4679
      %v4681 = vpop.f32.mrf.mxu0
      %v4682 = vpop.f32.mrf.mxu0
      %v4683 = vadd.f32 0.0, %v4682
      %v4684 = vpop.f32.mrf.mxu0
      %4685 = vmatprep.mubr.bf16.mxu0 0
      %4686 = vmatmul.mubr.bf16.gmra.mxu0 %v4541
      %v4687 = vpop.f32.mrf.mxu0
      %v4688 = vadd.f32 0.0, %v4687
      %v4689 = vpop.f32.mrf.mxu0
      %v4690 = vpop.f32.mrf.mxu0
      %v4691 = vadd.f32 0.0, %v4690
      %v4692 = vpop.f32.mrf.mxu0
      %4693 = vmatprep.mubr.bf16.mxu0 0
      %4694 = vmatmul.mubr.bf16.gmra.mxu0 %v4544
      %v4695 = vpop.f32.mrf.mxu0
      %v4696 = vadd.f32 0.0, %v4695
      %v4697 = vpop.f32.mrf.mxu0
      %v4698 = vpop.f32.mrf.mxu0
      %v4699 = vadd.f32 0.0, %v4698
      %v4700 = vpop.f32.mrf.mxu0
      %4701 = vmatprep.mubr.bf16.mxu0 0
      %4702 = vmatmul.mubr.bf16.gmra.mxu0 %v4547
      %v4703 = vpop.f32.mrf.mxu0
      %v4704 = vadd.f32 0.0, %v4703
      %v4705 = vpop.f32.mrf.mxu0
      %v4706 = vpop.f32.mrf.mxu0
      %v4707 = vadd.f32 0.0, %v4706
      %v4708 = vpop.f32.mrf.mxu0
      %4709 = vdwg.mxu0
      %v4718 = vunpack.c.l.b16 %v4412
      %v4719 = vunpack.c.l.b16 %v4413
      %v4720 = vunpack.c.l.b16 %v4414
      %v4721 = vunpack.c.l.b16 %v4415
      %v4722 = vunpack.c.l.b16 %v4416
      %v4723 = vunpack.c.l.b16 %v4417
      %v4724 = vunpack.c.l.b16 %v4418
      %v4725 = vunpack.c.l.b16 %v4419
      %v4726 = vpack.c.b16 %v4719, %v4718
      %v4727 = vpack.c.b16 %v4721, %v4720
      %v4728 = vpack.c.b16 %v4723, %v4722
      %v4729 = vpack.c.b16 %v4725, %v4724
      %v4735 = vsel %vm784, %v4396, 0
      %v4738 = vsel %vm784, %v4397, 0
      %v4741 = vsel %vm784, %v4398, 0
      %v4744 = vsel %vm784, %v4399, 0
      %v4747 = vsel %vm784, %v4400, 0
      %v4750 = vsel %vm784, %v4401, 0
      %v4753 = vsel %vm784, %v4402, 0
      %v4756 = vsel %vm784, %v4403, 0
      %v4759 = vsel %vm784, %v4404, 0
      %v4762 = vsel %vm784, %v4405, 0
      %v4765 = vsel %vm784, %v4406, 0
      %v4768 = vsel %vm784, %v4407, 0
      %v4771 = vsel %vm784, %v4408, 0
      %v4774 = vsel %vm784, %v4409, 0
      %v4777 = vsel %vm784, %v4410, 0
      %v4780 = vsel %vm784, %v4411, 0
      %4782 = vmatprep.subr.bf16.mxu0 0
      %4783 = vmatpush1.bf16.msra.mxu0 0
      %4784 = vmatprep.subr.bf16.mxu0 0
      %4785 = vmatpush1.bf16.msra.mxu0 0
      %4786 = vmatprep.subr.bf16.mxu0 0
      %4787 = vmatpush1.bf16.msra.mxu0 0
      %4788 = vmatprep.subr.bf16.mxu0 0
      %4789 = vmatpush1.bf16.msra.mxu0 0
      %4790 = vmatprep.subr.bf16.mxu0 0
      %4791 = vmatpush1.bf16.msra.mxu0 %v4729
      %4792 = vmatprep.subr.bf16.mxu0 0
      %4793 = vmatpush1.bf16.msra.mxu0 %v4728
      %4794 = vmatprep.subr.bf16.mxu0 0
      %4795 = vmatpush1.bf16.msra.mxu0 %v4727
      %4796 = vmatprep.subr.bf16.mxu0 0
      %4797 = vmatpush1.bf16.msra.mxu0 %v4726
      %4798 = vmatprep.subr.bf16.mxu0 0
      %4799 = vmatpush2.bf16.msra.mxu0 0
      %4800 = vmatprep.subr.bf16.mxu0 0
      %4801 = vmatpush2.bf16.msra.mxu0 0
      %4802 = vmatprep.subr.bf16.mxu0 0
      %4803 = vmatpush2.bf16.msra.mxu0 0
      %4804 = vmatprep.subr.bf16.mxu0 0
      %4805 = vmatpush2.bf16.msra.mxu0 0
      %4806 = vmatprep.subr.bf16.mxu0 0
      %4807 = vmatpush2.bf16.msra.mxu0 0
      %4808 = vmatprep.subr.bf16.mxu0 0
      %4809 = vmatpush2.bf16.msra.mxu0 0
      %4810 = vmatprep.subr.bf16.mxu0 0
      %4811 = vmatpush2.bf16.msra.mxu0 0
      %4812 = vmatprep.subr.bf16.mxu0 0
      %4813 = vmatpush2.bf16.msra.mxu0 0
      %4814 = vmatprep.mubr.bf16.mxu0 0
      %4815 = vmatmul.mubr.bf16.gmra.mxu0 %v4735
      %v4816 = vpop.f32.mrf.mxu0
      %v4817 = vadd.f32 %v4584, %v4816
      %v4818 = vpop.f32.mrf.mxu0
      %v4819 = vpop.f32.mrf.mxu0
      %v4820 = vadd.f32 %v4587, %v4819
      %v4821 = vpop.f32.mrf.mxu0
      %4822 = vmatprep.mubr.bf16.mxu0 0
      %4823 = vmatmul.mubr.bf16.gmra.mxu0 %v4738
      %v4824 = vpop.f32.mrf.mxu0
      %v4825 = vadd.f32 %v4592, %v4824
      %v4826 = vpop.f32.mrf.mxu0
      %v4827 = vpop.f32.mrf.mxu0
      %v4828 = vadd.f32 %v4595, %v4827
      %v4829 = vpop.f32.mrf.mxu0
      %4830 = vmatprep.mubr.bf16.mxu0 0
      %4831 = vmatmul.mubr.bf16.gmra.mxu0 %v4741
      %v4832 = vpop.f32.mrf.mxu0
      %v4833 = vadd.f32 %v4600, %v4832
      %v4834 = vpop.f32.mrf.mxu0
      %v4835 = vpop.f32.mrf.mxu0
      %v4836 = vadd.f32 %v4603, %v4835
      %v4837 = vpop.f32.mrf.mxu0
      %4838 = vmatprep.mubr.bf16.mxu0 0
      %4839 = vmatmul.mubr.bf16.gmra.mxu0 %v4744
      %v4840 = vpop.f32.mrf.mxu0
      %v4841 = vadd.f32 %v4608, %v4840
      %v4842 = vpop.f32.mrf.mxu0
      %v4843 = vpop.f32.mrf.mxu0
      %v4844 = vadd.f32 %v4611, %v4843
      %v4845 = vpop.f32.mrf.mxu0
      %4846 = vmatprep.mubr.bf16.mxu0 0
      %4847 = vmatmul.mubr.bf16.gmra.mxu0 %v4747
      %v4848 = vpop.f32.mrf.mxu0
      %v4849 = vadd.f32 %v4616, %v4848
      %v4850 = vpop.f32.mrf.mxu0
      %v4851 = vpop.f32.mrf.mxu0
      %v4852 = vadd.f32 %v4619, %v4851
      %v4853 = vpop.f32.mrf.mxu0
      %4854 = vmatprep.mubr.bf16.mxu0 0
      %4855 = vmatmul.mubr.bf16.gmra.mxu0 %v4750
      %v4856 = vpop.f32.mrf.mxu0
      %v4857 = vadd.f32 %v4624, %v4856
      %v4858 = vpop.f32.mrf.mxu0
      %v4859 = vpop.f32.mrf.mxu0
      %v4860 = vadd.f32 %v4627, %v4859
      %v4861 = vpop.f32.mrf.mxu0
      %4862 = vmatprep.mubr.bf16.mxu0 0
      %4863 = vmatmul.mubr.bf16.gmra.mxu0 %v4753
      %v4864 = vpop.f32.mrf.mxu0
      %v4865 = vadd.f32 %v4632, %v4864
      %v4866 = vpop.f32.mrf.mxu0
      %v4867 = vpop.f32.mrf.mxu0
      %v4868 = vadd.f32 %v4635, %v4867
      %v4869 = vpop.f32.mrf.mxu0
      %4870 = vmatprep.mubr.bf16.mxu0 0
      %4871 = vmatmul.mubr.bf16.gmra.mxu0 %v4756
      %v4872 = vpop.f32.mrf.mxu0
      %v4873 = vadd.f32 %v4640, %v4872
      %v4874 = vpop.f32.mrf.mxu0
      %v4875 = vpop.f32.mrf.mxu0
      %v4876 = vadd.f32 %v4643, %v4875
      %v4877 = vpop.f32.mrf.mxu0
      %4878 = vmatprep.mubr.bf16.mxu0 0
      %4879 = vmatmul.mubr.bf16.gmra.mxu0 %v4759
      %v4880 = vpop.f32.mrf.mxu0
      %v4881 = vadd.f32 %v4648, %v4880
      %v4882 = vpop.f32.mrf.mxu0
      %v4883 = vpop.f32.mrf.mxu0
      %v4884 = vadd.f32 %v4651, %v4883
      %v4885 = vpop.f32.mrf.mxu0
      %4886 = vmatprep.mubr.bf16.mxu0 0
      %4887 = vmatmul.mubr.bf16.gmra.mxu0 %v4762
      %v4888 = vpop.f32.mrf.mxu0
      %v4889 = vadd.f32 %v4656, %v4888
      %v4890 = vpop.f32.mrf.mxu0
      %v4891 = vpop.f32.mrf.mxu0
      %v4892 = vadd.f32 %v4659, %v4891
      %v4893 = vpop.f32.mrf.mxu0
      %4894 = vmatprep.mubr.bf16.mxu0 0
      %4895 = vmatmul.mubr.bf16.gmra.mxu0 %v4765
      %v4896 = vpop.f32.mrf.mxu0
      %v4897 = vadd.f32 %v4664, %v4896
      %v4898 = vpop.f32.mrf.mxu0
      %v4899 = vpop.f32.mrf.mxu0
      %v4900 = vadd.f32 %v4667, %v4899
      %v4901 = vpop.f32.mrf.mxu0
      %4902 = vmatprep.mubr.bf16.mxu0 0
      %4903 = vmatmul.mubr.bf16.gmra.mxu0 %v4768
      %v4904 = vpop.f32.mrf.mxu0
      %v4905 = vadd.f32 %v4672, %v4904
      %v4906 = vpop.f32.mrf.mxu0
      %v4907 = vpop.f32.mrf.mxu0
      %v4908 = vadd.f32 %v4675, %v4907
      %v4909 = vpop.f32.mrf.mxu0
      %4910 = vmatprep.mubr.bf16.mxu0 0
      %4911 = vmatmul.mubr.bf16.gmra.mxu0 %v4771
      %v4912 = vpop.f32.mrf.mxu0
      %v4913 = vadd.f32 %v4680, %v4912
      %v4914 = vpop.f32.mrf.mxu0
      %v4915 = vpop.f32.mrf.mxu0
      %v4916 = vadd.f32 %v4683, %v4915
      %v4917 = vpop.f32.mrf.mxu0
      %4918 = vmatprep.mubr.bf16.mxu0 0
      %4919 = vmatmul.mubr.bf16.gmra.mxu0 %v4774
      %v4920 = vpop.f32.mrf.mxu0
      %v4921 = vadd.f32 %v4688, %v4920
      %v4922 = vpop.f32.mrf.mxu0
      %v4923 = vpop.f32.mrf.mxu0
      %v4924 = vadd.f32 %v4691, %v4923
      %v4925 = vpop.f32.mrf.mxu0
      %4926 = vmatprep.mubr.bf16.mxu0 0
      %4927 = vmatmul.mubr.bf16.gmra.mxu0 %v4777
      %v4928 = vpop.f32.mrf.mxu0
      %v4929 = vadd.f32 %v4696, %v4928
      %v4930 = vpop.f32.mrf.mxu0
      %v4931 = vpop.f32.mrf.mxu0
      %v4932 = vadd.f32 %v4699, %v4931
      %v4933 = vpop.f32.mrf.mxu0
      %4934 = vmatprep.mubr.bf16.mxu0 0
      %4935 = vmatmul.mubr.bf16.gmra.mxu0 %v4780
      %v4936 = vpop.f32.mrf.mxu0
      %v4937 = vadd.f32 %v4704, %v4936
      %v4938 = vpop.f32.mrf.mxu0
      %v4939 = vpop.f32.mrf.mxu0
      %v4940 = vadd.f32 %v4707, %v4939
      %v4941 = vpop.f32.mrf.mxu0
      %4942 = vdwg.mxu0
      %v4943 = vld [vmem:[#allocation2 + $0x2] sm:$0xff]
      %v4944 = vld [vmem:[#allocation2 + $0xa] sm:$0xff]
      %v4945 = vld [vmem:[#allocation2 + $0x1a] sm:$0xff]
      %v4946 = vld [vmem:[#allocation2 + $0x22] sm:$0xff]
      %v4947 = vld [vmem:[#allocation2 + $0x32] sm:$0xff]
      %v4948 = vld [vmem:[#allocation2 + $0x3a] sm:$0xff]
      %v4949 = vld [vmem:[#allocation2 + $0x4a] sm:$0xff]
      %v4950 = vld [vmem:[#allocation2 + $0x52] sm:$0xff]
      %v4951 = vld [vmem:[#allocation2 + $0x62] sm:$0xff]
      %v4952 = vld [vmem:[#allocation2 + $0x6a] sm:$0xff]
      %v4953 = vld [vmem:[#allocation2 + $0x7a] sm:$0xff]
      %v4954 = vld [vmem:[#allocation2 + $0x82] sm:$0xff]
      %v4955 = vld [vmem:[#allocation2 + $0x92] sm:$0xff]
      %v4956 = vld [vmem:[#allocation2 + $0x9a] sm:$0xff]
      %v4957 = vld [vmem:[#allocation2 + $0xaa] sm:$0xff]
      %v4958 = vld [vmem:[#allocation2 + $0xb2] sm:$0xff]
      %v4959 = vld [vmem:[#allocation2 + $0xc2] sm:$0xff]
      %v4960 = vld [vmem:[#allocation2 + $0xca] sm:$0xff]
      %v4961 = vld [vmem:[#allocation2 + $0xda] sm:$0xff]
      %v4962 = vld [vmem:[#allocation2 + $0xe2] sm:$0xff]
      %v4963 = vld [vmem:[#allocation2 + $0xf2] sm:$0xff]
      %v4964 = vld [vmem:[#allocation2 + $0xfa] sm:$0xff]
      %v4965 = vld [vmem:[#allocation2 + $0x10a] sm:$0xff]
      %v4966 = vld [vmem:[#allocation2 + $0x112] sm:$0xff]
      %v4967 = vld [vmem:[#allocation2 + $0x122] sm:$0xff]
      %v4968 = vld [vmem:[#allocation2 + $0x12a] sm:$0xff]
      %v4969 = vld [vmem:[#allocation2 + $0x13a] sm:$0xff]
      %v4970 = vld [vmem:[#allocation2 + $0x142] sm:$0xff]
      %v4971 = vld [vmem:[#allocation2 + $0x152] sm:$0xff]
      %v4972 = vld [vmem:[#allocation2 + $0x15a] sm:$0xff]
      %v4973 = vld [vmem:[#allocation2 + $0x16a] sm:$0xff]
      %v4974 = vld [vmem:[#allocation2 + $0x172] sm:$0xff]
      %v4975 = vpack.c.bf16 %v4944, %v4943
      %v4976 = vpack.c.bf16 %v4946, %v4945
      %v4977 = vpack.c.bf16 %v4948, %v4947
      %v4978 = vpack.c.bf16 %v4950, %v4949
      %v4979 = vpack.c.bf16 %v4952, %v4951
      %v4980 = vpack.c.bf16 %v4954, %v4953
      %v4981 = vpack.c.bf16 %v4956, %v4955
      %v4982 = vpack.c.bf16 %v4958, %v4957
      %v4983 = vpack.c.bf16 %v4960, %v4959
      %v4984 = vpack.c.bf16 %v4962, %v4961
      %v4985 = vpack.c.bf16 %v4964, %v4963
      %v4986 = vpack.c.bf16 %v4966, %v4965
      %v4987 = vpack.c.bf16 %v4968, %v4967
      %v4988 = vpack.c.bf16 %v4970, %v4969
      %v4989 = vpack.c.bf16 %v4972, %v4971
      %v4990 = vpack.c.bf16 %v4974, %v4973
      %s4991 = scalar_lea.vmem %s3, 64
      %v4992 = vld [vmem:[%s4991] sm:$0xf]
      %v4993 = vld [vmem:[%s4991 + $0x4] sm:$0xf]
      %v4994 = vld [vmem:[%s4991 + $0x8] sm:$0xf]
      %v4995 = vld [vmem:[%s4991 + $0xc] sm:$0xf]
      %v4996 = vld [vmem:[%s4991 + $0x10] sm:$0xf]
      %v4997 = vld [vmem:[%s4991 + $0x14] sm:$0xf]
      %v4998 = vld [vmem:[%s4991 + $0x18] sm:$0xf]
      %v4999 = vld [vmem:[%s4991 + $0x1c] sm:$0xf]
      %v5008 = vunpack.c.l.b16 %v4992
      %v5009 = vunpack.c.l.b16 %v4993
      %v5010 = vunpack.c.l.b16 %v4994
      %v5011 = vunpack.c.l.b16 %v4995
      %v5012 = vunpack.c.l.b16 %v4996
      %v5013 = vunpack.c.l.b16 %v4997
      %v5014 = vunpack.c.l.b16 %v4998
      %v5015 = vunpack.c.l.b16 %v4999
      %v5016 = vpack.c.b16 %v5009, %v5008
      %v5017 = vpack.c.b16 %v5011, %v5010
      %v5018 = vpack.c.b16 %v5013, %v5012
      %v5019 = vpack.c.b16 %v5015, %v5014
      %v5025 = vsel %vm784, %v4975, 0
      %v5028 = vsel %vm784, %v4976, 0
      %v5031 = vsel %vm784, %v4977, 0
      %v5034 = vsel %vm784, %v4978, 0
      %v5037 = vsel %vm784, %v4979, 0
      %v5040 = vsel %vm784, %v4980, 0
      %v5043 = vsel %vm784, %v4981, 0
      %v5046 = vsel %vm784, %v4982, 0
      %v5049 = vsel %vm784, %v4983, 0
      %v5052 = vsel %vm784, %v4984, 0
      %v5055 = vsel %vm784, %v4985, 0
      %v5058 = vsel %vm784, %v4986, 0
      %v5061 = vsel %vm784, %v4987, 0
      %v5064 = vsel %vm784, %v4988, 0
      %v5067 = vsel %vm784, %v4989, 0
      %v5070 = vsel %vm784, %v4990, 0
      %5072 = vmatprep.subr.bf16.mxu0 0
      %5073 = vmatpush1.bf16.msra.mxu0 0
      %5074 = vmatprep.subr.bf16.mxu0 0
      %5075 = vmatpush1.bf16.msra.mxu0 0
      %5076 = vmatprep.subr.bf16.mxu0 0
      %5077 = vmatpush1.bf16.msra.mxu0 0
      %5078 = vmatprep.subr.bf16.mxu0 0
      %5079 = vmatpush1.bf16.msra.mxu0 0
      %5080 = vmatprep.subr.bf16.mxu0 0
      %5081 = vmatpush1.bf16.msra.mxu0 %v5019
      %5082 = vmatprep.subr.bf16.mxu0 0
      %5083 = vmatpush1.bf16.msra.mxu0 %v5018
      %5084 = vmatprep.subr.bf16.mxu0 0
      %5085 = vmatpush1.bf16.msra.mxu0 %v5017
      %5086 = vmatprep.subr.bf16.mxu0 0
      %5087 = vmatpush1.bf16.msra.mxu0 %v5016
      %5088 = vmatprep.subr.bf16.mxu0 0
      %5089 = vmatpush2.bf16.msra.mxu0 0
      %5090 = vmatprep.subr.bf16.mxu0 0
      %5091 = vmatpush2.bf16.msra.mxu0 0
      %5092 = vmatprep.subr.bf16.mxu0 0
      %5093 = vmatpush2.bf16.msra.mxu0 0
      %5094 = vmatprep.subr.bf16.mxu0 0
      %5095 = vmatpush2.bf16.msra.mxu0 0
      %5096 = vmatprep.subr.bf16.mxu0 0
      %5097 = vmatpush2.bf16.msra.mxu0 0
      %5098 = vmatprep.subr.bf16.mxu0 0
      %5099 = vmatpush2.bf16.msra.mxu0 0
      %5100 = vmatprep.subr.bf16.mxu0 0
      %5101 = vmatpush2.bf16.msra.mxu0 0
      %5102 = vmatprep.subr.bf16.mxu0 0
      %5103 = vmatpush2.bf16.msra.mxu0 0
      %5104 = vmatprep.mubr.bf16.mxu0 0
      %5105 = vmatmul.mubr.bf16.gmra.mxu0 %v5025
      %v5106 = vpop.f32.mrf.mxu0
      %v5107 = vadd.f32 0.0, %v5106
      %v5108 = vpop.f32.mrf.mxu0
      %v5109 = vpop.f32.mrf.mxu0
      %v5110 = vadd.f32 0.0, %v5109
      %v5111 = vpop.f32.mrf.mxu0
      %5112 = vmatprep.mubr.bf16.mxu0 0
      %5113 = vmatmul.mubr.bf16.gmra.mxu0 %v5028
      %v5114 = vpop.f32.mrf.mxu0
      %v5115 = vadd.f32 0.0, %v5114
      %v5116 = vpop.f32.mrf.mxu0
      %v5117 = vpop.f32.mrf.mxu0
      %v5118 = vadd.f32 0.0, %v5117
      %v5119 = vpop.f32.mrf.mxu0
      %5120 = vmatprep.mubr.bf16.mxu0 0
      %5121 = vmatmul.mubr.bf16.gmra.mxu0 %v5031
      %v5122 = vpop.f32.mrf.mxu0
      %v5123 = vadd.f32 0.0, %v5122
      %v5124 = vpop.f32.mrf.mxu0
      %v5125 = vpop.f32.mrf.mxu0
      %v5126 = vadd.f32 0.0, %v5125
      %v5127 = vpop.f32.mrf.mxu0
      %5128 = vmatprep.mubr.bf16.mxu0 0
      %5129 = vmatmul.mubr.bf16.gmra.mxu0 %v5034
      %v5130 = vpop.f32.mrf.mxu0
      %v5131 = vadd.f32 0.0, %v5130
      %v5132 = vpop.f32.mrf.mxu0
      %v5133 = vpop.f32.mrf.mxu0
      %v5134 = vadd.f32 0.0, %v5133
      %v5135 = vpop.f32.mrf.mxu0
      %5136 = vmatprep.mubr.bf16.mxu0 0
      %5137 = vmatmul.mubr.bf16.gmra.mxu0 %v5037
      %v5138 = vpop.f32.mrf.mxu0
      %v5139 = vadd.f32 0.0, %v5138
      %v5140 = vpop.f32.mrf.mxu0
      %v5141 = vpop.f32.mrf.mxu0
      %v5142 = vadd.f32 0.0, %v5141
      %v5143 = vpop.f32.mrf.mxu0
      %5144 = vmatprep.mubr.bf16.mxu0 0
      %5145 = vmatmul.mubr.bf16.gmra.mxu0 %v5040
      %v5146 = vpop.f32.mrf.mxu0
      %v5147 = vadd.f32 0.0, %v5146
      %v5148 = vpop.f32.mrf.mxu0
      %v5149 = vpop.f32.mrf.mxu0
      %v5150 = vadd.f32 0.0, %v5149
      %v5151 = vpop.f32.mrf.mxu0
      %5152 = vmatprep.mubr.bf16.mxu0 0
      %5153 = vmatmul.mubr.bf16.gmra.mxu0 %v5043
      %v5154 = vpop.f32.mrf.mxu0
      %v5155 = vadd.f32 0.0, %v5154
      %v5156 = vpop.f32.mrf.mxu0
      %v5157 = vpop.f32.mrf.mxu0
      %v5158 = vadd.f32 0.0, %v5157
      %v5159 = vpop.f32.mrf.mxu0
      %5160 = vmatprep.mubr.bf16.mxu0 0
      %5161 = vmatmul.mubr.bf16.gmra.mxu0 %v5046
      %v5162 = vpop.f32.mrf.mxu0
      %v5163 = vadd.f32 0.0, %v5162
      %v5164 = vpop.f32.mrf.mxu0
      %v5165 = vpop.f32.mrf.mxu0
      %v5166 = vadd.f32 0.0, %v5165
      %v5167 = vpop.f32.mrf.mxu0
      %5168 = vmatprep.mubr.bf16.mxu0 0
      %5169 = vmatmul.mubr.bf16.gmra.mxu0 %v5049
      %v5170 = vpop.f32.mrf.mxu0
      %v5171 = vadd.f32 0.0, %v5170
      %v5172 = vpop.f32.mrf.mxu0
      %v5173 = vpop.f32.mrf.mxu0
      %v5174 = vadd.f32 0.0, %v5173
      %v5175 = vpop.f32.mrf.mxu0
      %5176 = vmatprep.mubr.bf16.mxu0 0
      %5177 = vmatmul.mubr.bf16.gmra.mxu0 %v5052
      %v5178 = vpop.f32.mrf.mxu0
      %v5179 = vadd.f32 0.0, %v5178
      %v5180 = vpop.f32.mrf.mxu0
      %v5181 = vpop.f32.mrf.mxu0
      %v5182 = vadd.f32 0.0, %v5181
      %v5183 = vpop.f32.mrf.mxu0
      %5184 = vmatprep.mubr.bf16.mxu0 0
      %5185 = vmatmul.mubr.bf16.gmra.mxu0 %v5055
      %v5186 = vpop.f32.mrf.mxu0
      %v5187 = vadd.f32 0.0, %v5186
      %v5188 = vpop.f32.mrf.mxu0
      %v5189 = vpop.f32.mrf.mxu0
      %v5190 = vadd.f32 0.0, %v5189
      %v5191 = vpop.f32.mrf.mxu0
      %5192 = vmatprep.mubr.bf16.mxu0 0
      %5193 = vmatmul.mubr.bf16.gmra.mxu0 %v5058
      %v5194 = vpop.f32.mrf.mxu0
      %v5195 = vadd.f32 0.0, %v5194
      %v5196 = vpop.f32.mrf.mxu0
      %v5197 = vpop.f32.mrf.mxu0
      %v5198 = vadd.f32 0.0, %v5197
      %v5199 = vpop.f32.mrf.mxu0
      %5200 = vmatprep.mubr.bf16.mxu0 0
      %5201 = vmatmul.mubr.bf16.gmra.mxu0 %v5061
      %v5202 = vpop.f32.mrf.mxu0
      %v5203 = vadd.f32 0.0, %v5202
      %v5204 = vpop.f32.mrf.mxu0
      %v5205 = vpop.f32.mrf.mxu0
      %v5206 = vadd.f32 0.0, %v5205
      %v5207 = vpop.f32.mrf.mxu0
      %5208 = vmatprep.mubr.bf16.mxu0 0
      %5209 = vmatmul.mubr.bf16.gmra.mxu0 %v5064
      %v5210 = vpop.f32.mrf.mxu0
      %v5211 = vadd.f32 0.0, %v5210
      %v5212 = vpop.f32.mrf.mxu0
      %v5213 = vpop.f32.mrf.mxu0
      %v5214 = vadd.f32 0.0, %v5213
      %v5215 = vpop.f32.mrf.mxu0
      %5216 = vmatprep.mubr.bf16.mxu0 0
      %5217 = vmatmul.mubr.bf16.gmra.mxu0 %v5067
      %v5218 = vpop.f32.mrf.mxu0
      %v5219 = vadd.f32 0.0, %v5218
      %v5220 = vpop.f32.mrf.mxu0
      %v5221 = vpop.f32.mrf.mxu0
      %v5222 = vadd.f32 0.0, %v5221
      %v5223 = vpop.f32.mrf.mxu0
      %5224 = vmatprep.mubr.bf16.mxu0 0
      %5225 = vmatmul.mubr.bf16.gmra.mxu0 %v5070
      %v5226 = vpop.f32.mrf.mxu0
      %v5227 = vadd.f32 0.0, %v5226
      %v5228 = vpop.f32.mrf.mxu0
      %v5229 = vpop.f32.mrf.mxu0
      %v5230 = vadd.f32 0.0, %v5229
      %v5231 = vpop.f32.mrf.mxu0
      %5232 = vdwg.mxu0
      %v5233 = vadd.f32 %v4817, %v5107
      %v5234 = vadd.f32 %v4820, %v5110
      %v5235 = vadd.f32 %v4825, %v5115
      %v5236 = vadd.f32 %v4828, %v5118
      %v5237 = vadd.f32 %v4833, %v5123
      %v5238 = vadd.f32 %v4836, %v5126
      %v5239 = vadd.f32 %v4841, %v5131
      %v5240 = vadd.f32 %v4844, %v5134
      %v5241 = vadd.f32 %v4849, %v5139
      %v5242 = vadd.f32 %v4852, %v5142
      %v5243 = vadd.f32 %v4857, %v5147
      %v5244 = vadd.f32 %v4860, %v5150
      %v5245 = vadd.f32 %v4865, %v5155
      %v5246 = vadd.f32 %v4868, %v5158
      %v5247 = vadd.f32 %v4873, %v5163
      %v5248 = vadd.f32 %v4876, %v5166
      %v5249 = vadd.f32 %v4881, %v5171
      %v5250 = vadd.f32 %v4884, %v5174
      %v5251 = vadd.f32 %v4889, %v5179
      %v5252 = vadd.f32 %v4892, %v5182
      %v5253 = vadd.f32 %v4897, %v5187
      %v5254 = vadd.f32 %v4900, %v5190
      %v5255 = vadd.f32 %v4905, %v5195
      %v5256 = vadd.f32 %v4908, %v5198
      %v5257 = vadd.f32 %v4913, %v5203
      %v5258 = vadd.f32 %v4916, %v5206
      %v5259 = vadd.f32 %v4921, %v5211
      %v5260 = vadd.f32 %v4924, %v5214
      %v5261 = vadd.f32 %v4929, %v5219
      %v5262 = vadd.f32 %v4932, %v5222
      %v5263 = vadd.f32 %v4937, %v5227
      %v5264 = vadd.f32 %v4940, %v5230
      %v5265 = vld [vmem:[%s968] sm:$0xff]
      %v5266 = vld [vmem:[%s968 + $0x8] sm:$0xff]
      %v5267 = vld [vmem:[%s968 + $0x18] sm:$0xff]
      %v5268 = vld [vmem:[%s968 + $0x20] sm:$0xff]
      %v5269 = vld [vmem:[%s968 + $0x30] sm:$0xff]
      %v5270 = vld [vmem:[%s968 + $0x38] sm:$0xff]
      %v5271 = vld [vmem:[%s968 + $0x48] sm:$0xff]
      %v5272 = vld [vmem:[%s968 + $0x50] sm:$0xff]
      %v5273 = vld [vmem:[%s968 + $0x60] sm:$0xff]
      %v5274 = vld [vmem:[%s968 + $0x68] sm:$0xff]
      %v5275 = vld [vmem:[%s968 + $0x78] sm:$0xff]
      %v5276 = vld [vmem:[%s968 + $0x80] sm:$0xff]
      %v5277 = vld [vmem:[%s968 + $0x90] sm:$0xff]
      %v5278 = vld [vmem:[%s968 + $0x98] sm:$0xff]
      %v5279 = vld [vmem:[%s968 + $0xa8] sm:$0xff]
      %v5280 = vld [vmem:[%s968 + $0xb0] sm:$0xff]
      %v5281 = vld [vmem:[%s968 + $0xc0] sm:$0xff]
      %v5282 = vld [vmem:[%s968 + $0xc8] sm:$0xff]
      %v5283 = vld [vmem:[%s968 + $0xd8] sm:$0xff]
      %v5284 = vld [vmem:[%s968 + $0xe0] sm:$0xff]
      %v5285 = vld [vmem:[%s968 + $0xf0] sm:$0xff]
      %v5286 = vld [vmem:[%s968 + $0xf8] sm:$0xff]
      %v5287 = vld [vmem:[%s968 + $0x108] sm:$0xff]
      %v5288 = vld [vmem:[%s968 + $0x110] sm:$0xff]
      %v5289 = vld [vmem:[%s968 + $0x120] sm:$0xff]
      %v5290 = vld [vmem:[%s968 + $0x128] sm:$0xff]
      %v5291 = vld [vmem:[%s968 + $0x138] sm:$0xff]
      %v5292 = vld [vmem:[%s968 + $0x140] sm:$0xff]
      %v5293 = vld [vmem:[%s968 + $0x150] sm:$0xff]
      %v5294 = vld [vmem:[%s968 + $0x158] sm:$0xff]
      %v5295 = vld [vmem:[%s968 + $0x168] sm:$0xff]
      %v5296 = vld [vmem:[%s968 + $0x170] sm:$0xff]
      %v5297 = vpack.c.bf16 %v5266, %v5265
      %v5298 = vpack.c.bf16 %v5268, %v5267
      %v5299 = vpack.c.bf16 %v5270, %v5269
      %v5300 = vpack.c.bf16 %v5272, %v5271
      %v5301 = vpack.c.bf16 %v5274, %v5273
      %v5302 = vpack.c.bf16 %v5276, %v5275
      %v5303 = vpack.c.bf16 %v5278, %v5277
      %v5304 = vpack.c.bf16 %v5280, %v5279
      %v5305 = vpack.c.bf16 %v5282, %v5281
      %v5306 = vpack.c.bf16 %v5284, %v5283
      %v5307 = vpack.c.bf16 %v5286, %v5285
      %v5308 = vpack.c.bf16 %v5288, %v5287
      %v5309 = vpack.c.bf16 %v5290, %v5289
      %v5310 = vpack.c.bf16 %v5292, %v5291
      %v5311 = vpack.c.bf16 %v5294, %v5293
      %v5312 = vpack.c.bf16 %v5296, %v5295
      %s5313 = scalar_lea.vmem %s3, 96
      %v5314 = vld [vmem:[%s5313] sm:$0xf]
      %v5315 = vld [vmem:[%s5313 + $0x4] sm:$0xf]
      %v5316 = vld [vmem:[%s5313 + $0x8] sm:$0xf]
      %v5317 = vld [vmem:[%s5313 + $0xc] sm:$0xf]
      %v5318 = vld [vmem:[%s5313 + $0x10] sm:$0xf]
      %v5319 = vld [vmem:[%s5313 + $0x14] sm:$0xf]
      %v5320 = vld [vmem:[%s5313 + $0x18] sm:$0xf]
      %v5321 = vld [vmem:[%s5313 + $0x1c] sm:$0xf]
      %v5330 = vunpack.c.l.b16 %v5314
      %v5331 = vunpack.c.l.b16 %v5315
      %v5332 = vunpack.c.l.b16 %v5316
      %v5333 = vunpack.c.l.b16 %v5317
      %v5334 = vunpack.c.l.b16 %v5318
      %v5335 = vunpack.c.l.b16 %v5319
      %v5336 = vunpack.c.l.b16 %v5320
      %v5337 = vunpack.c.l.b16 %v5321
      %v5338 = vpack.c.b16 %v5331, %v5330
      %v5339 = vpack.c.b16 %v5333, %v5332
      %v5340 = vpack.c.b16 %v5335, %v5334
      %v5341 = vpack.c.b16 %v5337, %v5336
      %v5347 = vsel %vm784, %v5297, 0
      %v5350 = vsel %vm784, %v5298, 0
      %v5353 = vsel %vm784, %v5299, 0
      %v5356 = vsel %vm784, %v5300, 0
      %v5359 = vsel %vm784, %v5301, 0
      %v5362 = vsel %vm784, %v5302, 0
      %v5365 = vsel %vm784, %v5303, 0
      %v5368 = vsel %vm784, %v5304, 0
      %v5371 = vsel %vm784, %v5305, 0
      %v5374 = vsel %vm784, %v5306, 0
      %v5377 = vsel %vm784, %v5307, 0
      %v5380 = vsel %vm784, %v5308, 0
      %v5383 = vsel %vm784, %v5309, 0
      %v5386 = vsel %vm784, %v5310, 0
      %v5389 = vsel %vm784, %v5311, 0
      %v5392 = vsel %vm784, %v5312, 0
      %5394 = vmatprep.subr.bf16.mxu0 0
      %5395 = vmatpush1.bf16.msra.mxu0 0
      %5396 = vmatprep.subr.bf16.mxu0 0
      %5397 = vmatpush1.bf16.msra.mxu0 0
      %5398 = vmatprep.subr.bf16.mxu0 0
      %5399 = vmatpush1.bf16.msra.mxu0 0
      %5400 = vmatprep.subr.bf16.mxu0 0
      %5401 = vmatpush1.bf16.msra.mxu0 0
      %5402 = vmatprep.subr.bf16.mxu0 0
      %5403 = vmatpush1.bf16.msra.mxu0 %v5341
      %5404 = vmatprep.subr.bf16.mxu0 0
      %5405 = vmatpush1.bf16.msra.mxu0 %v5340
      %5406 = vmatprep.subr.bf16.mxu0 0
      %5407 = vmatpush1.bf16.msra.mxu0 %v5339
      %5408 = vmatprep.subr.bf16.mxu0 0
      %5409 = vmatpush1.bf16.msra.mxu0 %v5338
      %5410 = vmatprep.subr.bf16.mxu0 0
      %5411 = vmatpush2.bf16.msra.mxu0 0
      %5412 = vmatprep.subr.bf16.mxu0 0
      %5413 = vmatpush2.bf16.msra.mxu0 0
      %5414 = vmatprep.subr.bf16.mxu0 0
      %5415 = vmatpush2.bf16.msra.mxu0 0
      %5416 = vmatprep.subr.bf16.mxu0 0
      %5417 = vmatpush2.bf16.msra.mxu0 0
      %5418 = vmatprep.subr.bf16.mxu0 0
      %5419 = vmatpush2.bf16.msra.mxu0 0
      %5420 = vmatprep.subr.bf16.mxu0 0
      %5421 = vmatpush2.bf16.msra.mxu0 0
      %5422 = vmatprep.subr.bf16.mxu0 0
      %5423 = vmatpush2.bf16.msra.mxu0 0
      %5424 = vmatprep.subr.bf16.mxu0 0
      %5425 = vmatpush2.bf16.msra.mxu0 0
      %5426 = vmatprep.mubr.bf16.mxu0 0
      %5427 = vmatmul.mubr.bf16.gmra.mxu0 %v5347
      %v5428 = vpop.f32.mrf.mxu0
      %v5429 = vadd.f32 0.0, %v5428
      %v5430 = vpop.f32.mrf.mxu0
      %v5431 = vpop.f32.mrf.mxu0
      %v5432 = vadd.f32 0.0, %v5431
      %v5433 = vpop.f32.mrf.mxu0
      %5434 = vmatprep.mubr.bf16.mxu0 0
      %5435 = vmatmul.mubr.bf16.gmra.mxu0 %v5350
      %v5436 = vpop.f32.mrf.mxu0
      %v5437 = vadd.f32 0.0, %v5436
      %v5438 = vpop.f32.mrf.mxu0
      %v5439 = vpop.f32.mrf.mxu0
      %v5440 = vadd.f32 0.0, %v5439
      %v5441 = vpop.f32.mrf.mxu0
      %5442 = vmatprep.mubr.bf16.mxu0 0
      %5443 = vmatmul.mubr.bf16.gmra.mxu0 %v5353
      %v5444 = vpop.f32.mrf.mxu0
      %v5445 = vadd.f32 0.0, %v5444
      %v5446 = vpop.f32.mrf.mxu0
      %v5447 = vpop.f32.mrf.mxu0
      %v5448 = vadd.f32 0.0, %v5447
      %v5449 = vpop.f32.mrf.mxu0
      %5450 = vmatprep.mubr.bf16.mxu0 0
      %5451 = vmatmul.mubr.bf16.gmra.mxu0 %v5356
      %v5452 = vpop.f32.mrf.mxu0
      %v5453 = vadd.f32 0.0, %v5452
      %v5454 = vpop.f32.mrf.mxu0
      %v5455 = vpop.f32.mrf.mxu0
      %v5456 = vadd.f32 0.0, %v5455
      %v5457 = vpop.f32.mrf.mxu0
      %5458 = vmatprep.mubr.bf16.mxu0 0
      %5459 = vmatmul.mubr.bf16.gmra.mxu0 %v5359
      %v5460 = vpop.f32.mrf.mxu0
      %v5461 = vadd.f32 0.0, %v5460
      %v5462 = vpop.f32.mrf.mxu0
      %v5463 = vpop.f32.mrf.mxu0
      %v5464 = vadd.f32 0.0, %v5463
      %v5465 = vpop.f32.mrf.mxu0
      %5466 = vmatprep.mubr.bf16.mxu0 0
      %5467 = vmatmul.mubr.bf16.gmra.mxu0 %v5362
      %v5468 = vpop.f32.mrf.mxu0
      %v5469 = vadd.f32 0.0, %v5468
      %v5470 = vpop.f32.mrf.mxu0
      %v5471 = vpop.f32.mrf.mxu0
      %v5472 = vadd.f32 0.0, %v5471
      %v5473 = vpop.f32.mrf.mxu0
      %5474 = vmatprep.mubr.bf16.mxu0 0
      %5475 = vmatmul.mubr.bf16.gmra.mxu0 %v5365
      %v5476 = vpop.f32.mrf.mxu0
      %v5477 = vadd.f32 0.0, %v5476
      %v5478 = vpop.f32.mrf.mxu0
      %v5479 = vpop.f32.mrf.mxu0
      %v5480 = vadd.f32 0.0, %v5479
      %v5481 = vpop.f32.mrf.mxu0
      %5482 = vmatprep.mubr.bf16.mxu0 0
      %5483 = vmatmul.mubr.bf16.gmra.mxu0 %v5368
      %v5484 = vpop.f32.mrf.mxu0
      %v5485 = vadd.f32 0.0, %v5484
      %v5486 = vpop.f32.mrf.mxu0
      %v5487 = vpop.f32.mrf.mxu0
      %v5488 = vadd.f32 0.0, %v5487
      %v5489 = vpop.f32.mrf.mxu0
      %5490 = vmatprep.mubr.bf16.mxu0 0
      %5491 = vmatmul.mubr.bf16.gmra.mxu0 %v5371
      %v5492 = vpop.f32.mrf.mxu0
      %v5493 = vadd.f32 0.0, %v5492
      %v5494 = vpop.f32.mrf.mxu0
      %v5495 = vpop.f32.mrf.mxu0
      %v5496 = vadd.f32 0.0, %v5495
      %v5497 = vpop.f32.mrf.mxu0
      %5498 = vmatprep.mubr.bf16.mxu0 0
      %5499 = vmatmul.mubr.bf16.gmra.mxu0 %v5374
      %v5500 = vpop.f32.mrf.mxu0
      %v5501 = vadd.f32 0.0, %v5500
      %v5502 = vpop.f32.mrf.mxu0
      %v5503 = vpop.f32.mrf.mxu0
      %v5504 = vadd.f32 0.0, %v5503
      %v5505 = vpop.f32.mrf.mxu0
      %5506 = vmatprep.mubr.bf16.mxu0 0
      %5507 = vmatmul.mubr.bf16.gmra.mxu0 %v5377
      %v5508 = vpop.f32.mrf.mxu0
      %v5509 = vadd.f32 0.0, %v5508
      %v5510 = vpop.f32.mrf.mxu0
      %v5511 = vpop.f32.mrf.mxu0
      %v5512 = vadd.f32 0.0, %v5511
      %v5513 = vpop.f32.mrf.mxu0
      %5514 = vmatprep.mubr.bf16.mxu0 0
      %5515 = vmatmul.mubr.bf16.gmra.mxu0 %v5380
      %v5516 = vpop.f32.mrf.mxu0
      %v5517 = vadd.f32 0.0, %v5516
      %v5518 = vpop.f32.mrf.mxu0
      %v5519 = vpop.f32.mrf.mxu0
      %v5520 = vadd.f32 0.0, %v5519
      %v5521 = vpop.f32.mrf.mxu0
      %5522 = vmatprep.mubr.bf16.mxu0 0
      %5523 = vmatmul.mubr.bf16.gmra.mxu0 %v5383
      %v5524 = vpop.f32.mrf.mxu0
      %v5525 = vadd.f32 0.0, %v5524
      %v5526 = vpop.f32.mrf.mxu0
      %v5527 = vpop.f32.mrf.mxu0
      %v5528 = vadd.f32 0.0, %v5527
      %v5529 = vpop.f32.mrf.mxu0
      %5530 = vmatprep.mubr.bf16.mxu0 0
      %5531 = vmatmul.mubr.bf16.gmra.mxu0 %v5386
      %v5532 = vpop.f32.mrf.mxu0
      %v5533 = vadd.f32 0.0, %v5532
      %v5534 = vpop.f32.mrf.mxu0
      %v5535 = vpop.f32.mrf.mxu0
      %v5536 = vadd.f32 0.0, %v5535
      %v5537 = vpop.f32.mrf.mxu0
      %5538 = vmatprep.mubr.bf16.mxu0 0
      %5539 = vmatmul.mubr.bf16.gmra.mxu0 %v5389
      %v5540 = vpop.f32.mrf.mxu0
      %v5541 = vadd.f32 0.0, %v5540
      %v5542 = vpop.f32.mrf.mxu0
      %v5543 = vpop.f32.mrf.mxu0
      %v5544 = vadd.f32 0.0, %v5543
      %v5545 = vpop.f32.mrf.mxu0
      %5546 = vmatprep.mubr.bf16.mxu0 0
      %5547 = vmatmul.mubr.bf16.gmra.mxu0 %v5392
      %v5548 = vpop.f32.mrf.mxu0
      %v5549 = vadd.f32 0.0, %v5548
      %v5550 = vpop.f32.mrf.mxu0
      %v5551 = vpop.f32.mrf.mxu0
      %v5552 = vadd.f32 0.0, %v5551
      %v5553 = vpop.f32.mrf.mxu0
      %5554 = vdwg.mxu0
      %v5555 = vadd.f32 %v5233, %v5429
      %v5556 = vadd.f32 %v5234, %v5432
      %v5557 = vadd.f32 %v5235, %v5437
      %v5558 = vadd.f32 %v5236, %v5440
      %v5559 = vadd.f32 %v5237, %v5445
      %v5560 = vadd.f32 %v5238, %v5448
      %v5561 = vadd.f32 %v5239, %v5453
      %v5562 = vadd.f32 %v5240, %v5456
      %v5563 = vadd.f32 %v5241, %v5461
      %v5564 = vadd.f32 %v5242, %v5464
      %v5565 = vadd.f32 %v5243, %v5469
      %v5566 = vadd.f32 %v5244, %v5472
      %v5567 = vadd.f32 %v5245, %v5477
      %v5568 = vadd.f32 %v5246, %v5480
      %v5569 = vadd.f32 %v5247, %v5485
      %v5570 = vadd.f32 %v5248, %v5488
      %v5571 = vadd.f32 %v5249, %v5493
      %v5572 = vadd.f32 %v5250, %v5496
      %v5573 = vadd.f32 %v5251, %v5501
      %v5574 = vadd.f32 %v5252, %v5504
      %v5575 = vadd.f32 %v5253, %v5509
      %v5576 = vadd.f32 %v5254, %v5512
      %v5577 = vadd.f32 %v5255, %v5517
      %v5578 = vadd.f32 %v5256, %v5520
      %v5579 = vadd.f32 %v5257, %v5525
      %v5580 = vadd.f32 %v5258, %v5528
      %v5581 = vadd.f32 %v5259, %v5533
      %v5582 = vadd.f32 %v5260, %v5536
      %v5583 = vadd.f32 %v5261, %v5541
      %v5584 = vadd.f32 %v5262, %v5544
      %v5585 = vadd.f32 %v5263, %v5549
      %v5586 = vadd.f32 %v5264, %v5552
      %v5587 = vld [vmem:[%s968 + $0x1] sm:$0xff]
      %v5588 = vld [vmem:[%s968 + $0x9] sm:$0xff]
      %v5589 = vld [vmem:[%s968 + $0x19] sm:$0xff]
      %v5590 = vld [vmem:[%s968 + $0x21] sm:$0xff]
      %v5591 = vld [vmem:[%s968 + $0x31] sm:$0xff]
      %v5592 = vld [vmem:[%s968 + $0x39] sm:$0xff]
      %v5593 = vld [vmem:[%s968 + $0x49] sm:$0xff]
      %v5594 = vld [vmem:[%s968 + $0x51] sm:$0xff]
      %v5595 = vld [vmem:[%s968 + $0x61] sm:$0xff]
      %v5596 = vld [vmem:[%s968 + $0x69] sm:$0xff]
      %v5597 = vld [vmem:[%s968 + $0x79] sm:$0xff]
      %v5598 = vld [vmem:[%s968 + $0x81] sm:$0xff]
      %v5599 = vld [vmem:[%s968 + $0x91] sm:$0xff]
      %v5600 = vld [vmem:[%s968 + $0x99] sm:$0xff]
      %v5601 = vld [vmem:[%s968 + $0xa9] sm:$0xff]
      %v5602 = vld [vmem:[%s968 + $0xb1] sm:$0xff]
      %v5603 = vld [vmem:[%s968 + $0xc1] sm:$0xff]
      %v5604 = vld [vmem:[%s968 + $0xc9] sm:$0xff]
      %v5605 = vld [vmem:[%s968 + $0xd9] sm:$0xff]
      %v5606 = vld [vmem:[%s968 + $0xe1] sm:$0xff]
      %v5607 = vld [vmem:[%s968 + $0xf1] sm:$0xff]
      %v5608 = vld [vmem:[%s968 + $0xf9] sm:$0xff]
      %v5609 = vld [vmem:[%s968 + $0x109] sm:$0xff]
      %v5610 = vld [vmem:[%s968 + $0x111] sm:$0xff]
      %v5611 = vld [vmem:[%s968 + $0x121] sm:$0xff]
      %v5612 = vld [vmem:[%s968 + $0x129] sm:$0xff]
      %v5613 = vld [vmem:[%s968 + $0x139] sm:$0xff]
      %v5614 = vld [vmem:[%s968 + $0x141] sm:$0xff]
      %v5615 = vld [vmem:[%s968 + $0x151] sm:$0xff]
      %v5616 = vld [vmem:[%s968 + $0x159] sm:$0xff]
      %v5617 = vld [vmem:[%s968 + $0x169] sm:$0xff]
      %v5618 = vld [vmem:[%s968 + $0x171] sm:$0xff]
      %v5619 = vpack.c.bf16 %v5588, %v5587
      %v5620 = vpack.c.bf16 %v5590, %v5589
      %v5621 = vpack.c.bf16 %v5592, %v5591
      %v5622 = vpack.c.bf16 %v5594, %v5593
      %v5623 = vpack.c.bf16 %v5596, %v5595
      %v5624 = vpack.c.bf16 %v5598, %v5597
      %v5625 = vpack.c.bf16 %v5600, %v5599
      %v5626 = vpack.c.bf16 %v5602, %v5601
      %v5627 = vpack.c.bf16 %v5604, %v5603
      %v5628 = vpack.c.bf16 %v5606, %v5605
      %v5629 = vpack.c.bf16 %v5608, %v5607
      %v5630 = vpack.c.bf16 %v5610, %v5609
      %v5631 = vpack.c.bf16 %v5612, %v5611
      %v5632 = vpack.c.bf16 %v5614, %v5613
      %v5633 = vpack.c.bf16 %v5616, %v5615
      %v5634 = vpack.c.bf16 %v5618, %v5617
      %s5635 = scalar_lea.vmem %s3, 128
      %v5636 = vld [vmem:[%s5635] sm:$0xf]
      %v5637 = vld [vmem:[%s5635 + $0x4] sm:$0xf]
      %v5638 = vld [vmem:[%s5635 + $0x8] sm:$0xf]
      %v5639 = vld [vmem:[%s5635 + $0xc] sm:$0xf]
      %v5640 = vld [vmem:[%s5635 + $0x10] sm:$0xf]
      %v5641 = vld [vmem:[%s5635 + $0x14] sm:$0xf]
      %v5642 = vld [vmem:[%s5635 + $0x18] sm:$0xf]
      %v5643 = vld [vmem:[%s5635 + $0x1c] sm:$0xf]
      %v5652 = vunpack.c.l.b16 %v5636
      %v5653 = vunpack.c.l.b16 %v5637
      %v5654 = vunpack.c.l.b16 %v5638
      %v5655 = vunpack.c.l.b16 %v5639
      %v5656 = vunpack.c.l.b16 %v5640
      %v5657 = vunpack.c.l.b16 %v5641
      %v5658 = vunpack.c.l.b16 %v5642
      %v5659 = vunpack.c.l.b16 %v5643
      %v5660 = vpack.c.b16 %v5653, %v5652
      %v5661 = vpack.c.b16 %v5655, %v5654
      %v5662 = vpack.c.b16 %v5657, %v5656
      %v5663 = vpack.c.b16 %v5659, %v5658
      %v5669 = vsel %vm784, %v5619, 0
      %v5672 = vsel %vm784, %v5620, 0
      %v5675 = vsel %vm784, %v5621, 0
      %v5678 = vsel %vm784, %v5622, 0
      %v5681 = vsel %vm784, %v5623, 0
      %v5684 = vsel %vm784, %v5624, 0
      %v5687 = vsel %vm784, %v5625, 0
      %v5690 = vsel %vm784, %v5626, 0
      %v5693 = vsel %vm784, %v5627, 0
      %v5696 = vsel %vm784, %v5628, 0
      %v5699 = vsel %vm784, %v5629, 0
      %v5702 = vsel %vm784, %v5630, 0
      %v5705 = vsel %vm784, %v5631, 0
      %v5708 = vsel %vm784, %v5632, 0
      %v5711 = vsel %vm784, %v5633, 0
      %v5714 = vsel %vm784, %v5634, 0
      %5716 = vmatprep.subr.bf16.mxu0 0
      %5717 = vmatpush1.bf16.msra.mxu0 0
      %5718 = vmatprep.subr.bf16.mxu0 0
      %5719 = vmatpush1.bf16.msra.mxu0 0
      %5720 = vmatprep.subr.bf16.mxu0 0
      %5721 = vmatpush1.bf16.msra.mxu0 0
      %5722 = vmatprep.subr.bf16.mxu0 0
      %5723 = vmatpush1.bf16.msra.mxu0 0
      %5724 = vmatprep.subr.bf16.mxu0 0
      %5725 = vmatpush1.bf16.msra.mxu0 %v5663
      %5726 = vmatprep.subr.bf16.mxu0 0
      %5727 = vmatpush1.bf16.msra.mxu0 %v5662
      %5728 = vmatprep.subr.bf16.mxu0 0
      %5729 = vmatpush1.bf16.msra.mxu0 %v5661
      %5730 = vmatprep.subr.bf16.mxu0 0
      %5731 = vmatpush1.bf16.msra.mxu0 %v5660
      %5732 = vmatprep.subr.bf16.mxu0 0
      %5733 = vmatpush2.bf16.msra.mxu0 0
      %5734 = vmatprep.subr.bf16.mxu0 0
      %5735 = vmatpush2.bf16.msra.mxu0 0
      %5736 = vmatprep.subr.bf16.mxu0 0
      %5737 = vmatpush2.bf16.msra.mxu0 0
      %5738 = vmatprep.subr.bf16.mxu0 0
      %5739 = vmatpush2.bf16.msra.mxu0 0
      %5740 = vmatprep.subr.bf16.mxu0 0
      %5741 = vmatpush2.bf16.msra.mxu0 0
      %5742 = vmatprep.subr.bf16.mxu0 0
      %5743 = vmatpush2.bf16.msra.mxu0 0
      %5744 = vmatprep.subr.bf16.mxu0 0
      %5745 = vmatpush2.bf16.msra.mxu0 0
      %5746 = vmatprep.subr.bf16.mxu0 0
      %5747 = vmatpush2.bf16.msra.mxu0 0
      %5748 = vmatprep.mubr.bf16.mxu0 0
      %5749 = vmatmul.mubr.bf16.gmra.mxu0 %v5669
      %v5750 = vpop.f32.mrf.mxu0
      %v5751 = vadd.f32 0.0, %v5750
      %v5752 = vpop.f32.mrf.mxu0
      %v5753 = vpop.f32.mrf.mxu0
      %v5754 = vadd.f32 0.0, %v5753
      %v5755 = vpop.f32.mrf.mxu0
      %5756 = vmatprep.mubr.bf16.mxu0 0
      %5757 = vmatmul.mubr.bf16.gmra.mxu0 %v5672
      %v5758 = vpop.f32.mrf.mxu0
      %v5759 = vadd.f32 0.0, %v5758
      %v5760 = vpop.f32.mrf.mxu0
      %v5761 = vpop.f32.mrf.mxu0
      %v5762 = vadd.f32 0.0, %v5761
      %v5763 = vpop.f32.mrf.mxu0
      %5764 = vmatprep.mubr.bf16.mxu0 0
      %5765 = vmatmul.mubr.bf16.gmra.mxu0 %v5675
      %v5766 = vpop.f32.mrf.mxu0
      %v5767 = vadd.f32 0.0, %v5766
      %v5768 = vpop.f32.mrf.mxu0
      %v5769 = vpop.f32.mrf.mxu0
      %v5770 = vadd.f32 0.0, %v5769
      %v5771 = vpop.f32.mrf.mxu0
      %5772 = vmatprep.mubr.bf16.mxu0 0
      %5773 = vmatmul.mubr.bf16.gmra.mxu0 %v5678
      %v5774 = vpop.f32.mrf.mxu0
      %v5775 = vadd.f32 0.0, %v5774
      %v5776 = vpop.f32.mrf.mxu0
      %v5777 = vpop.f32.mrf.mxu0
      %v5778 = vadd.f32 0.0, %v5777
      %v5779 = vpop.f32.mrf.mxu0
      %5780 = vmatprep.mubr.bf16.mxu0 0
      %5781 = vmatmul.mubr.bf16.gmra.mxu0 %v5681
      %v5782 = vpop.f32.mrf.mxu0
      %v5783 = vadd.f32 0.0, %v5782
      %v5784 = vpop.f32.mrf.mxu0
      %v5785 = vpop.f32.mrf.mxu0
      %v5786 = vadd.f32 0.0, %v5785
      %v5787 = vpop.f32.mrf.mxu0
      %5788 = vmatprep.mubr.bf16.mxu0 0
      %5789 = vmatmul.mubr.bf16.gmra.mxu0 %v5684
      %v5790 = vpop.f32.mrf.mxu0
      %v5791 = vadd.f32 0.0, %v5790
      %v5792 = vpop.f32.mrf.mxu0
      %v5793 = vpop.f32.mrf.mxu0
      %v5794 = vadd.f32 0.0, %v5793
      %v5795 = vpop.f32.mrf.mxu0
      %5796 = vmatprep.mubr.bf16.mxu0 0
      %5797 = vmatmul.mubr.bf16.gmra.mxu0 %v5687
      %v5798 = vpop.f32.mrf.mxu0
      %v5799 = vadd.f32 0.0, %v5798
      %v5800 = vpop.f32.mrf.mxu0
      %v5801 = vpop.f32.mrf.mxu0
      %v5802 = vadd.f32 0.0, %v5801
      %v5803 = vpop.f32.mrf.mxu0
      %5804 = vmatprep.mubr.bf16.mxu0 0
      %5805 = vmatmul.mubr.bf16.gmra.mxu0 %v5690
      %v5806 = vpop.f32.mrf.mxu0
      %v5807 = vadd.f32 0.0, %v5806
      %v5808 = vpop.f32.mrf.mxu0
      %v5809 = vpop.f32.mrf.mxu0
      %v5810 = vadd.f32 0.0, %v5809
      %v5811 = vpop.f32.mrf.mxu0
      %5812 = vmatprep.mubr.bf16.mxu0 0
      %5813 = vmatmul.mubr.bf16.gmra.mxu0 %v5693
      %v5814 = vpop.f32.mrf.mxu0
      %v5815 = vadd.f32 0.0, %v5814
      %v5816 = vpop.f32.mrf.mxu0
      %v5817 = vpop.f32.mrf.mxu0
      %v5818 = vadd.f32 0.0, %v5817
      %v5819 = vpop.f32.mrf.mxu0
      %5820 = vmatprep.mubr.bf16.mxu0 0
      %5821 = vmatmul.mubr.bf16.gmra.mxu0 %v5696
      %v5822 = vpop.f32.mrf.mxu0
      %v5823 = vadd.f32 0.0, %v5822
      %v5824 = vpop.f32.mrf.mxu0
      %v5825 = vpop.f32.mrf.mxu0
      %v5826 = vadd.f32 0.0, %v5825
      %v5827 = vpop.f32.mrf.mxu0
      %5828 = vmatprep.mubr.bf16.mxu0 0
      %5829 = vmatmul.mubr.bf16.gmra.mxu0 %v5699
      %v5830 = vpop.f32.mrf.mxu0
      %v5831 = vadd.f32 0.0, %v5830
      %v5832 = vpop.f32.mrf.mxu0
      %v5833 = vpop.f32.mrf.mxu0
      %v5834 = vadd.f32 0.0, %v5833
      %v5835 = vpop.f32.mrf.mxu0
      %5836 = vmatprep.mubr.bf16.mxu0 0
      %5837 = vmatmul.mubr.bf16.gmra.mxu0 %v5702
      %v5838 = vpop.f32.mrf.mxu0
      %v5839 = vadd.f32 0.0, %v5838
      %v5840 = vpop.f32.mrf.mxu0
      %v5841 = vpop.f32.mrf.mxu0
      %v5842 = vadd.f32 0.0, %v5841
      %v5843 = vpop.f32.mrf.mxu0
      %5844 = vmatprep.mubr.bf16.mxu0 0
      %5845 = vmatmul.mubr.bf16.gmra.mxu0 %v5705
      %v5846 = vpop.f32.mrf.mxu0
      %v5847 = vadd.f32 0.0, %v5846
      %v5848 = vpop.f32.mrf.mxu0
      %v5849 = vpop.f32.mrf.mxu0
      %v5850 = vadd.f32 0.0, %v5849
      %v5851 = vpop.f32.mrf.mxu0
      %5852 = vmatprep.mubr.bf16.mxu0 0
      %5853 = vmatmul.mubr.bf16.gmra.mxu0 %v5708
      %v5854 = vpop.f32.mrf.mxu0
      %v5855 = vadd.f32 0.0, %v5854
      %v5856 = vpop.f32.mrf.mxu0
      %v5857 = vpop.f32.mrf.mxu0
      %v5858 = vadd.f32 0.0, %v5857
      %v5859 = vpop.f32.mrf.mxu0
      %5860 = vmatprep.mubr.bf16.mxu0 0
      %5861 = vmatmul.mubr.bf16.gmra.mxu0 %v5711
      %v5862 = vpop.f32.mrf.mxu0
      %v5863 = vadd.f32 0.0, %v5862
      %v5864 = vpop.f32.mrf.mxu0
      %v5865 = vpop.f32.mrf.mxu0
      %v5866 = vadd.f32 0.0, %v5865
      %v5867 = vpop.f32.mrf.mxu0
      %5868 = vmatprep.mubr.bf16.mxu0 0
      %5869 = vmatmul.mubr.bf16.gmra.mxu0 %v5714
      %v5870 = vpop.f32.mrf.mxu0
      %v5871 = vadd.f32 0.0, %v5870
      %v5872 = vpop.f32.mrf.mxu0
      %v5873 = vpop.f32.mrf.mxu0
      %v5874 = vadd.f32 0.0, %v5873
      %v5875 = vpop.f32.mrf.mxu0
      %5876 = vdwg.mxu0
      %v5877 = vadd.f32 %v5555, %v5751
      %v5878 = vadd.f32 %v5556, %v5754
      %v5879 = vadd.f32 %v5557, %v5759
      %v5880 = vadd.f32 %v5558, %v5762
      %v5881 = vadd.f32 %v5559, %v5767
      %v5882 = vadd.f32 %v5560, %v5770
      %v5883 = vadd.f32 %v5561, %v5775
      %v5884 = vadd.f32 %v5562, %v5778
      %v5885 = vadd.f32 %v5563, %v5783
      %v5886 = vadd.f32 %v5564, %v5786
      %v5887 = vadd.f32 %v5565, %v5791
      %v5888 = vadd.f32 %v5566, %v5794
      %v5889 = vadd.f32 %v5567, %v5799
      %v5890 = vadd.f32 %v5568, %v5802
      %v5891 = vadd.f32 %v5569, %v5807
      %v5892 = vadd.f32 %v5570, %v5810
      %v5893 = vadd.f32 %v5571, %v5815
      %v5894 = vadd.f32 %v5572, %v5818
      %v5895 = vadd.f32 %v5573, %v5823
      %v5896 = vadd.f32 %v5574, %v5826
      %v5897 = vadd.f32 %v5575, %v5831
      %v5898 = vadd.f32 %v5576, %v5834
      %v5899 = vadd.f32 %v5577, %v5839
      %v5900 = vadd.f32 %v5578, %v5842
      %v5901 = vadd.f32 %v5579, %v5847
      %v5902 = vadd.f32 %v5580, %v5850
      %v5903 = vadd.f32 %v5581, %v5855
      %v5904 = vadd.f32 %v5582, %v5858
      %v5905 = vadd.f32 %v5583, %v5863
      %v5906 = vadd.f32 %v5584, %v5866
      %v5907 = vadd.f32 %v5585, %v5871
      %v5908 = vadd.f32 %v5586, %v5874
      %v5909 = vld [vmem:[%s968 + $0x2] sm:$0xff]
      %v5910 = vld [vmem:[%s968 + $0xa] sm:$0xff]
      %v5911 = vld [vmem:[%s968 + $0x1a] sm:$0xff]
      %v5912 = vld [vmem:[%s968 + $0x22] sm:$0xff]
      %v5913 = vld [vmem:[%s968 + $0x32] sm:$0xff]
      %v5914 = vld [vmem:[%s968 + $0x3a] sm:$0xff]
      %v5915 = vld [vmem:[%s968 + $0x4a] sm:$0xff]
      %v5916 = vld [vmem:[%s968 + $0x52] sm:$0xff]
      %v5917 = vld [vmem:[%s968 + $0x62] sm:$0xff]
      %v5918 = vld [vmem:[%s968 + $0x6a] sm:$0xff]
      %v5919 = vld [vmem:[%s968 + $0x7a] sm:$0xff]
      %v5920 = vld [vmem:[%s968 + $0x82] sm:$0xff]
      %v5921 = vld [vmem:[%s968 + $0x92] sm:$0xff]
      %v5922 = vld [vmem:[%s968 + $0x9a] sm:$0xff]
      %v5923 = vld [vmem:[%s968 + $0xaa] sm:$0xff]
      %v5924 = vld [vmem:[%s968 + $0xb2] sm:$0xff]
      %v5925 = vld [vmem:[%s968 + $0xc2] sm:$0xff]
      %v5926 = vld [vmem:[%s968 + $0xca] sm:$0xff]
      %v5927 = vld [vmem:[%s968 + $0xda] sm:$0xff]
      %v5928 = vld [vmem:[%s968 + $0xe2] sm:$0xff]
      %v5929 = vld [vmem:[%s968 + $0xf2] sm:$0xff]
      %v5930 = vld [vmem:[%s968 + $0xfa] sm:$0xff]
      %v5931 = vld [vmem:[%s968 + $0x10a] sm:$0xff]
      %v5932 = vld [vmem:[%s968 + $0x112] sm:$0xff]
      %v5933 = vld [vmem:[%s968 + $0x122] sm:$0xff]
      %v5934 = vld [vmem:[%s968 + $0x12a] sm:$0xff]
      %v5935 = vld [vmem:[%s968 + $0x13a] sm:$0xff]
      %v5936 = vld [vmem:[%s968 + $0x142] sm:$0xff]
      %v5937 = vld [vmem:[%s968 + $0x152] sm:$0xff]
      %v5938 = vld [vmem:[%s968 + $0x15a] sm:$0xff]
      %v5939 = vld [vmem:[%s968 + $0x16a] sm:$0xff]
      %v5940 = vld [vmem:[%s968 + $0x172] sm:$0xff]
      %v5941 = vpack.c.bf16 %v5910, %v5909
      %v5942 = vpack.c.bf16 %v5912, %v5911
      %v5943 = vpack.c.bf16 %v5914, %v5913
      %v5944 = vpack.c.bf16 %v5916, %v5915
      %v5945 = vpack.c.bf16 %v5918, %v5917
      %v5946 = vpack.c.bf16 %v5920, %v5919
      %v5947 = vpack.c.bf16 %v5922, %v5921
      %v5948 = vpack.c.bf16 %v5924, %v5923
      %v5949 = vpack.c.bf16 %v5926, %v5925
      %v5950 = vpack.c.bf16 %v5928, %v5927
      %v5951 = vpack.c.bf16 %v5930, %v5929
      %v5952 = vpack.c.bf16 %v5932, %v5931
      %v5953 = vpack.c.bf16 %v5934, %v5933
      %v5954 = vpack.c.bf16 %v5936, %v5935
      %v5955 = vpack.c.bf16 %v5938, %v5937
      %v5956 = vpack.c.bf16 %v5940, %v5939
      %s5957 = scalar_lea.vmem %s3, 160
      %v5958 = vld [vmem:[%s5957] sm:$0xf]
      %v5959 = vld [vmem:[%s5957 + $0x4] sm:$0xf]
      %v5960 = vld [vmem:[%s5957 + $0x8] sm:$0xf]
      %v5961 = vld [vmem:[%s5957 + $0xc] sm:$0xf]
      %v5962 = vld [vmem:[%s5957 + $0x10] sm:$0xf]
      %v5963 = vld [vmem:[%s5957 + $0x14] sm:$0xf]
      %v5964 = vld [vmem:[%s5957 + $0x18] sm:$0xf]
      %v5965 = vld [vmem:[%s5957 + $0x1c] sm:$0xf]
      %v5974 = vunpack.c.l.b16 %v5958
      %v5975 = vunpack.c.l.b16 %v5959
      %v5976 = vunpack.c.l.b16 %v5960
      %v5977 = vunpack.c.l.b16 %v5961
      %v5978 = vunpack.c.l.b16 %v5962
      %v5979 = vunpack.c.l.b16 %v5963
      %v5980 = vunpack.c.l.b16 %v5964
      %v5981 = vunpack.c.l.b16 %v5965
      %v5982 = vpack.c.b16 %v5975, %v5974
      %v5983 = vpack.c.b16 %v5977, %v5976
      %v5984 = vpack.c.b16 %v5979, %v5978
      %v5985 = vpack.c.b16 %v5981, %v5980
      %v5991 = vsel %vm784, %v5941, 0
      %v5994 = vsel %vm784, %v5942, 0
      %v5997 = vsel %vm784, %v5943, 0
      %v6000 = vsel %vm784, %v5944, 0
      %v6003 = vsel %vm784, %v5945, 0
      %v6006 = vsel %vm784, %v5946, 0
      %v6009 = vsel %vm784, %v5947, 0
      %v6012 = vsel %vm784, %v5948, 0
      %v6015 = vsel %vm784, %v5949, 0
      %v6018 = vsel %vm784, %v5950, 0
      %v6021 = vsel %vm784, %v5951, 0
      %v6024 = vsel %vm784, %v5952, 0
      %v6027 = vsel %vm784, %v5953, 0
      %v6030 = vsel %vm784, %v5954, 0
      %v6033 = vsel %vm784, %v5955, 0
      %v6036 = vsel %vm784, %v5956, 0
      %6038 = vmatprep.subr.bf16.mxu0 0
      %6039 = vmatpush1.bf16.msra.mxu0 0
      %6040 = vmatprep.subr.bf16.mxu0 0
      %6041 = vmatpush1.bf16.msra.mxu0 0
      %6042 = vmatprep.subr.bf16.mxu0 0
      %6043 = vmatpush1.bf16.msra.mxu0 0
      %6044 = vmatprep.subr.bf16.mxu0 0
      %6045 = vmatpush1.bf16.msra.mxu0 0
      %6046 = vmatprep.subr.bf16.mxu0 0
      %6047 = vmatpush1.bf16.msra.mxu0 %v5985
      %6048 = vmatprep.subr.bf16.mxu0 0
      %6049 = vmatpush1.bf16.msra.mxu0 %v5984
      %6050 = vmatprep.subr.bf16.mxu0 0
      %6051 = vmatpush1.bf16.msra.mxu0 %v5983
      %6052 = vmatprep.subr.bf16.mxu0 0
      %6053 = vmatpush1.bf16.msra.mxu0 %v5982
      %6054 = vmatprep.subr.bf16.mxu0 0
      %6055 = vmatpush2.bf16.msra.mxu0 0
      %6056 = vmatprep.subr.bf16.mxu0 0
      %6057 = vmatpush2.bf16.msra.mxu0 0
      %6058 = vmatprep.subr.bf16.mxu0 0
      %6059 = vmatpush2.bf16.msra.mxu0 0
      %6060 = vmatprep.subr.bf16.mxu0 0
      %6061 = vmatpush2.bf16.msra.mxu0 0
      %6062 = vmatprep.subr.bf16.mxu0 0
      %6063 = vmatpush2.bf16.msra.mxu0 0
      %6064 = vmatprep.subr.bf16.mxu0 0
      %6065 = vmatpush2.bf16.msra.mxu0 0
      %6066 = vmatprep.subr.bf16.mxu0 0
      %6067 = vmatpush2.bf16.msra.mxu0 0
      %6068 = vmatprep.subr.bf16.mxu0 0
      %6069 = vmatpush2.bf16.msra.mxu0 0
      %6070 = vmatprep.mubr.bf16.mxu0 0
      %6071 = vmatmul.mubr.bf16.gmra.mxu0 %v5991
      %v6072 = vpop.f32.mrf.mxu0
      %v6073 = vadd.f32 0.0, %v6072
      %v6074 = vpop.f32.mrf.mxu0
      %v6075 = vpop.f32.mrf.mxu0
      %v6076 = vadd.f32 0.0, %v6075
      %v6077 = vpop.f32.mrf.mxu0
      %6078 = vmatprep.mubr.bf16.mxu0 0
      %6079 = vmatmul.mubr.bf16.gmra.mxu0 %v5994
      %v6080 = vpop.f32.mrf.mxu0
      %v6081 = vadd.f32 0.0, %v6080
      %v6082 = vpop.f32.mrf.mxu0
      %v6083 = vpop.f32.mrf.mxu0
      %v6084 = vadd.f32 0.0, %v6083
      %v6085 = vpop.f32.mrf.mxu0
      %6086 = vmatprep.mubr.bf16.mxu0 0
      %6087 = vmatmul.mubr.bf16.gmra.mxu0 %v5997
      %v6088 = vpop.f32.mrf.mxu0
      %v6089 = vadd.f32 0.0, %v6088
      %v6090 = vpop.f32.mrf.mxu0
      %v6091 = vpop.f32.mrf.mxu0
      %v6092 = vadd.f32 0.0, %v6091
      %v6093 = vpop.f32.mrf.mxu0
      %6094 = vmatprep.mubr.bf16.mxu0 0
      %6095 = vmatmul.mubr.bf16.gmra.mxu0 %v6000
      %v6096 = vpop.f32.mrf.mxu0
      %v6097 = vadd.f32 0.0, %v6096
      %v6098 = vpop.f32.mrf.mxu0
      %v6099 = vpop.f32.mrf.mxu0
      %v6100 = vadd.f32 0.0, %v6099
      %v6101 = vpop.f32.mrf.mxu0
      %6102 = vmatprep.mubr.bf16.mxu0 0
      %6103 = vmatmul.mubr.bf16.gmra.mxu0 %v6003
      %v6104 = vpop.f32.mrf.mxu0
      %v6105 = vadd.f32 0.0, %v6104
      %v6106 = vpop.f32.mrf.mxu0
      %v6107 = vpop.f32.mrf.mxu0
      %v6108 = vadd.f32 0.0, %v6107
      %v6109 = vpop.f32.mrf.mxu0
      %6110 = vmatprep.mubr.bf16.mxu0 0
      %6111 = vmatmul.mubr.bf16.gmra.mxu0 %v6006
      %v6112 = vpop.f32.mrf.mxu0
      %v6113 = vadd.f32 0.0, %v6112
      %v6114 = vpop.f32.mrf.mxu0
      %v6115 = vpop.f32.mrf.mxu0
      %v6116 = vadd.f32 0.0, %v6115
      %v6117 = vpop.f32.mrf.mxu0
      %6118 = vmatprep.mubr.bf16.mxu0 0
      %6119 = vmatmul.mubr.bf16.gmra.mxu0 %v6009
      %v6120 = vpop.f32.mrf.mxu0
      %v6121 = vadd.f32 0.0, %v6120
      %v6122 = vpop.f32.mrf.mxu0
      %v6123 = vpop.f32.mrf.mxu0
      %v6124 = vadd.f32 0.0, %v6123
      %v6125 = vpop.f32.mrf.mxu0
      %6126 = vmatprep.mubr.bf16.mxu0 0
      %6127 = vmatmul.mubr.bf16.gmra.mxu0 %v6012
      %v6128 = vpop.f32.mrf.mxu0
      %v6129 = vadd.f32 0.0, %v6128
      %v6130 = vpop.f32.mrf.mxu0
      %v6131 = vpop.f32.mrf.mxu0
      %v6132 = vadd.f32 0.0, %v6131
      %v6133 = vpop.f32.mrf.mxu0
      %6134 = vmatprep.mubr.bf16.mxu0 0
      %6135 = vmatmul.mubr.bf16.gmra.mxu0 %v6015
      %v6136 = vpop.f32.mrf.mxu0
      %v6137 = vadd.f32 0.0, %v6136
      %v6138 = vpop.f32.mrf.mxu0
      %v6139 = vpop.f32.mrf.mxu0
      %v6140 = vadd.f32 0.0, %v6139
      %v6141 = vpop.f32.mrf.mxu0
      %6142 = vmatprep.mubr.bf16.mxu0 0
      %6143 = vmatmul.mubr.bf16.gmra.mxu0 %v6018
      %v6144 = vpop.f32.mrf.mxu0
      %v6145 = vadd.f32 0.0, %v6144
      %v6146 = vpop.f32.mrf.mxu0
      %v6147 = vpop.f32.mrf.mxu0
      %v6148 = vadd.f32 0.0, %v6147
      %v6149 = vpop.f32.mrf.mxu0
      %6150 = vmatprep.mubr.bf16.mxu0 0
      %6151 = vmatmul.mubr.bf16.gmra.mxu0 %v6021
      %v6152 = vpop.f32.mrf.mxu0
      %v6153 = vadd.f32 0.0, %v6152
      %v6154 = vpop.f32.mrf.mxu0
      %v6155 = vpop.f32.mrf.mxu0
      %v6156 = vadd.f32 0.0, %v6155
      %v6157 = vpop.f32.mrf.mxu0
      %6158 = vmatprep.mubr.bf16.mxu0 0
      %6159 = vmatmul.mubr.bf16.gmra.mxu0 %v6024
      %v6160 = vpop.f32.mrf.mxu0
      %v6161 = vadd.f32 0.0, %v6160
      %v6162 = vpop.f32.mrf.mxu0
      %v6163 = vpop.f32.mrf.mxu0
      %v6164 = vadd.f32 0.0, %v6163
      %v6165 = vpop.f32.mrf.mxu0
      %6166 = vmatprep.mubr.bf16.mxu0 0
      %6167 = vmatmul.mubr.bf16.gmra.mxu0 %v6027
      %v6168 = vpop.f32.mrf.mxu0
      %v6169 = vadd.f32 0.0, %v6168
      %v6170 = vpop.f32.mrf.mxu0
      %v6171 = vpop.f32.mrf.mxu0
      %v6172 = vadd.f32 0.0, %v6171
      %v6173 = vpop.f32.mrf.mxu0
      %6174 = vmatprep.mubr.bf16.mxu0 0
      %6175 = vmatmul.mubr.bf16.gmra.mxu0 %v6030
      %v6176 = vpop.f32.mrf.mxu0
      %v6177 = vadd.f32 0.0, %v6176
      %v6178 = vpop.f32.mrf.mxu0
      %v6179 = vpop.f32.mrf.mxu0
      %v6180 = vadd.f32 0.0, %v6179
      %v6181 = vpop.f32.mrf.mxu0
      %6182 = vmatprep.mubr.bf16.mxu0 0
      %6183 = vmatmul.mubr.bf16.gmra.mxu0 %v6033
      %v6184 = vpop.f32.mrf.mxu0
      %v6185 = vadd.f32 0.0, %v6184
      %v6186 = vpop.f32.mrf.mxu0
      %v6187 = vpop.f32.mrf.mxu0
      %v6188 = vadd.f32 0.0, %v6187
      %v6189 = vpop.f32.mrf.mxu0
      %6190 = vmatprep.mubr.bf16.mxu0 0
      %6191 = vmatmul.mubr.bf16.gmra.mxu0 %v6036
      %v6192 = vpop.f32.mrf.mxu0
      %v6193 = vadd.f32 0.0, %v6192
      %v6194 = vpop.f32.mrf.mxu0
      %v6195 = vpop.f32.mrf.mxu0
      %v6196 = vadd.f32 0.0, %v6195
      %v6197 = vpop.f32.mrf.mxu0
      %6198 = vdwg.mxu0
      %v6199 = vadd.f32 %v5877, %v6073
      %v6200 = vadd.f32 %v5878, %v6076
      %v6201 = vadd.f32 %v5879, %v6081
      %v6202 = vadd.f32 %v5880, %v6084
      %v6203 = vadd.f32 %v5881, %v6089
      %v6204 = vadd.f32 %v5882, %v6092
      %v6205 = vadd.f32 %v5883, %v6097
      %v6206 = vadd.f32 %v5884, %v6100
      %v6207 = vadd.f32 %v5885, %v6105
      %v6208 = vadd.f32 %v5886, %v6108
      %v6209 = vadd.f32 %v5887, %v6113
      %v6210 = vadd.f32 %v5888, %v6116
      %v6211 = vadd.f32 %v5889, %v6121
      %v6212 = vadd.f32 %v5890, %v6124
      %v6213 = vadd.f32 %v5891, %v6129
      %v6214 = vadd.f32 %v5892, %v6132
      %v6215 = vadd.f32 %v5893, %v6137
      %v6216 = vadd.f32 %v5894, %v6140
      %v6217 = vadd.f32 %v5895, %v6145
      %v6218 = vadd.f32 %v5896, %v6148
      %v6219 = vadd.f32 %v5897, %v6153
      %v6220 = vadd.f32 %v5898, %v6156
      %v6221 = vadd.f32 %v5899, %v6161
      %v6222 = vadd.f32 %v5900, %v6164
      %v6223 = vadd.f32 %v5901, %v6169
      %v6224 = vadd.f32 %v5902, %v6172
      %v6225 = vadd.f32 %v5903, %v6177
      %v6226 = vadd.f32 %v5904, %v6180
      %v6227 = vadd.f32 %v5905, %v6185
      %v6228 = vadd.f32 %v5906, %v6188
      %v6229 = vadd.f32 %v5907, %v6193
      %v6230 = vadd.f32 %v5908, %v6196
      %v6231 = vld [vmem:[%s2946] sm:$0xff]
      %v6232 = vld [vmem:[%s2946 + $0x8] sm:$0xff]
      %v6233 = vld [vmem:[%s2946 + $0x18] sm:$0xff]
      %v6234 = vld [vmem:[%s2946 + $0x20] sm:$0xff]
      %v6235 = vld [vmem:[%s2946 + $0x30] sm:$0xff]
      %v6236 = vld [vmem:[%s2946 + $0x38] sm:$0xff]
      %v6237 = vld [vmem:[%s2946 + $0x48] sm:$0xff]
      %v6238 = vld [vmem:[%s2946 + $0x50] sm:$0xff]
      %v6239 = vld [vmem:[%s2946 + $0x60] sm:$0xff]
      %v6240 = vld [vmem:[%s2946 + $0x68] sm:$0xff]
      %v6241 = vld [vmem:[%s2946 + $0x78] sm:$0xff]
      %v6242 = vld [vmem:[%s2946 + $0x80] sm:$0xff]
      %v6243 = vld [vmem:[%s2946 + $0x90] sm:$0xff]
      %v6244 = vld [vmem:[%s2946 + $0x98] sm:$0xff]
      %v6245 = vld [vmem:[%s2946 + $0xa8] sm:$0xff]
      %v6246 = vld [vmem:[%s2946 + $0xb0] sm:$0xff]
      %v6247 = vld [vmem:[%s2946 + $0xc0] sm:$0xff]
      %v6248 = vld [vmem:[%s2946 + $0xc8] sm:$0xff]
      %v6249 = vld [vmem:[%s2946 + $0xd8] sm:$0xff]
      %v6250 = vld [vmem:[%s2946 + $0xe0] sm:$0xff]
      %v6251 = vld [vmem:[%s2946 + $0xf0] sm:$0xff]
      %v6252 = vld [vmem:[%s2946 + $0xf8] sm:$0xff]
      %v6253 = vld [vmem:[%s2946 + $0x108] sm:$0xff]
      %v6254 = vld [vmem:[%s2946 + $0x110] sm:$0xff]
      %v6255 = vld [vmem:[%s2946 + $0x120] sm:$0xff]
      %v6256 = vld [vmem:[%s2946 + $0x128] sm:$0xff]
      %v6257 = vld [vmem:[%s2946 + $0x138] sm:$0xff]
      %v6258 = vld [vmem:[%s2946 + $0x140] sm:$0xff]
      %v6259 = vld [vmem:[%s2946 + $0x150] sm:$0xff]
      %v6260 = vld [vmem:[%s2946 + $0x158] sm:$0xff]
      %v6261 = vld [vmem:[%s2946 + $0x168] sm:$0xff]
      %v6262 = vld [vmem:[%s2946 + $0x170] sm:$0xff]
      %v6263 = vpack.c.bf16 %v6232, %v6231
      %v6264 = vpack.c.bf16 %v6234, %v6233
      %v6265 = vpack.c.bf16 %v6236, %v6235
      %v6266 = vpack.c.bf16 %v6238, %v6237
      %v6267 = vpack.c.bf16 %v6240, %v6239
      %v6268 = vpack.c.bf16 %v6242, %v6241
      %v6269 = vpack.c.bf16 %v6244, %v6243
      %v6270 = vpack.c.bf16 %v6246, %v6245
      %v6271 = vpack.c.bf16 %v6248, %v6247
      %v6272 = vpack.c.bf16 %v6250, %v6249
      %v6273 = vpack.c.bf16 %v6252, %v6251
      %v6274 = vpack.c.bf16 %v6254, %v6253
      %v6275 = vpack.c.bf16 %v6256, %v6255
      %v6276 = vpack.c.bf16 %v6258, %v6257
      %v6277 = vpack.c.bf16 %v6260, %v6259
      %v6278 = vpack.c.bf16 %v6262, %v6261
      %s6279 = scalar_lea.vmem %s3, 192
      %v6280 = vld [vmem:[%s6279] sm:$0xf]
      %v6281 = vld [vmem:[%s6279 + $0x4] sm:$0xf]
      %v6282 = vld [vmem:[%s6279 + $0x8] sm:$0xf]
      %v6283 = vld [vmem:[%s6279 + $0xc] sm:$0xf]
      %v6284 = vld [vmem:[%s6279 + $0x10] sm:$0xf]
      %v6285 = vld [vmem:[%s6279 + $0x14] sm:$0xf]
      %v6286 = vld [vmem:[%s6279 + $0x18] sm:$0xf]
      %v6287 = vld [vmem:[%s6279 + $0x1c] sm:$0xf]
      %v6296 = vunpack.c.l.b16 %v6280
      %v6297 = vunpack.c.l.b16 %v6281
      %v6298 = vunpack.c.l.b16 %v6282
      %v6299 = vunpack.c.l.b16 %v6283
      %v6300 = vunpack.c.l.b16 %v6284
      %v6301 = vunpack.c.l.b16 %v6285
      %v6302 = vunpack.c.l.b16 %v6286
      %v6303 = vunpack.c.l.b16 %v6287
      %v6304 = vpack.c.b16 %v6297, %v6296
      %v6305 = vpack.c.b16 %v6299, %v6298
      %v6306 = vpack.c.b16 %v6301, %v6300
      %v6307 = vpack.c.b16 %v6303, %v6302
      %v6313 = vsel %vm784, %v6263, 0
      %v6316 = vsel %vm784, %v6264, 0
      %v6319 = vsel %vm784, %v6265, 0
      %v6322 = vsel %vm784, %v6266, 0
      %v6325 = vsel %vm784, %v6267, 0
      %v6328 = vsel %vm784, %v6268, 0
      %v6331 = vsel %vm784, %v6269, 0
      %v6334 = vsel %vm784, %v6270, 0
      %v6337 = vsel %vm784, %v6271, 0
      %v6340 = vsel %vm784, %v6272, 0
      %v6343 = vsel %vm784, %v6273, 0
      %v6346 = vsel %vm784, %v6274, 0
      %v6349 = vsel %vm784, %v6275, 0
      %v6352 = vsel %vm784, %v6276, 0
      %v6355 = vsel %vm784, %v6277, 0
      %v6358 = vsel %vm784, %v6278, 0
      %6360 = vmatprep.subr.bf16.mxu0 0
      %6361 = vmatpush1.bf16.msra.mxu0 0
      %6362 = vmatprep.subr.bf16.mxu0 0
      %6363 = vmatpush1.bf16.msra.mxu0 0
      %6364 = vmatprep.subr.bf16.mxu0 0
      %6365 = vmatpush1.bf16.msra.mxu0 0
      %6366 = vmatprep.subr.bf16.mxu0 0
      %6367 = vmatpush1.bf16.msra.mxu0 0
      %6368 = vmatprep.subr.bf16.mxu0 0
      %6369 = vmatpush1.bf16.msra.mxu0 %v6307
      %6370 = vmatprep.subr.bf16.mxu0 0
      %6371 = vmatpush1.bf16.msra.mxu0 %v6306
      %6372 = vmatprep.subr.bf16.mxu0 0
      %6373 = vmatpush1.bf16.msra.mxu0 %v6305
      %6374 = vmatprep.subr.bf16.mxu0 0
      %6375 = vmatpush1.bf16.msra.mxu0 %v6304
      %6376 = vmatprep.subr.bf16.mxu0 0
      %6377 = vmatpush2.bf16.msra.mxu0 0
      %6378 = vmatprep.subr.bf16.mxu0 0
      %6379 = vmatpush2.bf16.msra.mxu0 0
      %6380 = vmatprep.subr.bf16.mxu0 0
      %6381 = vmatpush2.bf16.msra.mxu0 0
      %6382 = vmatprep.subr.bf16.mxu0 0
      %6383 = vmatpush2.bf16.msra.mxu0 0
      %6384 = vmatprep.subr.bf16.mxu0 0
      %6385 = vmatpush2.bf16.msra.mxu0 0
      %6386 = vmatprep.subr.bf16.mxu0 0
      %6387 = vmatpush2.bf16.msra.mxu0 0
      %6388 = vmatprep.subr.bf16.mxu0 0
      %6389 = vmatpush2.bf16.msra.mxu0 0
      %6390 = vmatprep.subr.bf16.mxu0 0
      %6391 = vmatpush2.bf16.msra.mxu0 0
      %6392 = vmatprep.mubr.bf16.mxu0 0
      %6393 = vmatmul.mubr.bf16.gmra.mxu0 %v6313
      %v6394 = vpop.f32.mrf.mxu0
      %v6395 = vadd.f32 0.0, %v6394
      %v6396 = vpop.f32.mrf.mxu0
      %v6397 = vpop.f32.mrf.mxu0
      %v6398 = vadd.f32 0.0, %v6397
      %v6399 = vpop.f32.mrf.mxu0
      %6400 = vmatprep.mubr.bf16.mxu0 0
      %6401 = vmatmul.mubr.bf16.gmra.mxu0 %v6316
      %v6402 = vpop.f32.mrf.mxu0
      %v6403 = vadd.f32 0.0, %v6402
      %v6404 = vpop.f32.mrf.mxu0
      %v6405 = vpop.f32.mrf.mxu0
      %v6406 = vadd.f32 0.0, %v6405
      %v6407 = vpop.f32.mrf.mxu0
      %6408 = vmatprep.mubr.bf16.mxu0 0
      %6409 = vmatmul.mubr.bf16.gmra.mxu0 %v6319
      %v6410 = vpop.f32.mrf.mxu0
      %v6411 = vadd.f32 0.0, %v6410
      %v6412 = vpop.f32.mrf.mxu0
      %v6413 = vpop.f32.mrf.mxu0
      %v6414 = vadd.f32 0.0, %v6413
      %v6415 = vpop.f32.mrf.mxu0
      %6416 = vmatprep.mubr.bf16.mxu0 0
      %6417 = vmatmul.mubr.bf16.gmra.mxu0 %v6322
      %v6418 = vpop.f32.mrf.mxu0
      %v6419 = vadd.f32 0.0, %v6418
      %v6420 = vpop.f32.mrf.mxu0
      %v6421 = vpop.f32.mrf.mxu0
      %v6422 = vadd.f32 0.0, %v6421
      %v6423 = vpop.f32.mrf.mxu0
      %6424 = vmatprep.mubr.bf16.mxu0 0
      %6425 = vmatmul.mubr.bf16.gmra.mxu0 %v6325
      %v6426 = vpop.f32.mrf.mxu0
      %v6427 = vadd.f32 0.0, %v6426
      %v6428 = vpop.f32.mrf.mxu0
      %v6429 = vpop.f32.mrf.mxu0
      %v6430 = vadd.f32 0.0, %v6429
      %v6431 = vpop.f32.mrf.mxu0
      %6432 = vmatprep.mubr.bf16.mxu0 0
      %6433 = vmatmul.mubr.bf16.gmra.mxu0 %v6328
      %v6434 = vpop.f32.mrf.mxu0
      %v6435 = vadd.f32 0.0, %v6434
      %v6436 = vpop.f32.mrf.mxu0
      %v6437 = vpop.f32.mrf.mxu0
      %v6438 = vadd.f32 0.0, %v6437
      %v6439 = vpop.f32.mrf.mxu0
      %6440 = vmatprep.mubr.bf16.mxu0 0
      %6441 = vmatmul.mubr.bf16.gmra.mxu0 %v6331
      %v6442 = vpop.f32.mrf.mxu0
      %v6443 = vadd.f32 0.0, %v6442
      %v6444 = vpop.f32.mrf.mxu0
      %v6445 = vpop.f32.mrf.mxu0
      %v6446 = vadd.f32 0.0, %v6445
      %v6447 = vpop.f32.mrf.mxu0
      %6448 = vmatprep.mubr.bf16.mxu0 0
      %6449 = vmatmul.mubr.bf16.gmra.mxu0 %v6334
      %v6450 = vpop.f32.mrf.mxu0
      %v6451 = vadd.f32 0.0, %v6450
      %v6452 = vpop.f32.mrf.mxu0
      %v6453 = vpop.f32.mrf.mxu0
      %v6454 = vadd.f32 0.0, %v6453
      %v6455 = vpop.f32.mrf.mxu0
      %6456 = vmatprep.mubr.bf16.mxu0 0
      %6457 = vmatmul.mubr.bf16.gmra.mxu0 %v6337
      %v6458 = vpop.f32.mrf.mxu0
      %v6459 = vadd.f32 0.0, %v6458
      %v6460 = vpop.f32.mrf.mxu0
      %v6461 = vpop.f32.mrf.mxu0
      %v6462 = vadd.f32 0.0, %v6461
      %v6463 = vpop.f32.mrf.mxu0
      %6464 = vmatprep.mubr.bf16.mxu0 0
      %6465 = vmatmul.mubr.bf16.gmra.mxu0 %v6340
      %v6466 = vpop.f32.mrf.mxu0
      %v6467 = vadd.f32 0.0, %v6466
      %v6468 = vpop.f32.mrf.mxu0
      %v6469 = vpop.f32.mrf.mxu0
      %v6470 = vadd.f32 0.0, %v6469
      %v6471 = vpop.f32.mrf.mxu0
      %6472 = vmatprep.mubr.bf16.mxu0 0
      %6473 = vmatmul.mubr.bf16.gmra.mxu0 %v6343
      %v6474 = vpop.f32.mrf.mxu0
      %v6475 = vadd.f32 0.0, %v6474
      %v6476 = vpop.f32.mrf.mxu0
      %v6477 = vpop.f32.mrf.mxu0
      %v6478 = vadd.f32 0.0, %v6477
      %v6479 = vpop.f32.mrf.mxu0
      %6480 = vmatprep.mubr.bf16.mxu0 0
      %6481 = vmatmul.mubr.bf16.gmra.mxu0 %v6346
      %v6482 = vpop.f32.mrf.mxu0
      %v6483 = vadd.f32 0.0, %v6482
      %v6484 = vpop.f32.mrf.mxu0
      %v6485 = vpop.f32.mrf.mxu0
      %v6486 = vadd.f32 0.0, %v6485
      %v6487 = vpop.f32.mrf.mxu0
      %6488 = vmatprep.mubr.bf16.mxu0 0
      %6489 = vmatmul.mubr.bf16.gmra.mxu0 %v6349
      %v6490 = vpop.f32.mrf.mxu0
      %v6491 = vadd.f32 0.0, %v6490
      %v6492 = vpop.f32.mrf.mxu0
      %v6493 = vpop.f32.mrf.mxu0
      %v6494 = vadd.f32 0.0, %v6493
      %v6495 = vpop.f32.mrf.mxu0
      %6496 = vmatprep.mubr.bf16.mxu0 0
      %6497 = vmatmul.mubr.bf16.gmra.mxu0 %v6352
      %v6498 = vpop.f32.mrf.mxu0
      %v6499 = vadd.f32 0.0, %v6498
      %v6500 = vpop.f32.mrf.mxu0
      %v6501 = vpop.f32.mrf.mxu0
      %v6502 = vadd.f32 0.0, %v6501
      %v6503 = vpop.f32.mrf.mxu0
      %6504 = vmatprep.mubr.bf16.mxu0 0
      %6505 = vmatmul.mubr.bf16.gmra.mxu0 %v6355
      %v6506 = vpop.f32.mrf.mxu0
      %v6507 = vadd.f32 0.0, %v6506
      %v6508 = vpop.f32.mrf.mxu0
      %v6509 = vpop.f32.mrf.mxu0
      %v6510 = vadd.f32 0.0, %v6509
      %v6511 = vpop.f32.mrf.mxu0
      %6512 = vmatprep.mubr.bf16.mxu0 0
      %6513 = vmatmul.mubr.bf16.gmra.mxu0 %v6358
      %v6514 = vpop.f32.mrf.mxu0
      %v6515 = vadd.f32 0.0, %v6514
      %v6516 = vpop.f32.mrf.mxu0
      %v6517 = vpop.f32.mrf.mxu0
      %v6518 = vadd.f32 0.0, %v6517
      %v6519 = vpop.f32.mrf.mxu0
      %6520 = vdwg.mxu0
      %v6521 = vadd.f32 %v6199, %v6395
      %v6522 = vadd.f32 %v6200, %v6398
      %v6523 = vadd.f32 %v6201, %v6403
      %v6524 = vadd.f32 %v6202, %v6406
      %v6525 = vadd.f32 %v6203, %v6411
      %v6526 = vadd.f32 %v6204, %v6414
      %v6527 = vadd.f32 %v6205, %v6419
      %v6528 = vadd.f32 %v6206, %v6422
      %v6529 = vadd.f32 %v6207, %v6427
      %v6530 = vadd.f32 %v6208, %v6430
      %v6531 = vadd.f32 %v6209, %v6435
      %v6532 = vadd.f32 %v6210, %v6438
      %v6533 = vadd.f32 %v6211, %v6443
      %v6534 = vadd.f32 %v6212, %v6446
      %v6535 = vadd.f32 %v6213, %v6451
      %v6536 = vadd.f32 %v6214, %v6454
      %v6537 = vadd.f32 %v6215, %v6459
      %v6538 = vadd.f32 %v6216, %v6462
      %v6539 = vadd.f32 %v6217, %v6467
      %v6540 = vadd.f32 %v6218, %v6470
      %v6541 = vadd.f32 %v6219, %v6475
      %v6542 = vadd.f32 %v6220, %v6478
      %v6543 = vadd.f32 %v6221, %v6483
      %v6544 = vadd.f32 %v6222, %v6486
      %v6545 = vadd.f32 %v6223, %v6491
      %v6546 = vadd.f32 %v6224, %v6494
      %v6547 = vadd.f32 %v6225, %v6499
      %v6548 = vadd.f32 %v6226, %v6502
      %v6549 = vadd.f32 %v6227, %v6507
      %v6550 = vadd.f32 %v6228, %v6510
      %v6551 = vadd.f32 %v6229, %v6515
      %v6552 = vadd.f32 %v6230, %v6518
      %v6553 = vld [vmem:[%s2946 + $0x1] sm:$0xff]
      %v6554 = vld [vmem:[%s2946 + $0x9] sm:$0xff]
      %v6555 = vld [vmem:[%s2946 + $0x19] sm:$0xff]
      %v6556 = vld [vmem:[%s2946 + $0x21] sm:$0xff]
      %v6557 = vld [vmem:[%s2946 + $0x31] sm:$0xff]
      %v6558 = vld [vmem:[%s2946 + $0x39] sm:$0xff]
      %v6559 = vld [vmem:[%s2946 + $0x49] sm:$0xff]
      %v6560 = vld [vmem:[%s2946 + $0x51] sm:$0xff]
      %v6561 = vld [vmem:[%s2946 + $0x61] sm:$0xff]
      %v6562 = vld [vmem:[%s2946 + $0x69] sm:$0xff]
      %v6563 = vld [vmem:[%s2946 + $0x79] sm:$0xff]
      %v6564 = vld [vmem:[%s2946 + $0x81] sm:$0xff]
      %v6565 = vld [vmem:[%s2946 + $0x91] sm:$0xff]
      %v6566 = vld [vmem:[%s2946 + $0x99] sm:$0xff]
      %v6567 = vld [vmem:[%s2946 + $0xa9] sm:$0xff]
      %v6568 = vld [vmem:[%s2946 + $0xb1] sm:$0xff]
      %v6569 = vld [vmem:[%s2946 + $0xc1] sm:$0xff]
      %v6570 = vld [vmem:[%s2946 + $0xc9] sm:$0xff]
      %v6571 = vld [vmem:[%s2946 + $0xd9] sm:$0xff]
      %v6572 = vld [vmem:[%s2946 + $0xe1] sm:$0xff]
      %v6573 = vld [vmem:[%s2946 + $0xf1] sm:$0xff]
      %v6574 = vld [vmem:[%s2946 + $0xf9] sm:$0xff]
      %v6575 = vld [vmem:[%s2946 + $0x109] sm:$0xff]
      %v6576 = vld [vmem:[%s2946 + $0x111] sm:$0xff]
      %v6577 = vld [vmem:[%s2946 + $0x121] sm:$0xff]
      %v6578 = vld [vmem:[%s2946 + $0x129] sm:$0xff]
      %v6579 = vld [vmem:[%s2946 + $0x139] sm:$0xff]
      %v6580 = vld [vmem:[%s2946 + $0x141] sm:$0xff]
      %v6581 = vld [vmem:[%s2946 + $0x151] sm:$0xff]
      %v6582 = vld [vmem:[%s2946 + $0x159] sm:$0xff]
      %v6583 = vld [vmem:[%s2946 + $0x169] sm:$0xff]
      %v6584 = vld [vmem:[%s2946 + $0x171] sm:$0xff]
      %v6585 = vpack.c.bf16 %v6554, %v6553
      %v6586 = vpack.c.bf16 %v6556, %v6555
      %v6587 = vpack.c.bf16 %v6558, %v6557
      %v6588 = vpack.c.bf16 %v6560, %v6559
      %v6589 = vpack.c.bf16 %v6562, %v6561
      %v6590 = vpack.c.bf16 %v6564, %v6563
      %v6591 = vpack.c.bf16 %v6566, %v6565
      %v6592 = vpack.c.bf16 %v6568, %v6567
      %v6593 = vpack.c.bf16 %v6570, %v6569
      %v6594 = vpack.c.bf16 %v6572, %v6571
      %v6595 = vpack.c.bf16 %v6574, %v6573
      %v6596 = vpack.c.bf16 %v6576, %v6575
      %v6597 = vpack.c.bf16 %v6578, %v6577
      %v6598 = vpack.c.bf16 %v6580, %v6579
      %v6599 = vpack.c.bf16 %v6582, %v6581
      %v6600 = vpack.c.bf16 %v6584, %v6583
      %s6601 = scalar_lea.vmem %s3, 224
      %v6602 = vld [vmem:[%s6601] sm:$0xf]
      %v6603 = vld [vmem:[%s6601 + $0x4] sm:$0xf]
      %v6604 = vld [vmem:[%s6601 + $0x8] sm:$0xf]
      %v6605 = vld [vmem:[%s6601 + $0xc] sm:$0xf]
      %v6606 = vld [vmem:[%s6601 + $0x10] sm:$0xf]
      %v6607 = vld [vmem:[%s6601 + $0x14] sm:$0xf]
      %v6608 = vld [vmem:[%s6601 + $0x18] sm:$0xf]
      %v6609 = vld [vmem:[%s6601 + $0x1c] sm:$0xf]
      %v6618 = vunpack.c.l.b16 %v6602
      %v6619 = vunpack.c.l.b16 %v6603
      %v6620 = vunpack.c.l.b16 %v6604
      %v6621 = vunpack.c.l.b16 %v6605
      %v6622 = vunpack.c.l.b16 %v6606
      %v6623 = vunpack.c.l.b16 %v6607
      %v6624 = vunpack.c.l.b16 %v6608
      %v6625 = vunpack.c.l.b16 %v6609
      %v6626 = vpack.c.b16 %v6619, %v6618
      %v6627 = vpack.c.b16 %v6621, %v6620
      %v6628 = vpack.c.b16 %v6623, %v6622
      %v6629 = vpack.c.b16 %v6625, %v6624
      %v6635 = vsel %vm784, %v6585, 0
      %v6638 = vsel %vm784, %v6586, 0
      %v6641 = vsel %vm784, %v6587, 0
      %v6644 = vsel %vm784, %v6588, 0
      %v6647 = vsel %vm784, %v6589, 0
      %v6650 = vsel %vm784, %v6590, 0
      %v6653 = vsel %vm784, %v6591, 0
      %v6656 = vsel %vm784, %v6592, 0
      %v6659 = vsel %vm784, %v6593, 0
      %v6662 = vsel %vm784, %v6594, 0
      %v6665 = vsel %vm784, %v6595, 0
      %v6668 = vsel %vm784, %v6596, 0
      %v6671 = vsel %vm784, %v6597, 0
      %v6674 = vsel %vm784, %v6598, 0
      %v6677 = vsel %vm784, %v6599, 0
      %v6680 = vsel %vm784, %v6600, 0
      %6682 = vmatprep.subr.bf16.mxu0 0
      %6683 = vmatpush1.bf16.msra.mxu0 0
      %6684 = vmatprep.subr.bf16.mxu0 0
      %6685 = vmatpush1.bf16.msra.mxu0 0
      %6686 = vmatprep.subr.bf16.mxu0 0
      %6687 = vmatpush1.bf16.msra.mxu0 0
      %6688 = vmatprep.subr.bf16.mxu0 0
      %6689 = vmatpush1.bf16.msra.mxu0 0
      %6690 = vmatprep.subr.bf16.mxu0 0
      %6691 = vmatpush1.bf16.msra.mxu0 %v6629
      %6692 = vmatprep.subr.bf16.mxu0 0
      %6693 = vmatpush1.bf16.msra.mxu0 %v6628
      %6694 = vmatprep.subr.bf16.mxu0 0
      %6695 = vmatpush1.bf16.msra.mxu0 %v6627
      %6696 = vmatprep.subr.bf16.mxu0 0
      %6697 = vmatpush1.bf16.msra.mxu0 %v6626
      %6698 = vmatprep.subr.bf16.mxu0 0
      %6699 = vmatpush2.bf16.msra.mxu0 0
      %6700 = vmatprep.subr.bf16.mxu0 0
      %6701 = vmatpush2.bf16.msra.mxu0 0
      %6702 = vmatprep.subr.bf16.mxu0 0
      %6703 = vmatpush2.bf16.msra.mxu0 0
      %6704 = vmatprep.subr.bf16.mxu0 0
      %6705 = vmatpush2.bf16.msra.mxu0 0
      %6706 = vmatprep.subr.bf16.mxu0 0
      %6707 = vmatpush2.bf16.msra.mxu0 0
      %6708 = vmatprep.subr.bf16.mxu0 0
      %6709 = vmatpush2.bf16.msra.mxu0 0
      %6710 = vmatprep.subr.bf16.mxu0 0
      %6711 = vmatpush2.bf16.msra.mxu0 0
      %6712 = vmatprep.subr.bf16.mxu0 0
      %6713 = vmatpush2.bf16.msra.mxu0 0
      %6714 = vmatprep.mubr.bf16.mxu0 0
      %6715 = vmatmul.mubr.bf16.gmra.mxu0 %v6635
      %v6716 = vpop.f32.mrf.mxu0
      %v6717 = vadd.f32 0.0, %v6716
      %v6718 = vpop.f32.mrf.mxu0
      %v6719 = vpop.f32.mrf.mxu0
      %v6720 = vadd.f32 0.0, %v6719
      %v6721 = vpop.f32.mrf.mxu0
      %6722 = vmatprep.mubr.bf16.mxu0 0
      %6723 = vmatmul.mubr.bf16.gmra.mxu0 %v6638
      %v6724 = vpop.f32.mrf.mxu0
      %v6725 = vadd.f32 0.0, %v6724
      %v6726 = vpop.f32.mrf.mxu0
      %v6727 = vpop.f32.mrf.mxu0
      %v6728 = vadd.f32 0.0, %v6727
      %v6729 = vpop.f32.mrf.mxu0
      %6730 = vmatprep.mubr.bf16.mxu0 0
      %6731 = vmatmul.mubr.bf16.gmra.mxu0 %v6641
      %v6732 = vpop.f32.mrf.mxu0
      %v6733 = vadd.f32 0.0, %v6732
      %v6734 = vpop.f32.mrf.mxu0
      %v6735 = vpop.f32.mrf.mxu0
      %v6736 = vadd.f32 0.0, %v6735
      %v6737 = vpop.f32.mrf.mxu0
      %6738 = vmatprep.mubr.bf16.mxu0 0
      %6739 = vmatmul.mubr.bf16.gmra.mxu0 %v6644
      %v6740 = vpop.f32.mrf.mxu0
      %v6741 = vadd.f32 0.0, %v6740
      %v6742 = vpop.f32.mrf.mxu0
      %v6743 = vpop.f32.mrf.mxu0
      %v6744 = vadd.f32 0.0, %v6743
      %v6745 = vpop.f32.mrf.mxu0
      %6746 = vmatprep.mubr.bf16.mxu0 0
      %6747 = vmatmul.mubr.bf16.gmra.mxu0 %v6647
      %v6748 = vpop.f32.mrf.mxu0
      %v6749 = vadd.f32 0.0, %v6748
      %v6750 = vpop.f32.mrf.mxu0
      %v6751 = vpop.f32.mrf.mxu0
      %v6752 = vadd.f32 0.0, %v6751
      %v6753 = vpop.f32.mrf.mxu0
      %6754 = vmatprep.mubr.bf16.mxu0 0
      %6755 = vmatmul.mubr.bf16.gmra.mxu0 %v6650
      %v6756 = vpop.f32.mrf.mxu0
      %v6757 = vadd.f32 0.0, %v6756
      %v6758 = vpop.f32.mrf.mxu0
      %v6759 = vpop.f32.mrf.mxu0
      %v6760 = vadd.f32 0.0, %v6759
      %v6761 = vpop.f32.mrf.mxu0
      %6762 = vmatprep.mubr.bf16.mxu0 0
      %6763 = vmatmul.mubr.bf16.gmra.mxu0 %v6653
      %v6764 = vpop.f32.mrf.mxu0
      %v6765 = vadd.f32 0.0, %v6764
      %v6766 = vpop.f32.mrf.mxu0
      %v6767 = vpop.f32.mrf.mxu0
      %v6768 = vadd.f32 0.0, %v6767
      %v6769 = vpop.f32.mrf.mxu0
      %6770 = vmatprep.mubr.bf16.mxu0 0
      %6771 = vmatmul.mubr.bf16.gmra.mxu0 %v6656
      %v6772 = vpop.f32.mrf.mxu0
      %v6773 = vadd.f32 0.0, %v6772
      %v6774 = vpop.f32.mrf.mxu0
      %v6775 = vpop.f32.mrf.mxu0
      %v6776 = vadd.f32 0.0, %v6775
      %v6777 = vpop.f32.mrf.mxu0
      %6778 = vmatprep.mubr.bf16.mxu0 0
      %6779 = vmatmul.mubr.bf16.gmra.mxu0 %v6659
      %v6780 = vpop.f32.mrf.mxu0
      %v6781 = vadd.f32 0.0, %v6780
      %v6782 = vpop.f32.mrf.mxu0
      %v6783 = vpop.f32.mrf.mxu0
      %v6784 = vadd.f32 0.0, %v6783
      %v6785 = vpop.f32.mrf.mxu0
      %6786 = vmatprep.mubr.bf16.mxu0 0
      %6787 = vmatmul.mubr.bf16.gmra.mxu0 %v6662
      %v6788 = vpop.f32.mrf.mxu0
      %v6789 = vadd.f32 0.0, %v6788
      %v6790 = vpop.f32.mrf.mxu0
      %v6791 = vpop.f32.mrf.mxu0
      %v6792 = vadd.f32 0.0, %v6791
      %v6793 = vpop.f32.mrf.mxu0
      %6794 = vmatprep.mubr.bf16.mxu0 0
      %6795 = vmatmul.mubr.bf16.gmra.mxu0 %v6665
      %v6796 = vpop.f32.mrf.mxu0
      %v6797 = vadd.f32 0.0, %v6796
      %v6798 = vpop.f32.mrf.mxu0
      %v6799 = vpop.f32.mrf.mxu0
      %v6800 = vadd.f32 0.0, %v6799
      %v6801 = vpop.f32.mrf.mxu0
      %6802 = vmatprep.mubr.bf16.mxu0 0
      %6803 = vmatmul.mubr.bf16.gmra.mxu0 %v6668
      %v6804 = vpop.f32.mrf.mxu0
      %v6805 = vadd.f32 0.0, %v6804
      %v6806 = vpop.f32.mrf.mxu0
      %v6807 = vpop.f32.mrf.mxu0
      %v6808 = vadd.f32 0.0, %v6807
      %v6809 = vpop.f32.mrf.mxu0
      %6810 = vmatprep.mubr.bf16.mxu0 0
      %6811 = vmatmul.mubr.bf16.gmra.mxu0 %v6671
      %v6812 = vpop.f32.mrf.mxu0
      %v6813 = vadd.f32 0.0, %v6812
      %v6814 = vpop.f32.mrf.mxu0
      %v6815 = vpop.f32.mrf.mxu0
      %v6816 = vadd.f32 0.0, %v6815
      %v6817 = vpop.f32.mrf.mxu0
      %6818 = vmatprep.mubr.bf16.mxu0 0
      %6819 = vmatmul.mubr.bf16.gmra.mxu0 %v6674
      %v6820 = vpop.f32.mrf.mxu0
      %v6821 = vadd.f32 0.0, %v6820
      %v6822 = vpop.f32.mrf.mxu0
      %v6823 = vpop.f32.mrf.mxu0
      %v6824 = vadd.f32 0.0, %v6823
      %v6825 = vpop.f32.mrf.mxu0
      %6826 = vmatprep.mubr.bf16.mxu0 0
      %6827 = vmatmul.mubr.bf16.gmra.mxu0 %v6677
      %v6828 = vpop.f32.mrf.mxu0
      %v6829 = vadd.f32 0.0, %v6828
      %v6830 = vpop.f32.mrf.mxu0
      %v6831 = vpop.f32.mrf.mxu0
      %v6832 = vadd.f32 0.0, %v6831
      %v6833 = vpop.f32.mrf.mxu0
      %6834 = vmatprep.mubr.bf16.mxu0 0
      %6835 = vmatmul.mubr.bf16.gmra.mxu0 %v6680
      %v6836 = vpop.f32.mrf.mxu0
      %v6837 = vadd.f32 0.0, %v6836
      %v6838 = vpop.f32.mrf.mxu0
      %v6839 = vpop.f32.mrf.mxu0
      %v6840 = vadd.f32 0.0, %v6839
      %v6841 = vpop.f32.mrf.mxu0
      %6842 = vdwg.mxu0
      %v6843 = vadd.f32 %v6521, %v6717
      %v6844 = vadd.f32 %v6522, %v6720
      %v6845 = vadd.f32 %v6523, %v6725
      %v6846 = vadd.f32 %v6524, %v6728
      %v6847 = vadd.f32 %v6525, %v6733
      %v6848 = vadd.f32 %v6526, %v6736
      %v6849 = vadd.f32 %v6527, %v6741
      %v6850 = vadd.f32 %v6528, %v6744
      %v6851 = vadd.f32 %v6529, %v6749
      %v6852 = vadd.f32 %v6530, %v6752
      %v6853 = vadd.f32 %v6531, %v6757
      %v6854 = vadd.f32 %v6532, %v6760
      %v6855 = vadd.f32 %v6533, %v6765
      %v6856 = vadd.f32 %v6534, %v6768
      %v6857 = vadd.f32 %v6535, %v6773
      %v6858 = vadd.f32 %v6536, %v6776
      %v6859 = vadd.f32 %v6537, %v6781
      %v6860 = vadd.f32 %v6538, %v6784
      %v6861 = vadd.f32 %v6539, %v6789
      %v6862 = vadd.f32 %v6540, %v6792
      %v6863 = vadd.f32 %v6541, %v6797
      %v6864 = vadd.f32 %v6542, %v6800
      %v6865 = vadd.f32 %v6543, %v6805
      %v6866 = vadd.f32 %v6544, %v6808
      %v6867 = vadd.f32 %v6545, %v6813
      %v6868 = vadd.f32 %v6546, %v6816
      %v6869 = vadd.f32 %v6547, %v6821
      %v6870 = vadd.f32 %v6548, %v6824
      %v6871 = vadd.f32 %v6549, %v6829
      %v6872 = vadd.f32 %v6550, %v6832
      %v6873 = vadd.f32 %v6551, %v6837
      %v6874 = vadd.f32 %v6552, %v6840
      %v6875 = vld [vmem:[%s2946 + $0x2] sm:$0xff]
      %v6876 = vld [vmem:[%s2946 + $0xa] sm:$0xff]
      %v6877 = vld [vmem:[%s2946 + $0x1a] sm:$0xff]
      %v6878 = vld [vmem:[%s2946 + $0x22] sm:$0xff]
      %v6879 = vld [vmem:[%s2946 + $0x32] sm:$0xff]
      %v6880 = vld [vmem:[%s2946 + $0x3a] sm:$0xff]
      %v6881 = vld [vmem:[%s2946 + $0x4a] sm:$0xff]
      %v6882 = vld [vmem:[%s2946 + $0x52] sm:$0xff]
      %v6883 = vld [vmem:[%s2946 + $0x62] sm:$0xff]
      %v6884 = vld [vmem:[%s2946 + $0x6a] sm:$0xff]
      %v6885 = vld [vmem:[%s2946 + $0x7a] sm:$0xff]
      %v6886 = vld [vmem:[%s2946 + $0x82] sm:$0xff]
      %v6887 = vld [vmem:[%s2946 + $0x92] sm:$0xff]
      %v6888 = vld [vmem:[%s2946 + $0x9a] sm:$0xff]
      %v6889 = vld [vmem:[%s2946 + $0xaa] sm:$0xff]
      %v6890 = vld [vmem:[%s2946 + $0xb2] sm:$0xff]
      %v6891 = vld [vmem:[%s2946 + $0xc2] sm:$0xff]
      %v6892 = vld [vmem:[%s2946 + $0xca] sm:$0xff]
      %v6893 = vld [vmem:[%s2946 + $0xda] sm:$0xff]
      %v6894 = vld [vmem:[%s2946 + $0xe2] sm:$0xff]
      %v6895 = vld [vmem:[%s2946 + $0xf2] sm:$0xff]
      %v6896 = vld [vmem:[%s2946 + $0xfa] sm:$0xff]
      %v6897 = vld [vmem:[%s2946 + $0x10a] sm:$0xff]
      %v6898 = vld [vmem:[%s2946 + $0x112] sm:$0xff]
      %v6899 = vld [vmem:[%s2946 + $0x122] sm:$0xff]
      %v6900 = vld [vmem:[%s2946 + $0x12a] sm:$0xff]
      %v6901 = vld [vmem:[%s2946 + $0x13a] sm:$0xff]
      %v6902 = vld [vmem:[%s2946 + $0x142] sm:$0xff]
      %v6903 = vld [vmem:[%s2946 + $0x152] sm:$0xff]
      %v6904 = vld [vmem:[%s2946 + $0x15a] sm:$0xff]
      %v6905 = vld [vmem:[%s2946 + $0x16a] sm:$0xff]
      %v6906 = vld [vmem:[%s2946 + $0x172] sm:$0xff]
      %v6907 = vpack.c.bf16 %v6876, %v6875
      %v6908 = vpack.c.bf16 %v6878, %v6877
      %v6909 = vpack.c.bf16 %v6880, %v6879
      %v6910 = vpack.c.bf16 %v6882, %v6881
      %v6911 = vpack.c.bf16 %v6884, %v6883
      %v6912 = vpack.c.bf16 %v6886, %v6885
      %v6913 = vpack.c.bf16 %v6888, %v6887
      %v6914 = vpack.c.bf16 %v6890, %v6889
      %v6915 = vpack.c.bf16 %v6892, %v6891
      %v6916 = vpack.c.bf16 %v6894, %v6893
      %v6917 = vpack.c.bf16 %v6896, %v6895
      %v6918 = vpack.c.bf16 %v6898, %v6897
      %v6919 = vpack.c.bf16 %v6900, %v6899
      %v6920 = vpack.c.bf16 %v6902, %v6901
      %v6921 = vpack.c.bf16 %v6904, %v6903
      %v6922 = vpack.c.bf16 %v6906, %v6905
      %s6923 = scalar_lea.vmem %s3, 256
      %v6924 = vld [vmem:[%s6923] sm:$0xf]
      %v6925 = vld [vmem:[%s6923 + $0x4] sm:$0xf]
      %v6926 = vld [vmem:[%s6923 + $0x8] sm:$0xf]
      %v6927 = vld [vmem:[%s6923 + $0xc] sm:$0xf]
      %v6928 = vld [vmem:[%s6923 + $0x10] sm:$0xf]
      %v6929 = vld [vmem:[%s6923 + $0x14] sm:$0xf]
      %v6930 = vld [vmem:[%s6923 + $0x18] sm:$0xf]
      %v6931 = vld [vmem:[%s6923 + $0x1c] sm:$0xf]
      %v6940 = vunpack.c.l.b16 %v6924
      %v6941 = vunpack.c.l.b16 %v6925
      %v6942 = vunpack.c.l.b16 %v6926
      %v6943 = vunpack.c.l.b16 %v6927
      %v6944 = vunpack.c.l.b16 %v6928
      %v6945 = vunpack.c.l.b16 %v6929
      %v6946 = vunpack.c.l.b16 %v6930
      %v6947 = vunpack.c.l.b16 %v6931
      %v6948 = vpack.c.b16 %v6941, %v6940
      %v6949 = vpack.c.b16 %v6943, %v6942
      %v6950 = vpack.c.b16 %v6945, %v6944
      %v6951 = vpack.c.b16 %v6947, %v6946
      %v6957 = vsel %vm784, %v6907, 0
      %v6960 = vsel %vm784, %v6908, 0
      %v6963 = vsel %vm784, %v6909, 0
      %v6966 = vsel %vm784, %v6910, 0
      %v6969 = vsel %vm784, %v6911, 0
      %v6972 = vsel %vm784, %v6912, 0
      %v6975 = vsel %vm784, %v6913, 0
      %v6978 = vsel %vm784, %v6914, 0
      %v6981 = vsel %vm784, %v6915, 0
      %v6984 = vsel %vm784, %v6916, 0
      %v6987 = vsel %vm784, %v6917, 0
      %v6990 = vsel %vm784, %v6918, 0
      %v6993 = vsel %vm784, %v6919, 0
      %v6996 = vsel %vm784, %v6920, 0
      %v6999 = vsel %vm784, %v6921, 0
      %v7002 = vsel %vm784, %v6922, 0
      %7004 = vmatprep.subr.bf16.mxu0 0
      %7005 = vmatpush1.bf16.msra.mxu0 0
      %7006 = vmatprep.subr.bf16.mxu0 0
      %7007 = vmatpush1.bf16.msra.mxu0 0
      %7008 = vmatprep.subr.bf16.mxu0 0
      %7009 = vmatpush1.bf16.msra.mxu0 0
      %7010 = vmatprep.subr.bf16.mxu0 0
      %7011 = vmatpush1.bf16.msra.mxu0 0
      %7012 = vmatprep.subr.bf16.mxu0 0
      %7013 = vmatpush1.bf16.msra.mxu0 %v6951
      %7014 = vmatprep.subr.bf16.mxu0 0
      %7015 = vmatpush1.bf16.msra.mxu0 %v6950
      %7016 = vmatprep.subr.bf16.mxu0 0
      %7017 = vmatpush1.bf16.msra.mxu0 %v6949
      %7018 = vmatprep.subr.bf16.mxu0 0
      %7019 = vmatpush1.bf16.msra.mxu0 %v6948
      %7020 = vmatprep.subr.bf16.mxu0 0
      %7021 = vmatpush2.bf16.msra.mxu0 0
      %7022 = vmatprep.subr.bf16.mxu0 0
      %7023 = vmatpush2.bf16.msra.mxu0 0
      %7024 = vmatprep.subr.bf16.mxu0 0
      %7025 = vmatpush2.bf16.msra.mxu0 0
      %7026 = vmatprep.subr.bf16.mxu0 0
      %7027 = vmatpush2.bf16.msra.mxu0 0
      %7028 = vmatprep.subr.bf16.mxu0 0
      %7029 = vmatpush2.bf16.msra.mxu0 0
      %7030 = vmatprep.subr.bf16.mxu0 0
      %7031 = vmatpush2.bf16.msra.mxu0 0
      %7032 = vmatprep.subr.bf16.mxu0 0
      %7033 = vmatpush2.bf16.msra.mxu0 0
      %7034 = vmatprep.subr.bf16.mxu0 0
      %7035 = vmatpush2.bf16.msra.mxu0 0
      %7036 = vmatprep.mubr.bf16.mxu0 0
      %7037 = vmatmul.mubr.bf16.gmra.mxu0 %v6957
      %v7038 = vpop.f32.mrf.mxu0
      %v7039 = vadd.f32 0.0, %v7038
      %v7040 = vpop.f32.mrf.mxu0
      %v7041 = vpop.f32.mrf.mxu0
      %v7042 = vadd.f32 0.0, %v7041
      %v7043 = vpop.f32.mrf.mxu0
      %7044 = vmatprep.mubr.bf16.mxu0 0
      %7045 = vmatmul.mubr.bf16.gmra.mxu0 %v6960
      %v7046 = vpop.f32.mrf.mxu0
      %v7047 = vadd.f32 0.0, %v7046
      %v7048 = vpop.f32.mrf.mxu0
      %v7049 = vpop.f32.mrf.mxu0
      %v7050 = vadd.f32 0.0, %v7049
      %v7051 = vpop.f32.mrf.mxu0
      %7052 = vmatprep.mubr.bf16.mxu0 0
      %7053 = vmatmul.mubr.bf16.gmra.mxu0 %v6963
      %v7054 = vpop.f32.mrf.mxu0
      %v7055 = vadd.f32 0.0, %v7054
      %v7056 = vpop.f32.mrf.mxu0
      %v7057 = vpop.f32.mrf.mxu0
      %v7058 = vadd.f32 0.0, %v7057
      %v7059 = vpop.f32.mrf.mxu0
      %7060 = vmatprep.mubr.bf16.mxu0 0
      %7061 = vmatmul.mubr.bf16.gmra.mxu0 %v6966
      %v7062 = vpop.f32.mrf.mxu0
      %v7063 = vadd.f32 0.0, %v7062
      %v7064 = vpop.f32.mrf.mxu0
      %v7065 = vpop.f32.mrf.mxu0
      %v7066 = vadd.f32 0.0, %v7065
      %v7067 = vpop.f32.mrf.mxu0
      %7068 = vmatprep.mubr.bf16.mxu0 0
      %7069 = vmatmul.mubr.bf16.gmra.mxu0 %v6969
      %v7070 = vpop.f32.mrf.mxu0
      %v7071 = vadd.f32 0.0, %v7070
      %v7072 = vpop.f32.mrf.mxu0
      %v7073 = vpop.f32.mrf.mxu0
      %v7074 = vadd.f32 0.0, %v7073
      %v7075 = vpop.f32.mrf.mxu0
      %7076 = vmatprep.mubr.bf16.mxu0 0
      %7077 = vmatmul.mubr.bf16.gmra.mxu0 %v6972
      %v7078 = vpop.f32.mrf.mxu0
      %v7079 = vadd.f32 0.0, %v7078
      %v7080 = vpop.f32.mrf.mxu0
      %v7081 = vpop.f32.mrf.mxu0
      %v7082 = vadd.f32 0.0, %v7081
      %v7083 = vpop.f32.mrf.mxu0
      %7084 = vmatprep.mubr.bf16.mxu0 0
      %7085 = vmatmul.mubr.bf16.gmra.mxu0 %v6975
      %v7086 = vpop.f32.mrf.mxu0
      %v7087 = vadd.f32 0.0, %v7086
      %v7088 = vpop.f32.mrf.mxu0
      %v7089 = vpop.f32.mrf.mxu0
      %v7090 = vadd.f32 0.0, %v7089
      %v7091 = vpop.f32.mrf.mxu0
      %7092 = vmatprep.mubr.bf16.mxu0 0
      %7093 = vmatmul.mubr.bf16.gmra.mxu0 %v6978
      %v7094 = vpop.f32.mrf.mxu0
      %v7095 = vadd.f32 0.0, %v7094
      %v7096 = vpop.f32.mrf.mxu0
      %v7097 = vpop.f32.mrf.mxu0
      %v7098 = vadd.f32 0.0, %v7097
      %v7099 = vpop.f32.mrf.mxu0
      %7100 = vmatprep.mubr.bf16.mxu0 0
      %7101 = vmatmul.mubr.bf16.gmra.mxu0 %v6981
      %v7102 = vpop.f32.mrf.mxu0
      %v7103 = vadd.f32 0.0, %v7102
      %v7104 = vpop.f32.mrf.mxu0
      %v7105 = vpop.f32.mrf.mxu0
      %v7106 = vadd.f32 0.0, %v7105
      %v7107 = vpop.f32.mrf.mxu0
      %7108 = vmatprep.mubr.bf16.mxu0 0
      %7109 = vmatmul.mubr.bf16.gmra.mxu0 %v6984
      %v7110 = vpop.f32.mrf.mxu0
      %v7111 = vadd.f32 0.0, %v7110
      %v7112 = vpop.f32.mrf.mxu0
      %v7113 = vpop.f32.mrf.mxu0
      %v7114 = vadd.f32 0.0, %v7113
      %v7115 = vpop.f32.mrf.mxu0
      %7116 = vmatprep.mubr.bf16.mxu0 0
      %7117 = vmatmul.mubr.bf16.gmra.mxu0 %v6987
      %v7118 = vpop.f32.mrf.mxu0
      %v7119 = vadd.f32 0.0, %v7118
      %v7120 = vpop.f32.mrf.mxu0
      %v7121 = vpop.f32.mrf.mxu0
      %v7122 = vadd.f32 0.0, %v7121
      %v7123 = vpop.f32.mrf.mxu0
      %7124 = vmatprep.mubr.bf16.mxu0 0
      %7125 = vmatmul.mubr.bf16.gmra.mxu0 %v6990
      %v7126 = vpop.f32.mrf.mxu0
      %v7127 = vadd.f32 0.0, %v7126
      %v7128 = vpop.f32.mrf.mxu0
      %v7129 = vpop.f32.mrf.mxu0
      %v7130 = vadd.f32 0.0, %v7129
      %v7131 = vpop.f32.mrf.mxu0
      %7132 = vmatprep.mubr.bf16.mxu0 0
      %7133 = vmatmul.mubr.bf16.gmra.mxu0 %v6993
      %v7134 = vpop.f32.mrf.mxu0
      %v7135 = vadd.f32 0.0, %v7134
      %v7136 = vpop.f32.mrf.mxu0
      %v7137 = vpop.f32.mrf.mxu0
      %v7138 = vadd.f32 0.0, %v7137
      %v7139 = vpop.f32.mrf.mxu0
      %7140 = vmatprep.mubr.bf16.mxu0 0
      %7141 = vmatmul.mubr.bf16.gmra.mxu0 %v6996
      %v7142 = vpop.f32.mrf.mxu0
      %v7143 = vadd.f32 0.0, %v7142
      %v7144 = vpop.f32.mrf.mxu0
      %v7145 = vpop.f32.mrf.mxu0
      %v7146 = vadd.f32 0.0, %v7145
      %v7147 = vpop.f32.mrf.mxu0
      %7148 = vmatprep.mubr.bf16.mxu0 0
      %7149 = vmatmul.mubr.bf16.gmra.mxu0 %v6999
      %v7150 = vpop.f32.mrf.mxu0
      %v7151 = vadd.f32 0.0, %v7150
      %v7152 = vpop.f32.mrf.mxu0
      %v7153 = vpop.f32.mrf.mxu0
      %v7154 = vadd.f32 0.0, %v7153
      %v7155 = vpop.f32.mrf.mxu0
      %7156 = vmatprep.mubr.bf16.mxu0 0
      %7157 = vmatmul.mubr.bf16.gmra.mxu0 %v7002
      %v7158 = vpop.f32.mrf.mxu0
      %v7159 = vadd.f32 0.0, %v7158
      %v7160 = vpop.f32.mrf.mxu0
      %v7161 = vpop.f32.mrf.mxu0
      %v7162 = vadd.f32 0.0, %v7161
      %v7163 = vpop.f32.mrf.mxu0
      %7164 = vdwg.mxu0
      %v7165 = vadd.f32 %v6843, %v7039
      %v7166 = vadd.f32 %v6844, %v7042
      %v7167 = vadd.f32 %v6845, %v7047
      %v7168 = vadd.f32 %v6846, %v7050
      %v7169 = vadd.f32 %v6847, %v7055
      %v7170 = vadd.f32 %v6848, %v7058
      %v7171 = vadd.f32 %v6849, %v7063
      %v7172 = vadd.f32 %v6850, %v7066
      %v7173 = vadd.f32 %v6851, %v7071
      %v7174 = vadd.f32 %v6852, %v7074
      %v7175 = vadd.f32 %v6853, %v7079
      %v7176 = vadd.f32 %v6854, %v7082
      %v7177 = vadd.f32 %v6855, %v7087
      %v7178 = vadd.f32 %v6856, %v7090
      %v7179 = vadd.f32 %v6857, %v7095
      %v7180 = vadd.f32 %v6858, %v7098
      %v7181 = vadd.f32 %v6859, %v7103
      %v7182 = vadd.f32 %v6860, %v7106
      %v7183 = vadd.f32 %v6861, %v7111
      %v7184 = vadd.f32 %v6862, %v7114
      %v7185 = vadd.f32 %v6863, %v7119
      %v7186 = vadd.f32 %v6864, %v7122
      %v7187 = vadd.f32 %v6865, %v7127
      %v7188 = vadd.f32 %v6866, %v7130
      %v7189 = vadd.f32 %v6867, %v7135
      %v7190 = vadd.f32 %v6868, %v7138
      %v7191 = vadd.f32 %v6869, %v7143
      %v7192 = vadd.f32 %v6870, %v7146
      %v7193 = vadd.f32 %v6871, %v7151
      %v7194 = vadd.f32 %v6872, %v7154
      %v7195 = vadd.f32 %v6873, %v7159
      %v7196 = vadd.f32 %v6874, %v7162
      %v7197 = vmul.f32 %v7165, %v7165
      %v7198 = vmul.f32 %v7166, %v7166
      %v7199 = vmul.f32 %v7167, %v7167
      %v7200 = vmul.f32 %v7168, %v7168
      %v7201 = vmul.f32 %v7169, %v7169
      %v7202 = vmul.f32 %v7170, %v7170
      %v7203 = vmul.f32 %v7171, %v7171
      %v7204 = vmul.f32 %v7172, %v7172
      %v7205 = vmul.f32 %v7173, %v7173
      %v7206 = vmul.f32 %v7174, %v7174
      %v7207 = vmul.f32 %v7175, %v7175
      %v7208 = vmul.f32 %v7176, %v7176
      %v7209 = vmul.f32 %v7177, %v7177
      %v7210 = vmul.f32 %v7178, %v7178
      %v7211 = vmul.f32 %v7179, %v7179
      %v7212 = vmul.f32 %v7180, %v7180
      %v7213 = vmul.f32 %v7181, %v7181
      %v7214 = vmul.f32 %v7182, %v7182
      %v7215 = vmul.f32 %v7183, %v7183
      %v7216 = vmul.f32 %v7184, %v7184
      %v7217 = vmul.f32 %v7185, %v7185
      %v7218 = vmul.f32 %v7186, %v7186
      %v7219 = vmul.f32 %v7187, %v7187
      %v7220 = vmul.f32 %v7188, %v7188
      %v7221 = vmul.f32 %v7189, %v7189
      %v7222 = vmul.f32 %v7190, %v7190
      %v7223 = vmul.f32 %v7191, %v7191
      %v7224 = vmul.f32 %v7192, %v7192
      %v7225 = vmul.f32 %v7193, %v7193
      %v7226 = vmul.f32 %v7194, %v7194
      %v7227 = vmul.f32 %v7195, %v7195
      %v7228 = vmul.f32 %v7196, %v7196
      %7261 = vrot.lane.b32.xlu0 %v7197, 64
      %v7262 = vpop.permute.xlu0 %7261
      %7263 = vrot.lane.b32.xlu0 %v7198, 64
      %v7264 = vpop.permute.xlu0 %7263
      %7265 = vrot.lane.b32.xlu0 %v7199, 64
      %v7266 = vpop.permute.xlu0 %7265
      %7267 = vrot.lane.b32.xlu0 %v7200, 64
      %v7268 = vpop.permute.xlu0 %7267
      %7269 = vrot.lane.b32.xlu0 %v7201, 64
      %v7270 = vpop.permute.xlu0 %7269
      %7271 = vrot.lane.b32.xlu0 %v7202, 64
      %v7272 = vpop.permute.xlu0 %7271
      %7273 = vrot.lane.b32.xlu0 %v7203, 64
      %v7274 = vpop.permute.xlu0 %7273
      %7275 = vrot.lane.b32.xlu0 %v7204, 64
      %v7276 = vpop.permute.xlu0 %7275
      %7277 = vrot.lane.b32.xlu0 %v7205, 64
      %v7278 = vpop.permute.xlu0 %7277
      %7279 = vrot.lane.b32.xlu0 %v7206, 64
      %v7280 = vpop.permute.xlu0 %7279
      %7281 = vrot.lane.b32.xlu0 %v7207, 64
      %v7282 = vpop.permute.xlu0 %7281
      %7283 = vrot.lane.b32.xlu0 %v7208, 64
      %v7284 = vpop.permute.xlu0 %7283
      %7285 = vrot.lane.b32.xlu0 %v7209, 64
      %v7286 = vpop.permute.xlu0 %7285
      %7287 = vrot.lane.b32.xlu0 %v7210, 64
      %v7288 = vpop.permute.xlu0 %7287
      %7289 = vrot.lane.b32.xlu0 %v7211, 64
      %v7290 = vpop.permute.xlu0 %7289
      %7291 = vrot.lane.b32.xlu0 %v7212, 64
      %v7292 = vpop.permute.xlu0 %7291
      %7293 = vrot.lane.b32.xlu0 %v7213, 64
      %v7294 = vpop.permute.xlu0 %7293
      %7295 = vrot.lane.b32.xlu0 %v7214, 64
      %v7296 = vpop.permute.xlu0 %7295
      %7297 = vrot.lane.b32.xlu0 %v7215, 64
      %v7298 = vpop.permute.xlu0 %7297
      %7299 = vrot.lane.b32.xlu0 %v7216, 64
      %v7300 = vpop.permute.xlu0 %7299
      %7301 = vrot.lane.b32.xlu0 %v7217, 64
      %v7302 = vpop.permute.xlu0 %7301
      %7303 = vrot.lane.b32.xlu0 %v7218, 64
      %v7304 = vpop.permute.xlu0 %7303
      %7305 = vrot.lane.b32.xlu0 %v7219, 64
      %v7306 = vpop.permute.xlu0 %7305
      %7307 = vrot.lane.b32.xlu0 %v7220, 64
      %v7308 = vpop.permute.xlu0 %7307
      %7309 = vrot.lane.b32.xlu0 %v7221, 64
      %v7310 = vpop.permute.xlu0 %7309
      %7311 = vrot.lane.b32.xlu0 %v7222, 64
      %v7312 = vpop.permute.xlu0 %7311
      %7313 = vrot.lane.b32.xlu0 %v7223, 64
      %v7314 = vpop.permute.xlu0 %7313
      %7315 = vrot.lane.b32.xlu0 %v7224, 64
      %v7316 = vpop.permute.xlu0 %7315
      %7317 = vrot.lane.b32.xlu0 %v7225, 64
      %v7318 = vpop.permute.xlu0 %7317
      %7319 = vrot.lane.b32.xlu0 %v7226, 64
      %v7320 = vpop.permute.xlu0 %7319
      %7321 = vrot.lane.b32.xlu0 %v7227, 64
      %v7322 = vpop.permute.xlu0 %7321
      %7323 = vrot.lane.b32.xlu0 %v7228, 64
      %v7324 = vpop.permute.xlu0 %7323
      %v7357 = vsel %vm784, %v7165, %v7262
      %v7358 = vsel %vm784, %v7166, %v7264
      %v7359 = vsel %vm784, %v7167, %v7266
      %v7360 = vsel %vm784, %v7168, %v7268
      %v7361 = vsel %vm784, %v7169, %v7270
      %v7362 = vsel %vm784, %v7170, %v7272
      %v7363 = vsel %vm784, %v7171, %v7274
      %v7364 = vsel %vm784, %v7172, %v7276
      %v7365 = vsel %vm784, %v7173, %v7278
      %v7366 = vsel %vm784, %v7174, %v7280
      %v7367 = vsel %vm784, %v7175, %v7282
      %v7368 = vsel %vm784, %v7176, %v7284
      %v7369 = vsel %vm784, %v7177, %v7286
      %v7370 = vsel %vm784, %v7178, %v7288
      %v7371 = vsel %vm784, %v7179, %v7290
      %v7372 = vsel %vm784, %v7180, %v7292
      %v7373 = vsel %vm784, %v7181, %v7294
      %v7374 = vsel %vm784, %v7182, %v7296
      %v7375 = vsel %vm784, %v7183, %v7298
      %v7376 = vsel %vm784, %v7184, %v7300
      %v7377 = vsel %vm784, %v7185, %v7302
      %v7378 = vsel %vm784, %v7186, %v7304
      %v7379 = vsel %vm784, %v7187, %v7306
      %v7380 = vsel %vm784, %v7188, %v7308
      %v7381 = vsel %vm784, %v7189, %v7310
      %v7382 = vsel %vm784, %v7190, %v7312
      %v7383 = vsel %vm784, %v7191, %v7314
      %v7384 = vsel %vm784, %v7192, %v7316
      %v7385 = vsel %vm784, %v7193, %v7318
      %v7386 = vsel %vm784, %v7194, %v7320
      %v7387 = vsel %vm784, %v7195, %v7322
      %v7388 = vsel %vm784, %v7196, %v7324
      %v7389 = vadd.f32 %v7357, %v7358
      %v7390 = vadd.f32 %v7389, %v7359
      %v7391 = vadd.f32 %v7390, %v7360
      %v7392 = vadd.f32 %v7391, %v7361
      %v7393 = vadd.f32 %v7392, %v7362
      %v7394 = vadd.f32 %v7393, %v7363
      %v7395 = vadd.f32 %v7394, %v7364
      %v7396 = vadd.f32 %v7395, %v7365
      %v7397 = vadd.f32 %v7396, %v7366
      %v7398 = vadd.f32 %v7397, %v7367
      %v7399 = vadd.f32 %v7398, %v7368
      %v7400 = vadd.f32 %v7399, %v7369
      %v7401 = vadd.f32 %v7400, %v7370
      %v7402 = vadd.f32 %v7401, %v7371
      %v7403 = vadd.f32 %v7402, %v7372
      %v7404 = vadd.f32 %v7403, %v7373
      %v7405 = vadd.f32 %v7404, %v7374
      %v7406 = vadd.f32 %v7405, %v7375
      %v7407 = vadd.f32 %v7406, %v7376
      %v7408 = vadd.f32 %v7407, %v7377
      %v7409 = vadd.f32 %v7408, %v7378
      %v7410 = vadd.f32 %v7409, %v7379
      %v7411 = vadd.f32 %v7410, %v7380
      %v7412 = vadd.f32 %v7411, %v7381
      %v7413 = vadd.f32 %v7412, %v7382
      %v7414 = vadd.f32 %v7413, %v7383
      %v7415 = vadd.f32 %v7414, %v7384
      %v7416 = vadd.f32 %v7415, %v7385
      %v7417 = vadd.f32 %v7416, %v7386
      %v7418 = vadd.f32 %v7417, %v7387
      %v7419 = vadd.f32 %v7418, %v7388
      %v7420 = vrot.slane %v7419, 4
      %v7421 = vadd.f32 %v7419, %v7420
      %v7422 = vrot.slane %v7421, 2
      %v7423 = vadd.f32 %v7421, %v7422
      %v7424 = vrot.slane %v7423, 1
      %v7425 = vadd.f32 %v7423, %v7424
      %v7426 = vmul.f32 %v7425, 0.00390625
      %v7427 = vmul.f32 %v7426, %v7426
      %7429 = vrot.lane.b32.xlu0 %v7427, 64
      %v7430 = vpop.permute.xlu0 %7429
      %v7432 = vsub.f32 %v7426, %v7430
      %v7433 = vmax.f32 %v7432, 0.0
      %v7434 = vsub.f32 %v7165, %v7426
      %v7435 = vsub.f32 %v7166, %v7426
      %v7436 = vsub.f32 %v7167, %v7426
      %v7437 = vsub.f32 %v7168, %v7426
      %v7438 = vsub.f32 %v7169, %v7426
      %v7439 = vsub.f32 %v7170, %v7426
      %v7440 = vsub.f32 %v7171, %v7426
      %v7441 = vsub.f32 %v7172, %v7426
      %v7442 = vsub.f32 %v7173, %v7426
      %v7443 = vsub.f32 %v7174, %v7426
      %v7444 = vsub.f32 %v7175, %v7426
      %v7445 = vsub.f32 %v7176, %v7426
      %v7446 = vsub.f32 %v7177, %v7426
      %v7447 = vsub.f32 %v7178, %v7426
      %v7448 = vsub.f32 %v7179, %v7426
      %v7449 = vsub.f32 %v7180, %v7426
      %v7450 = vsub.f32 %v7181, %v7426
      %v7451 = vsub.f32 %v7182, %v7426
      %v7452 = vsub.f32 %v7183, %v7426
      %v7453 = vsub.f32 %v7184, %v7426
      %v7454 = vsub.f32 %v7185, %v7426
      %v7455 = vsub.f32 %v7186, %v7426
      %v7456 = vsub.f32 %v7187, %v7426
      %v7457 = vsub.f32 %v7188, %v7426
      %v7458 = vsub.f32 %v7189, %v7426
      %v7459 = vsub.f32 %v7190, %v7426
      %v7460 = vsub.f32 %v7191, %v7426
      %v7461 = vsub.f32 %v7192, %v7426
      %v7462 = vsub.f32 %v7193, %v7426
      %v7463 = vsub.f32 %v7194, %v7426
      %v7464 = vsub.f32 %v7195, %v7426
      %v7465 = vsub.f32 %v7196, %v7426
      %v7466 = vadd.f32 %v7433, 1e-05
      %v7467 = vrsqrt.pop %v7466
      %v7468 = vlaneseq
      %v7469 = vshrl.u32 %v7468, 7
      %v7470 = vsub.s32 0, %v7469
      %v7471 = vrot.slane %v7467, %v7470
      %7473 = vrot.lane.b32.xlu0 %v7471, 64
      %v7474 = vpop.permute.xlu0 %7473
      %v7476 = vmul.f32 %v7434, %v7474
      %v7477 = vmul.f32 %v7435, %v7474
      %v7478 = vmul.f32 %v7436, %v7474
      %v7479 = vmul.f32 %v7437, %v7474
      %v7480 = vmul.f32 %v7438, %v7474
      %v7481 = vmul.f32 %v7439, %v7474
      %v7482 = vmul.f32 %v7440, %v7474
      %v7483 = vmul.f32 %v7441, %v7474
      %v7484 = vmul.f32 %v7442, %v7474
      %v7485 = vmul.f32 %v7443, %v7474
      %v7486 = vmul.f32 %v7444, %v7474
      %v7487 = vmul.f32 %v7445, %v7474
      %v7488 = vmul.f32 %v7446, %v7474
      %v7489 = vmul.f32 %v7447, %v7474
      %v7490 = vmul.f32 %v7448, %v7474
      %v7491 = vmul.f32 %v7449, %v7474
      %v7492 = vmul.f32 %v7450, %v7474
      %v7493 = vmul.f32 %v7451, %v7474
      %v7494 = vmul.f32 %v7452, %v7474
      %v7495 = vmul.f32 %v7453, %v7474
      %v7496 = vmul.f32 %v7454, %v7474
      %v7497 = vmul.f32 %v7455, %v7474
      %v7498 = vmul.f32 %v7456, %v7474
      %v7499 = vmul.f32 %v7457, %v7474
      %v7500 = vmul.f32 %v7458, %v7474
      %v7501 = vmul.f32 %v7459, %v7474
      %v7502 = vmul.f32 %v7460, %v7474
      %v7503 = vmul.f32 %v7461, %v7474
      %v7504 = vmul.f32 %v7462, %v7474
      %v7505 = vmul.f32 %v7463, %v7474
      %v7506 = vmul.f32 %v7464, %v7474
      %v7507 = vmul.f32 %v7465, %v7474
      %v7508 = vmax.f32 %v7476, 0.0
      %v7509 = vmax.f32 %v7477, 0.0
      %v7510 = vmax.f32 %v7478, 0.0
      %v7511 = vmax.f32 %v7479, 0.0
      %v7512 = vmax.f32 %v7480, 0.0
      %v7513 = vmax.f32 %v7481, 0.0
      %v7514 = vmax.f32 %v7482, 0.0
      %v7515 = vmax.f32 %v7483, 0.0
      %v7516 = vmax.f32 %v7484, 0.0
      %v7517 = vmax.f32 %v7485, 0.0
      %v7518 = vmax.f32 %v7486, 0.0
      %v7519 = vmax.f32 %v7487, 0.0
      %v7520 = vmax.f32 %v7488, 0.0
      %v7521 = vmax.f32 %v7489, 0.0
      %v7522 = vmax.f32 %v7490, 0.0
      %v7523 = vmax.f32 %v7491, 0.0
      %v7524 = vmax.f32 %v7492, 0.0
      %v7525 = vmax.f32 %v7493, 0.0
      %v7526 = vmax.f32 %v7494, 0.0
      %v7527 = vmax.f32 %v7495, 0.0
      %v7528 = vmax.f32 %v7496, 0.0
      %v7529 = vmax.f32 %v7497, 0.0
      %v7530 = vmax.f32 %v7498, 0.0
      %v7531 = vmax.f32 %v7499, 0.0
      %v7532 = vmax.f32 %v7500, 0.0
      %v7533 = vmax.f32 %v7501, 0.0
      %v7534 = vmax.f32 %v7502, 0.0
      %v7535 = vmax.f32 %v7503, 0.0
      %v7536 = vmax.f32 %v7504, 0.0
      %v7537 = vmax.f32 %v7505, 0.0
      %v7538 = vmax.f32 %v7506, 0.0
      %v7539 = vmax.f32 %v7507, 0.0
      %7540 = vst.msk [vmem:[%s968 + $0x1] sm:$0xff] %vm784, %v7508
      %7541 = vst.msk [vmem:[%s968 + $0x9] sm:$0xff] %vm784, %v7509
      %7542 = vst.msk [vmem:[%s968 + $0x19] sm:$0xff] %vm784, %v7510
      %7543 = vst.msk [vmem:[%s968 + $0x21] sm:$0xff] %vm784, %v7511
      %7544 = vst.msk [vmem:[%s968 + $0x31] sm:$0xff] %vm784, %v7512
      %7545 = vst.msk [vmem:[%s968 + $0x39] sm:$0xff] %vm784, %v7513
      %7546 = vst.msk [vmem:[%s968 + $0x49] sm:$0xff] %vm784, %v7514
      %7547 = vst.msk [vmem:[%s968 + $0x51] sm:$0xff] %vm784, %v7515
      %7548 = vst.msk [vmem:[%s968 + $0x61] sm:$0xff] %vm784, %v7516
      %7549 = vst.msk [vmem:[%s968 + $0x69] sm:$0xff] %vm784, %v7517
      %7550 = vst.msk [vmem:[%s968 + $0x79] sm:$0xff] %vm784, %v7518
      %7551 = vst.msk [vmem:[%s968 + $0x81] sm:$0xff] %vm784, %v7519
      %7552 = vst.msk [vmem:[%s968 + $0x91] sm:$0xff] %vm784, %v7520
      %7553 = vst.msk [vmem:[%s968 + $0x99] sm:$0xff] %vm784, %v7521
      %7554 = vst.msk [vmem:[%s968 + $0xa9] sm:$0xff] %vm784, %v7522
      %7555 = vst.msk [vmem:[%s968 + $0xb1] sm:$0xff] %vm784, %v7523
      %7556 = vst.msk [vmem:[%s968 + $0xc1] sm:$0xff] %vm784, %v7524
      %7557 = vst.msk [vmem:[%s968 + $0xc9] sm:$0xff] %vm784, %v7525
      %7558 = vst.msk [vmem:[%s968 + $0xd9] sm:$0xff] %vm784, %v7526
      %7559 = vst.msk [vmem:[%s968 + $0xe1] sm:$0xff] %vm784, %v7527
      %7560 = vst.msk [vmem:[%s968 + $0xf1] sm:$0xff] %vm784, %v7528
      %7561 = vst.msk [vmem:[%s968 + $0xf9] sm:$0xff] %vm784, %v7529
      %7562 = vst.msk [vmem:[%s968 + $0x109] sm:$0xff] %vm784, %v7530
      %7563 = vst.msk [vmem:[%s968 + $0x111] sm:$0xff] %vm784, %v7531
      %7564 = vst.msk [vmem:[%s968 + $0x121] sm:$0xff] %vm784, %v7532
      %7565 = vst.msk [vmem:[%s968 + $0x129] sm:$0xff] %vm784, %v7533
      %7566 = vst.msk [vmem:[%s968 + $0x139] sm:$0xff] %vm784, %v7534
      %7567 = vst.msk [vmem:[%s968 + $0x141] sm:$0xff] %vm784, %v7535
      %7568 = vst.msk [vmem:[%s968 + $0x151] sm:$0xff] %vm784, %v7536
      %7569 = vst.msk [vmem:[%s968 + $0x159] sm:$0xff] %vm784, %v7537
      %7570 = vst.msk [vmem:[%s968 + $0x169] sm:$0xff] %vm784, %v7538
      %7571 = vst.msk [vmem:[%s968 + $0x171] sm:$0xff] %vm784, %v7539
      %7572 = vst.msk [vmem:[#allocation2 + $0x1] sm:$0xff] %vm784, %v7510
      %7573 = vst.msk [vmem:[#allocation2 + $0x9] sm:$0xff] %vm784, %v7511
      %7574 = vst.msk [vmem:[%s1003 + $0x1] sm:$0xff] %vm784, %v7536
      %7575 = vst.msk [vmem:[%s1003 + $0x9] sm:$0xff] %vm784, %v7537
      %v7576 = vld [vmem:[#allocation2 + $0x2] sm:$0x1]
      %v7577 = vld [vmem:[#allocation2 + $0x1a] sm:$0x1]
      %v7578 = vld [vmem:[#allocation2 + $0x32] sm:$0x1]
      %v7579 = vld [vmem:[#allocation2 + $0x4a] sm:$0x1]
      %v7580 = vld [vmem:[#allocation2 + $0x62] sm:$0x1]
      %v7581 = vld [vmem:[#allocation2 + $0x7a] sm:$0x1]
      %v7582 = vld [vmem:[#allocation2 + $0x92] sm:$0x1]
      %v7583 = vld [vmem:[#allocation2 + $0xaa] sm:$0x1]
      %v7584 = vld [vmem:[#allocation2 + $0xc2] sm:$0x1]
      %v7585 = vld [vmem:[#allocation2 + $0xda] sm:$0x1]
      %v7586 = vld [vmem:[#allocation2 + $0xf2] sm:$0x1]
      %v7587 = vld [vmem:[#allocation2 + $0x10a] sm:$0x1]
      %v7588 = vld [vmem:[#allocation2 + $0x122] sm:$0x1]
      %v7589 = vld [vmem:[#allocation2 + $0x13a] sm:$0x1]
      %v7590 = vld [vmem:[#allocation2 + $0x152] sm:$0x1]
      %v7591 = vld [vmem:[#allocation2 + $0x16a] sm:$0x1]
      %v7592 = vld [vmem:[#allocation2 + $0x182] sm:$0x1]
      %v7593 = vld [vmem:[#allocation2 + $0x19a] sm:$0x1]
      %7594 = vst.msk [vmem:[#allocation2] sm:$0x1] %vm1024, %v7576
      %7595 = vst.msk [vmem:[#allocation2 + $0x18] sm:$0x1] %vm1024, %v7577
      %7596 = vst.msk [vmem:[#allocation2 + $0x30] sm:$0x1] %vm1024, %v7578
      %7597 = vst.msk [vmem:[#allocation2 + $0x48] sm:$0x1] %vm1024, %v7579
      %7598 = vst.msk [vmem:[#allocation2 + $0x60] sm:$0x1] %vm1024, %v7580
      %7599 = vst.msk [vmem:[#allocation2 + $0x78] sm:$0x1] %vm1024, %v7581
      %7600 = vst.msk [vmem:[#allocation2 + $0x90] sm:$0x1] %vm1024, %v7582
      %7601 = vst.msk [vmem:[#allocation2 + $0xa8] sm:$0x1] %vm1024, %v7583
      %7602 = vst.msk [vmem:[#allocation2 + $0xc0] sm:$0x1] %vm1024, %v7584
      %7603 = vst.msk [vmem:[#allocation2 + $0xd8] sm:$0x1] %vm1024, %v7585
      %7604 = vst.msk [vmem:[#allocation2 + $0xf0] sm:$0x1] %vm1024, %v7586
      %7605 = vst.msk [vmem:[#allocation2 + $0x108] sm:$0x1] %vm1024, %v7587
      %7606 = vst.msk [vmem:[#allocation2 + $0x120] sm:$0x1] %vm1024, %v7588
      %7607 = vst.msk [vmem:[#allocation2 + $0x138] sm:$0x1] %vm1024, %v7589
      %7608 = vst.msk [vmem:[#allocation2 + $0x150] sm:$0x1] %vm1024, %v7590
      %7609 = vst.msk [vmem:[#allocation2 + $0x168] sm:$0x1] %vm1024, %v7591
      %7610 = vst.msk [vmem:[#allocation2 + $0x180] sm:$0x1] %vm1024, %v7592
      %7611 = vst.msk [vmem:[#allocation2 + $0x198] sm:$0x1] %vm1024, %v7593
      %v7612 = vld [vmem:[#allocation2 + $0xf] sm:$0x1]
      %v7613 = vld [vmem:[#allocation2 + $0x27] sm:$0x1]
      %v7614 = vld [vmem:[#allocation2 + $0x3f] sm:$0x1]
      %v7615 = vld [vmem:[#allocation2 + $0x57] sm:$0x1]
      %v7616 = vld [vmem:[#allocation2 + $0x6f] sm:$0x1]
      %v7617 = vld [vmem:[#allocation2 + $0x87] sm:$0x1]
      %v7618 = vld [vmem:[#allocation2 + $0x9f] sm:$0x1]
      %v7619 = vld [vmem:[#allocation2 + $0xb7] sm:$0x1]
      %v7620 = vld [vmem:[#allocation2 + $0xcf] sm:$0x1]
      %v7621 = vld [vmem:[#allocation2 + $0xe7] sm:$0x1]
      %v7622 = vld [vmem:[#allocation2 + $0xff] sm:$0x1]
      %v7623 = vld [vmem:[#allocation2 + $0x117] sm:$0x1]
      %v7624 = vld [vmem:[#allocation2 + $0x12f] sm:$0x1]
      %v7625 = vld [vmem:[#allocation2 + $0x147] sm:$0x1]
      %v7626 = vld [vmem:[#allocation2 + $0x15f] sm:$0x1]
      %v7627 = vld [vmem:[#allocation2 + $0x177] sm:$0x1]
      %v7628 = vld [vmem:[#allocation2 + $0x18f] sm:$0x1]
      %v7629 = vld [vmem:[#allocation2 + $0x1a7] sm:$0x1]
      %7630 = vst.msk [vmem:[#allocation2 + $0x11] sm:$0x1] %vm1024, %v7612
      %7631 = vst.msk [vmem:[#allocation2 + $0x29] sm:$0x1] %vm1024, %v7613
      %7632 = vst.msk [vmem:[#allocation2 + $0x41] sm:$0x1] %vm1024, %v7614
      %7633 = vst.msk [vmem:[#allocation2 + $0x59] sm:$0x1] %vm1024, %v7615
      %7634 = vst.msk [vmem:[#allocation2 + $0x71] sm:$0x1] %vm1024, %v7616
      %7635 = vst.msk [vmem:[#allocation2 + $0x89] sm:$0x1] %vm1024, %v7617
      %7636 = vst.msk [vmem:[#allocation2 + $0xa1] sm:$0x1] %vm1024, %v7618
      %7637 = vst.msk [vmem:[#allocation2 + $0xb9] sm:$0x1] %vm1024, %v7619
      %7638 = vst.msk [vmem:[#allocation2 + $0xd1] sm:$0x1] %vm1024, %v7620
      %7639 = vst.msk [vmem:[#allocation2 + $0xe9] sm:$0x1] %vm1024, %v7621
      %7640 = vst.msk [vmem:[#allocation2 + $0x101] sm:$0x1] %vm1024, %v7622
      %7641 = vst.msk [vmem:[#allocation2 + $0x119] sm:$0x1] %vm1024, %v7623
      %7642 = vst.msk [vmem:[#allocation2 + $0x131] sm:$0x1] %vm1024, %v7624
      %7643 = vst.msk [vmem:[#allocation2 + $0x149] sm:$0x1] %vm1024, %v7625
      %7644 = vst.msk [vmem:[#allocation2 + $0x161] sm:$0x1] %vm1024, %v7626
      %7645 = vst.msk [vmem:[#allocation2 + $0x179] sm:$0x1] %vm1024, %v7627
      %7646 = vst.msk [vmem:[#allocation2 + $0x191] sm:$0x1] %vm1024, %v7628
      %7647 = vst.msk [vmem:[#allocation2 + $0x1a9] sm:$0x1] %vm1024, %v7629
      %v7648 = vld [vmem:[#allocation2] sm:$0xff]
      %v7649 = vld [vmem:[#allocation2 + $0x8] sm:$0xff]
      %v7650 = vld [vmem:[#allocation2 + $0x18] sm:$0xff]
      %v7651 = vld [vmem:[#allocation2 + $0x20] sm:$0xff]
      %v7652 = vld [vmem:[#allocation2 + $0x30] sm:$0xff]
      %v7653 = vld [vmem:[#allocation2 + $0x38] sm:$0xff]
      %v7654 = vld [vmem:[#allocation2 + $0x48] sm:$0xff]
      %v7655 = vld [vmem:[#allocation2 + $0x50] sm:$0xff]
      %v7656 = vld [vmem:[#allocation2 + $0x60] sm:$0xff]
      %v7657 = vld [vmem:[#allocation2 + $0x68] sm:$0xff]
      %v7658 = vld [vmem:[#allocation2 + $0x78] sm:$0xff]
      %v7659 = vld [vmem:[#allocation2 + $0x80] sm:$0xff]
      %v7660 = vld [vmem:[#allocation2 + $0x90] sm:$0xff]
      %v7661 = vld [vmem:[#allocation2 + $0x98] sm:$0xff]
      %v7662 = vld [vmem:[#allocation2 + $0xa8] sm:$0xff]
      %v7663 = vld [vmem:[#allocation2 + $0xb0] sm:$0xff]
      %v7664 = vld [vmem:[#allocation2 + $0xc0] sm:$0xff]
      %v7665 = vld [vmem:[#allocation2 + $0xc8] sm:$0xff]
      %v7666 = vld [vmem:[#allocation2 + $0xd8] sm:$0xff]
      %v7667 = vld [vmem:[#allocation2 + $0xe0] sm:$0xff]
      %v7668 = vld [vmem:[#allocation2 + $0xf0] sm:$0xff]
      %v7669 = vld [vmem:[#allocation2 + $0xf8] sm:$0xff]
      %v7670 = vld [vmem:[#allocation2 + $0x108] sm:$0xff]
      %v7671 = vld [vmem:[#allocation2 + $0x110] sm:$0xff]
      %v7672 = vld [vmem:[#allocation2 + $0x120] sm:$0xff]
      %v7673 = vld [vmem:[#allocation2 + $0x128] sm:$0xff]
      %v7674 = vld [vmem:[#allocation2 + $0x138] sm:$0xff]
      %v7675 = vld [vmem:[#allocation2 + $0x140] sm:$0xff]
      %v7676 = vld [vmem:[#allocation2 + $0x150] sm:$0xff]
      %v7677 = vld [vmem:[#allocation2 + $0x158] sm:$0xff]
      %v7678 = vld [vmem:[#allocation2 + $0x168] sm:$0xff]
      %v7679 = vld [vmem:[#allocation2 + $0x170] sm:$0xff]
      %v7680 = vpack.c.bf16 %v7649, %v7648
      %v7681 = vpack.c.bf16 %v7651, %v7650
      %v7682 = vpack.c.bf16 %v7653, %v7652
      %v7683 = vpack.c.bf16 %v7655, %v7654
      %v7684 = vpack.c.bf16 %v7657, %v7656
      %v7685 = vpack.c.bf16 %v7659, %v7658
      %v7686 = vpack.c.bf16 %v7661, %v7660
      %v7687 = vpack.c.bf16 %v7663, %v7662
      %v7688 = vpack.c.bf16 %v7665, %v7664
      %v7689 = vpack.c.bf16 %v7667, %v7666
      %v7690 = vpack.c.bf16 %v7669, %v7668
      %v7691 = vpack.c.bf16 %v7671, %v7670
      %v7692 = vpack.c.bf16 %v7673, %v7672
      %v7693 = vpack.c.bf16 %v7675, %v7674
      %v7694 = vpack.c.bf16 %v7677, %v7676
      %v7695 = vpack.c.bf16 %v7679, %v7678
      %v7696 = vld [vmem:[%s4] sm:$0xf]
      %v7697 = vld [vmem:[%s4 + $0x4] sm:$0xf]
      %v7698 = vld [vmem:[%s4 + $0x8] sm:$0xf]
      %v7699 = vld [vmem:[%s4 + $0xc] sm:$0xf]
      %v7700 = vld [vmem:[%s4 + $0x10] sm:$0xf]
      %v7701 = vld [vmem:[%s4 + $0x14] sm:$0xf]
      %v7702 = vld [vmem:[%s4 + $0x18] sm:$0xf]
      %v7703 = vld [vmem:[%s4 + $0x1c] sm:$0xf]
      %v7704 = vld [vmem:[#allocation2 + $0x1] sm:$0xff]
      %v7705 = vld [vmem:[#allocation2 + $0x9] sm:$0xff]
      %v7706 = vld [vmem:[#allocation2 + $0x19] sm:$0xff]
      %v7707 = vld [vmem:[#allocation2 + $0x21] sm:$0xff]
      %v7708 = vld [vmem:[#allocation2 + $0x31] sm:$0xff]
      %v7709 = vld [vmem:[#allocation2 + $0x39] sm:$0xff]
      %v7710 = vld [vmem:[#allocation2 + $0x49] sm:$0xff]
      %v7711 = vld [vmem:[#allocation2 + $0x51] sm:$0xff]
      %v7712 = vld [vmem:[#allocation2 + $0x61] sm:$0xff]
      %v7713 = vld [vmem:[#allocation2 + $0x69] sm:$0xff]
      %v7714 = vld [vmem:[#allocation2 + $0x79] sm:$0xff]
      %v7715 = vld [vmem:[#allocation2 + $0x81] sm:$0xff]
      %v7716 = vld [vmem:[#allocation2 + $0x91] sm:$0xff]
      %v7717 = vld [vmem:[#allocation2 + $0x99] sm:$0xff]
      %v7718 = vld [vmem:[#allocation2 + $0xa9] sm:$0xff]
      %v7719 = vld [vmem:[#allocation2 + $0xb1] sm:$0xff]
      %v7720 = vld [vmem:[#allocation2 + $0xc1] sm:$0xff]
      %v7721 = vld [vmem:[#allocation2 + $0xc9] sm:$0xff]
      %v7722 = vld [vmem:[#allocation2 + $0xd9] sm:$0xff]
      %v7723 = vld [vmem:[#allocation2 + $0xe1] sm:$0xff]
      %v7724 = vld [vmem:[#allocation2 + $0xf1] sm:$0xff]
      %v7725 = vld [vmem:[#allocation2 + $0xf9] sm:$0xff]
      %v7726 = vld [vmem:[#allocation2 + $0x109] sm:$0xff]
      %v7727 = vld [vmem:[#allocation2 + $0x111] sm:$0xff]
      %v7728 = vld [vmem:[#allocation2 + $0x121] sm:$0xff]
      %v7729 = vld [vmem:[#allocation2 + $0x129] sm:$0xff]
      %v7730 = vld [vmem:[#allocation2 + $0x139] sm:$0xff]
      %v7731 = vld [vmem:[#allocation2 + $0x141] sm:$0xff]
      %v7732 = vld [vmem:[#allocation2 + $0x151] sm:$0xff]
      %v7733 = vld [vmem:[#allocation2 + $0x159] sm:$0xff]
      %v7734 = vld [vmem:[#allocation2 + $0x169] sm:$0xff]
      %v7735 = vld [vmem:[#allocation2 + $0x171] sm:$0xff]
      %v7736 = vpack.c.bf16 %v7705, %v7704
      %v7737 = vpack.c.bf16 %v7707, %v7706
      %v7738 = vpack.c.bf16 %v7709, %v7708
      %v7739 = vpack.c.bf16 %v7711, %v7710
      %v7740 = vpack.c.bf16 %v7713, %v7712
      %v7741 = vpack.c.bf16 %v7715, %v7714
      %v7742 = vpack.c.bf16 %v7717, %v7716
      %v7743 = vpack.c.bf16 %v7719, %v7718
      %v7744 = vpack.c.bf16 %v7721, %v7720
      %v7745 = vpack.c.bf16 %v7723, %v7722
      %v7746 = vpack.c.bf16 %v7725, %v7724
      %v7747 = vpack.c.bf16 %v7727, %v7726
      %v7748 = vpack.c.bf16 %v7729, %v7728
      %v7749 = vpack.c.bf16 %v7731, %v7730
      %v7750 = vpack.c.bf16 %v7733, %v7732
      %v7751 = vpack.c.bf16 %v7735, %v7734
      %s7752 = scalar_lea.vmem %s4, 32
      %v7753 = vld [vmem:[%s7752] sm:$0xf]
      %v7754 = vld [vmem:[%s7752 + $0x4] sm:$0xf]
      %v7755 = vld [vmem:[%s7752 + $0x8] sm:$0xf]
      %v7756 = vld [vmem:[%s7752 + $0xc] sm:$0xf]
      %v7757 = vld [vmem:[%s7752 + $0x10] sm:$0xf]
      %v7758 = vld [vmem:[%s7752 + $0x14] sm:$0xf]
      %v7759 = vld [vmem:[%s7752 + $0x18] sm:$0xf]
      %v7760 = vld [vmem:[%s7752 + $0x1c] sm:$0xf]
      %v7769 = vunpack.c.l.b16 %v7753
      %v7770 = vunpack.c.l.b16 %v7754
      %v7771 = vunpack.c.l.b16 %v7755
      %v7772 = vunpack.c.l.b16 %v7756
      %v7773 = vunpack.c.l.b16 %v7757
      %v7774 = vunpack.c.l.b16 %v7758
      %v7775 = vunpack.c.l.b16 %v7759
      %v7776 = vunpack.c.l.b16 %v7760
      %v7777 = vpack.c.b16 %v7770, %v7769
      %v7778 = vpack.c.b16 %v7772, %v7771
      %v7779 = vpack.c.b16 %v7774, %v7773
      %v7780 = vpack.c.b16 %v7776, %v7775
      %v7786 = vsel %vm784, %v7736, 0
      %v7789 = vsel %vm784, %v7737, 0
      %v7792 = vsel %vm784, %v7738, 0
      %v7795 = vsel %vm784, %v7739, 0
      %v7798 = vsel %vm784, %v7740, 0
      %v7801 = vsel %vm784, %v7741, 0
      %v7804 = vsel %vm784, %v7742, 0
      %v7807 = vsel %vm784, %v7743, 0
      %v7810 = vsel %vm784, %v7744, 0
      %v7813 = vsel %vm784, %v7745, 0
      %v7816 = vsel %vm784, %v7746, 0
      %v7819 = vsel %vm784, %v7747, 0
      %v7822 = vsel %vm784, %v7748, 0
      %v7825 = vsel %vm784, %v7749, 0
      %v7828 = vsel %vm784, %v7750, 0
      %v7831 = vsel %vm784, %v7751, 0
      %7833 = vmatprep.subr.bf16.mxu0 0
      %7834 = vmatpush1.bf16.msra.mxu0 0
      %7835 = vmatprep.subr.bf16.mxu0 0
      %7836 = vmatpush1.bf16.msra.mxu0 0
      %7837 = vmatprep.subr.bf16.mxu0 0
      %7838 = vmatpush1.bf16.msra.mxu0 0
      %7839 = vmatprep.subr.bf16.mxu0 0
      %7840 = vmatpush1.bf16.msra.mxu0 0
      %7841 = vmatprep.subr.bf16.mxu0 0
      %7842 = vmatpush1.bf16.msra.mxu0 %v7780
      %7843 = vmatprep.subr.bf16.mxu0 0
      %7844 = vmatpush1.bf16.msra.mxu0 %v7779
      %7845 = vmatprep.subr.bf16.mxu0 0
      %7846 = vmatpush1.bf16.msra.mxu0 %v7778
      %7847 = vmatprep.subr.bf16.mxu0 0
      %7848 = vmatpush1.bf16.msra.mxu0 %v7777
      %7849 = vmatprep.subr.bf16.mxu0 0
      %7850 = vmatpush2.bf16.msra.mxu0 0
      %7851 = vmatprep.subr.bf16.mxu0 0
      %7852 = vmatpush2.bf16.msra.mxu0 0
      %7853 = vmatprep.subr.bf16.mxu0 0
      %7854 = vmatpush2.bf16.msra.mxu0 0
      %7855 = vmatprep.subr.bf16.mxu0 0
      %7856 = vmatpush2.bf16.msra.mxu0 0
      %7857 = vmatprep.subr.bf16.mxu0 0
      %7858 = vmatpush2.bf16.msra.mxu0 0
      %7859 = vmatprep.subr.bf16.mxu0 0
      %7860 = vmatpush2.bf16.msra.mxu0 0
      %7861 = vmatprep.subr.bf16.mxu0 0
      %7862 = vmatpush2.bf16.msra.mxu0 0
      %7863 = vmatprep.subr.bf16.mxu0 0
      %7864 = vmatpush2.bf16.msra.mxu0 0
      %7865 = vmatprep.mubr.bf16.mxu0 0
      %7866 = vmatmul.mubr.bf16.gmra.mxu0 %v7786
      %v7867 = vpop.f32.mrf.mxu0
      %v7868 = vadd.f32 0.0, %v7867
      %v7869 = vpop.f32.mrf.mxu0
      %v7870 = vpop.f32.mrf.mxu0
      %v7871 = vadd.f32 0.0, %v7870
      %v7872 = vpop.f32.mrf.mxu0
      %7873 = vmatprep.mubr.bf16.mxu0 0
      %7874 = vmatmul.mubr.bf16.gmra.mxu0 %v7789
      %v7875 = vpop.f32.mrf.mxu0
      %v7876 = vadd.f32 0.0, %v7875
      %v7877 = vpop.f32.mrf.mxu0
      %v7878 = vpop.f32.mrf.mxu0
      %v7879 = vadd.f32 0.0, %v7878
      %v7880 = vpop.f32.mrf.mxu0
      %7881 = vmatprep.mubr.bf16.mxu0 0
      %7882 = vmatmul.mubr.bf16.gmra.mxu0 %v7792
      %v7883 = vpop.f32.mrf.mxu0
      %v7884 = vadd.f32 0.0, %v7883
      %v7885 = vpop.f32.mrf.mxu0
      %v7886 = vpop.f32.mrf.mxu0
      %v7887 = vadd.f32 0.0, %v7886
      %v7888 = vpop.f32.mrf.mxu0
      %7889 = vmatprep.mubr.bf16.mxu0 0
      %7890 = vmatmul.mubr.bf16.gmra.mxu0 %v7795
      %v7891 = vpop.f32.mrf.mxu0
      %v7892 = vadd.f32 0.0, %v7891
      %v7893 = vpop.f32.mrf.mxu0
      %v7894 = vpop.f32.mrf.mxu0
      %v7895 = vadd.f32 0.0, %v7894
      %v7896 = vpop.f32.mrf.mxu0
      %7897 = vmatprep.mubr.bf16.mxu0 0
      %7898 = vmatmul.mubr.bf16.gmra.mxu0 %v7798
      %v7899 = vpop.f32.mrf.mxu0
      %v7900 = vadd.f32 0.0, %v7899
      %v7901 = vpop.f32.mrf.mxu0
      %v7902 = vpop.f32.mrf.mxu0
      %v7903 = vadd.f32 0.0, %v7902
      %v7904 = vpop.f32.mrf.mxu0
      %7905 = vmatprep.mubr.bf16.mxu0 0
      %7906 = vmatmul.mubr.bf16.gmra.mxu0 %v7801
      %v7907 = vpop.f32.mrf.mxu0
      %v7908 = vadd.f32 0.0, %v7907
      %v7909 = vpop.f32.mrf.mxu0
      %v7910 = vpop.f32.mrf.mxu0
      %v7911 = vadd.f32 0.0, %v7910
      %v7912 = vpop.f32.mrf.mxu0
      %7913 = vmatprep.mubr.bf16.mxu0 0
      %7914 = vmatmul.mubr.bf16.gmra.mxu0 %v7804
      %v7915 = vpop.f32.mrf.mxu0
      %v7916 = vadd.f32 0.0, %v7915
      %v7917 = vpop.f32.mrf.mxu0
      %v7918 = vpop.f32.mrf.mxu0
      %v7919 = vadd.f32 0.0, %v7918
      %v7920 = vpop.f32.mrf.mxu0
      %7921 = vmatprep.mubr.bf16.mxu0 0
      %7922 = vmatmul.mubr.bf16.gmra.mxu0 %v7807
      %v7923 = vpop.f32.mrf.mxu0
      %v7924 = vadd.f32 0.0, %v7923
      %v7925 = vpop.f32.mrf.mxu0
      %v7926 = vpop.f32.mrf.mxu0
      %v7927 = vadd.f32 0.0, %v7926
      %v7928 = vpop.f32.mrf.mxu0
      %7929 = vmatprep.mubr.bf16.mxu0 0
      %7930 = vmatmul.mubr.bf16.gmra.mxu0 %v7810
      %v7931 = vpop.f32.mrf.mxu0
      %v7932 = vadd.f32 0.0, %v7931
      %v7933 = vpop.f32.mrf.mxu0
      %v7934 = vpop.f32.mrf.mxu0
      %v7935 = vadd.f32 0.0, %v7934
      %v7936 = vpop.f32.mrf.mxu0
      %7937 = vmatprep.mubr.bf16.mxu0 0
      %7938 = vmatmul.mubr.bf16.gmra.mxu0 %v7813
      %v7939 = vpop.f32.mrf.mxu0
      %v7940 = vadd.f32 0.0, %v7939
      %v7941 = vpop.f32.mrf.mxu0
      %v7942 = vpop.f32.mrf.mxu0
      %v7943 = vadd.f32 0.0, %v7942
      %v7944 = vpop.f32.mrf.mxu0
      %7945 = vmatprep.mubr.bf16.mxu0 0
      %7946 = vmatmul.mubr.bf16.gmra.mxu0 %v7816
      %v7947 = vpop.f32.mrf.mxu0
      %v7948 = vadd.f32 0.0, %v7947
      %v7949 = vpop.f32.mrf.mxu0
      %v7950 = vpop.f32.mrf.mxu0
      %v7951 = vadd.f32 0.0, %v7950
      %v7952 = vpop.f32.mrf.mxu0
      %7953 = vmatprep.mubr.bf16.mxu0 0
      %7954 = vmatmul.mubr.bf16.gmra.mxu0 %v7819
      %v7955 = vpop.f32.mrf.mxu0
      %v7956 = vadd.f32 0.0, %v7955
      %v7957 = vpop.f32.mrf.mxu0
      %v7958 = vpop.f32.mrf.mxu0
      %v7959 = vadd.f32 0.0, %v7958
      %v7960 = vpop.f32.mrf.mxu0
      %7961 = vmatprep.mubr.bf16.mxu0 0
      %7962 = vmatmul.mubr.bf16.gmra.mxu0 %v7822
      %v7963 = vpop.f32.mrf.mxu0
      %v7964 = vadd.f32 0.0, %v7963
      %v7965 = vpop.f32.mrf.mxu0
      %v7966 = vpop.f32.mrf.mxu0
      %v7967 = vadd.f32 0.0, %v7966
      %v7968 = vpop.f32.mrf.mxu0
      %7969 = vmatprep.mubr.bf16.mxu0 0
      %7970 = vmatmul.mubr.bf16.gmra.mxu0 %v7825
      %v7971 = vpop.f32.mrf.mxu0
      %v7972 = vadd.f32 0.0, %v7971
      %v7973 = vpop.f32.mrf.mxu0
      %v7974 = vpop.f32.mrf.mxu0
      %v7975 = vadd.f32 0.0, %v7974
      %v7976 = vpop.f32.mrf.mxu0
      %7977 = vmatprep.mubr.bf16.mxu0 0
      %7978 = vmatmul.mubr.bf16.gmra.mxu0 %v7828
      %v7979 = vpop.f32.mrf.mxu0
      %v7980 = vadd.f32 0.0, %v7979
      %v7981 = vpop.f32.mrf.mxu0
      %v7982 = vpop.f32.mrf.mxu0
      %v7983 = vadd.f32 0.0, %v7982
      %v7984 = vpop.f32.mrf.mxu0
      %7985 = vmatprep.mubr.bf16.mxu0 0
      %7986 = vmatmul.mubr.bf16.gmra.mxu0 %v7831
      %v7987 = vpop.f32.mrf.mxu0
      %v7988 = vadd.f32 0.0, %v7987
      %v7989 = vpop.f32.mrf.mxu0
      %v7990 = vpop.f32.mrf.mxu0
      %v7991 = vadd.f32 0.0, %v7990
      %v7992 = vpop.f32.mrf.mxu0
      %7993 = vdwg.mxu0
      %v8002 = vunpack.c.l.b16 %v7696
      %v8003 = vunpack.c.l.b16 %v7697
      %v8004 = vunpack.c.l.b16 %v7698
      %v8005 = vunpack.c.l.b16 %v7699
      %v8006 = vunpack.c.l.b16 %v7700
      %v8007 = vunpack.c.l.b16 %v7701
      %v8008 = vunpack.c.l.b16 %v7702
      %v8009 = vunpack.c.l.b16 %v7703
      %v8010 = vpack.c.b16 %v8003, %v8002
      %v8011 = vpack.c.b16 %v8005, %v8004
      %v8012 = vpack.c.b16 %v8007, %v8006
      %v8013 = vpack.c.b16 %v8009, %v8008
      %v8019 = vsel %vm784, %v7680, 0
      %v8022 = vsel %vm784, %v7681, 0
      %v8025 = vsel %vm784, %v7682, 0
      %v8028 = vsel %vm784, %v7683, 0
      %v8031 = vsel %vm784, %v7684, 0
      %v8034 = vsel %vm784, %v7685, 0
      %v8037 = vsel %vm784, %v7686, 0
      %v8040 = vsel %vm784, %v7687, 0
      %v8043 = vsel %vm784, %v7688, 0
      %v8046 = vsel %vm784, %v7689, 0
      %v8049 = vsel %vm784, %v7690, 0
      %v8052 = vsel %vm784, %v7691, 0
      %v8055 = vsel %vm784, %v7692, 0
      %v8058 = vsel %vm784, %v7693, 0
      %v8061 = vsel %vm784, %v7694, 0
      %v8064 = vsel %vm784, %v7695, 0
      %8066 = vmatprep.subr.bf16.mxu0 0
      %8067 = vmatpush1.bf16.msra.mxu0 0
      %8068 = vmatprep.subr.bf16.mxu0 0
      %8069 = vmatpush1.bf16.msra.mxu0 0
      %8070 = vmatprep.subr.bf16.mxu0 0
      %8071 = vmatpush1.bf16.msra.mxu0 0
      %8072 = vmatprep.subr.bf16.mxu0 0
      %8073 = vmatpush1.bf16.msra.mxu0 0
      %8074 = vmatprep.subr.bf16.mxu0 0
      %8075 = vmatpush1.bf16.msra.mxu0 %v8013
      %8076 = vmatprep.subr.bf16.mxu0 0
      %8077 = vmatpush1.bf16.msra.mxu0 %v8012
      %8078 = vmatprep.subr.bf16.mxu0 0
      %8079 = vmatpush1.bf16.msra.mxu0 %v8011
      %8080 = vmatprep.subr.bf16.mxu0 0
      %8081 = vmatpush1.bf16.msra.mxu0 %v8010
      %8082 = vmatprep.subr.bf16.mxu0 0
      %8083 = vmatpush2.bf16.msra.mxu0 0
      %8084 = vmatprep.subr.bf16.mxu0 0
      %8085 = vmatpush2.bf16.msra.mxu0 0
      %8086 = vmatprep.subr.bf16.mxu0 0
      %8087 = vmatpush2.bf16.msra.mxu0 0
      %8088 = vmatprep.subr.bf16.mxu0 0
      %8089 = vmatpush2.bf16.msra.mxu0 0
      %8090 = vmatprep.subr.bf16.mxu0 0
      %8091 = vmatpush2.bf16.msra.mxu0 0
      %8092 = vmatprep.subr.bf16.mxu0 0
      %8093 = vmatpush2.bf16.msra.mxu0 0
      %8094 = vmatprep.subr.bf16.mxu0 0
      %8095 = vmatpush2.bf16.msra.mxu0 0
      %8096 = vmatprep.subr.bf16.mxu0 0
      %8097 = vmatpush2.bf16.msra.mxu0 0
      %8098 = vmatprep.mubr.bf16.mxu0 0
      %8099 = vmatmul.mubr.bf16.gmra.mxu0 %v8019
      %v8100 = vpop.f32.mrf.mxu0
      %v8101 = vadd.f32 %v7868, %v8100
      %v8102 = vpop.f32.mrf.mxu0
      %v8103 = vpop.f32.mrf.mxu0
      %v8104 = vadd.f32 %v7871, %v8103
      %v8105 = vpop.f32.mrf.mxu0
      %8106 = vmatprep.mubr.bf16.mxu0 0
      %8107 = vmatmul.mubr.bf16.gmra.mxu0 %v8022
      %v8108 = vpop.f32.mrf.mxu0
      %v8109 = vadd.f32 %v7876, %v8108
      %v8110 = vpop.f32.mrf.mxu0
      %v8111 = vpop.f32.mrf.mxu0
      %v8112 = vadd.f32 %v7879, %v8111
      %v8113 = vpop.f32.mrf.mxu0
      %8114 = vmatprep.mubr.bf16.mxu0 0
      %8115 = vmatmul.mubr.bf16.gmra.mxu0 %v8025
      %v8116 = vpop.f32.mrf.mxu0
      %v8117 = vadd.f32 %v7884, %v8116
      %v8118 = vpop.f32.mrf.mxu0
      %v8119 = vpop.f32.mrf.mxu0
      %v8120 = vadd.f32 %v7887, %v8119
      %v8121 = vpop.f32.mrf.mxu0
      %8122 = vmatprep.mubr.bf16.mxu0 0
      %8123 = vmatmul.mubr.bf16.gmra.mxu0 %v8028
      %v8124 = vpop.f32.mrf.mxu0
      %v8125 = vadd.f32 %v7892, %v8124
      %v8126 = vpop.f32.mrf.mxu0
      %v8127 = vpop.f32.mrf.mxu0
      %v8128 = vadd.f32 %v7895, %v8127
      %v8129 = vpop.f32.mrf.mxu0
      %8130 = vmatprep.mubr.bf16.mxu0 0
      %8131 = vmatmul.mubr.bf16.gmra.mxu0 %v8031
      %v8132 = vpop.f32.mrf.mxu0
      %v8133 = vadd.f32 %v7900, %v8132
      %v8134 = vpop.f32.mrf.mxu0
      %v8135 = vpop.f32.mrf.mxu0
      %v8136 = vadd.f32 %v7903, %v8135
      %v8137 = vpop.f32.mrf.mxu0
      %8138 = vmatprep.mubr.bf16.mxu0 0
      %8139 = vmatmul.mubr.bf16.gmra.mxu0 %v8034
      %v8140 = vpop.f32.mrf.mxu0
      %v8141 = vadd.f32 %v7908, %v8140
      %v8142 = vpop.f32.mrf.mxu0
      %v8143 = vpop.f32.mrf.mxu0
      %v8144 = vadd.f32 %v7911, %v8143
      %v8145 = vpop.f32.mrf.mxu0
      %8146 = vmatprep.mubr.bf16.mxu0 0
      %8147 = vmatmul.mubr.bf16.gmra.mxu0 %v8037
      %v8148 = vpop.f32.mrf.mxu0
      %v8149 = vadd.f32 %v7916, %v8148
      %v8150 = vpop.f32.mrf.mxu0
      %v8151 = vpop.f32.mrf.mxu0
      %v8152 = vadd.f32 %v7919, %v8151
      %v8153 = vpop.f32.mrf.mxu0
      %8154 = vmatprep.mubr.bf16.mxu0 0
      %8155 = vmatmul.mubr.bf16.gmra.mxu0 %v8040
      %v8156 = vpop.f32.mrf.mxu0
      %v8157 = vadd.f32 %v7924, %v8156
      %v8158 = vpop.f32.mrf.mxu0
      %v8159 = vpop.f32.mrf.mxu0
      %v8160 = vadd.f32 %v7927, %v8159
      %v8161 = vpop.f32.mrf.mxu0
      %8162 = vmatprep.mubr.bf16.mxu0 0
      %8163 = vmatmul.mubr.bf16.gmra.mxu0 %v8043
      %v8164 = vpop.f32.mrf.mxu0
      %v8165 = vadd.f32 %v7932, %v8164
      %v8166 = vpop.f32.mrf.mxu0
      %v8167 = vpop.f32.mrf.mxu0
      %v8168 = vadd.f32 %v7935, %v8167
      %v8169 = vpop.f32.mrf.mxu0
      %8170 = vmatprep.mubr.bf16.mxu0 0
      %8171 = vmatmul.mubr.bf16.gmra.mxu0 %v8046
      %v8172 = vpop.f32.mrf.mxu0
      %v8173 = vadd.f32 %v7940, %v8172
      %v8174 = vpop.f32.mrf.mxu0
      %v8175 = vpop.f32.mrf.mxu0
      %v8176 = vadd.f32 %v7943, %v8175
      %v8177 = vpop.f32.mrf.mxu0
      %8178 = vmatprep.mubr.bf16.mxu0 0
      %8179 = vmatmul.mubr.bf16.gmra.mxu0 %v8049
      %v8180 = vpop.f32.mrf.mxu0
      %v8181 = vadd.f32 %v7948, %v8180
      %v8182 = vpop.f32.mrf.mxu0
      %v8183 = vpop.f32.mrf.mxu0
      %v8184 = vadd.f32 %v7951, %v8183
      %v8185 = vpop.f32.mrf.mxu0
      %8186 = vmatprep.mubr.bf16.mxu0 0
      %8187 = vmatmul.mubr.bf16.gmra.mxu0 %v8052
      %v8188 = vpop.f32.mrf.mxu0
      %v8189 = vadd.f32 %v7956, %v8188
      %v8190 = vpop.f32.mrf.mxu0
      %v8191 = vpop.f32.mrf.mxu0
      %v8192 = vadd.f32 %v7959, %v8191
      %v8193 = vpop.f32.mrf.mxu0
      %8194 = vmatprep.mubr.bf16.mxu0 0
      %8195 = vmatmul.mubr.bf16.gmra.mxu0 %v8055
      %v8196 = vpop.f32.mrf.mxu0
      %v8197 = vadd.f32 %v7964, %v8196
      %v8198 = vpop.f32.mrf.mxu0
      %v8199 = vpop.f32.mrf.mxu0
      %v8200 = vadd.f32 %v7967, %v8199
      %v8201 = vpop.f32.mrf.mxu0
      %8202 = vmatprep.mubr.bf16.mxu0 0
      %8203 = vmatmul.mubr.bf16.gmra.mxu0 %v8058
      %v8204 = vpop.f32.mrf.mxu0
      %v8205 = vadd.f32 %v7972, %v8204
      %v8206 = vpop.f32.mrf.mxu0
      %v8207 = vpop.f32.mrf.mxu0
      %v8208 = vadd.f32 %v7975, %v8207
      %v8209 = vpop.f32.mrf.mxu0
      %8210 = vmatprep.mubr.bf16.mxu0 0
      %8211 = vmatmul.mubr.bf16.gmra.mxu0 %v8061
      %v8212 = vpop.f32.mrf.mxu0
      %v8213 = vadd.f32 %v7980, %v8212
      %v8214 = vpop.f32.mrf.mxu0
      %v8215 = vpop.f32.mrf.mxu0
      %v8216 = vadd.f32 %v7983, %v8215
      %v8217 = vpop.f32.mrf.mxu0
      %8218 = vmatprep.mubr.bf16.mxu0 0
      %8219 = vmatmul.mubr.bf16.gmra.mxu0 %v8064
      %v8220 = vpop.f32.mrf.mxu0
      %v8221 = vadd.f32 %v7988, %v8220
      %v8222 = vpop.f32.mrf.mxu0
      %v8223 = vpop.f32.mrf.mxu0
      %v8224 = vadd.f32 %v7991, %v8223
      %v8225 = vpop.f32.mrf.mxu0
      %8226 = vdwg.mxu0
      %v8227 = vld [vmem:[#allocation2 + $0x2] sm:$0xff]
      %v8228 = vld [vmem:[#allocation2 + $0xa] sm:$0xff]
      %v8229 = vld [vmem:[#allocation2 + $0x1a] sm:$0xff]
      %v8230 = vld [vmem:[#allocation2 + $0x22] sm:$0xff]
      %v8231 = vld [vmem:[#allocation2 + $0x32] sm:$0xff]
      %v8232 = vld [vmem:[#allocation2 + $0x3a] sm:$0xff]
      %v8233 = vld [vmem:[#allocation2 + $0x4a] sm:$0xff]
      %v8234 = vld [vmem:[#allocation2 + $0x52] sm:$0xff]
      %v8235 = vld [vmem:[#allocation2 + $0x62] sm:$0xff]
      %v8236 = vld [vmem:[#allocation2 + $0x6a] sm:$0xff]
      %v8237 = vld [vmem:[#allocation2 + $0x7a] sm:$0xff]
      %v8238 = vld [vmem:[#allocation2 + $0x82] sm:$0xff]
      %v8239 = vld [vmem:[#allocation2 + $0x92] sm:$0xff]
      %v8240 = vld [vmem:[#allocation2 + $0x9a] sm:$0xff]
      %v8241 = vld [vmem:[#allocation2 + $0xaa] sm:$0xff]
      %v8242 = vld [vmem:[#allocation2 + $0xb2] sm:$0xff]
      %v8243 = vld [vmem:[#allocation2 + $0xc2] sm:$0xff]
      %v8244 = vld [vmem:[#allocation2 + $0xca] sm:$0xff]
      %v8245 = vld [vmem:[#allocation2 + $0xda] sm:$0xff]
      %v8246 = vld [vmem:[#allocation2 + $0xe2] sm:$0xff]
      %v8247 = vld [vmem:[#allocation2 + $0xf2] sm:$0xff]
      %v8248 = vld [vmem:[#allocation2 + $0xfa] sm:$0xff]
      %v8249 = vld [vmem:[#allocation2 + $0x10a] sm:$0xff]
      %v8250 = vld [vmem:[#allocation2 + $0x112] sm:$0xff]
      %v8251 = vld [vmem:[#allocation2 + $0x122] sm:$0xff]
      %v8252 = vld [vmem:[#allocation2 + $0x12a] sm:$0xff]
      %v8253 = vld [vmem:[#allocation2 + $0x13a] sm:$0xff]
      %v8254 = vld [vmem:[#allocation2 + $0x142] sm:$0xff]
      %v8255 = vld [vmem:[#allocation2 + $0x152] sm:$0xff]
      %v8256 = vld [vmem:[#allocation2 + $0x15a] sm:$0xff]
      %v8257 = vld [vmem:[#allocation2 + $0x16a] sm:$0xff]
      %v8258 = vld [vmem:[#allocation2 + $0x172] sm:$0xff]
      %v8259 = vpack.c.bf16 %v8228, %v8227
      %v8260 = vpack.c.bf16 %v8230, %v8229
      %v8261 = vpack.c.bf16 %v8232, %v8231
      %v8262 = vpack.c.bf16 %v8234, %v8233
      %v8263 = vpack.c.bf16 %v8236, %v8235
      %v8264 = vpack.c.bf16 %v8238, %v8237
      %v8265 = vpack.c.bf16 %v8240, %v8239
      %v8266 = vpack.c.bf16 %v8242, %v8241
      %v8267 = vpack.c.bf16 %v8244, %v8243
      %v8268 = vpack.c.bf16 %v8246, %v8245
      %v8269 = vpack.c.bf16 %v8248, %v8247
      %v8270 = vpack.c.bf16 %v8250, %v8249
      %v8271 = vpack.c.bf16 %v8252, %v8251
      %v8272 = vpack.c.bf16 %v8254, %v8253
      %v8273 = vpack.c.bf16 %v8256, %v8255
      %v8274 = vpack.c.bf16 %v8258, %v8257
      %s8275 = scalar_lea.vmem %s4, 64
      %v8276 = vld [vmem:[%s8275] sm:$0xf]
      %v8277 = vld [vmem:[%s8275 + $0x4] sm:$0xf]
      %v8278 = vld [vmem:[%s8275 + $0x8] sm:$0xf]
      %v8279 = vld [vmem:[%s8275 + $0xc] sm:$0xf]
      %v8280 = vld [vmem:[%s8275 + $0x10] sm:$0xf]
      %v8281 = vld [vmem:[%s8275 + $0x14] sm:$0xf]
      %v8282 = vld [vmem:[%s8275 + $0x18] sm:$0xf]
      %v8283 = vld [vmem:[%s8275 + $0x1c] sm:$0xf]
      %v8292 = vunpack.c.l.b16 %v8276
      %v8293 = vunpack.c.l.b16 %v8277
      %v8294 = vunpack.c.l.b16 %v8278
      %v8295 = vunpack.c.l.b16 %v8279
      %v8296 = vunpack.c.l.b16 %v8280
      %v8297 = vunpack.c.l.b16 %v8281
      %v8298 = vunpack.c.l.b16 %v8282
      %v8299 = vunpack.c.l.b16 %v8283
      %v8300 = vpack.c.b16 %v8293, %v8292
      %v8301 = vpack.c.b16 %v8295, %v8294
      %v8302 = vpack.c.b16 %v8297, %v8296
      %v8303 = vpack.c.b16 %v8299, %v8298
      %v8309 = vsel %vm784, %v8259, 0
      %v8312 = vsel %vm784, %v8260, 0
      %v8315 = vsel %vm784, %v8261, 0
      %v8318 = vsel %vm784, %v8262, 0
      %v8321 = vsel %vm784, %v8263, 0
      %v8324 = vsel %vm784, %v8264, 0
      %v8327 = vsel %vm784, %v8265, 0
      %v8330 = vsel %vm784, %v8266, 0
      %v8333 = vsel %vm784, %v8267, 0
      %v8336 = vsel %vm784, %v8268, 0
      %v8339 = vsel %vm784, %v8269, 0
      %v8342 = vsel %vm784, %v8270, 0
      %v8345 = vsel %vm784, %v8271, 0
      %v8348 = vsel %vm784, %v8272, 0
      %v8351 = vsel %vm784, %v8273, 0
      %v8354 = vsel %vm784, %v8274, 0
      %8356 = vmatprep.subr.bf16.mxu0 0
      %8357 = vmatpush1.bf16.msra.mxu0 0
      %8358 = vmatprep.subr.bf16.mxu0 0
      %8359 = vmatpush1.bf16.msra.mxu0 0
      %8360 = vmatprep.subr.bf16.mxu0 0
      %8361 = vmatpush1.bf16.msra.mxu0 0
      %8362 = vmatprep.subr.bf16.mxu0 0
      %8363 = vmatpush1.bf16.msra.mxu0 0
      %8364 = vmatprep.subr.bf16.mxu0 0
      %8365 = vmatpush1.bf16.msra.mxu0 %v8303
      %8366 = vmatprep.subr.bf16.mxu0 0
      %8367 = vmatpush1.bf16.msra.mxu0 %v8302
      %8368 = vmatprep.subr.bf16.mxu0 0
      %8369 = vmatpush1.bf16.msra.mxu0 %v8301
      %8370 = vmatprep.subr.bf16.mxu0 0
      %8371 = vmatpush1.bf16.msra.mxu0 %v8300
      %8372 = vmatprep.subr.bf16.mxu0 0
      %8373 = vmatpush2.bf16.msra.mxu0 0
      %8374 = vmatprep.subr.bf16.mxu0 0
      %8375 = vmatpush2.bf16.msra.mxu0 0
      %8376 = vmatprep.subr.bf16.mxu0 0
      %8377 = vmatpush2.bf16.msra.mxu0 0
      %8378 = vmatprep.subr.bf16.mxu0 0
      %8379 = vmatpush2.bf16.msra.mxu0 0
      %8380 = vmatprep.subr.bf16.mxu0 0
      %8381 = vmatpush2.bf16.msra.mxu0 0
      %8382 = vmatprep.subr.bf16.mxu0 0
      %8383 = vmatpush2.bf16.msra.mxu0 0
      %8384 = vmatprep.subr.bf16.mxu0 0
      %8385 = vmatpush2.bf16.msra.mxu0 0
      %8386 = vmatprep.subr.bf16.mxu0 0
      %8387 = vmatpush2.bf16.msra.mxu0 0
      %8388 = vmatprep.mubr.bf16.mxu0 0
      %8389 = vmatmul.mubr.bf16.gmra.mxu0 %v8309
      %v8390 = vpop.f32.mrf.mxu0
      %v8391 = vadd.f32 0.0, %v8390
      %v8392 = vpop.f32.mrf.mxu0
      %v8393 = vpop.f32.mrf.mxu0
      %v8394 = vadd.f32 0.0, %v8393
      %v8395 = vpop.f32.mrf.mxu0
      %8396 = vmatprep.mubr.bf16.mxu0 0
      %8397 = vmatmul.mubr.bf16.gmra.mxu0 %v8312
      %v8398 = vpop.f32.mrf.mxu0
      %v8399 = vadd.f32 0.0, %v8398
      %v8400 = vpop.f32.mrf.mxu0
      %v8401 = vpop.f32.mrf.mxu0
      %v8402 = vadd.f32 0.0, %v8401
      %v8403 = vpop.f32.mrf.mxu0
      %8404 = vmatprep.mubr.bf16.mxu0 0
      %8405 = vmatmul.mubr.bf16.gmra.mxu0 %v8315
      %v8406 = vpop.f32.mrf.mxu0
      %v8407 = vadd.f32 0.0, %v8406
      %v8408 = vpop.f32.mrf.mxu0
      %v8409 = vpop.f32.mrf.mxu0
      %v8410 = vadd.f32 0.0, %v8409
      %v8411 = vpop.f32.mrf.mxu0
      %8412 = vmatprep.mubr.bf16.mxu0 0
      %8413 = vmatmul.mubr.bf16.gmra.mxu0 %v8318
      %v8414 = vpop.f32.mrf.mxu0
      %v8415 = vadd.f32 0.0, %v8414
      %v8416 = vpop.f32.mrf.mxu0
      %v8417 = vpop.f32.mrf.mxu0
      %v8418 = vadd.f32 0.0, %v8417
      %v8419 = vpop.f32.mrf.mxu0
      %8420 = vmatprep.mubr.bf16.mxu0 0
      %8421 = vmatmul.mubr.bf16.gmra.mxu0 %v8321
      %v8422 = vpop.f32.mrf.mxu0
      %v8423 = vadd.f32 0.0, %v8422
      %v8424 = vpop.f32.mrf.mxu0
      %v8425 = vpop.f32.mrf.mxu0
      %v8426 = vadd.f32 0.0, %v8425
      %v8427 = vpop.f32.mrf.mxu0
      %8428 = vmatprep.mubr.bf16.mxu0 0
      %8429 = vmatmul.mubr.bf16.gmra.mxu0 %v8324
      %v8430 = vpop.f32.mrf.mxu0
      %v8431 = vadd.f32 0.0, %v8430
      %v8432 = vpop.f32.mrf.mxu0
      %v8433 = vpop.f32.mrf.mxu0
      %v8434 = vadd.f32 0.0, %v8433
      %v8435 = vpop.f32.mrf.mxu0
      %8436 = vmatprep.mubr.bf16.mxu0 0
      %8437 = vmatmul.mubr.bf16.gmra.mxu0 %v8327
      %v8438 = vpop.f32.mrf.mxu0
      %v8439 = vadd.f32 0.0, %v8438
      %v8440 = vpop.f32.mrf.mxu0
      %v8441 = vpop.f32.mrf.mxu0
      %v8442 = vadd.f32 0.0, %v8441
      %v8443 = vpop.f32.mrf.mxu0
      %8444 = vmatprep.mubr.bf16.mxu0 0
      %8445 = vmatmul.mubr.bf16.gmra.mxu0 %v8330
      %v8446 = vpop.f32.mrf.mxu0
      %v8447 = vadd.f32 0.0, %v8446
      %v8448 = vpop.f32.mrf.mxu0
      %v8449 = vpop.f32.mrf.mxu0
      %v8450 = vadd.f32 0.0, %v8449
      %v8451 = vpop.f32.mrf.mxu0
      %8452 = vmatprep.mubr.bf16.mxu0 0
      %8453 = vmatmul.mubr.bf16.gmra.mxu0 %v8333
      %v8454 = vpop.f32.mrf.mxu0
      %v8455 = vadd.f32 0.0, %v8454
      %v8456 = vpop.f32.mrf.mxu0
      %v8457 = vpop.f32.mrf.mxu0
      %v8458 = vadd.f32 0.0, %v8457
      %v8459 = vpop.f32.mrf.mxu0
      %8460 = vmatprep.mubr.bf16.mxu0 0
      %8461 = vmatmul.mubr.bf16.gmra.mxu0 %v8336
      %v8462 = vpop.f32.mrf.mxu0
      %v8463 = vadd.f32 0.0, %v8462
      %v8464 = vpop.f32.mrf.mxu0
      %v8465 = vpop.f32.mrf.mxu0
      %v8466 = vadd.f32 0.0, %v8465
      %v8467 = vpop.f32.mrf.mxu0
      %8468 = vmatprep.mubr.bf16.mxu0 0
      %8469 = vmatmul.mubr.bf16.gmra.mxu0 %v8339
      %v8470 = vpop.f32.mrf.mxu0
      %v8471 = vadd.f32 0.0, %v8470
      %v8472 = vpop.f32.mrf.mxu0
      %v8473 = vpop.f32.mrf.mxu0
      %v8474 = vadd.f32 0.0, %v8473
      %v8475 = vpop.f32.mrf.mxu0
      %8476 = vmatprep.mubr.bf16.mxu0 0
      %8477 = vmatmul.mubr.bf16.gmra.mxu0 %v8342
      %v8478 = vpop.f32.mrf.mxu0
      %v8479 = vadd.f32 0.0, %v8478
      %v8480 = vpop.f32.mrf.mxu0
      %v8481 = vpop.f32.mrf.mxu0
      %v8482 = vadd.f32 0.0, %v8481
      %v8483 = vpop.f32.mrf.mxu0
      %8484 = vmatprep.mubr.bf16.mxu0 0
      %8485 = vmatmul.mubr.bf16.gmra.mxu0 %v8345
      %v8486 = vpop.f32.mrf.mxu0
      %v8487 = vadd.f32 0.0, %v8486
      %v8488 = vpop.f32.mrf.mxu0
      %v8489 = vpop.f32.mrf.mxu0
      %v8490 = vadd.f32 0.0, %v8489
      %v8491 = vpop.f32.mrf.mxu0
      %8492 = vmatprep.mubr.bf16.mxu0 0
      %8493 = vmatmul.mubr.bf16.gmra.mxu0 %v8348
      %v8494 = vpop.f32.mrf.mxu0
      %v8495 = vadd.f32 0.0, %v8494
      %v8496 = vpop.f32.mrf.mxu0
      %v8497 = vpop.f32.mrf.mxu0
      %v8498 = vadd.f32 0.0, %v8497
      %v8499 = vpop.f32.mrf.mxu0
      %8500 = vmatprep.mubr.bf16.mxu0 0
      %8501 = vmatmul.mubr.bf16.gmra.mxu0 %v8351
      %v8502 = vpop.f32.mrf.mxu0
      %v8503 = vadd.f32 0.0, %v8502
      %v8504 = vpop.f32.mrf.mxu0
      %v8505 = vpop.f32.mrf.mxu0
      %v8506 = vadd.f32 0.0, %v8505
      %v8507 = vpop.f32.mrf.mxu0
      %8508 = vmatprep.mubr.bf16.mxu0 0
      %8509 = vmatmul.mubr.bf16.gmra.mxu0 %v8354
      %v8510 = vpop.f32.mrf.mxu0
      %v8511 = vadd.f32 0.0, %v8510
      %v8512 = vpop.f32.mrf.mxu0
      %v8513 = vpop.f32.mrf.mxu0
      %v8514 = vadd.f32 0.0, %v8513
      %v8515 = vpop.f32.mrf.mxu0
      %8516 = vdwg.mxu0
      %v8517 = vadd.f32 %v8101, %v8391
      %v8518 = vadd.f32 %v8104, %v8394
      %v8519 = vadd.f32 %v8109, %v8399
      %v8520 = vadd.f32 %v8112, %v8402
      %v8521 = vadd.f32 %v8117, %v8407
      %v8522 = vadd.f32 %v8120, %v8410
      %v8523 = vadd.f32 %v8125, %v8415
      %v8524 = vadd.f32 %v8128, %v8418
      %v8525 = vadd.f32 %v8133, %v8423
      %v8526 = vadd.f32 %v8136, %v8426
      %v8527 = vadd.f32 %v8141, %v8431
      %v8528 = vadd.f32 %v8144, %v8434
      %v8529 = vadd.f32 %v8149, %v8439
      %v8530 = vadd.f32 %v8152, %v8442
      %v8531 = vadd.f32 %v8157, %v8447
      %v8532 = vadd.f32 %v8160, %v8450
      %v8533 = vadd.f32 %v8165, %v8455
      %v8534 = vadd.f32 %v8168, %v8458
      %v8535 = vadd.f32 %v8173, %v8463
      %v8536 = vadd.f32 %v8176, %v8466
      %v8537 = vadd.f32 %v8181, %v8471
      %v8538 = vadd.f32 %v8184, %v8474
      %v8539 = vadd.f32 %v8189, %v8479
      %v8540 = vadd.f32 %v8192, %v8482
      %v8541 = vadd.f32 %v8197, %v8487
      %v8542 = vadd.f32 %v8200, %v8490
      %v8543 = vadd.f32 %v8205, %v8495
      %v8544 = vadd.f32 %v8208, %v8498
      %v8545 = vadd.f32 %v8213, %v8503
      %v8546 = vadd.f32 %v8216, %v8506
      %v8547 = vadd.f32 %v8221, %v8511
      %v8548 = vadd.f32 %v8224, %v8514
      %v8549 = vld [vmem:[%s968] sm:$0xff]
      %v8550 = vld [vmem:[%s968 + $0x8] sm:$0xff]
      %v8551 = vld [vmem:[%s968 + $0x18] sm:$0xff]
      %v8552 = vld [vmem:[%s968 + $0x20] sm:$0xff]
      %v8553 = vld [vmem:[%s968 + $0x30] sm:$0xff]
      %v8554 = vld [vmem:[%s968 + $0x38] sm:$0xff]
      %v8555 = vld [vmem:[%s968 + $0x48] sm:$0xff]
      %v8556 = vld [vmem:[%s968 + $0x50] sm:$0xff]
      %v8557 = vld [vmem:[%s968 + $0x60] sm:$0xff]
      %v8558 = vld [vmem:[%s968 + $0x68] sm:$0xff]
      %v8559 = vld [vmem:[%s968 + $0x78] sm:$0xff]
      %v8560 = vld [vmem:[%s968 + $0x80] sm:$0xff]
      %v8561 = vld [vmem:[%s968 + $0x90] sm:$0xff]
      %v8562 = vld [vmem:[%s968 + $0x98] sm:$0xff]
      %v8563 = vld [vmem:[%s968 + $0xa8] sm:$0xff]
      %v8564 = vld [vmem:[%s968 + $0xb0] sm:$0xff]
      %v8565 = vld [vmem:[%s968 + $0xc0] sm:$0xff]
      %v8566 = vld [vmem:[%s968 + $0xc8] sm:$0xff]
      %v8567 = vld [vmem:[%s968 + $0xd8] sm:$0xff]
      %v8568 = vld [vmem:[%s968 + $0xe0] sm:$0xff]
      %v8569 = vld [vmem:[%s968 + $0xf0] sm:$0xff]
      %v8570 = vld [vmem:[%s968 + $0xf8] sm:$0xff]
      %v8571 = vld [vmem:[%s968 + $0x108] sm:$0xff]
      %v8572 = vld [vmem:[%s968 + $0x110] sm:$0xff]
      %v8573 = vld [vmem:[%s968 + $0x120] sm:$0xff]
      %v8574 = vld [vmem:[%s968 + $0x128] sm:$0xff]
      %v8575 = vld [vmem:[%s968 + $0x138] sm:$0xff]
      %v8576 = vld [vmem:[%s968 + $0x140] sm:$0xff]
      %v8577 = vld [vmem:[%s968 + $0x150] sm:$0xff]
      %v8578 = vld [vmem:[%s968 + $0x158] sm:$0xff]
      %v8579 = vld [vmem:[%s968 + $0x168] sm:$0xff]
      %v8580 = vld [vmem:[%s968 + $0x170] sm:$0xff]
      %v8581 = vpack.c.bf16 %v8550, %v8549
      %v8582 = vpack.c.bf16 %v8552, %v8551
      %v8583 = vpack.c.bf16 %v8554, %v8553
      %v8584 = vpack.c.bf16 %v8556, %v8555
      %v8585 = vpack.c.bf16 %v8558, %v8557
      %v8586 = vpack.c.bf16 %v8560, %v8559
      %v8587 = vpack.c.bf16 %v8562, %v8561
      %v8588 = vpack.c.bf16 %v8564, %v8563
      %v8589 = vpack.c.bf16 %v8566, %v8565
      %v8590 = vpack.c.bf16 %v8568, %v8567
      %v8591 = vpack.c.bf16 %v8570, %v8569
      %v8592 = vpack.c.bf16 %v8572, %v8571
      %v8593 = vpack.c.bf16 %v8574, %v8573
      %v8594 = vpack.c.bf16 %v8576, %v8575
      %v8595 = vpack.c.bf16 %v8578, %v8577
      %v8596 = vpack.c.bf16 %v8580, %v8579
      %s8597 = scalar_lea.vmem %s4, 96
      %v8598 = vld [vmem:[%s8597] sm:$0xf]
      %v8599 = vld [vmem:[%s8597 + $0x4] sm:$0xf]
      %v8600 = vld [vmem:[%s8597 + $0x8] sm:$0xf]
      %v8601 = vld [vmem:[%s8597 + $0xc] sm:$0xf]
      %v8602 = vld [vmem:[%s8597 + $0x10] sm:$0xf]
      %v8603 = vld [vmem:[%s8597 + $0x14] sm:$0xf]
      %v8604 = vld [vmem:[%s8597 + $0x18] sm:$0xf]
      %v8605 = vld [vmem:[%s8597 + $0x1c] sm:$0xf]
      %v8614 = vunpack.c.l.b16 %v8598
      %v8615 = vunpack.c.l.b16 %v8599
      %v8616 = vunpack.c.l.b16 %v8600
      %v8617 = vunpack.c.l.b16 %v8601
      %v8618 = vunpack.c.l.b16 %v8602
      %v8619 = vunpack.c.l.b16 %v8603
      %v8620 = vunpack.c.l.b16 %v8604
      %v8621 = vunpack.c.l.b16 %v8605
      %v8622 = vpack.c.b16 %v8615, %v8614
      %v8623 = vpack.c.b16 %v8617, %v8616
      %v8624 = vpack.c.b16 %v8619, %v8618
      %v8625 = vpack.c.b16 %v8621, %v8620
      %v8631 = vsel %vm784, %v8581, 0
      %v8634 = vsel %vm784, %v8582, 0
      %v8637 = vsel %vm784, %v8583, 0
      %v8640 = vsel %vm784, %v8584, 0
      %v8643 = vsel %vm784, %v8585, 0
      %v8646 = vsel %vm784, %v8586, 0
      %v8649 = vsel %vm784, %v8587, 0
      %v8652 = vsel %vm784, %v8588, 0
      %v8655 = vsel %vm784, %v8589, 0
      %v8658 = vsel %vm784, %v8590, 0
      %v8661 = vsel %vm784, %v8591, 0
      %v8664 = vsel %vm784, %v8592, 0
      %v8667 = vsel %vm784, %v8593, 0
      %v8670 = vsel %vm784, %v8594, 0
      %v8673 = vsel %vm784, %v8595, 0
      %v8676 = vsel %vm784, %v8596, 0
      %8678 = vmatprep.subr.bf16.mxu0 0
      %8679 = vmatpush1.bf16.msra.mxu0 0
      %8680 = vmatprep.subr.bf16.mxu0 0
      %8681 = vmatpush1.bf16.msra.mxu0 0
      %8682 = vmatprep.subr.bf16.mxu0 0
      %8683 = vmatpush1.bf16.msra.mxu0 0
      %8684 = vmatprep.subr.bf16.mxu0 0
      %8685 = vmatpush1.bf16.msra.mxu0 0
      %8686 = vmatprep.subr.bf16.mxu0 0
      %8687 = vmatpush1.bf16.msra.mxu0 %v8625
      %8688 = vmatprep.subr.bf16.mxu0 0
      %8689 = vmatpush1.bf16.msra.mxu0 %v8624
      %8690 = vmatprep.subr.bf16.mxu0 0
      %8691 = vmatpush1.bf16.msra.mxu0 %v8623
      %8692 = vmatprep.subr.bf16.mxu0 0
      %8693 = vmatpush1.bf16.msra.mxu0 %v8622
      %8694 = vmatprep.subr.bf16.mxu0 0
      %8695 = vmatpush2.bf16.msra.mxu0 0
      %8696 = vmatprep.subr.bf16.mxu0 0
      %8697 = vmatpush2.bf16.msra.mxu0 0
      %8698 = vmatprep.subr.bf16.mxu0 0
      %8699 = vmatpush2.bf16.msra.mxu0 0
      %8700 = vmatprep.subr.bf16.mxu0 0
      %8701 = vmatpush2.bf16.msra.mxu0 0
      %8702 = vmatprep.subr.bf16.mxu0 0
      %8703 = vmatpush2.bf16.msra.mxu0 0
      %8704 = vmatprep.subr.bf16.mxu0 0
      %8705 = vmatpush2.bf16.msra.mxu0 0
      %8706 = vmatprep.subr.bf16.mxu0 0
      %8707 = vmatpush2.bf16.msra.mxu0 0
      %8708 = vmatprep.subr.bf16.mxu0 0
      %8709 = vmatpush2.bf16.msra.mxu0 0
      %8710 = vmatprep.mubr.bf16.mxu0 0
      %8711 = vmatmul.mubr.bf16.gmra.mxu0 %v8631
      %v8712 = vpop.f32.mrf.mxu0
      %v8713 = vadd.f32 0.0, %v8712
      %v8714 = vpop.f32.mrf.mxu0
      %v8715 = vpop.f32.mrf.mxu0
      %v8716 = vadd.f32 0.0, %v8715
      %v8717 = vpop.f32.mrf.mxu0
      %8718 = vmatprep.mubr.bf16.mxu0 0
      %8719 = vmatmul.mubr.bf16.gmra.mxu0 %v8634
      %v8720 = vpop.f32.mrf.mxu0
      %v8721 = vadd.f32 0.0, %v8720
      %v8722 = vpop.f32.mrf.mxu0
      %v8723 = vpop.f32.mrf.mxu0
      %v8724 = vadd.f32 0.0, %v8723
      %v8725 = vpop.f32.mrf.mxu0
      %8726 = vmatprep.mubr.bf16.mxu0 0
      %8727 = vmatmul.mubr.bf16.gmra.mxu0 %v8637
      %v8728 = vpop.f32.mrf.mxu0
      %v8729 = vadd.f32 0.0, %v8728
      %v8730 = vpop.f32.mrf.mxu0
      %v8731 = vpop.f32.mrf.mxu0
      %v8732 = vadd.f32 0.0, %v8731
      %v8733 = vpop.f32.mrf.mxu0
      %8734 = vmatprep.mubr.bf16.mxu0 0
      %8735 = vmatmul.mubr.bf16.gmra.mxu0 %v8640
      %v8736 = vpop.f32.mrf.mxu0
      %v8737 = vadd.f32 0.0, %v8736
      %v8738 = vpop.f32.mrf.mxu0
      %v8739 = vpop.f32.mrf.mxu0
      %v8740 = vadd.f32 0.0, %v8739
      %v8741 = vpop.f32.mrf.mxu0
      %8742 = vmatprep.mubr.bf16.mxu0 0
      %8743 = vmatmul.mubr.bf16.gmra.mxu0 %v8643
      %v8744 = vpop.f32.mrf.mxu0
      %v8745 = vadd.f32 0.0, %v8744
      %v8746 = vpop.f32.mrf.mxu0
      %v8747 = vpop.f32.mrf.mxu0
      %v8748 = vadd.f32 0.0, %v8747
      %v8749 = vpop.f32.mrf.mxu0
      %8750 = vmatprep.mubr.bf16.mxu0 0
      %8751 = vmatmul.mubr.bf16.gmra.mxu0 %v8646
      %v8752 = vpop.f32.mrf.mxu0
      %v8753 = vadd.f32 0.0, %v8752
      %v8754 = vpop.f32.mrf.mxu0
      %v8755 = vpop.f32.mrf.mxu0
      %v8756 = vadd.f32 0.0, %v8755
      %v8757 = vpop.f32.mrf.mxu0
      %8758 = vmatprep.mubr.bf16.mxu0 0
      %8759 = vmatmul.mubr.bf16.gmra.mxu0 %v8649
      %v8760 = vpop.f32.mrf.mxu0
      %v8761 = vadd.f32 0.0, %v8760
      %v8762 = vpop.f32.mrf.mxu0
      %v8763 = vpop.f32.mrf.mxu0
      %v8764 = vadd.f32 0.0, %v8763
      %v8765 = vpop.f32.mrf.mxu0
      %8766 = vmatprep.mubr.bf16.mxu0 0
      %8767 = vmatmul.mubr.bf16.gmra.mxu0 %v8652
      %v8768 = vpop.f32.mrf.mxu0
      %v8769 = vadd.f32 0.0, %v8768
      %v8770 = vpop.f32.mrf.mxu0
      %v8771 = vpop.f32.mrf.mxu0
      %v8772 = vadd.f32 0.0, %v8771
      %v8773 = vpop.f32.mrf.mxu0
      %8774 = vmatprep.mubr.bf16.mxu0 0
      %8775 = vmatmul.mubr.bf16.gmra.mxu0 %v8655
      %v8776 = vpop.f32.mrf.mxu0
      %v8777 = vadd.f32 0.0, %v8776
      %v8778 = vpop.f32.mrf.mxu0
      %v8779 = vpop.f32.mrf.mxu0
      %v8780 = vadd.f32 0.0, %v8779
      %v8781 = vpop.f32.mrf.mxu0
      %8782 = vmatprep.mubr.bf16.mxu0 0
      %8783 = vmatmul.mubr.bf16.gmra.mxu0 %v8658
      %v8784 = vpop.f32.mrf.mxu0
      %v8785 = vadd.f32 0.0, %v8784
      %v8786 = vpop.f32.mrf.mxu0
      %v8787 = vpop.f32.mrf.mxu0
      %v8788 = vadd.f32 0.0, %v8787
      %v8789 = vpop.f32.mrf.mxu0
      %8790 = vmatprep.mubr.bf16.mxu0 0
      %8791 = vmatmul.mubr.bf16.gmra.mxu0 %v8661
      %v8792 = vpop.f32.mrf.mxu0
      %v8793 = vadd.f32 0.0, %v8792
      %v8794 = vpop.f32.mrf.mxu0
      %v8795 = vpop.f32.mrf.mxu0
      %v8796 = vadd.f32 0.0, %v8795
      %v8797 = vpop.f32.mrf.mxu0
      %8798 = vmatprep.mubr.bf16.mxu0 0
      %8799 = vmatmul.mubr.bf16.gmra.mxu0 %v8664
      %v8800 = vpop.f32.mrf.mxu0
      %v8801 = vadd.f32 0.0, %v8800
      %v8802 = vpop.f32.mrf.mxu0
      %v8803 = vpop.f32.mrf.mxu0
      %v8804 = vadd.f32 0.0, %v8803
      %v8805 = vpop.f32.mrf.mxu0
      %8806 = vmatprep.mubr.bf16.mxu0 0
      %8807 = vmatmul.mubr.bf16.gmra.mxu0 %v8667
      %v8808 = vpop.f32.mrf.mxu0
      %v8809 = vadd.f32 0.0, %v8808
      %v8810 = vpop.f32.mrf.mxu0
      %v8811 = vpop.f32.mrf.mxu0
      %v8812 = vadd.f32 0.0, %v8811
      %v8813 = vpop.f32.mrf.mxu0
      %8814 = vmatprep.mubr.bf16.mxu0 0
      %8815 = vmatmul.mubr.bf16.gmra.mxu0 %v8670
      %v8816 = vpop.f32.mrf.mxu0
      %v8817 = vadd.f32 0.0, %v8816
      %v8818 = vpop.f32.mrf.mxu0
      %v8819 = vpop.f32.mrf.mxu0
      %v8820 = vadd.f32 0.0, %v8819
      %v8821 = vpop.f32.mrf.mxu0
      %8822 = vmatprep.mubr.bf16.mxu0 0
      %8823 = vmatmul.mubr.bf16.gmra.mxu0 %v8673
      %v8824 = vpop.f32.mrf.mxu0
      %v8825 = vadd.f32 0.0, %v8824
      %v8826 = vpop.f32.mrf.mxu0
      %v8827 = vpop.f32.mrf.mxu0
      %v8828 = vadd.f32 0.0, %v8827
      %v8829 = vpop.f32.mrf.mxu0
      %8830 = vmatprep.mubr.bf16.mxu0 0
      %8831 = vmatmul.mubr.bf16.gmra.mxu0 %v8676
      %v8832 = vpop.f32.mrf.mxu0
      %v8833 = vadd.f32 0.0, %v8832
      %v8834 = vpop.f32.mrf.mxu0
      %v8835 = vpop.f32.mrf.mxu0
      %v8836 = vadd.f32 0.0, %v8835
      %v8837 = vpop.f32.mrf.mxu0
      %8838 = vdwg.mxu0
      %v8839 = vadd.f32 %v8517, %v8713
      %v8840 = vadd.f32 %v8518, %v8716
      %v8841 = vadd.f32 %v8519, %v8721
      %v8842 = vadd.f32 %v8520, %v8724
      %v8843 = vadd.f32 %v8521, %v8729
      %v8844 = vadd.f32 %v8522, %v8732
      %v8845 = vadd.f32 %v8523, %v8737
      %v8846 = vadd.f32 %v8524, %v8740
      %v8847 = vadd.f32 %v8525, %v8745
      %v8848 = vadd.f32 %v8526, %v8748
      %v8849 = vadd.f32 %v8527, %v8753
      %v8850 = vadd.f32 %v8528, %v8756
      %v8851 = vadd.f32 %v8529, %v8761
      %v8852 = vadd.f32 %v8530, %v8764
      %v8853 = vadd.f32 %v8531, %v8769
      %v8854 = vadd.f32 %v8532, %v8772
      %v8855 = vadd.f32 %v8533, %v8777
      %v8856 = vadd.f32 %v8534, %v8780
      %v8857 = vadd.f32 %v8535, %v8785
      %v8858 = vadd.f32 %v8536, %v8788
      %v8859 = vadd.f32 %v8537, %v8793
      %v8860 = vadd.f32 %v8538, %v8796
      %v8861 = vadd.f32 %v8539, %v8801
      %v8862 = vadd.f32 %v8540, %v8804
      %v8863 = vadd.f32 %v8541, %v8809
      %v8864 = vadd.f32 %v8542, %v8812
      %v8865 = vadd.f32 %v8543, %v8817
      %v8866 = vadd.f32 %v8544, %v8820
      %v8867 = vadd.f32 %v8545, %v8825
      %v8868 = vadd.f32 %v8546, %v8828
      %v8869 = vadd.f32 %v8547, %v8833
      %v8870 = vadd.f32 %v8548, %v8836
      %v8871 = vld [vmem:[%s968 + $0x1] sm:$0xff]
      %v8872 = vld [vmem:[%s968 + $0x9] sm:$0xff]
      %v8873 = vld [vmem:[%s968 + $0x19] sm:$0xff]
      %v8874 = vld [vmem:[%s968 + $0x21] sm:$0xff]
      %v8875 = vld [vmem:[%s968 + $0x31] sm:$0xff]
      %v8876 = vld [vmem:[%s968 + $0x39] sm:$0xff]
      %v8877 = vld [vmem:[%s968 + $0x49] sm:$0xff]
      %v8878 = vld [vmem:[%s968 + $0x51] sm:$0xff]
      %v8879 = vld [vmem:[%s968 + $0x61] sm:$0xff]
      %v8880 = vld [vmem:[%s968 + $0x69] sm:$0xff]
      %v8881 = vld [vmem:[%s968 + $0x79] sm:$0xff]
      %v8882 = vld [vmem:[%s968 + $0x81] sm:$0xff]
      %v8883 = vld [vmem:[%s968 + $0x91] sm:$0xff]
      %v8884 = vld [vmem:[%s968 + $0x99] sm:$0xff]
      %v8885 = vld [vmem:[%s968 + $0xa9] sm:$0xff]
      %v8886 = vld [vmem:[%s968 + $0xb1] sm:$0xff]
      %v8887 = vld [vmem:[%s968 + $0xc1] sm:$0xff]
      %v8888 = vld [vmem:[%s968 + $0xc9] sm:$0xff]
      %v8889 = vld [vmem:[%s968 + $0xd9] sm:$0xff]
      %v8890 = vld [vmem:[%s968 + $0xe1] sm:$0xff]
      %v8891 = vld [vmem:[%s968 + $0xf1] sm:$0xff]
      %v8892 = vld [vmem:[%s968 + $0xf9] sm:$0xff]
      %v8893 = vld [vmem:[%s968 + $0x109] sm:$0xff]
      %v8894 = vld [vmem:[%s968 + $0x111] sm:$0xff]
      %v8895 = vld [vmem:[%s968 + $0x121] sm:$0xff]
      %v8896 = vld [vmem:[%s968 + $0x129] sm:$0xff]
      %v8897 = vld [vmem:[%s968 + $0x139] sm:$0xff]
      %v8898 = vld [vmem:[%s968 + $0x141] sm:$0xff]
      %v8899 = vld [vmem:[%s968 + $0x151] sm:$0xff]
      %v8900 = vld [vmem:[%s968 + $0x159] sm:$0xff]
      %v8901 = vld [vmem:[%s968 + $0x169] sm:$0xff]
      %v8902 = vld [vmem:[%s968 + $0x171] sm:$0xff]
      %v8903 = vpack.c.bf16 %v8872, %v8871
      %v8904 = vpack.c.bf16 %v8874, %v8873
      %v8905 = vpack.c.bf16 %v8876, %v8875
      %v8906 = vpack.c.bf16 %v8878, %v8877
      %v8907 = vpack.c.bf16 %v8880, %v8879
      %v8908 = vpack.c.bf16 %v8882, %v8881
      %v8909 = vpack.c.bf16 %v8884, %v8883
      %v8910 = vpack.c.bf16 %v8886, %v8885
      %v8911 = vpack.c.bf16 %v8888, %v8887
      %v8912 = vpack.c.bf16 %v8890, %v8889
      %v8913 = vpack.c.bf16 %v8892, %v8891
      %v8914 = vpack.c.bf16 %v8894, %v8893
      %v8915 = vpack.c.bf16 %v8896, %v8895
      %v8916 = vpack.c.bf16 %v8898, %v8897
      %v8917 = vpack.c.bf16 %v8900, %v8899
      %v8918 = vpack.c.bf16 %v8902, %v8901
      %s8919 = scalar_lea.vmem %s4, 128
      %v8920 = vld [vmem:[%s8919] sm:$0xf]
      %v8921 = vld [vmem:[%s8919 + $0x4] sm:$0xf]
      %v8922 = vld [vmem:[%s8919 + $0x8] sm:$0xf]
      %v8923 = vld [vmem:[%s8919 + $0xc] sm:$0xf]
      %v8924 = vld [vmem:[%s8919 + $0x10] sm:$0xf]
      %v8925 = vld [vmem:[%s8919 + $0x14] sm:$0xf]
      %v8926 = vld [vmem:[%s8919 + $0x18] sm:$0xf]
      %v8927 = vld [vmem:[%s8919 + $0x1c] sm:$0xf]
      %v8936 = vunpack.c.l.b16 %v8920
      %v8937 = vunpack.c.l.b16 %v8921
      %v8938 = vunpack.c.l.b16 %v8922
      %v8939 = vunpack.c.l.b16 %v8923
      %v8940 = vunpack.c.l.b16 %v8924
      %v8941 = vunpack.c.l.b16 %v8925
      %v8942 = vunpack.c.l.b16 %v8926
      %v8943 = vunpack.c.l.b16 %v8927
      %v8944 = vpack.c.b16 %v8937, %v8936
      %v8945 = vpack.c.b16 %v8939, %v8938
      %v8946 = vpack.c.b16 %v8941, %v8940
      %v8947 = vpack.c.b16 %v8943, %v8942
      %v8953 = vsel %vm784, %v8903, 0
      %v8956 = vsel %vm784, %v8904, 0
      %v8959 = vsel %vm784, %v8905, 0
      %v8962 = vsel %vm784, %v8906, 0
      %v8965 = vsel %vm784, %v8907, 0
      %v8968 = vsel %vm784, %v8908, 0
      %v8971 = vsel %vm784, %v8909, 0
      %v8974 = vsel %vm784, %v8910, 0
      %v8977 = vsel %vm784, %v8911, 0
      %v8980 = vsel %vm784, %v8912, 0
      %v8983 = vsel %vm784, %v8913, 0
      %v8986 = vsel %vm784, %v8914, 0
      %v8989 = vsel %vm784, %v8915, 0
      %v8992 = vsel %vm784, %v8916, 0
      %v8995 = vsel %vm784, %v8917, 0
      %v8998 = vsel %vm784, %v8918, 0
      %9000 = vmatprep.subr.bf16.mxu0 0
      %9001 = vmatpush1.bf16.msra.mxu0 0
      %9002 = vmatprep.subr.bf16.mxu0 0
      %9003 = vmatpush1.bf16.msra.mxu0 0
      %9004 = vmatprep.subr.bf16.mxu0 0
      %9005 = vmatpush1.bf16.msra.mxu0 0
      %9006 = vmatprep.subr.bf16.mxu0 0
      %9007 = vmatpush1.bf16.msra.mxu0 0
      %9008 = vmatprep.subr.bf16.mxu0 0
      %9009 = vmatpush1.bf16.msra.mxu0 %v8947
      %9010 = vmatprep.subr.bf16.mxu0 0
      %9011 = vmatpush1.bf16.msra.mxu0 %v8946
      %9012 = vmatprep.subr.bf16.mxu0 0
      %9013 = vmatpush1.bf16.msra.mxu0 %v8945
      %9014 = vmatprep.subr.bf16.mxu0 0
      %9015 = vmatpush1.bf16.msra.mxu0 %v8944
      %9016 = vmatprep.subr.bf16.mxu0 0
      %9017 = vmatpush2.bf16.msra.mxu0 0
      %9018 = vmatprep.subr.bf16.mxu0 0
      %9019 = vmatpush2.bf16.msra.mxu0 0
      %9020 = vmatprep.subr.bf16.mxu0 0
      %9021 = vmatpush2.bf16.msra.mxu0 0
      %9022 = vmatprep.subr.bf16.mxu0 0
      %9023 = vmatpush2.bf16.msra.mxu0 0
      %9024 = vmatprep.subr.bf16.mxu0 0
      %9025 = vmatpush2.bf16.msra.mxu0 0
      %9026 = vmatprep.subr.bf16.mxu0 0
      %9027 = vmatpush2.bf16.msra.mxu0 0
      %9028 = vmatprep.subr.bf16.mxu0 0
      %9029 = vmatpush2.bf16.msra.mxu0 0
      %9030 = vmatprep.subr.bf16.mxu0 0
      %9031 = vmatpush2.bf16.msra.mxu0 0
      %9032 = vmatprep.mubr.bf16.mxu0 0
      %9033 = vmatmul.mubr.bf16.gmra.mxu0 %v8953
      %v9034 = vpop.f32.mrf.mxu0
      %v9035 = vadd.f32 0.0, %v9034
      %v9036 = vpop.f32.mrf.mxu0
      %v9037 = vpop.f32.mrf.mxu0
      %v9038 = vadd.f32 0.0, %v9037
      %v9039 = vpop.f32.mrf.mxu0
      %9040 = vmatprep.mubr.bf16.mxu0 0
      %9041 = vmatmul.mubr.bf16.gmra.mxu0 %v8956
      %v9042 = vpop.f32.mrf.mxu0
      %v9043 = vadd.f32 0.0, %v9042
      %v9044 = vpop.f32.mrf.mxu0
      %v9045 = vpop.f32.mrf.mxu0
      %v9046 = vadd.f32 0.0, %v9045
      %v9047 = vpop.f32.mrf.mxu0
      %9048 = vmatprep.mubr.bf16.mxu0 0
      %9049 = vmatmul.mubr.bf16.gmra.mxu0 %v8959
      %v9050 = vpop.f32.mrf.mxu0
      %v9051 = vadd.f32 0.0, %v9050
      %v9052 = vpop.f32.mrf.mxu0
      %v9053 = vpop.f32.mrf.mxu0
      %v9054 = vadd.f32 0.0, %v9053
      %v9055 = vpop.f32.mrf.mxu0
      %9056 = vmatprep.mubr.bf16.mxu0 0
      %9057 = vmatmul.mubr.bf16.gmra.mxu0 %v8962
      %v9058 = vpop.f32.mrf.mxu0
      %v9059 = vadd.f32 0.0, %v9058
      %v9060 = vpop.f32.mrf.mxu0
      %v9061 = vpop.f32.mrf.mxu0
      %v9062 = vadd.f32 0.0, %v9061
      %v9063 = vpop.f32.mrf.mxu0
      %9064 = vmatprep.mubr.bf16.mxu0 0
      %9065 = vmatmul.mubr.bf16.gmra.mxu0 %v8965
      %v9066 = vpop.f32.mrf.mxu0
      %v9067 = vadd.f32 0.0, %v9066
      %v9068 = vpop.f32.mrf.mxu0
      %v9069 = vpop.f32.mrf.mxu0
      %v9070 = vadd.f32 0.0, %v9069
      %v9071 = vpop.f32.mrf.mxu0
      %9072 = vmatprep.mubr.bf16.mxu0 0
      %9073 = vmatmul.mubr.bf16.gmra.mxu0 %v8968
      %v9074 = vpop.f32.mrf.mxu0
      %v9075 = vadd.f32 0.0, %v9074
      %v9076 = vpop.f32.mrf.mxu0
      %v9077 = vpop.f32.mrf.mxu0
      %v9078 = vadd.f32 0.0, %v9077
      %v9079 = vpop.f32.mrf.mxu0
      %9080 = vmatprep.mubr.bf16.mxu0 0
      %9081 = vmatmul.mubr.bf16.gmra.mxu0 %v8971
      %v9082 = vpop.f32.mrf.mxu0
      %v9083 = vadd.f32 0.0, %v9082
      %v9084 = vpop.f32.mrf.mxu0
      %v9085 = vpop.f32.mrf.mxu0
      %v9086 = vadd.f32 0.0, %v9085
      %v9087 = vpop.f32.mrf.mxu0
      %9088 = vmatprep.mubr.bf16.mxu0 0
      %9089 = vmatmul.mubr.bf16.gmra.mxu0 %v8974
      %v9090 = vpop.f32.mrf.mxu0
      %v9091 = vadd.f32 0.0, %v9090
      %v9092 = vpop.f32.mrf.mxu0
      %v9093 = vpop.f32.mrf.mxu0
      %v9094 = vadd.f32 0.0, %v9093
      %v9095 = vpop.f32.mrf.mxu0
      %9096 = vmatprep.mubr.bf16.mxu0 0
      %9097 = vmatmul.mubr.bf16.gmra.mxu0 %v8977
      %v9098 = vpop.f32.mrf.mxu0
      %v9099 = vadd.f32 0.0, %v9098
      %v9100 = vpop.f32.mrf.mxu0
      %v9101 = vpop.f32.mrf.mxu0
      %v9102 = vadd.f32 0.0, %v9101
      %v9103 = vpop.f32.mrf.mxu0
      %9104 = vmatprep.mubr.bf16.mxu0 0
      %9105 = vmatmul.mubr.bf16.gmra.mxu0 %v8980
      %v9106 = vpop.f32.mrf.mxu0
      %v9107 = vadd.f32 0.0, %v9106
      %v9108 = vpop.f32.mrf.mxu0
      %v9109 = vpop.f32.mrf.mxu0
      %v9110 = vadd.f32 0.0, %v9109
      %v9111 = vpop.f32.mrf.mxu0
      %9112 = vmatprep.mubr.bf16.mxu0 0
      %9113 = vmatmul.mubr.bf16.gmra.mxu0 %v8983
      %v9114 = vpop.f32.mrf.mxu0
      %v9115 = vadd.f32 0.0, %v9114
      %v9116 = vpop.f32.mrf.mxu0
      %v9117 = vpop.f32.mrf.mxu0
      %v9118 = vadd.f32 0.0, %v9117
      %v9119 = vpop.f32.mrf.mxu0
      %9120 = vmatprep.mubr.bf16.mxu0 0
      %9121 = vmatmul.mubr.bf16.gmra.mxu0 %v8986
      %v9122 = vpop.f32.mrf.mxu0
      %v9123 = vadd.f32 0.0, %v9122
      %v9124 = vpop.f32.mrf.mxu0
      %v9125 = vpop.f32.mrf.mxu0
      %v9126 = vadd.f32 0.0, %v9125
      %v9127 = vpop.f32.mrf.mxu0
      %9128 = vmatprep.mubr.bf16.mxu0 0
      %9129 = vmatmul.mubr.bf16.gmra.mxu0 %v8989
      %v9130 = vpop.f32.mrf.mxu0
      %v9131 = vadd.f32 0.0, %v9130
      %v9132 = vpop.f32.mrf.mxu0
      %v9133 = vpop.f32.mrf.mxu0
      %v9134 = vadd.f32 0.0, %v9133
      %v9135 = vpop.f32.mrf.mxu0
      %9136 = vmatprep.mubr.bf16.mxu0 0
      %9137 = vmatmul.mubr.bf16.gmra.mxu0 %v8992
      %v9138 = vpop.f32.mrf.mxu0
      %v9139 = vadd.f32 0.0, %v9138
      %v9140 = vpop.f32.mrf.mxu0
      %v9141 = vpop.f32.mrf.mxu0
      %v9142 = vadd.f32 0.0, %v9141
      %v9143 = vpop.f32.mrf.mxu0
      %9144 = vmatprep.mubr.bf16.mxu0 0
      %9145 = vmatmul.mubr.bf16.gmra.mxu0 %v8995
      %v9146 = vpop.f32.mrf.mxu0
      %v9147 = vadd.f32 0.0, %v9146
      %v9148 = vpop.f32.mrf.mxu0
      %v9149 = vpop.f32.mrf.mxu0
      %v9150 = vadd.f32 0.0, %v9149
      %v9151 = vpop.f32.mrf.mxu0
      %9152 = vmatprep.mubr.bf16.mxu0 0
      %9153 = vmatmul.mubr.bf16.gmra.mxu0 %v8998
      %v9154 = vpop.f32.mrf.mxu0
      %v9155 = vadd.f32 0.0, %v9154
      %v9156 = vpop.f32.mrf.mxu0
      %v9157 = vpop.f32.mrf.mxu0
      %v9158 = vadd.f32 0.0, %v9157
      %v9159 = vpop.f32.mrf.mxu0
      %9160 = vdwg.mxu0
      %v9161 = vadd.f32 %v8839, %v9035
      %v9162 = vadd.f32 %v8840, %v9038
      %v9163 = vadd.f32 %v8841, %v9043
      %v9164 = vadd.f32 %v8842, %v9046
      %v9165 = vadd.f32 %v8843, %v9051
      %v9166 = vadd.f32 %v8844, %v9054
      %v9167 = vadd.f32 %v8845, %v9059
      %v9168 = vadd.f32 %v8846, %v9062
      %v9169 = vadd.f32 %v8847, %v9067
      %v9170 = vadd.f32 %v8848, %v9070
      %v9171 = vadd.f32 %v8849, %v9075
      %v9172 = vadd.f32 %v8850, %v9078
      %v9173 = vadd.f32 %v8851, %v9083
      %v9174 = vadd.f32 %v8852, %v9086
      %v9175 = vadd.f32 %v8853, %v9091
      %v9176 = vadd.f32 %v8854, %v9094
      %v9177 = vadd.f32 %v8855, %v9099
      %v9178 = vadd.f32 %v8856, %v9102
      %v9179 = vadd.f32 %v8857, %v9107
      %v9180 = vadd.f32 %v8858, %v9110
      %v9181 = vadd.f32 %v8859, %v9115
      %v9182 = vadd.f32 %v8860, %v9118
      %v9183 = vadd.f32 %v8861, %v9123
      %v9184 = vadd.f32 %v8862, %v9126
      %v9185 = vadd.f32 %v8863, %v9131
      %v9186 = vadd.f32 %v8864, %v9134
      %v9187 = vadd.f32 %v8865, %v9139
      %v9188 = vadd.f32 %v8866, %v9142
      %v9189 = vadd.f32 %v8867, %v9147
      %v9190 = vadd.f32 %v8868, %v9150
      %v9191 = vadd.f32 %v8869, %v9155
      %v9192 = vadd.f32 %v8870, %v9158
      %v9193 = vld [vmem:[%s968 + $0x2] sm:$0xff]
      %v9194 = vld [vmem:[%s968 + $0xa] sm:$0xff]
      %v9195 = vld [vmem:[%s968 + $0x1a] sm:$0xff]
      %v9196 = vld [vmem:[%s968 + $0x22] sm:$0xff]
      %v9197 = vld [vmem:[%s968 + $0x32] sm:$0xff]
      %v9198 = vld [vmem:[%s968 + $0x3a] sm:$0xff]
      %v9199 = vld [vmem:[%s968 + $0x4a] sm:$0xff]
      %v9200 = vld [vmem:[%s968 + $0x52] sm:$0xff]
      %v9201 = vld [vmem:[%s968 + $0x62] sm:$0xff]
      %v9202 = vld [vmem:[%s968 + $0x6a] sm:$0xff]
      %v9203 = vld [vmem:[%s968 + $0x7a] sm:$0xff]
      %v9204 = vld [vmem:[%s968 + $0x82] sm:$0xff]
      %v9205 = vld [vmem:[%s968 + $0x92] sm:$0xff]
      %v9206 = vld [vmem:[%s968 + $0x9a] sm:$0xff]
      %v9207 = vld [vmem:[%s968 + $0xaa] sm:$0xff]
      %v9208 = vld [vmem:[%s968 + $0xb2] sm:$0xff]
      %v9209 = vld [vmem:[%s968 + $0xc2] sm:$0xff]
      %v9210 = vld [vmem:[%s968 + $0xca] sm:$0xff]
      %v9211 = vld [vmem:[%s968 + $0xda] sm:$0xff]
      %v9212 = vld [vmem:[%s968 + $0xe2] sm:$0xff]
      %v9213 = vld [vmem:[%s968 + $0xf2] sm:$0xff]
      %v9214 = vld [vmem:[%s968 + $0xfa] sm:$0xff]
      %v9215 = vld [vmem:[%s968 + $0x10a] sm:$0xff]
      %v9216 = vld [vmem:[%s968 + $0x112] sm:$0xff]
      %v9217 = vld [vmem:[%s968 + $0x122] sm:$0xff]
      %v9218 = vld [vmem:[%s968 + $0x12a] sm:$0xff]
      %v9219 = vld [vmem:[%s968 + $0x13a] sm:$0xff]
      %v9220 = vld [vmem:[%s968 + $0x142] sm:$0xff]
      %v9221 = vld [vmem:[%s968 + $0x152] sm:$0xff]
      %v9222 = vld [vmem:[%s968 + $0x15a] sm:$0xff]
      %v9223 = vld [vmem:[%s968 + $0x16a] sm:$0xff]
      %v9224 = vld [vmem:[%s968 + $0x172] sm:$0xff]
      %v9225 = vpack.c.bf16 %v9194, %v9193
      %v9226 = vpack.c.bf16 %v9196, %v9195
      %v9227 = vpack.c.bf16 %v9198, %v9197
      %v9228 = vpack.c.bf16 %v9200, %v9199
      %v9229 = vpack.c.bf16 %v9202, %v9201
      %v9230 = vpack.c.bf16 %v9204, %v9203
      %v9231 = vpack.c.bf16 %v9206, %v9205
      %v9232 = vpack.c.bf16 %v9208, %v9207
      %v9233 = vpack.c.bf16 %v9210, %v9209
      %v9234 = vpack.c.bf16 %v9212, %v9211
      %v9235 = vpack.c.bf16 %v9214, %v9213
      %v9236 = vpack.c.bf16 %v9216, %v9215
      %v9237 = vpack.c.bf16 %v9218, %v9217
      %v9238 = vpack.c.bf16 %v9220, %v9219
      %v9239 = vpack.c.bf16 %v9222, %v9221
      %v9240 = vpack.c.bf16 %v9224, %v9223
      %s9241 = scalar_lea.vmem %s4, 160
      %v9242 = vld [vmem:[%s9241] sm:$0xf]
      %v9243 = vld [vmem:[%s9241 + $0x4] sm:$0xf]
      %v9244 = vld [vmem:[%s9241 + $0x8] sm:$0xf]
      %v9245 = vld [vmem:[%s9241 + $0xc] sm:$0xf]
      %v9246 = vld [vmem:[%s9241 + $0x10] sm:$0xf]
      %v9247 = vld [vmem:[%s9241 + $0x14] sm:$0xf]
      %v9248 = vld [vmem:[%s9241 + $0x18] sm:$0xf]
      %v9249 = vld [vmem:[%s9241 + $0x1c] sm:$0xf]
      %v9258 = vunpack.c.l.b16 %v9242
      %v9259 = vunpack.c.l.b16 %v9243
      %v9260 = vunpack.c.l.b16 %v9244
      %v9261 = vunpack.c.l.b16 %v9245
      %v9262 = vunpack.c.l.b16 %v9246
      %v9263 = vunpack.c.l.b16 %v9247
      %v9264 = vunpack.c.l.b16 %v9248
      %v9265 = vunpack.c.l.b16 %v9249
      %v9266 = vpack.c.b16 %v9259, %v9258
      %v9267 = vpack.c.b16 %v9261, %v9260
      %v9268 = vpack.c.b16 %v9263, %v9262
      %v9269 = vpack.c.b16 %v9265, %v9264
      %v9275 = vsel %vm784, %v9225, 0
      %v9278 = vsel %vm784, %v9226, 0
      %v9281 = vsel %vm784, %v9227, 0
      %v9284 = vsel %vm784, %v9228, 0
      %v9287 = vsel %vm784, %v9229, 0
      %v9290 = vsel %vm784, %v9230, 0
      %v9293 = vsel %vm784, %v9231, 0
      %v9296 = vsel %vm784, %v9232, 0
      %v9299 = vsel %vm784, %v9233, 0
      %v9302 = vsel %vm784, %v9234, 0
      %v9305 = vsel %vm784, %v9235, 0
      %v9308 = vsel %vm784, %v9236, 0
      %v9311 = vsel %vm784, %v9237, 0
      %v9314 = vsel %vm784, %v9238, 0
      %v9317 = vsel %vm784, %v9239, 0
      %v9320 = vsel %vm784, %v9240, 0
      %9322 = vmatprep.subr.bf16.mxu0 0
      %9323 = vmatpush1.bf16.msra.mxu0 0
      %9324 = vmatprep.subr.bf16.mxu0 0
      %9325 = vmatpush1.bf16.msra.mxu0 0
      %9326 = vmatprep.subr.bf16.mxu0 0
      %9327 = vmatpush1.bf16.msra.mxu0 0
      %9328 = vmatprep.subr.bf16.mxu0 0
      %9329 = vmatpush1.bf16.msra.mxu0 0
      %9330 = vmatprep.subr.bf16.mxu0 0
      %9331 = vmatpush1.bf16.msra.mxu0 %v9269
      %9332 = vmatprep.subr.bf16.mxu0 0
      %9333 = vmatpush1.bf16.msra.mxu0 %v9268
      %9334 = vmatprep.subr.bf16.mxu0 0
      %9335 = vmatpush1.bf16.msra.mxu0 %v9267
      %9336 = vmatprep.subr.bf16.mxu0 0
      %9337 = vmatpush1.bf16.msra.mxu0 %v9266
      %9338 = vmatprep.subr.bf16.mxu0 0
      %9339 = vmatpush2.bf16.msra.mxu0 0
      %9340 = vmatprep.subr.bf16.mxu0 0
      %9341 = vmatpush2.bf16.msra.mxu0 0
      %9342 = vmatprep.subr.bf16.mxu0 0
      %9343 = vmatpush2.bf16.msra.mxu0 0
      %9344 = vmatprep.subr.bf16.mxu0 0
      %9345 = vmatpush2.bf16.msra.mxu0 0
      %9346 = vmatprep.subr.bf16.mxu0 0
      %9347 = vmatpush2.bf16.msra.mxu0 0
      %9348 = vmatprep.subr.bf16.mxu0 0
      %9349 = vmatpush2.bf16.msra.mxu0 0
      %9350 = vmatprep.subr.bf16.mxu0 0
      %9351 = vmatpush2.bf16.msra.mxu0 0
      %9352 = vmatprep.subr.bf16.mxu0 0
      %9353 = vmatpush2.bf16.msra.mxu0 0
      %9354 = vmatprep.mubr.bf16.mxu0 0
      %9355 = vmatmul.mubr.bf16.gmra.mxu0 %v9275
      %v9356 = vpop.f32.mrf.mxu0
      %v9357 = vadd.f32 0.0, %v9356
      %v9358 = vpop.f32.mrf.mxu0
      %v9359 = vpop.f32.mrf.mxu0
      %v9360 = vadd.f32 0.0, %v9359
      %v9361 = vpop.f32.mrf.mxu0
      %9362 = vmatprep.mubr.bf16.mxu0 0
      %9363 = vmatmul.mubr.bf16.gmra.mxu0 %v9278
      %v9364 = vpop.f32.mrf.mxu0
      %v9365 = vadd.f32 0.0, %v9364
      %v9366 = vpop.f32.mrf.mxu0
      %v9367 = vpop.f32.mrf.mxu0
      %v9368 = vadd.f32 0.0, %v9367
      %v9369 = vpop.f32.mrf.mxu0
      %9370 = vmatprep.mubr.bf16.mxu0 0
      %9371 = vmatmul.mubr.bf16.gmra.mxu0 %v9281
      %v9372 = vpop.f32.mrf.mxu0
      %v9373 = vadd.f32 0.0, %v9372
      %v9374 = vpop.f32.mrf.mxu0
      %v9375 = vpop.f32.mrf.mxu0
      %v9376 = vadd.f32 0.0, %v9375
      %v9377 = vpop.f32.mrf.mxu0
      %9378 = vmatprep.mubr.bf16.mxu0 0
      %9379 = vmatmul.mubr.bf16.gmra.mxu0 %v9284
      %v9380 = vpop.f32.mrf.mxu0
      %v9381 = vadd.f32 0.0, %v9380
      %v9382 = vpop.f32.mrf.mxu0
      %v9383 = vpop.f32.mrf.mxu0
      %v9384 = vadd.f32 0.0, %v9383
      %v9385 = vpop.f32.mrf.mxu0
      %9386 = vmatprep.mubr.bf16.mxu0 0
      %9387 = vmatmul.mubr.bf16.gmra.mxu0 %v9287
      %v9388 = vpop.f32.mrf.mxu0
      %v9389 = vadd.f32 0.0, %v9388
      %v9390 = vpop.f32.mrf.mxu0
      %v9391 = vpop.f32.mrf.mxu0
      %v9392 = vadd.f32 0.0, %v9391
      %v9393 = vpop.f32.mrf.mxu0
      %9394 = vmatprep.mubr.bf16.mxu0 0
      %9395 = vmatmul.mubr.bf16.gmra.mxu0 %v9290
      %v9396 = vpop.f32.mrf.mxu0
      %v9397 = vadd.f32 0.0, %v9396
      %v9398 = vpop.f32.mrf.mxu0
      %v9399 = vpop.f32.mrf.mxu0
      %v9400 = vadd.f32 0.0, %v9399
      %v9401 = vpop.f32.mrf.mxu0
      %9402 = vmatprep.mubr.bf16.mxu0 0
      %9403 = vmatmul.mubr.bf16.gmra.mxu0 %v9293
      %v9404 = vpop.f32.mrf.mxu0
      %v9405 = vadd.f32 0.0, %v9404
      %v9406 = vpop.f32.mrf.mxu0
      %v9407 = vpop.f32.mrf.mxu0
      %v9408 = vadd.f32 0.0, %v9407
      %v9409 = vpop.f32.mrf.mxu0
      %9410 = vmatprep.mubr.bf16.mxu0 0
      %9411 = vmatmul.mubr.bf16.gmra.mxu0 %v9296
      %v9412 = vpop.f32.mrf.mxu0
      %v9413 = vadd.f32 0.0, %v9412
      %v9414 = vpop.f32.mrf.mxu0
      %v9415 = vpop.f32.mrf.mxu0
      %v9416 = vadd.f32 0.0, %v9415
      %v9417 = vpop.f32.mrf.mxu0
      %9418 = vmatprep.mubr.bf16.mxu0 0
      %9419 = vmatmul.mubr.bf16.gmra.mxu0 %v9299
      %v9420 = vpop.f32.mrf.mxu0
      %v9421 = vadd.f32 0.0, %v9420
      %v9422 = vpop.f32.mrf.mxu0
      %v9423 = vpop.f32.mrf.mxu0
      %v9424 = vadd.f32 0.0, %v9423
      %v9425 = vpop.f32.mrf.mxu0
      %9426 = vmatprep.mubr.bf16.mxu0 0
      %9427 = vmatmul.mubr.bf16.gmra.mxu0 %v9302
      %v9428 = vpop.f32.mrf.mxu0
      %v9429 = vadd.f32 0.0, %v9428
      %v9430 = vpop.f32.mrf.mxu0
      %v9431 = vpop.f32.mrf.mxu0
      %v9432 = vadd.f32 0.0, %v9431
      %v9433 = vpop.f32.mrf.mxu0
      %9434 = vmatprep.mubr.bf16.mxu0 0
      %9435 = vmatmul.mubr.bf16.gmra.mxu0 %v9305
      %v9436 = vpop.f32.mrf.mxu0
      %v9437 = vadd.f32 0.0, %v9436
      %v9438 = vpop.f32.mrf.mxu0
      %v9439 = vpop.f32.mrf.mxu0
      %v9440 = vadd.f32 0.0, %v9439
      %v9441 = vpop.f32.mrf.mxu0
      %9442 = vmatprep.mubr.bf16.mxu0 0
      %9443 = vmatmul.mubr.bf16.gmra.mxu0 %v9308
      %v9444 = vpop.f32.mrf.mxu0
      %v9445 = vadd.f32 0.0, %v9444
      %v9446 = vpop.f32.mrf.mxu0
      %v9447 = vpop.f32.mrf.mxu0
      %v9448 = vadd.f32 0.0, %v9447
      %v9449 = vpop.f32.mrf.mxu0
      %9450 = vmatprep.mubr.bf16.mxu0 0
      %9451 = vmatmul.mubr.bf16.gmra.mxu0 %v9311
      %v9452 = vpop.f32.mrf.mxu0
      %v9453 = vadd.f32 0.0, %v9452
      %v9454 = vpop.f32.mrf.mxu0
      %v9455 = vpop.f32.mrf.mxu0
      %v9456 = vadd.f32 0.0, %v9455
      %v9457 = vpop.f32.mrf.mxu0
      %9458 = vmatprep.mubr.bf16.mxu0 0
      %9459 = vmatmul.mubr.bf16.gmra.mxu0 %v9314
      %v9460 = vpop.f32.mrf.mxu0
      %v9461 = vadd.f32 0.0, %v9460
      %v9462 = vpop.f32.mrf.mxu0
      %v9463 = vpop.f32.mrf.mxu0
      %v9464 = vadd.f32 0.0, %v9463
      %v9465 = vpop.f32.mrf.mxu0
      %9466 = vmatprep.mubr.bf16.mxu0 0
      %9467 = vmatmul.mubr.bf16.gmra.mxu0 %v9317
      %v9468 = vpop.f32.mrf.mxu0
      %v9469 = vadd.f32 0.0, %v9468
      %v9470 = vpop.f32.mrf.mxu0
      %v9471 = vpop.f32.mrf.mxu0
      %v9472 = vadd.f32 0.0, %v9471
      %v9473 = vpop.f32.mrf.mxu0
      %9474 = vmatprep.mubr.bf16.mxu0 0
      %9475 = vmatmul.mubr.bf16.gmra.mxu0 %v9320
      %v9476 = vpop.f32.mrf.mxu0
      %v9477 = vadd.f32 0.0, %v9476
      %v9478 = vpop.f32.mrf.mxu0
      %v9479 = vpop.f32.mrf.mxu0
      %v9480 = vadd.f32 0.0, %v9479
      %v9481 = vpop.f32.mrf.mxu0
      %9482 = vdwg.mxu0
      %v9483 = vadd.f32 %v9161, %v9357
      %v9484 = vadd.f32 %v9162, %v9360
      %v9485 = vadd.f32 %v9163, %v9365
      %v9486 = vadd.f32 %v9164, %v9368
      %v9487 = vadd.f32 %v9165, %v9373
      %v9488 = vadd.f32 %v9166, %v9376
      %v9489 = vadd.f32 %v9167, %v9381
      %v9490 = vadd.f32 %v9168, %v9384
      %v9491 = vadd.f32 %v9169, %v9389
      %v9492 = vadd.f32 %v9170, %v9392
      %v9493 = vadd.f32 %v9171, %v9397
      %v9494 = vadd.f32 %v9172, %v9400
      %v9495 = vadd.f32 %v9173, %v9405
      %v9496 = vadd.f32 %v9174, %v9408
      %v9497 = vadd.f32 %v9175, %v9413
      %v9498 = vadd.f32 %v9176, %v9416
      %v9499 = vadd.f32 %v9177, %v9421
      %v9500 = vadd.f32 %v9178, %v9424
      %v9501 = vadd.f32 %v9179, %v9429
      %v9502 = vadd.f32 %v9180, %v9432
      %v9503 = vadd.f32 %v9181, %v9437
      %v9504 = vadd.f32 %v9182, %v9440
      %v9505 = vadd.f32 %v9183, %v9445
      %v9506 = vadd.f32 %v9184, %v9448
      %v9507 = vadd.f32 %v9185, %v9453
      %v9508 = vadd.f32 %v9186, %v9456
      %v9509 = vadd.f32 %v9187, %v9461
      %v9510 = vadd.f32 %v9188, %v9464
      %v9511 = vadd.f32 %v9189, %v9469
      %v9512 = vadd.f32 %v9190, %v9472
      %v9513 = vadd.f32 %v9191, %v9477
      %v9514 = vadd.f32 %v9192, %v9480
      %v9515 = vld [vmem:[%s2946] sm:$0xff]
      %v9516 = vld [vmem:[%s2946 + $0x8] sm:$0xff]
      %v9517 = vld [vmem:[%s2946 + $0x18] sm:$0xff]
      %v9518 = vld [vmem:[%s2946 + $0x20] sm:$0xff]
      %v9519 = vld [vmem:[%s2946 + $0x30] sm:$0xff]
      %v9520 = vld [vmem:[%s2946 + $0x38] sm:$0xff]
      %v9521 = vld [vmem:[%s2946 + $0x48] sm:$0xff]
      %v9522 = vld [vmem:[%s2946 + $0x50] sm:$0xff]
      %v9523 = vld [vmem:[%s2946 + $0x60] sm:$0xff]
      %v9524 = vld [vmem:[%s2946 + $0x68] sm:$0xff]
      %v9525 = vld [vmem:[%s2946 + $0x78] sm:$0xff]
      %v9526 = vld [vmem:[%s2946 + $0x80] sm:$0xff]
      %v9527 = vld [vmem:[%s2946 + $0x90] sm:$0xff]
      %v9528 = vld [vmem:[%s2946 + $0x98] sm:$0xff]
      %v9529 = vld [vmem:[%s2946 + $0xa8] sm:$0xff]
      %v9530 = vld [vmem:[%s2946 + $0xb0] sm:$0xff]
      %v9531 = vld [vmem:[%s2946 + $0xc0] sm:$0xff]
      %v9532 = vld [vmem:[%s2946 + $0xc8] sm:$0xff]
      %v9533 = vld [vmem:[%s2946 + $0xd8] sm:$0xff]
      %v9534 = vld [vmem:[%s2946 + $0xe0] sm:$0xff]
      %v9535 = vld [vmem:[%s2946 + $0xf0] sm:$0xff]
      %v9536 = vld [vmem:[%s2946 + $0xf8] sm:$0xff]
      %v9537 = vld [vmem:[%s2946 + $0x108] sm:$0xff]
      %v9538 = vld [vmem:[%s2946 + $0x110] sm:$0xff]
      %v9539 = vld [vmem:[%s2946 + $0x120] sm:$0xff]
      %v9540 = vld [vmem:[%s2946 + $0x128] sm:$0xff]
      %v9541 = vld [vmem:[%s2946 + $0x138] sm:$0xff]
      %v9542 = vld [vmem:[%s2946 + $0x140] sm:$0xff]
      %v9543 = vld [vmem:[%s2946 + $0x150] sm:$0xff]
      %v9544 = vld [vmem:[%s2946 + $0x158] sm:$0xff]
      %v9545 = vld [vmem:[%s2946 + $0x168] sm:$0xff]
      %v9546 = vld [vmem:[%s2946 + $0x170] sm:$0xff]
      %v9547 = vpack.c.bf16 %v9516, %v9515
      %v9548 = vpack.c.bf16 %v9518, %v9517
      %v9549 = vpack.c.bf16 %v9520, %v9519
      %v9550 = vpack.c.bf16 %v9522, %v9521
      %v9551 = vpack.c.bf16 %v9524, %v9523
      %v9552 = vpack.c.bf16 %v9526, %v9525
      %v9553 = vpack.c.bf16 %v9528, %v9527
      %v9554 = vpack.c.bf16 %v9530, %v9529
      %v9555 = vpack.c.bf16 %v9532, %v9531
      %v9556 = vpack.c.bf16 %v9534, %v9533
      %v9557 = vpack.c.bf16 %v9536, %v9535
      %v9558 = vpack.c.bf16 %v9538, %v9537
      %v9559 = vpack.c.bf16 %v9540, %v9539
      %v9560 = vpack.c.bf16 %v9542, %v9541
      %v9561 = vpack.c.bf16 %v9544, %v9543
      %v9562 = vpack.c.bf16 %v9546, %v9545
      %s9563 = scalar_lea.vmem %s4, 192
      %v9564 = vld [vmem:[%s9563] sm:$0xf]
      %v9565 = vld [vmem:[%s9563 + $0x4] sm:$0xf]
      %v9566 = vld [vmem:[%s9563 + $0x8] sm:$0xf]
      %v9567 = vld [vmem:[%s9563 + $0xc] sm:$0xf]
      %v9568 = vld [vmem:[%s9563 + $0x10] sm:$0xf]
      %v9569 = vld [vmem:[%s9563 + $0x14] sm:$0xf]
      %v9570 = vld [vmem:[%s9563 + $0x18] sm:$0xf]
      %v9571 = vld [vmem:[%s9563 + $0x1c] sm:$0xf]
      %v9580 = vunpack.c.l.b16 %v9564
      %v9581 = vunpack.c.l.b16 %v9565
      %v9582 = vunpack.c.l.b16 %v9566
      %v9583 = vunpack.c.l.b16 %v9567
      %v9584 = vunpack.c.l.b16 %v9568
      %v9585 = vunpack.c.l.b16 %v9569
      %v9586 = vunpack.c.l.b16 %v9570
      %v9587 = vunpack.c.l.b16 %v9571
      %v9588 = vpack.c.b16 %v9581, %v9580
      %v9589 = vpack.c.b16 %v9583, %v9582
      %v9590 = vpack.c.b16 %v9585, %v9584
      %v9591 = vpack.c.b16 %v9587, %v9586
      %v9597 = vsel %vm784, %v9547, 0
      %v9600 = vsel %vm784, %v9548, 0
      %v9603 = vsel %vm784, %v9549, 0
      %v9606 = vsel %vm784, %v9550, 0
      %v9609 = vsel %vm784, %v9551, 0
      %v9612 = vsel %vm784, %v9552, 0
      %v9615 = vsel %vm784, %v9553, 0
      %v9618 = vsel %vm784, %v9554, 0
      %v9621 = vsel %vm784, %v9555, 0
      %v9624 = vsel %vm784, %v9556, 0
      %v9627 = vsel %vm784, %v9557, 0
      %v9630 = vsel %vm784, %v9558, 0
      %v9633 = vsel %vm784, %v9559, 0
      %v9636 = vsel %vm784, %v9560, 0
      %v9639 = vsel %vm784, %v9561, 0
      %v9642 = vsel %vm784, %v9562, 0
      %9644 = vmatprep.subr.bf16.mxu0 0
      %9645 = vmatpush1.bf16.msra.mxu0 0
      %9646 = vmatprep.subr.bf16.mxu0 0
      %9647 = vmatpush1.bf16.msra.mxu0 0
      %9648 = vmatprep.subr.bf16.mxu0 0
      %9649 = vmatpush1.bf16.msra.mxu0 0
      %9650 = vmatprep.subr.bf16.mxu0 0
      %9651 = vmatpush1.bf16.msra.mxu0 0
      %9652 = vmatprep.subr.bf16.mxu0 0
      %9653 = vmatpush1.bf16.msra.mxu0 %v9591
      %9654 = vmatprep.subr.bf16.mxu0 0
      %9655 = vmatpush1.bf16.msra.mxu0 %v9590
      %9656 = vmatprep.subr.bf16.mxu0 0
      %9657 = vmatpush1.bf16.msra.mxu0 %v9589
      %9658 = vmatprep.subr.bf16.mxu0 0
      %9659 = vmatpush1.bf16.msra.mxu0 %v9588
      %9660 = vmatprep.subr.bf16.mxu0 0
      %9661 = vmatpush2.bf16.msra.mxu0 0
      %9662 = vmatprep.subr.bf16.mxu0 0
      %9663 = vmatpush2.bf16.msra.mxu0 0
      %9664 = vmatprep.subr.bf16.mxu0 0
      %9665 = vmatpush2.bf16.msra.mxu0 0
      %9666 = vmatprep.subr.bf16.mxu0 0
      %9667 = vmatpush2.bf16.msra.mxu0 0
      %9668 = vmatprep.subr.bf16.mxu0 0
      %9669 = vmatpush2.bf16.msra.mxu0 0
      %9670 = vmatprep.subr.bf16.mxu0 0
      %9671 = vmatpush2.bf16.msra.mxu0 0
      %9672 = vmatprep.subr.bf16.mxu0 0
      %9673 = vmatpush2.bf16.msra.mxu0 0
      %9674 = vmatprep.subr.bf16.mxu0 0
      %9675 = vmatpush2.bf16.msra.mxu0 0
      %9676 = vmatprep.mubr.bf16.mxu0 0
      %9677 = vmatmul.mubr.bf16.gmra.mxu0 %v9597
      %v9678 = vpop.f32.mrf.mxu0
      %v9679 = vadd.f32 0.0, %v9678
      %v9680 = vpop.f32.mrf.mxu0
      %v9681 = vpop.f32.mrf.mxu0
      %v9682 = vadd.f32 0.0, %v9681
      %v9683 = vpop.f32.mrf.mxu0
      %9684 = vmatprep.mubr.bf16.mxu0 0
      %9685 = vmatmul.mubr.bf16.gmra.mxu0 %v9600
      %v9686 = vpop.f32.mrf.mxu0
      %v9687 = vadd.f32 0.0, %v9686
      %v9688 = vpop.f32.mrf.mxu0
      %v9689 = vpop.f32.mrf.mxu0
      %v9690 = vadd.f32 0.0, %v9689
      %v9691 = vpop.f32.mrf.mxu0
      %9692 = vmatprep.mubr.bf16.mxu0 0
      %9693 = vmatmul.mubr.bf16.gmra.mxu0 %v9603
      %v9694 = vpop.f32.mrf.mxu0
      %v9695 = vadd.f32 0.0, %v9694
      %v9696 = vpop.f32.mrf.mxu0
      %v9697 = vpop.f32.mrf.mxu0
      %v9698 = vadd.f32 0.0, %v9697
      %v9699 = vpop.f32.mrf.mxu0
      %9700 = vmatprep.mubr.bf16.mxu0 0
      %9701 = vmatmul.mubr.bf16.gmra.mxu0 %v9606
      %v9702 = vpop.f32.mrf.mxu0
      %v9703 = vadd.f32 0.0, %v9702
      %v9704 = vpop.f32.mrf.mxu0
      %v9705 = vpop.f32.mrf.mxu0
      %v9706 = vadd.f32 0.0, %v9705
      %v9707 = vpop.f32.mrf.mxu0
      %9708 = vmatprep.mubr.bf16.mxu0 0
      %9709 = vmatmul.mubr.bf16.gmra.mxu0 %v9609
      %v9710 = vpop.f32.mrf.mxu0
      %v9711 = vadd.f32 0.0, %v9710
      %v9712 = vpop.f32.mrf.mxu0
      %v9713 = vpop.f32.mrf.mxu0
      %v9714 = vadd.f32 0.0, %v9713
      %v9715 = vpop.f32.mrf.mxu0
      %9716 = vmatprep.mubr.bf16.mxu0 0
      %9717 = vmatmul.mubr.bf16.gmra.mxu0 %v9612
      %v9718 = vpop.f32.mrf.mxu0
      %v9719 = vadd.f32 0.0, %v9718
      %v9720 = vpop.f32.mrf.mxu0
      %v9721 = vpop.f32.mrf.mxu0
      %v9722 = vadd.f32 0.0, %v9721
      %v9723 = vpop.f32.mrf.mxu0
      %9724 = vmatprep.mubr.bf16.mxu0 0
      %9725 = vmatmul.mubr.bf16.gmra.mxu0 %v9615
      %v9726 = vpop.f32.mrf.mxu0
      %v9727 = vadd.f32 0.0, %v9726
      %v9728 = vpop.f32.mrf.mxu0
      %v9729 = vpop.f32.mrf.mxu0
      %v9730 = vadd.f32 0.0, %v9729
      %v9731 = vpop.f32.mrf.mxu0
      %9732 = vmatprep.mubr.bf16.mxu0 0
      %9733 = vmatmul.mubr.bf16.gmra.mxu0 %v9618
      %v9734 = vpop.f32.mrf.mxu0
      %v9735 = vadd.f32 0.0, %v9734
      %v9736 = vpop.f32.mrf.mxu0
      %v9737 = vpop.f32.mrf.mxu0
      %v9738 = vadd.f32 0.0, %v9737
      %v9739 = vpop.f32.mrf.mxu0
      %9740 = vmatprep.mubr.bf16.mxu0 0
      %9741 = vmatmul.mubr.bf16.gmra.mxu0 %v9621
      %v9742 = vpop.f32.mrf.mxu0
      %v9743 = vadd.f32 0.0, %v9742
      %v9744 = vpop.f32.mrf.mxu0
      %v9745 = vpop.f32.mrf.mxu0
      %v9746 = vadd.f32 0.0, %v9745
      %v9747 = vpop.f32.mrf.mxu0
      %9748 = vmatprep.mubr.bf16.mxu0 0
      %9749 = vmatmul.mubr.bf16.gmra.mxu0 %v9624
      %v9750 = vpop.f32.mrf.mxu0
      %v9751 = vadd.f32 0.0, %v9750
      %v9752 = vpop.f32.mrf.mxu0
      %v9753 = vpop.f32.mrf.mxu0
      %v9754 = vadd.f32 0.0, %v9753
      %v9755 = vpop.f32.mrf.mxu0
      %9756 = vmatprep.mubr.bf16.mxu0 0
      %9757 = vmatmul.mubr.bf16.gmra.mxu0 %v9627
      %v9758 = vpop.f32.mrf.mxu0
      %v9759 = vadd.f32 0.0, %v9758
      %v9760 = vpop.f32.mrf.mxu0
      %v9761 = vpop.f32.mrf.mxu0
      %v9762 = vadd.f32 0.0, %v9761
      %v9763 = vpop.f32.mrf.mxu0
      %9764 = vmatprep.mubr.bf16.mxu0 0
      %9765 = vmatmul.mubr.bf16.gmra.mxu0 %v9630
      %v9766 = vpop.f32.mrf.mxu0
      %v9767 = vadd.f32 0.0, %v9766
      %v9768 = vpop.f32.mrf.mxu0
      %v9769 = vpop.f32.mrf.mxu0
      %v9770 = vadd.f32 0.0, %v9769
      %v9771 = vpop.f32.mrf.mxu0
      %9772 = vmatprep.mubr.bf16.mxu0 0
      %9773 = vmatmul.mubr.bf16.gmra.mxu0 %v9633
      %v9774 = vpop.f32.mrf.mxu0
      %v9775 = vadd.f32 0.0, %v9774
      %v9776 = vpop.f32.mrf.mxu0
      %v9777 = vpop.f32.mrf.mxu0
      %v9778 = vadd.f32 0.0, %v9777
      %v9779 = vpop.f32.mrf.mxu0
      %9780 = vmatprep.mubr.bf16.mxu0 0
      %9781 = vmatmul.mubr.bf16.gmra.mxu0 %v9636
      %v9782 = vpop.f32.mrf.mxu0
      %v9783 = vadd.f32 0.0, %v9782
      %v9784 = vpop.f32.mrf.mxu0
      %v9785 = vpop.f32.mrf.mxu0
      %v9786 = vadd.f32 0.0, %v9785
      %v9787 = vpop.f32.mrf.mxu0
      %9788 = vmatprep.mubr.bf16.mxu0 0
      %9789 = vmatmul.mubr.bf16.gmra.mxu0 %v9639
      %v9790 = vpop.f32.mrf.mxu0
      %v9791 = vadd.f32 0.0, %v9790
      %v9792 = vpop.f32.mrf.mxu0
      %v9793 = vpop.f32.mrf.mxu0
      %v9794 = vadd.f32 0.0, %v9793
      %v9795 = vpop.f32.mrf.mxu0
      %9796 = vmatprep.mubr.bf16.mxu0 0
      %9797 = vmatmul.mubr.bf16.gmra.mxu0 %v9642
      %v9798 = vpop.f32.mrf.mxu0
      %v9799 = vadd.f32 0.0, %v9798
      %v9800 = vpop.f32.mrf.mxu0
      %v9801 = vpop.f32.mrf.mxu0
      %v9802 = vadd.f32 0.0, %v9801
      %v9803 = vpop.f32.mrf.mxu0
      %9804 = vdwg.mxu0
      %v9805 = vadd.f32 %v9483, %v9679
      %v9806 = vadd.f32 %v9484, %v9682
      %v9807 = vadd.f32 %v9485, %v9687
      %v9808 = vadd.f32 %v9486, %v9690
      %v9809 = vadd.f32 %v9487, %v9695
      %v9810 = vadd.f32 %v9488, %v9698
      %v9811 = vadd.f32 %v9489, %v9703
      %v9812 = vadd.f32 %v9490, %v9706
      %v9813 = vadd.f32 %v9491, %v9711
      %v9814 = vadd.f32 %v9492, %v9714
      %v9815 = vadd.f32 %v9493, %v9719
      %v9816 = vadd.f32 %v9494, %v9722
      %v9817 = vadd.f32 %v9495, %v9727
      %v9818 = vadd.f32 %v9496, %v9730
      %v9819 = vadd.f32 %v9497, %v9735
      %v9820 = vadd.f32 %v9498, %v9738
      %v9821 = vadd.f32 %v9499, %v9743
      %v9822 = vadd.f32 %v9500, %v9746
      %v9823 = vadd.f32 %v9501, %v9751
      %v9824 = vadd.f32 %v9502, %v9754
      %v9825 = vadd.f32 %v9503, %v9759
      %v9826 = vadd.f32 %v9504, %v9762
      %v9827 = vadd.f32 %v9505, %v9767
      %v9828 = vadd.f32 %v9506, %v9770
      %v9829 = vadd.f32 %v9507, %v9775
      %v9830 = vadd.f32 %v9508, %v9778
      %v9831 = vadd.f32 %v9509, %v9783
      %v9832 = vadd.f32 %v9510, %v9786
      %v9833 = vadd.f32 %v9511, %v9791
      %v9834 = vadd.f32 %v9512, %v9794
      %v9835 = vadd.f32 %v9513, %v9799
      %v9836 = vadd.f32 %v9514, %v9802
      %v9837 = vld [vmem:[%s2946 + $0x1] sm:$0xff]
      %v9838 = vld [vmem:[%s2946 + $0x9] sm:$0xff]
      %v9839 = vld [vmem:[%s2946 + $0x19] sm:$0xff]
      %v9840 = vld [vmem:[%s2946 + $0x21] sm:$0xff]
      %v9841 = vld [vmem:[%s2946 + $0x31] sm:$0xff]
      %v9842 = vld [vmem:[%s2946 + $0x39] sm:$0xff]
      %v9843 = vld [vmem:[%s2946 + $0x49] sm:$0xff]
      %v9844 = vld [vmem:[%s2946 + $0x51] sm:$0xff]
      %v9845 = vld [vmem:[%s2946 + $0x61] sm:$0xff]
      %v9846 = vld [vmem:[%s2946 + $0x69] sm:$0xff]
      %v9847 = vld [vmem:[%s2946 + $0x79] sm:$0xff]
      %v9848 = vld [vmem:[%s2946 + $0x81] sm:$0xff]
      %v9849 = vld [vmem:[%s2946 + $0x91] sm:$0xff]
      %v9850 = vld [vmem:[%s2946 + $0x99] sm:$0xff]
      %v9851 = vld [vmem:[%s2946 + $0xa9] sm:$0xff]
      %v9852 = vld [vmem:[%s2946 + $0xb1] sm:$0xff]
      %v9853 = vld [vmem:[%s2946 + $0xc1] sm:$0xff]
      %v9854 = vld [vmem:[%s2946 + $0xc9] sm:$0xff]
      %v9855 = vld [vmem:[%s2946 + $0xd9] sm:$0xff]
      %v9856 = vld [vmem:[%s2946 + $0xe1] sm:$0xff]
      %v9857 = vld [vmem:[%s2946 + $0xf1] sm:$0xff]
      %v9858 = vld [vmem:[%s2946 + $0xf9] sm:$0xff]
      %v9859 = vld [vmem:[%s2946 + $0x109] sm:$0xff]
      %v9860 = vld [vmem:[%s2946 + $0x111] sm:$0xff]
      %v9861 = vld [vmem:[%s2946 + $0x121] sm:$0xff]
      %v9862 = vld [vmem:[%s2946 + $0x129] sm:$0xff]
      %v9863 = vld [vmem:[%s2946 + $0x139] sm:$0xff]
      %v9864 = vld [vmem:[%s2946 + $0x141] sm:$0xff]
      %v9865 = vld [vmem:[%s2946 + $0x151] sm:$0xff]
      %v9866 = vld [vmem:[%s2946 + $0x159] sm:$0xff]
      %v9867 = vld [vmem:[%s2946 + $0x169] sm:$0xff]
      %v9868 = vld [vmem:[%s2946 + $0x171] sm:$0xff]
      %v9869 = vpack.c.bf16 %v9838, %v9837
      %v9870 = vpack.c.bf16 %v9840, %v9839
      %v9871 = vpack.c.bf16 %v9842, %v9841
      %v9872 = vpack.c.bf16 %v9844, %v9843
      %v9873 = vpack.c.bf16 %v9846, %v9845
      %v9874 = vpack.c.bf16 %v9848, %v9847
      %v9875 = vpack.c.bf16 %v9850, %v9849
      %v9876 = vpack.c.bf16 %v9852, %v9851
      %v9877 = vpack.c.bf16 %v9854, %v9853
      %v9878 = vpack.c.bf16 %v9856, %v9855
      %v9879 = vpack.c.bf16 %v9858, %v9857
      %v9880 = vpack.c.bf16 %v9860, %v9859
      %v9881 = vpack.c.bf16 %v9862, %v9861
      %v9882 = vpack.c.bf16 %v9864, %v9863
      %v9883 = vpack.c.bf16 %v9866, %v9865
      %v9884 = vpack.c.bf16 %v9868, %v9867
      %s9885 = scalar_lea.vmem %s4, 224
      %v9886 = vld [vmem:[%s9885] sm:$0xf]
      %v9887 = vld [vmem:[%s9885 + $0x4] sm:$0xf]
      %v9888 = vld [vmem:[%s9885 + $0x8] sm:$0xf]
      %v9889 = vld [vmem:[%s9885 + $0xc] sm:$0xf]
      %v9890 = vld [vmem:[%s9885 + $0x10] sm:$0xf]
      %v9891 = vld [vmem:[%s9885 + $0x14] sm:$0xf]
      %v9892 = vld [vmem:[%s9885 + $0x18] sm:$0xf]
      %v9893 = vld [vmem:[%s9885 + $0x1c] sm:$0xf]
      %v9902 = vunpack.c.l.b16 %v9886
      %v9903 = vunpack.c.l.b16 %v9887
      %v9904 = vunpack.c.l.b16 %v9888
      %v9905 = vunpack.c.l.b16 %v9889
      %v9906 = vunpack.c.l.b16 %v9890
      %v9907 = vunpack.c.l.b16 %v9891
      %v9908 = vunpack.c.l.b16 %v9892
      %v9909 = vunpack.c.l.b16 %v9893
      %v9910 = vpack.c.b16 %v9903, %v9902
      %v9911 = vpack.c.b16 %v9905, %v9904
      %v9912 = vpack.c.b16 %v9907, %v9906
      %v9913 = vpack.c.b16 %v9909, %v9908
      %v9919 = vsel %vm784, %v9869, 0
      %v9922 = vsel %vm784, %v9870, 0
      %v9925 = vsel %vm784, %v9871, 0
      %v9928 = vsel %vm784, %v9872, 0
      %v9931 = vsel %vm784, %v9873, 0
      %v9934 = vsel %vm784, %v9874, 0
      %v9937 = vsel %vm784, %v9875, 0
      %v9940 = vsel %vm784, %v9876, 0
      %v9943 = vsel %vm784, %v9877, 0
      %v9946 = vsel %vm784, %v9878, 0
      %v9949 = vsel %vm784, %v9879, 0
      %v9952 = vsel %vm784, %v9880, 0
      %v9955 = vsel %vm784, %v9881, 0
      %v9958 = vsel %vm784, %v9882, 0
      %v9961 = vsel %vm784, %v9883, 0
      %v9964 = vsel %vm784, %v9884, 0
      %9966 = vmatprep.subr.bf16.mxu0 0
      %9967 = vmatpush1.bf16.msra.mxu0 0
      %9968 = vmatprep.subr.bf16.mxu0 0
      %9969 = vmatpush1.bf16.msra.mxu0 0
      %9970 = vmatprep.subr.bf16.mxu0 0
      %9971 = vmatpush1.bf16.msra.mxu0 0
      %9972 = vmatprep.subr.bf16.mxu0 0
      %9973 = vmatpush1.bf16.msra.mxu0 0
      %9974 = vmatprep.subr.bf16.mxu0 0
      %9975 = vmatpush1.bf16.msra.mxu0 %v9913
      %9976 = vmatprep.subr.bf16.mxu0 0
      %9977 = vmatpush1.bf16.msra.mxu0 %v9912
      %9978 = vmatprep.subr.bf16.mxu0 0
      %9979 = vmatpush1.bf16.msra.mxu0 %v9911
      %9980 = vmatprep.subr.bf16.mxu0 0
      %9981 = vmatpush1.bf16.msra.mxu0 %v9910
      %9982 = vmatprep.subr.bf16.mxu0 0
      %9983 = vmatpush2.bf16.msra.mxu0 0
      %9984 = vmatprep.subr.bf16.mxu0 0
      %9985 = vmatpush2.bf16.msra.mxu0 0
      %9986 = vmatprep.subr.bf16.mxu0 0
      %9987 = vmatpush2.bf16.msra.mxu0 0
      %9988 = vmatprep.subr.bf16.mxu0 0
      %9989 = vmatpush2.bf16.msra.mxu0 0
      %9990 = vmatprep.subr.bf16.mxu0 0
      %9991 = vmatpush2.bf16.msra.mxu0 0
      %9992 = vmatprep.subr.bf16.mxu0 0
      %9993 = vmatpush2.bf16.msra.mxu0 0
      %9994 = vmatprep.subr.bf16.mxu0 0
      %9995 = vmatpush2.bf16.msra.mxu0 0
      %9996 = vmatprep.subr.bf16.mxu0 0
      %9997 = vmatpush2.bf16.msra.mxu0 0
      %9998 = vmatprep.mubr.bf16.mxu0 0
      %9999 = vmatmul.mubr.bf16.gmra.mxu0 %v9919
      %v10000 = vpop.f32.mrf.mxu0
      %v10001 = vadd.f32 0.0, %v10000
      %v10002 = vpop.f32.mrf.mxu0
      %v10003 = vpop.f32.mrf.mxu0
      %v10004 = vadd.f32 0.0, %v10003
      %v10005 = vpop.f32.mrf.mxu0
      %10006 = vmatprep.mubr.bf16.mxu0 0
      %10007 = vmatmul.mubr.bf16.gmra.mxu0 %v9922
      %v10008 = vpop.f32.mrf.mxu0
      %v10009 = vadd.f32 0.0, %v10008
      %v10010 = vpop.f32.mrf.mxu0
      %v10011 = vpop.f32.mrf.mxu0
      %v10012 = vadd.f32 0.0, %v10011
      %v10013 = vpop.f32.mrf.mxu0
      %10014 = vmatprep.mubr.bf16.mxu0 0
      %10015 = vmatmul.mubr.bf16.gmra.mxu0 %v9925
      %v10016 = vpop.f32.mrf.mxu0
      %v10017 = vadd.f32 0.0, %v10016
      %v10018 = vpop.f32.mrf.mxu0
      %v10019 = vpop.f32.mrf.mxu0
      %v10020 = vadd.f32 0.0, %v10019
      %v10021 = vpop.f32.mrf.mxu0
      %10022 = vmatprep.mubr.bf16.mxu0 0
      %10023 = vmatmul.mubr.bf16.gmra.mxu0 %v9928
      %v10024 = vpop.f32.mrf.mxu0
      %v10025 = vadd.f32 0.0, %v10024
      %v10026 = vpop.f32.mrf.mxu0
      %v10027 = vpop.f32.mrf.mxu0
      %v10028 = vadd.f32 0.0, %v10027
      %v10029 = vpop.f32.mrf.mxu0
      %10030 = vmatprep.mubr.bf16.mxu0 0
      %10031 = vmatmul.mubr.bf16.gmra.mxu0 %v9931
      %v10032 = vpop.f32.mrf.mxu0
      %v10033 = vadd.f32 0.0, %v10032
      %v10034 = vpop.f32.mrf.mxu0
      %v10035 = vpop.f32.mrf.mxu0
      %v10036 = vadd.f32 0.0, %v10035
      %v10037 = vpop.f32.mrf.mxu0
      %10038 = vmatprep.mubr.bf16.mxu0 0
      %10039 = vmatmul.mubr.bf16.gmra.mxu0 %v9934
      %v10040 = vpop.f32.mrf.mxu0
      %v10041 = vadd.f32 0.0, %v10040
      %v10042 = vpop.f32.mrf.mxu0
      %v10043 = vpop.f32.mrf.mxu0
      %v10044 = vadd.f32 0.0, %v10043
      %v10045 = vpop.f32.mrf.mxu0
      %10046 = vmatprep.mubr.bf16.mxu0 0
      %10047 = vmatmul.mubr.bf16.gmra.mxu0 %v9937
      %v10048 = vpop.f32.mrf.mxu0
      %v10049 = vadd.f32 0.0, %v10048
      %v10050 = vpop.f32.mrf.mxu0
      %v10051 = vpop.f32.mrf.mxu0
      %v10052 = vadd.f32 0.0, %v10051
      %v10053 = vpop.f32.mrf.mxu0
      %10054 = vmatprep.mubr.bf16.mxu0 0
      %10055 = vmatmul.mubr.bf16.gmra.mxu0 %v9940
      %v10056 = vpop.f32.mrf.mxu0
      %v10057 = vadd.f32 0.0, %v10056
      %v10058 = vpop.f32.mrf.mxu0
      %v10059 = vpop.f32.mrf.mxu0
      %v10060 = vadd.f32 0.0, %v10059
      %v10061 = vpop.f32.mrf.mxu0
      %10062 = vmatprep.mubr.bf16.mxu0 0
      %10063 = vmatmul.mubr.bf16.gmra.mxu0 %v9943
      %v10064 = vpop.f32.mrf.mxu0
      %v10065 = vadd.f32 0.0, %v10064
      %v10066 = vpop.f32.mrf.mxu0
      %v10067 = vpop.f32.mrf.mxu0
      %v10068 = vadd.f32 0.0, %v10067
      %v10069 = vpop.f32.mrf.mxu0
      %10070 = vmatprep.mubr.bf16.mxu0 0
      %10071 = vmatmul.mubr.bf16.gmra.mxu0 %v9946
      %v10072 = vpop.f32.mrf.mxu0
      %v10073 = vadd.f32 0.0, %v10072
      %v10074 = vpop.f32.mrf.mxu0
      %v10075 = vpop.f32.mrf.mxu0
      %v10076 = vadd.f32 0.0, %v10075
      %v10077 = vpop.f32.mrf.mxu0
      %10078 = vmatprep.mubr.bf16.mxu0 0
      %10079 = vmatmul.mubr.bf16.gmra.mxu0 %v9949
      %v10080 = vpop.f32.mrf.mxu0
      %v10081 = vadd.f32 0.0, %v10080
      %v10082 = vpop.f32.mrf.mxu0
      %v10083 = vpop.f32.mrf.mxu0
      %v10084 = vadd.f32 0.0, %v10083
      %v10085 = vpop.f32.mrf.mxu0
      %10086 = vmatprep.mubr.bf16.mxu0 0
      %10087 = vmatmul.mubr.bf16.gmra.mxu0 %v9952
      %v10088 = vpop.f32.mrf.mxu0
      %v10089 = vadd.f32 0.0, %v10088
      %v10090 = vpop.f32.mrf.mxu0
      %v10091 = vpop.f32.mrf.mxu0
      %v10092 = vadd.f32 0.0, %v10091
      %v10093 = vpop.f32.mrf.mxu0
      %10094 = vmatprep.mubr.bf16.mxu0 0
      %10095 = vmatmul.mubr.bf16.gmra.mxu0 %v9955
      %v10096 = vpop.f32.mrf.mxu0
      %v10097 = vadd.f32 0.0, %v10096
      %v10098 = vpop.f32.mrf.mxu0
      %v10099 = vpop.f32.mrf.mxu0
      %v10100 = vadd.f32 0.0, %v10099
      %v10101 = vpop.f32.mrf.mxu0
      %10102 = vmatprep.mubr.bf16.mxu0 0
      %10103 = vmatmul.mubr.bf16.gmra.mxu0 %v9958
      %v10104 = vpop.f32.mrf.mxu0
      %v10105 = vadd.f32 0.0, %v10104
      %v10106 = vpop.f32.mrf.mxu0
      %v10107 = vpop.f32.mrf.mxu0
      %v10108 = vadd.f32 0.0, %v10107
      %v10109 = vpop.f32.mrf.mxu0
      %10110 = vmatprep.mubr.bf16.mxu0 0
      %10111 = vmatmul.mubr.bf16.gmra.mxu0 %v9961
      %v10112 = vpop.f32.mrf.mxu0
      %v10113 = vadd.f32 0.0, %v10112
      %v10114 = vpop.f32.mrf.mxu0
      %v10115 = vpop.f32.mrf.mxu0
      %v10116 = vadd.f32 0.0, %v10115
      %v10117 = vpop.f32.mrf.mxu0
      %10118 = vmatprep.mubr.bf16.mxu0 0
      %10119 = vmatmul.mubr.bf16.gmra.mxu0 %v9964
      %v10120 = vpop.f32.mrf.mxu0
      %v10121 = vadd.f32 0.0, %v10120
      %v10122 = vpop.f32.mrf.mxu0
      %v10123 = vpop.f32.mrf.mxu0
      %v10124 = vadd.f32 0.0, %v10123
      %v10125 = vpop.f32.mrf.mxu0
      %10126 = vdwg.mxu0
      %v10127 = vadd.f32 %v9805, %v10001
      %v10128 = vadd.f32 %v9806, %v10004
      %v10129 = vadd.f32 %v9807, %v10009
      %v10130 = vadd.f32 %v9808, %v10012
      %v10131 = vadd.f32 %v9809, %v10017
      %v10132 = vadd.f32 %v9810, %v10020
      %v10133 = vadd.f32 %v9811, %v10025
      %v10134 = vadd.f32 %v9812, %v10028
      %v10135 = vadd.f32 %v9813, %v10033
      %v10136 = vadd.f32 %v9814, %v10036
      %v10137 = vadd.f32 %v9815, %v10041
      %v10138 = vadd.f32 %v9816, %v10044
      %v10139 = vadd.f32 %v9817, %v10049
      %v10140 = vadd.f32 %v9818, %v10052
      %v10141 = vadd.f32 %v9819, %v10057
      %v10142 = vadd.f32 %v9820, %v10060
      %v10143 = vadd.f32 %v9821, %v10065
      %v10144 = vadd.f32 %v9822, %v10068
      %v10145 = vadd.f32 %v9823, %v10073
      %v10146 = vadd.f32 %v9824, %v10076
      %v10147 = vadd.f32 %v9825, %v10081
      %v10148 = vadd.f32 %v9826, %v10084
      %v10149 = vadd.f32 %v9827, %v10089
      %v10150 = vadd.f32 %v9828, %v10092
      %v10151 = vadd.f32 %v9829, %v10097
      %v10152 = vadd.f32 %v9830, %v10100
      %v10153 = vadd.f32 %v9831, %v10105
      %v10154 = vadd.f32 %v9832, %v10108
      %v10155 = vadd.f32 %v9833, %v10113
      %v10156 = vadd.f32 %v9834, %v10116
      %v10157 = vadd.f32 %v9835, %v10121
      %v10158 = vadd.f32 %v9836, %v10124
      %v10159 = vld [vmem:[%s2946 + $0x2] sm:$0xff]
      %v10160 = vld [vmem:[%s2946 + $0xa] sm:$0xff]
      %v10161 = vld [vmem:[%s2946 + $0x1a] sm:$0xff]
      %v10162 = vld [vmem:[%s2946 + $0x22] sm:$0xff]
      %v10163 = vld [vmem:[%s2946 + $0x32] sm:$0xff]
      %v10164 = vld [vmem:[%s2946 + $0x3a] sm:$0xff]
      %v10165 = vld [vmem:[%s2946 + $0x4a] sm:$0xff]
      %v10166 = vld [vmem:[%s2946 + $0x52] sm:$0xff]
      %v10167 = vld [vmem:[%s2946 + $0x62] sm:$0xff]
      %v10168 = vld [vmem:[%s2946 + $0x6a] sm:$0xff]
      %v10169 = vld [vmem:[%s2946 + $0x7a] sm:$0xff]
      %v10170 = vld [vmem:[%s2946 + $0x82] sm:$0xff]
      %v10171 = vld [vmem:[%s2946 + $0x92] sm:$0xff]
      %v10172 = vld [vmem:[%s2946 + $0x9a] sm:$0xff]
      %v10173 = vld [vmem:[%s2946 + $0xaa] sm:$0xff]
      %v10174 = vld [vmem:[%s2946 + $0xb2] sm:$0xff]
      %v10175 = vld [vmem:[%s2946 + $0xc2] sm:$0xff]
      %v10176 = vld [vmem:[%s2946 + $0xca] sm:$0xff]
      %v10177 = vld [vmem:[%s2946 + $0xda] sm:$0xff]
      %v10178 = vld [vmem:[%s2946 + $0xe2] sm:$0xff]
      %v10179 = vld [vmem:[%s2946 + $0xf2] sm:$0xff]
      %v10180 = vld [vmem:[%s2946 + $0xfa] sm:$0xff]
      %v10181 = vld [vmem:[%s2946 + $0x10a] sm:$0xff]
      %v10182 = vld [vmem:[%s2946 + $0x112] sm:$0xff]
      %v10183 = vld [vmem:[%s2946 + $0x122] sm:$0xff]
      %v10184 = vld [vmem:[%s2946 + $0x12a] sm:$0xff]
      %v10185 = vld [vmem:[%s2946 + $0x13a] sm:$0xff]
      %v10186 = vld [vmem:[%s2946 + $0x142] sm:$0xff]
      %v10187 = vld [vmem:[%s2946 + $0x152] sm:$0xff]
      %v10188 = vld [vmem:[%s2946 + $0x15a] sm:$0xff]
      %v10189 = vld [vmem:[%s2946 + $0x16a] sm:$0xff]
      %v10190 = vld [vmem:[%s2946 + $0x172] sm:$0xff]
      %v10191 = vpack.c.bf16 %v10160, %v10159
      %v10192 = vpack.c.bf16 %v10162, %v10161
      %v10193 = vpack.c.bf16 %v10164, %v10163
      %v10194 = vpack.c.bf16 %v10166, %v10165
      %v10195 = vpack.c.bf16 %v10168, %v10167
      %v10196 = vpack.c.bf16 %v10170, %v10169
      %v10197 = vpack.c.bf16 %v10172, %v10171
      %v10198 = vpack.c.bf16 %v10174, %v10173
      %v10199 = vpack.c.bf16 %v10176, %v10175
      %v10200 = vpack.c.bf16 %v10178, %v10177
      %v10201 = vpack.c.bf16 %v10180, %v10179
      %v10202 = vpack.c.bf16 %v10182, %v10181
      %v10203 = vpack.c.bf16 %v10184, %v10183
      %v10204 = vpack.c.bf16 %v10186, %v10185
      %v10205 = vpack.c.bf16 %v10188, %v10187
      %v10206 = vpack.c.bf16 %v10190, %v10189
      %s10207 = scalar_lea.vmem %s4, 256
      %v10208 = vld [vmem:[%s10207] sm:$0xf]
      %v10209 = vld [vmem:[%s10207 + $0x4] sm:$0xf]
      %v10210 = vld [vmem:[%s10207 + $0x8] sm:$0xf]
      %v10211 = vld [vmem:[%s10207 + $0xc] sm:$0xf]
      %v10212 = vld [vmem:[%s10207 + $0x10] sm:$0xf]
      %v10213 = vld [vmem:[%s10207 + $0x14] sm:$0xf]
      %v10214 = vld [vmem:[%s10207 + $0x18] sm:$0xf]
      %v10215 = vld [vmem:[%s10207 + $0x1c] sm:$0xf]
      %v10224 = vunpack.c.l.b16 %v10208
      %v10225 = vunpack.c.l.b16 %v10209
      %v10226 = vunpack.c.l.b16 %v10210
      %v10227 = vunpack.c.l.b16 %v10211
      %v10228 = vunpack.c.l.b16 %v10212
      %v10229 = vunpack.c.l.b16 %v10213
      %v10230 = vunpack.c.l.b16 %v10214
      %v10231 = vunpack.c.l.b16 %v10215
      %v10232 = vpack.c.b16 %v10225, %v10224
      %v10233 = vpack.c.b16 %v10227, %v10226
      %v10234 = vpack.c.b16 %v10229, %v10228
      %v10235 = vpack.c.b16 %v10231, %v10230
      %v10241 = vsel %vm784, %v10191, 0
      %v10244 = vsel %vm784, %v10192, 0
      %v10247 = vsel %vm784, %v10193, 0
      %v10250 = vsel %vm784, %v10194, 0
      %v10253 = vsel %vm784, %v10195, 0
      %v10256 = vsel %vm784, %v10196, 0
      %v10259 = vsel %vm784, %v10197, 0
      %v10262 = vsel %vm784, %v10198, 0
      %v10265 = vsel %vm784, %v10199, 0
      %v10268 = vsel %vm784, %v10200, 0
      %v10271 = vsel %vm784, %v10201, 0
      %v10274 = vsel %vm784, %v10202, 0
      %v10277 = vsel %vm784, %v10203, 0
      %v10280 = vsel %vm784, %v10204, 0
      %v10283 = vsel %vm784, %v10205, 0
      %v10286 = vsel %vm784, %v10206, 0
      %10288 = vmatprep.subr.bf16.mxu0 0
      %10289 = vmatpush1.bf16.msra.mxu0 0
      %10290 = vmatprep.subr.bf16.mxu0 0
      %10291 = vmatpush1.bf16.msra.mxu0 0
      %10292 = vmatprep.subr.bf16.mxu0 0
      %10293 = vmatpush1.bf16.msra.mxu0 0
      %10294 = vmatprep.subr.bf16.mxu0 0
      %10295 = vmatpush1.bf16.msra.mxu0 0
      %10296 = vmatprep.subr.bf16.mxu0 0
      %10297 = vmatpush1.bf16.msra.mxu0 %v10235
      %10298 = vmatprep.subr.bf16.mxu0 0
      %10299 = vmatpush1.bf16.msra.mxu0 %v10234
      %10300 = vmatprep.subr.bf16.mxu0 0
      %10301 = vmatpush1.bf16.msra.mxu0 %v10233
      %10302 = vmatprep.subr.bf16.mxu0 0
      %10303 = vmatpush1.bf16.msra.mxu0 %v10232
      %10304 = vmatprep.subr.bf16.mxu0 0
      %10305 = vmatpush2.bf16.msra.mxu0 0
      %10306 = vmatprep.subr.bf16.mxu0 0
      %10307 = vmatpush2.bf16.msra.mxu0 0
      %10308 = vmatprep.subr.bf16.mxu0 0
      %10309 = vmatpush2.bf16.msra.mxu0 0
      %10310 = vmatprep.subr.bf16.mxu0 0
      %10311 = vmatpush2.bf16.msra.mxu0 0
      %10312 = vmatprep.subr.bf16.mxu0 0
      %10313 = vmatpush2.bf16.msra.mxu0 0
      %10314 = vmatprep.subr.bf16.mxu0 0
      %10315 = vmatpush2.bf16.msra.mxu0 0
      %10316 = vmatprep.subr.bf16.mxu0 0
      %10317 = vmatpush2.bf16.msra.mxu0 0
      %10318 = vmatprep.subr.bf16.mxu0 0
      %10319 = vmatpush2.bf16.msra.mxu0 0
      %10320 = vmatprep.mubr.bf16.mxu0 0
      %10321 = vmatmul.mubr.bf16.gmra.mxu0 %v10241
      %v10322 = vpop.f32.mrf.mxu0
      %v10323 = vadd.f32 0.0, %v10322
      %v10324 = vpop.f32.mrf.mxu0
      %v10325 = vpop.f32.mrf.mxu0
      %v10326 = vadd.f32 0.0, %v10325
      %v10327 = vpop.f32.mrf.mxu0
      %10328 = vmatprep.mubr.bf16.mxu0 0
      %10329 = vmatmul.mubr.bf16.gmra.mxu0 %v10244
      %v10330 = vpop.f32.mrf.mxu0
      %v10331 = vadd.f32 0.0, %v10330
      %v10332 = vpop.f32.mrf.mxu0
      %v10333 = vpop.f32.mrf.mxu0
      %v10334 = vadd.f32 0.0, %v10333
      %v10335 = vpop.f32.mrf.mxu0
      %10336 = vmatprep.mubr.bf16.mxu0 0
      %10337 = vmatmul.mubr.bf16.gmra.mxu0 %v10247
      %v10338 = vpop.f32.mrf.mxu0
      %v10339 = vadd.f32 0.0, %v10338
      %v10340 = vpop.f32.mrf.mxu0
      %v10341 = vpop.f32.mrf.mxu0
      %v10342 = vadd.f32 0.0, %v10341
      %v10343 = vpop.f32.mrf.mxu0
      %10344 = vmatprep.mubr.bf16.mxu0 0
      %10345 = vmatmul.mubr.bf16.gmra.mxu0 %v10250
      %v10346 = vpop.f32.mrf.mxu0
      %v10347 = vadd.f32 0.0, %v10346
      %v10348 = vpop.f32.mrf.mxu0
      %v10349 = vpop.f32.mrf.mxu0
      %v10350 = vadd.f32 0.0, %v10349
      %v10351 = vpop.f32.mrf.mxu0
      %10352 = vmatprep.mubr.bf16.mxu0 0
      %10353 = vmatmul.mubr.bf16.gmra.mxu0 %v10253
      %v10354 = vpop.f32.mrf.mxu0
      %v10355 = vadd.f32 0.0, %v10354
      %v10356 = vpop.f32.mrf.mxu0
      %v10357 = vpop.f32.mrf.mxu0
      %v10358 = vadd.f32 0.0, %v10357
      %v10359 = vpop.f32.mrf.mxu0
      %10360 = vmatprep.mubr.bf16.mxu0 0
      %10361 = vmatmul.mubr.bf16.gmra.mxu0 %v10256
      %v10362 = vpop.f32.mrf.mxu0
      %v10363 = vadd.f32 0.0, %v10362
      %v10364 = vpop.f32.mrf.mxu0
      %v10365 = vpop.f32.mrf.mxu0
      %v10366 = vadd.f32 0.0, %v10365
      %v10367 = vpop.f32.mrf.mxu0
      %10368 = vmatprep.mubr.bf16.mxu0 0
      %10369 = vmatmul.mubr.bf16.gmra.mxu0 %v10259
      %v10370 = vpop.f32.mrf.mxu0
      %v10371 = vadd.f32 0.0, %v10370
      %v10372 = vpop.f32.mrf.mxu0
      %v10373 = vpop.f32.mrf.mxu0
      %v10374 = vadd.f32 0.0, %v10373
      %v10375 = vpop.f32.mrf.mxu0
      %10376 = vmatprep.mubr.bf16.mxu0 0
      %10377 = vmatmul.mubr.bf16.gmra.mxu0 %v10262
      %v10378 = vpop.f32.mrf.mxu0
      %v10379 = vadd.f32 0.0, %v10378
      %v10380 = vpop.f32.mrf.mxu0
      %v10381 = vpop.f32.mrf.mxu0
      %v10382 = vadd.f32 0.0, %v10381
      %v10383 = vpop.f32.mrf.mxu0
      %10384 = vmatprep.mubr.bf16.mxu0 0
      %10385 = vmatmul.mubr.bf16.gmra.mxu0 %v10265
      %v10386 = vpop.f32.mrf.mxu0
      %v10387 = vadd.f32 0.0, %v10386
      %v10388 = vpop.f32.mrf.mxu0
      %v10389 = vpop.f32.mrf.mxu0
      %v10390 = vadd.f32 0.0, %v10389
      %v10391 = vpop.f32.mrf.mxu0
      %10392 = vmatprep.mubr.bf16.mxu0 0
      %10393 = vmatmul.mubr.bf16.gmra.mxu0 %v10268
      %v10394 = vpop.f32.mrf.mxu0
      %v10395 = vadd.f32 0.0, %v10394
      %v10396 = vpop.f32.mrf.mxu0
      %v10397 = vpop.f32.mrf.mxu0
      %v10398 = vadd.f32 0.0, %v10397
      %v10399 = vpop.f32.mrf.mxu0
      %10400 = vmatprep.mubr.bf16.mxu0 0
      %10401 = vmatmul.mubr.bf16.gmra.mxu0 %v10271
      %v10402 = vpop.f32.mrf.mxu0
      %v10403 = vadd.f32 0.0, %v10402
      %v10404 = vpop.f32.mrf.mxu0
      %v10405 = vpop.f32.mrf.mxu0
      %v10406 = vadd.f32 0.0, %v10405
      %v10407 = vpop.f32.mrf.mxu0
      %10408 = vmatprep.mubr.bf16.mxu0 0
      %10409 = vmatmul.mubr.bf16.gmra.mxu0 %v10274
      %v10410 = vpop.f32.mrf.mxu0
      %v10411 = vadd.f32 0.0, %v10410
      %v10412 = vpop.f32.mrf.mxu0
      %v10413 = vpop.f32.mrf.mxu0
      %v10414 = vadd.f32 0.0, %v10413
      %v10415 = vpop.f32.mrf.mxu0
      %10416 = vmatprep.mubr.bf16.mxu0 0
      %10417 = vmatmul.mubr.bf16.gmra.mxu0 %v10277
      %v10418 = vpop.f32.mrf.mxu0
      %v10419 = vadd.f32 0.0, %v10418
      %v10420 = vpop.f32.mrf.mxu0
      %v10421 = vpop.f32.mrf.mxu0
      %v10422 = vadd.f32 0.0, %v10421
      %v10423 = vpop.f32.mrf.mxu0
      %10424 = vmatprep.mubr.bf16.mxu0 0
      %10425 = vmatmul.mubr.bf16.gmra.mxu0 %v10280
      %v10426 = vpop.f32.mrf.mxu0
      %v10427 = vadd.f32 0.0, %v10426
      %v10428 = vpop.f32.mrf.mxu0
      %v10429 = vpop.f32.mrf.mxu0
      %v10430 = vadd.f32 0.0, %v10429
      %v10431 = vpop.f32.mrf.mxu0
      %10432 = vmatprep.mubr.bf16.mxu0 0
      %10433 = vmatmul.mubr.bf16.gmra.mxu0 %v10283
      %v10434 = vpop.f32.mrf.mxu0
      %v10435 = vadd.f32 0.0, %v10434
      %v10436 = vpop.f32.mrf.mxu0
      %v10437 = vpop.f32.mrf.mxu0
      %v10438 = vadd.f32 0.0, %v10437
      %v10439 = vpop.f32.mrf.mxu0
      %10440 = vmatprep.mubr.bf16.mxu0 0
      %10441 = vmatmul.mubr.bf16.gmra.mxu0 %v10286
      %v10442 = vpop.f32.mrf.mxu0
      %v10443 = vadd.f32 0.0, %v10442
      %v10444 = vpop.f32.mrf.mxu0
      %v10445 = vpop.f32.mrf.mxu0
      %v10446 = vadd.f32 0.0, %v10445
      %v10447 = vpop.f32.mrf.mxu0
      %10448 = vdwg.mxu0
      %v10449 = vadd.f32 %v10127, %v10323
      %v10450 = vadd.f32 %v10128, %v10326
      %v10451 = vadd.f32 %v10129, %v10331
      %v10452 = vadd.f32 %v10130, %v10334
      %v10453 = vadd.f32 %v10131, %v10339
      %v10454 = vadd.f32 %v10132, %v10342
      %v10455 = vadd.f32 %v10133, %v10347
      %v10456 = vadd.f32 %v10134, %v10350
      %v10457 = vadd.f32 %v10135, %v10355
      %v10458 = vadd.f32 %v10136, %v10358
      %v10459 = vadd.f32 %v10137, %v10363
      %v10460 = vadd.f32 %v10138, %v10366
      %v10461 = vadd.f32 %v10139, %v10371
      %v10462 = vadd.f32 %v10140, %v10374
      %v10463 = vadd.f32 %v10141, %v10379
      %v10464 = vadd.f32 %v10142, %v10382
      %v10465 = vadd.f32 %v10143, %v10387
      %v10466 = vadd.f32 %v10144, %v10390
      %v10467 = vadd.f32 %v10145, %v10395
      %v10468 = vadd.f32 %v10146, %v10398
      %v10469 = vadd.f32 %v10147, %v10403
      %v10470 = vadd.f32 %v10148, %v10406
      %v10471 = vadd.f32 %v10149, %v10411
      %v10472 = vadd.f32 %v10150, %v10414
      %v10473 = vadd.f32 %v10151, %v10419
      %v10474 = vadd.f32 %v10152, %v10422
      %v10475 = vadd.f32 %v10153, %v10427
      %v10476 = vadd.f32 %v10154, %v10430
      %v10477 = vadd.f32 %v10155, %v10435
      %v10478 = vadd.f32 %v10156, %v10438
      %v10479 = vadd.f32 %v10157, %v10443
      %v10480 = vadd.f32 %v10158, %v10446
      %v10481 = vmul.f32 %v10449, %v10449
      %v10482 = vmul.f32 %v10450, %v10450
      %v10483 = vmul.f32 %v10451, %v10451
      %v10484 = vmul.f32 %v10452, %v10452
      %v10485 = vmul.f32 %v10453, %v10453
      %v10486 = vmul.f32 %v10454, %v10454
      %v10487 = vmul.f32 %v10455, %v10455
      %v10488 = vmul.f32 %v10456, %v10456
      %v10489 = vmul.f32 %v10457, %v10457
      %v10490 = vmul.f32 %v10458, %v10458
      %v10491 = vmul.f32 %v10459, %v10459
      %v10492 = vmul.f32 %v10460, %v10460
      %v10493 = vmul.f32 %v10461, %v10461
      %v10494 = vmul.f32 %v10462, %v10462
      %v10495 = vmul.f32 %v10463, %v10463
      %v10496 = vmul.f32 %v10464, %v10464
      %v10497 = vmul.f32 %v10465, %v10465
      %v10498 = vmul.f32 %v10466, %v10466
      %v10499 = vmul.f32 %v10467, %v10467
      %v10500 = vmul.f32 %v10468, %v10468
      %v10501 = vmul.f32 %v10469, %v10469
      %v10502 = vmul.f32 %v10470, %v10470
      %v10503 = vmul.f32 %v10471, %v10471
      %v10504 = vmul.f32 %v10472, %v10472
      %v10505 = vmul.f32 %v10473, %v10473
      %v10506 = vmul.f32 %v10474, %v10474
      %v10507 = vmul.f32 %v10475, %v10475
      %v10508 = vmul.f32 %v10476, %v10476
      %v10509 = vmul.f32 %v10477, %v10477
      %v10510 = vmul.f32 %v10478, %v10478
      %v10511 = vmul.f32 %v10479, %v10479
      %v10512 = vmul.f32 %v10480, %v10480
      %10545 = vrot.lane.b32.xlu0 %v10481, 64
      %v10546 = vpop.permute.xlu0 %10545
      %10547 = vrot.lane.b32.xlu0 %v10482, 64
      %v10548 = vpop.permute.xlu0 %10547
      %10549 = vrot.lane.b32.xlu0 %v10483, 64
      %v10550 = vpop.permute.xlu0 %10549
      %10551 = vrot.lane.b32.xlu0 %v10484, 64
      %v10552 = vpop.permute.xlu0 %10551
      %10553 = vrot.lane.b32.xlu0 %v10485, 64
      %v10554 = vpop.permute.xlu0 %10553
      %10555 = vrot.lane.b32.xlu0 %v10486, 64
      %v10556 = vpop.permute.xlu0 %10555
      %10557 = vrot.lane.b32.xlu0 %v10487, 64
      %v10558 = vpop.permute.xlu0 %10557
      %10559 = vrot.lane.b32.xlu0 %v10488, 64
      %v10560 = vpop.permute.xlu0 %10559
      %10561 = vrot.lane.b32.xlu0 %v10489, 64
      %v10562 = vpop.permute.xlu0 %10561
      %10563 = vrot.lane.b32.xlu0 %v10490, 64
      %v10564 = vpop.permute.xlu0 %10563
      %10565 = vrot.lane.b32.xlu0 %v10491, 64
      %v10566 = vpop.permute.xlu0 %10565
      %10567 = vrot.lane.b32.xlu0 %v10492, 64
      %v10568 = vpop.permute.xlu0 %10567
      %10569 = vrot.lane.b32.xlu0 %v10493, 64
      %v10570 = vpop.permute.xlu0 %10569
      %10571 = vrot.lane.b32.xlu0 %v10494, 64
      %v10572 = vpop.permute.xlu0 %10571
      %10573 = vrot.lane.b32.xlu0 %v10495, 64
      %v10574 = vpop.permute.xlu0 %10573
      %10575 = vrot.lane.b32.xlu0 %v10496, 64
      %v10576 = vpop.permute.xlu0 %10575
      %10577 = vrot.lane.b32.xlu0 %v10497, 64
      %v10578 = vpop.permute.xlu0 %10577
      %10579 = vrot.lane.b32.xlu0 %v10498, 64
      %v10580 = vpop.permute.xlu0 %10579
      %10581 = vrot.lane.b32.xlu0 %v10499, 64
      %v10582 = vpop.permute.xlu0 %10581
      %10583 = vrot.lane.b32.xlu0 %v10500, 64
      %v10584 = vpop.permute.xlu0 %10583
      %10585 = vrot.lane.b32.xlu0 %v10501, 64
      %v10586 = vpop.permute.xlu0 %10585
      %10587 = vrot.lane.b32.xlu0 %v10502, 64
      %v10588 = vpop.permute.xlu0 %10587
      %10589 = vrot.lane.b32.xlu0 %v10503, 64
      %v10590 = vpop.permute.xlu0 %10589
      %10591 = vrot.lane.b32.xlu0 %v10504, 64
      %v10592 = vpop.permute.xlu0 %10591
      %10593 = vrot.lane.b32.xlu0 %v10505, 64
      %v10594 = vpop.permute.xlu0 %10593
      %10595 = vrot.lane.b32.xlu0 %v10506, 64
      %v10596 = vpop.permute.xlu0 %10595
      %10597 = vrot.lane.b32.xlu0 %v10507, 64
      %v10598 = vpop.permute.xlu0 %10597
      %10599 = vrot.lane.b32.xlu0 %v10508, 64
      %v10600 = vpop.permute.xlu0 %10599
      %10601 = vrot.lane.b32.xlu0 %v10509, 64
      %v10602 = vpop.permute.xlu0 %10601
      %10603 = vrot.lane.b32.xlu0 %v10510, 64
      %v10604 = vpop.permute.xlu0 %10603
      %10605 = vrot.lane.b32.xlu0 %v10511, 64
      %v10606 = vpop.permute.xlu0 %10605
      %10607 = vrot.lane.b32.xlu0 %v10512, 64
      %v10608 = vpop.permute.xlu0 %10607
      %v10641 = vsel %vm784, %v10449, %v10546
      %v10642 = vsel %vm784, %v10450, %v10548
      %v10643 = vsel %vm784, %v10451, %v10550
      %v10644 = vsel %vm784, %v10452, %v10552
      %v10645 = vsel %vm784, %v10453, %v10554
      %v10646 = vsel %vm784, %v10454, %v10556
      %v10647 = vsel %vm784, %v10455, %v10558
      %v10648 = vsel %vm784, %v10456, %v10560
      %v10649 = vsel %vm784, %v10457, %v10562
      %v10650 = vsel %vm784, %v10458, %v10564
      %v10651 = vsel %vm784, %v10459, %v10566
      %v10652 = vsel %vm784, %v10460, %v10568
      %v10653 = vsel %vm784, %v10461, %v10570
      %v10654 = vsel %vm784, %v10462, %v10572
      %v10655 = vsel %vm784, %v10463, %v10574
      %v10656 = vsel %vm784, %v10464, %v10576
      %v10657 = vsel %vm784, %v10465, %v10578
      %v10658 = vsel %vm784, %v10466, %v10580
      %v10659 = vsel %vm784, %v10467, %v10582
      %v10660 = vsel %vm784, %v10468, %v10584
      %v10661 = vsel %vm784, %v10469, %v10586
      %v10662 = vsel %vm784, %v10470, %v10588
      %v10663 = vsel %vm784, %v10471, %v10590
      %v10664 = vsel %vm784, %v10472, %v10592
      %v10665 = vsel %vm784, %v10473, %v10594
      %v10666 = vsel %vm784, %v10474, %v10596
      %v10667 = vsel %vm784, %v10475, %v10598
      %v10668 = vsel %vm784, %v10476, %v10600
      %v10669 = vsel %vm784, %v10477, %v10602
      %v10670 = vsel %vm784, %v10478, %v10604
      %v10671 = vsel %vm784, %v10479, %v10606
      %v10672 = vsel %vm784, %v10480, %v10608
      %v10673 = vadd.f32 %v10641, %v10642
      %v10674 = vadd.f32 %v10673, %v10643
      %v10675 = vadd.f32 %v10674, %v10644
      %v10676 = vadd.f32 %v10675, %v10645
      %v10677 = vadd.f32 %v10676, %v10646
      %v10678 = vadd.f32 %v10677, %v10647
      %v10679 = vadd.f32 %v10678, %v10648
      %v10680 = vadd.f32 %v10679, %v10649
      %v10681 = vadd.f32 %v10680, %v10650
      %v10682 = vadd.f32 %v10681, %v10651
      %v10683 = vadd.f32 %v10682, %v10652
      %v10684 = vadd.f32 %v10683, %v10653
      %v10685 = vadd.f32 %v10684, %v10654
      %v10686 = vadd.f32 %v10685, %v10655
      %v10687 = vadd.f32 %v10686, %v10656
      %v10688 = vadd.f32 %v10687, %v10657
      %v10689 = vadd.f32 %v10688, %v10658
      %v10690 = vadd.f32 %v10689, %v10659
      %v10691 = vadd.f32 %v10690, %v10660
      %v10692 = vadd.f32 %v10691, %v10661
      %v10693 = vadd.f32 %v10692, %v10662
      %v10694 = vadd.f32 %v10693, %v10663
      %v10695 = vadd.f32 %v10694, %v10664
      %v10696 = vadd.f32 %v10695, %v10665
      %v10697 = vadd.f32 %v10696, %v10666
      %v10698 = vadd.f32 %v10697, %v10667
      %v10699 = vadd.f32 %v10698, %v10668
      %v10700 = vadd.f32 %v10699, %v10669
      %v10701 = vadd.f32 %v10700, %v10670
      %v10702 = vadd.f32 %v10701, %v10671
      %v10703 = vadd.f32 %v10702, %v10672
      %v10704 = vrot.slane %v10703, 4
      %v10705 = vadd.f32 %v10703, %v10704
      %v10706 = vrot.slane %v10705, 2
      %v10707 = vadd.f32 %v10705, %v10706
      %v10708 = vrot.slane %v10707, 1
      %v10709 = vadd.f32 %v10707, %v10708
      %v10710 = vmul.f32 %v10709, 0.00390625
      %v10711 = vmul.f32 %v10710, %v10710
      %10713 = vrot.lane.b32.xlu0 %v10711, 64
      %v10714 = vpop.permute.xlu0 %10713
      %v10716 = vsub.f32 %v10710, %v10714
      %v10717 = vmax.f32 %v10716, 0.0
      %v10718 = vsub.f32 %v10449, %v10710
      %v10719 = vsub.f32 %v10450, %v10710
      %v10720 = vsub.f32 %v10451, %v10710
      %v10721 = vsub.f32 %v10452, %v10710
      %v10722 = vsub.f32 %v10453, %v10710
      %v10723 = vsub.f32 %v10454, %v10710
      %v10724 = vsub.f32 %v10455, %v10710
      %v10725 = vsub.f32 %v10456, %v10710
      %v10726 = vsub.f32 %v10457, %v10710
      %v10727 = vsub.f32 %v10458, %v10710
      %v10728 = vsub.f32 %v10459, %v10710
      %v10729 = vsub.f32 %v10460, %v10710
      %v10730 = vsub.f32 %v10461, %v10710
      %v10731 = vsub.f32 %v10462, %v10710
      %v10732 = vsub.f32 %v10463, %v10710
      %v10733 = vsub.f32 %v10464, %v10710
      %v10734 = vsub.f32 %v10465, %v10710
      %v10735 = vsub.f32 %v10466, %v10710
      %v10736 = vsub.f32 %v10467, %v10710
      %v10737 = vsub.f32 %v10468, %v10710
      %v10738 = vsub.f32 %v10469, %v10710
      %v10739 = vsub.f32 %v10470, %v10710
      %v10740 = vsub.f32 %v10471, %v10710
      %v10741 = vsub.f32 %v10472, %v10710
      %v10742 = vsub.f32 %v10473, %v10710
      %v10743 = vsub.f32 %v10474, %v10710
      %v10744 = vsub.f32 %v10475, %v10710
      %v10745 = vsub.f32 %v10476, %v10710
      %v10746 = vsub.f32 %v10477, %v10710
      %v10747 = vsub.f32 %v10478, %v10710
      %v10748 = vsub.f32 %v10479, %v10710
      %v10749 = vsub.f32 %v10480, %v10710
      %v10750 = vadd.f32 %v10717, 1e-05
      %v10751 = vrsqrt.pop %v10750
      %v10752 = vlaneseq
      %v10753 = vshrl.u32 %v10752, 7
      %v10754 = vsub.s32 0, %v10753
      %v10755 = vrot.slane %v10751, %v10754
      %10757 = vrot.lane.b32.xlu0 %v10755, 64
      %v10758 = vpop.permute.xlu0 %10757
      %v10760 = vmul.f32 %v10718, %v10758
      %v10761 = vmul.f32 %v10719, %v10758
      %v10762 = vmul.f32 %v10720, %v10758
      %v10763 = vmul.f32 %v10721, %v10758
      %v10764 = vmul.f32 %v10722, %v10758
      %v10765 = vmul.f32 %v10723, %v10758
      %v10766 = vmul.f32 %v10724, %v10758
      %v10767 = vmul.f32 %v10725, %v10758
      %v10768 = vmul.f32 %v10726, %v10758
      %v10769 = vmul.f32 %v10727, %v10758
      %v10770 = vmul.f32 %v10728, %v10758
      %v10771 = vmul.f32 %v10729, %v10758
      %v10772 = vmul.f32 %v10730, %v10758
      %v10773 = vmul.f32 %v10731, %v10758
      %v10774 = vmul.f32 %v10732, %v10758
      %v10775 = vmul.f32 %v10733, %v10758
      %v10776 = vmul.f32 %v10734, %v10758
      %v10777 = vmul.f32 %v10735, %v10758
      %v10778 = vmul.f32 %v10736, %v10758
      %v10779 = vmul.f32 %v10737, %v10758
      %v10780 = vmul.f32 %v10738, %v10758
      %v10781 = vmul.f32 %v10739, %v10758
      %v10782 = vmul.f32 %v10740, %v10758
      %v10783 = vmul.f32 %v10741, %v10758
      %v10784 = vmul.f32 %v10742, %v10758
      %v10785 = vmul.f32 %v10743, %v10758
      %v10786 = vmul.f32 %v10744, %v10758
      %v10787 = vmul.f32 %v10745, %v10758
      %v10788 = vmul.f32 %v10746, %v10758
      %v10789 = vmul.f32 %v10747, %v10758
      %v10790 = vmul.f32 %v10748, %v10758
      %v10791 = vmul.f32 %v10749, %v10758
      %v10792 = vmax.f32 %v10760, 0.0
      %v10793 = vmax.f32 %v10761, 0.0
      %v10794 = vmax.f32 %v10762, 0.0
      %v10795 = vmax.f32 %v10763, 0.0
      %v10796 = vmax.f32 %v10764, 0.0
      %v10797 = vmax.f32 %v10765, 0.0
      %v10798 = vmax.f32 %v10766, 0.0
      %v10799 = vmax.f32 %v10767, 0.0
      %v10800 = vmax.f32 %v10768, 0.0
      %v10801 = vmax.f32 %v10769, 0.0
      %v10802 = vmax.f32 %v10770, 0.0
      %v10803 = vmax.f32 %v10771, 0.0
      %v10804 = vmax.f32 %v10772, 0.0
      %v10805 = vmax.f32 %v10773, 0.0
      %v10806 = vmax.f32 %v10774, 0.0
      %v10807 = vmax.f32 %v10775, 0.0
      %v10808 = vmax.f32 %v10776, 0.0
      %v10809 = vmax.f32 %v10777, 0.0
      %v10810 = vmax.f32 %v10778, 0.0
      %v10811 = vmax.f32 %v10779, 0.0
      %v10812 = vmax.f32 %v10780, 0.0
      %v10813 = vmax.f32 %v10781, 0.0
      %v10814 = vmax.f32 %v10782, 0.0
      %v10815 = vmax.f32 %v10783, 0.0
      %v10816 = vmax.f32 %v10784, 0.0
      %v10817 = vmax.f32 %v10785, 0.0
      %v10818 = vmax.f32 %v10786, 0.0
      %v10819 = vmax.f32 %v10787, 0.0
      %v10820 = vmax.f32 %v10788, 0.0
      %v10821 = vmax.f32 %v10789, 0.0
      %v10822 = vmax.f32 %v10790, 0.0
      %v10823 = vmax.f32 %v10791, 0.0
      %v10824 = vld [vmem:[%s5] sm:$0x3]
      %v10825 = vpack.c.bf16 %v10793, %v10792
      %v10826 = vpack.c.bf16 %v10795, %v10794
      %v10827 = vpack.c.bf16 %v10797, %v10796
      %v10828 = vpack.c.bf16 %v10799, %v10798
      %v10829 = vpack.c.bf16 %v10801, %v10800
      %v10830 = vpack.c.bf16 %v10803, %v10802
      %v10831 = vpack.c.bf16 %v10805, %v10804
      %v10832 = vpack.c.bf16 %v10807, %v10806
      %v10833 = vpack.c.bf16 %v10809, %v10808
      %v10834 = vpack.c.bf16 %v10811, %v10810
      %v10835 = vpack.c.bf16 %v10813, %v10812
      %v10836 = vpack.c.bf16 %v10815, %v10814
      %v10837 = vpack.c.bf16 %v10817, %v10816
      %v10838 = vpack.c.bf16 %v10819, %v10818
      %v10839 = vpack.c.bf16 %v10821, %v10820
      %v10840 = vpack.c.bf16 %v10823, %v10822
      %v10841 = vld [vmem:[%s6] sm:$0x7]
      %10843 = vset.pattern.permute.xlu0 0
      %10844 = vperm.xlu0 %10843, %v10841
      %v10845 = vpop.permute.xlu0 %10844
      %v10848 = vsel %vm784, %v10824, 0
      %v10851 = vsel %vm784, %v10825, 0
      %v10854 = vsel %vm784, %v10826, 0
      %v10857 = vsel %vm784, %v10827, 0
      %v10860 = vsel %vm784, %v10828, 0
      %v10863 = vsel %vm784, %v10829, 0
      %v10866 = vsel %vm784, %v10830, 0
      %v10869 = vsel %vm784, %v10831, 0
      %v10872 = vsel %vm784, %v10832, 0
      %v10875 = vsel %vm784, %v10833, 0
      %v10878 = vsel %vm784, %v10834, 0
      %v10881 = vsel %vm784, %v10835, 0
      %v10884 = vsel %vm784, %v10836, 0
      %v10887 = vsel %vm784, %v10837, 0
      %v10890 = vsel %vm784, %v10838, 0
      %v10893 = vsel %vm784, %v10839, 0
      %v10896 = vsel %vm784, %v10840, 0
      %10898 = vmatprep.subr.bf16.mxu0 0
      %10899 = vmatpush1.bf16.xpose.msra.mxu0 %v10872
      %10900 = vmatprep.subr.bf16.mxu0 0
      %10901 = vmatpush1.bf16.xpose.msra.mxu0 %v10869
      %10902 = vmatprep.subr.bf16.mxu0 0
      %10903 = vmatpush1.bf16.xpose.msra.mxu0 %v10866
      %10904 = vmatprep.subr.bf16.mxu0 0
      %10905 = vmatpush1.bf16.xpose.msra.mxu0 %v10863
      %10906 = vmatprep.subr.bf16.mxu0 0
      %10907 = vmatpush1.bf16.xpose.msra.mxu0 %v10860
      %10908 = vmatprep.subr.bf16.mxu0 0
      %10909 = vmatpush1.bf16.xpose.msra.mxu0 %v10857
      %10910 = vmatprep.subr.bf16.mxu0 0
      %10911 = vmatpush1.bf16.xpose.msra.mxu0 %v10854
      %10912 = vmatprep.subr.bf16.mxu0 0
      %10913 = vmatpush1.bf16.xpose.msra.mxu0 %v10851
      %10914 = vmatprep.subr.bf16.mxu0 0
      %10915 = vmatpush2.bf16.xpose.msra.mxu0 %v10896
      %10916 = vmatprep.subr.bf16.mxu0 0
      %10917 = vmatpush2.bf16.xpose.msra.mxu0 %v10893
      %10918 = vmatprep.subr.bf16.mxu0 0
      %10919 = vmatpush2.bf16.xpose.msra.mxu0 %v10890
      %10920 = vmatprep.subr.bf16.mxu0 0
      %10921 = vmatpush2.bf16.xpose.msra.mxu0 %v10887
      %10922 = vmatprep.subr.bf16.mxu0 0
      %10923 = vmatpush2.bf16.xpose.msra.mxu0 %v10884
      %10924 = vmatprep.subr.bf16.mxu0 0
      %10925 = vmatpush2.bf16.xpose.msra.mxu0 %v10881
      %10926 = vmatprep.subr.bf16.mxu0 0
      %10927 = vmatpush2.bf16.xpose.msra.mxu0 %v10878
      %10928 = vmatprep.subr.bf16.mxu0 0
      %10929 = vmatpush2.bf16.xpose.msra.mxu0 %v10875
      %10930 = vmatprep.mubr.bf16.mxu0 0
      %10931 = vmatmul.mubr.bf16.gmra.mxu0 %v10848
      %v10932 = vpop.f32.mrf.mxu0
      %v10933 = vadd.f32 %v10845, %v10932
      %v10934 = vpop.f32.mrf.mxu0
      %v10935 = vadd.f32 %v10845, %v10934
      %v10936 = vpop.f32.mrf.mxu0
      %v10937 = vpop.f32.mrf.mxu0
      %10938 = vdwg.mxu0
      %v10939 = vxor.u32 %v10933, 2147483648
      %v10940 = vxor.u32 %v10935, 2147483648
      %v10941 = vmul.f32 %v10939, 1.442695
      %v10942 = vpow.pop %v10941
      %v10943 = vmul.f32 %v10940, 1.442695
      %v10944 = vpow.pop %v10943
      %v10945 = vadd.f32 %v10942, 1.0
      %v10946 = vadd.f32 %v10944, 1.0
      %v10947 = vrcp.pop %v10945
      %v10948 = vmul.f32 1.0, %v10947
      %v10949 = vrcp.pop %v10946
      %v10950 = vmul.f32 1.0, %v10949
      %v10953 = vcombine.low %v10948, %v10950
      %10955 = vst [vmem:[%s278] sm:$0x77] %v10953
      %p10956 = scmp.lt.s32.totalorder %s18, 1
      %s10957 = scalar_select %p10956, %s18, 1
      %s10958 = smul.addr %s10957, 2
      %s10959 = smul.addr %s10958, 4
      %s10960 = scalar_lea.vmem %s7, %s10959
      // Predicated region
      $region49: #{tnet_forward.1} parent=47 // pred_check
        %p10961 = pneg %p188
      $region50: #{tnet_forward.1} parent=47 // pred_check_branch
        %10963 = sbr.rel (%p10961) target = $region52
      $region51: #{tnet_forward.1} parent=47 // pred_region
        _
      $region52: #{tnet_forward.1} parent=47 // pred_fallthru
        _
    $region48: #{tnet_forward.1} parent=5 // pred_fallthru
      _
    %p10964 = scmp.le.s32.totalorder 2, %s13
    // Predicated region
    $region53: #{tnet_forward.1} parent=5 // pred_check
      %p10965 = pneg %p10964
    $region54: #{tnet_forward.1} parent=5 // pred_check_branch
      %10967 = sbr.rel (%p10965) target = $region56
    $region55: #{tnet_forward.1} parent=5 // pred_region
      %s10968 = ssub.s32 %s13, 2
      // Predicated region
      $region57: #{tnet_forward.1} parent=55 // pred_check
        %p10969 = pneg %p194
      $region58: #{tnet_forward.1} parent=55 // pred_check_branch
        %10971 = sbr.rel (%p10969) target = $region60
      $region59: #{tnet_forward.1} parent=55 // pred_region
        %p10972 = scmp.lt.s32.totalorder %s19, 1
        %s10973 = scalar_select %p10972, %s19, 1
        %s10974 = smul.addr %s10973, 2
        %s10975 = smul.addr %s10974, 4
        %s10976 = scalar_lea.vmem %s7, %s10975
      $region60: #{tnet_forward.1} parent=55 // pred_fallthru
        _
    $region56: #{tnet_forward.1} parent=5 // pred_fallthru
      _
  $region6: #{tnet_forward.1} parent=0 // loop_footer
    %s17 = sadd.s32 1, %s13
  $region7: #{tnet_forward.1} parent=0 // loop_footer_branch
    %12 = sbr.rel target = $region3
  $region8: #{tnet_forward.1} parent=0 // loop_exit
    _

</llo_original>
